<compile_context>
chip_gen: v6e
topology: v6e:2x2x1
jax: 0.10.0
libtpu: 0.0.40
codegen_flags: <defaults>
</compile_context>

<pallas_src>
import functools

import jax
import jax.numpy as jnp
from jax.experimental import pallas as pl
from jax.experimental.pallas import tpu as pltpu


def _round_up(x, m):
    return (x + m - 1) // m * m


# ------------------------------ Pallas kernels ------------------------------

def _conv_pool_relu_kernel(p_ref, w_ref, b_ref, o_ref, *, tb, rows_per_phase):
    """(TB, 4R, K) phase-major patches -> one MXU matmul -> 2x2 maxpool ->
    +bias -> ReLU.  f32 accumulate/epilogue, bf16 store."""
    R = rows_per_phase                       # multiple of 8 for both conv layers
    K = p_ref.shape[-1]
    cout = w_ref.shape[-1]
    p = p_ref[...].reshape(tb * 4 * R, K)    # one big matmul fills the MXU M dim
    acc = jnp.dot(p, w_ref[...], preferred_element_type=jnp.float32)
    acc = acc.reshape(tb, 4, R, cout)        # phase axis = 1
    pooled = jnp.max(acc, axis=1)            # MaxPool2d(2) over the 4 pool phases
    pooled = pooled + b_ref[...]             # bias after pool: 4x fewer VALU adds
    o_ref[...] = jnp.maximum(pooled, 0.0).astype(o_ref.dtype)


def _fc_head_kernel(x_ref, w1_ref, b1_ref, w2_ref, b2_ref, o_ref):
    """fc1 + bias + ReLU + fc2 + bias; bf16 matmuls, f32 accumulate/epilogue."""
    h = jnp.dot(x_ref[...], w1_ref[...], preferred_element_type=jnp.float32)
    h = jnp.maximum(h + b1_ref[...], 0.0)
    o = jnp.dot(h.astype(w2_ref.dtype), w2_ref[...],
                preferred_element_type=jnp.float32)
    o_ref[...] = (o + b2_ref[...]).astype(o_ref.dtype)


# ------------------------------ wrappers ------------------------------------

def _im2col_pool_phases(x_nhwc, k):
    """Phase-major valid-conv patches: (N, 4 * Hp*Wp, k*k*C), in x's dtype.

    Row order: [phase(0,0) | phase(0,1) | phase(1,0) | phase(1,1)], each phase
    block ordered (i*Wp + j).  Feature order is (di, dj, c) to match the
    (kH, kW, Cin, Cout) weight reshape.
    """
    N, H, W, C = x_nhwc.shape
    Hp, Wp = (H - k + 1) // 2, (W - k + 1) // 2
    K = k * k * C
    phase_blocks = []
    for a in (0, 1):
        for b in (0, 1):
            cols = []
            for di in range(k):
                for dj in range(k):
                    cols.append(
                        x_nhwc[:, a + di:a + di + 2 * Hp - 1:2,
                                  b + dj:b + dj + 2 * Wp - 1:2, :])
            ph = jnp.stack(cols, axis=3)               # (N, Hp, Wp, k*k, C)
            phase_blocks.append(ph.reshape(N, Hp * Wp, K))
    patches = jnp.stack(phase_blocks, axis=1)          # (N, 4, Hp*Wp, K)
    return patches.reshape(N, 4 * Hp * Wp, K)


def conv_pool_relu(x_nhwc, w_mat, b_row, k, tb):
    """Fused Conv2d(k, valid) + MaxPool2d(2) + bias + ReLU over TB-image tiles.

    x_nhwc: (N, H, W, Cin) bf16 (N multiple of tb); w_mat: (k*k*Cin, Cout) bf16;
    b_row: (1, Cout) f32.  Returns (N, Hp*Wp, Cout) bf16, rows ordered (i*Wp+j).
    """
    N, H, W, Cin = x_nhwc.shape
    K, Cout = w_mat.shape
    Hp, Wp = (H - k + 1) // 2, (W - k + 1) // 2
    R = Hp * Wp                                       # rows per pool phase
    assert N % tb == 0, (N, tb)
    patches = _im2col_pool_phases(x_nhwc, k)          # (N, 4R, K) bf16
    kernel = functools.partial(_conv_pool_relu_kernel, tb=tb, rows_per_phase=R)
    return pl.pallas_call(
        kernel,
        out_shape=jax.ShapeDtypeStruct((N, R, Cout), jnp.bfloat16),
        grid=(N // tb,),
        in_specs=[
            pl.BlockSpec((tb, 4 * R, K), lambda n: (n, 0, 0)),  # TB images of patches
            pl.BlockSpec((K, Cout), lambda n: (0, 0)),          # weights stay resident
            pl.BlockSpec((1, Cout), lambda n: (0, 0)),          # bias stays resident
        ],
        out_specs=pl.BlockSpec((tb, R, Cout), lambda n: (n, 0, 0)),
        compiler_params=pltpu.CompilerParams(
            dimension_semantics=("parallel",)),
    )(patches, w_mat, b_row)


def fc_head(x, w1, b1_row, w2_pad, b2_row_pad, tb=256):
    """Fused fc1 + ReLU + fc2 over fixed batch tiles; batch is zero-padded to a
    tile multiple and the padding is sliced off again (fc2 padded to 128 lanes;
    the :10 slice happens outside)."""
    B, K = x.shape
    H = w1.shape[1]
    Np = w2_pad.shape[1]
    tb = min(tb, _round_up(B, 8))            # small batches: one 8-aligned block
    BF = _round_up(B, tb)
    if BF != B:
        x = jnp.pad(x, ((0, BF - B), (0, 0)))
    out = pl.pallas_call(
        _fc_head_kernel,
        out_shape=jax.ShapeDtypeStruct((BF, Np), jnp.float32),
        grid=(BF // tb,),
        in_specs=[
            pl.BlockSpec((tb, K), lambda i: (i, 0)),
            pl.BlockSpec((K, H), lambda i: (0, 0)),
            pl.BlockSpec((1, H), lambda i: (0, 0)),
            pl.BlockSpec((H, Np), lambda i: (0, 0)),
            pl.BlockSpec((1, Np), lambda i: (0, 0)),
        ],
        out_specs=pl.BlockSpec((tb, Np), lambda i: (i, 0)),
        compiler_params=pltpu.CompilerParams(
            dimension_semantics=("parallel",)),
    )(x, w1, b1_row, w2_pad, b2_row_pad)
    return out[:B]


# ------------------------------ parameters ----------------------------------

def init_params(key):
    """Random parameters in PyTorch conventions (OIHW convs, (out, in) linears)."""
    ks = jax.random.split(key, 8)
    s = 0.05
    return {
        "w_conv1": s * jax.random.normal(ks[0], (32, 1, 5, 5), jnp.float32),
        "b_conv1": s * jax.random.normal(ks[1], (32,), jnp.float32),
        "w_conv2": s * jax.random.normal(ks[2], (64, 32, 5, 5), jnp.float32),
        "b_conv2": s * jax.random.normal(ks[3], (64,), jnp.float32),
        "w_fc1": s * jax.random.normal(ks[4], (128, 1024), jnp.float32),
        "b_fc1": s * jax.random.normal(ks[5], (128,), jnp.float32),
        "w_fc2": s * jax.random.normal(ks[6], (10, 128), jnp.float32),
        "b_fc2": s * jax.random.normal(ks[7], (10,), jnp.float32),
    }


def prepare_params(p):
    """One-time layout prep: matmul-ready bf16 conv weights, pre-transposed bf16
    FC weights with the NCHW flatten permutation folded into fc1's rows, fc2
    padded to 128 output lanes, biases kept in f32 for the f32 epilogue."""
    bf16 = jnp.bfloat16
    w_c1 = jnp.transpose(p["w_conv1"], (2, 3, 1, 0)).reshape(5 * 5 * 1, 32)
    w_c2 = jnp.transpose(p["w_conv2"], (2, 3, 1, 0)).reshape(5 * 5 * 32, 64)
    # torch.flatten(NCHW) feature index is c*16 + h*4 + w; our activations are
    # flattened NHWC as (h*4 + w)*64 + c -> permute fc1 rows accordingly.
    w_fc1 = (p["w_fc1"].reshape(128, 64, 4, 4)
             .transpose(2, 3, 1, 0).reshape(4 * 4 * 64, 128))
    w_fc2 = jnp.zeros((128, 128), jnp.float32).at[:, :10].set(p["w_fc2"].T)
    b_fc2 = jnp.zeros((1, 128), jnp.float32).at[0, :10].set(p["b_fc2"])
    return {
        "w_conv1_mat": w_c1.astype(bf16), "b_conv1_row": p["b_conv1"].reshape(1, 32),
        "w_conv2_mat": w_c2.astype(bf16), "b_conv2_row": p["b_conv2"].reshape(1, 64),
        "w_fc1_mat": w_fc1.astype(bf16), "b_fc1_row": p["b_fc1"].reshape(1, 128),
        "w_fc2_pad": w_fc2.astype(bf16), "b_fc2_pad": b_fc2,
    }


# ------------------------------ forward pass --------------------------------

_TB_CONV = 8   # images per conv grid step (VMEM-safe on v5e; tune up on v6e/v7x)


def simple_cnn_forward(params, x_nchw):
    """Matches SimpleCNN.forward; x_nchw: (N, 1, 28, 28) float32 -> (N, 10)."""
    N = x_nchw.shape[0]
    BP = _round_up(N, _TB_CONV)
    x = jnp.transpose(x_nchw, (0, 2, 3, 1)).astype(jnp.bfloat16)       # NHWC bf16
    if BP != N:
        x = jnp.pad(x, ((0, BP - N), (0, 0), (0, 0), (0, 0)))
    x = conv_pool_relu(x, params["w_conv1_mat"], params["b_conv1_row"],
                       k=5, tb=_TB_CONV)                               # (BP,144,32)
    x = x.reshape(BP, 12, 12, 32)
    x = conv_pool_relu(x, params["w_conv2_mat"], params["b_conv2_row"],
                       k=5, tb=_TB_CONV)                               # (BP,16,64)
    x = x.reshape(BP, 16 * 64)       # NHWC flatten (permutation folded into fc1)
    x = fc_head(x, params["w_fc1_mat"], params["b_fc1_row"],
                params["w_fc2_pad"], params["b_fc2_pad"])              # (BP,128)
    return x[:N, :10]


if __name__ == "__main__":
    key = jax.random.PRNGKey(0)
    pkey, xkey = jax.random.split(key)
    params = prepare_params(init_params(pkey))

    # batch=2, 1 channel, 28x28 (required so the conv/pool stack yields the
    # 1024 features expected by fc1).
    x = jax.random.normal(xkey, (2, 1, 28, 28), jnp.float32)

    fwd = jax.jit(simple_cnn_forward)
    out = jax.block_until_ready(fwd(params, x))
    assert out.shape == (2, 10), out.shape
    print("KERNEL_OK")
</pallas_src>

<mosaic_0001>
module attributes {stable_mosaic.version = 11 : i64} {
  func.func @_conv_pool_relu_kernel(%arg0: i32, %arg1: memref<8x576x25xbf16, #tpu.memory_space<vmem>>, %arg2: memref<25x32xbf16, #tpu.memory_space<vmem>>, %arg3: memref<1x32xf32, #tpu.memory_space<vmem>>, %arg4: memref<8x144x32xbf16, #tpu.memory_space<vmem>>) attributes {dimension_semantics = [#tpu.dimension_semantics<parallel>], iteration_bounds = array<i64: 1>, scalar_prefetch = 0 : i64, scratch_operands = 0 : i64, tpu.core_type = #tpu.core_type<tc>, window_params = [{transform_indices = @transform_0, window_bounds = array<i64: 8, 576, 25>}, {pipeline_mode = #tpu.pipeline_mode<synchronous>, transform_indices = @transform_1, window_bounds = array<i64: 25, 32>}, {pipeline_mode = #tpu.pipeline_mode<synchronous>, transform_indices = @transform_2, window_bounds = array<i64: 1, 32>}, {transform_indices = @transform_3, window_bounds = array<i64: 8, 144, 32>}]} {
    %c0 = arith.constant 0 : index
    %c0_0 = arith.constant 0 : index
    %c0_1 = arith.constant 0 : index
    %0 = vector.load %arg1[%c0, %c0_0, %c0_1] : memref<8x576x25xbf16, #tpu.memory_space<vmem>>, vector<8x576x25xbf16>
    %1 = vector.shape_cast %0 : vector<8x576x25xbf16> to vector<4608x25xbf16>
    %c0_2 = arith.constant 0 : index
    %c0_3 = arith.constant 0 : index
    %2 = vector.load %arg2[%c0_2, %c0_3] : memref<25x32xbf16, #tpu.memory_space<vmem>>, vector<25x32xbf16>
    %cst = arith.constant dense<0.000000e+00> : vector<4608x32xf32>
    %3 = tpu.matmul %1, %2, %cst {dimension_numbers = #tpu.dot_dimension_numbers<[1], [0], [0], [1], [0, 0, 1, 1], [], []>} : vector<4608x25xbf16>, vector<25x32xbf16>, vector<4608x32xf32> -> vector<4608x32xf32>
    %4 = vector.shape_cast %3 : vector<4608x32xf32> to vector<8x4x144x32xf32>
    %cst_4 = arith.constant dense<0xFF800000> : vector<8x144x32xf32>
    %5 = vector.multi_reduction <maximumf>, %4, %cst_4 [1] : vector<8x4x144x32xf32> to vector<8x144x32xf32>
    %c0_5 = arith.constant 0 : index
    %c0_6 = arith.constant 0 : index
    %6 = vector.load %arg3[%c0_5, %c0_6] : memref<1x32xf32, #tpu.memory_space<vmem>>, vector<1x32xf32>
    %7 = vector.shape_cast %6 : vector<1x32xf32> to vector<1x1x32xf32>
    %8 = vector.broadcast %7 : vector<1x1x32xf32> to vector<8x144x32xf32>
    %9 = arith.addf %5, %8 : vector<8x144x32xf32>
    %cst_7 = arith.constant 0.000000e+00 : f32
    %10 = vector.broadcast %cst_7 : f32 to vector<8x144x32xf32>
    %11 = arith.maximumf %9, %10 : vector<8x144x32xf32>
    %12 = arith.truncf %11 : vector<8x144x32xf32> to vector<8x144x32xbf16>
    %c0_8 = arith.constant 0 : index
    %c0_9 = arith.constant 0 : index
    %c0_10 = arith.constant 0 : index
    %13 = vector.load %arg4[%c0_8, %c0_9, %c0_10] : memref<8x144x32xbf16, #tpu.memory_space<vmem>>, vector<8x144x32xbf16>
    tpu.vector_store %arg4[%c0_8, %c0_9, %c0_10], %12 {strides = array<i32>} : memref<8x144x32xbf16, #tpu.memory_space<vmem>>, vector<8x144x32xbf16>,
    return
  }
  func.func @transform_0(%arg0: i32) -> (i32, i32, i32) {
    %c0_i32 = arith.constant 0 : i32
    %c0_i32_0 = arith.constant 0 : i32
    %c0_i32_1 = arith.constant 0 : i32
    return %arg0, %c0_i32, %c0_i32_0 : i32, i32, i32
  }
  func.func @transform_1(%arg0: i32) -> (i32, i32) {
    %c0_i32 = arith.constant 0 : i32
    %c0_i32_0 = arith.constant 0 : i32
    %c0_i32_1 = arith.constant 0 : i32
    return %c0_i32, %c0_i32_0 : i32, i32
  }
  func.func @transform_2(%arg0: i32) -> (i32, i32) {
    %c0_i32 = arith.constant 0 : i32
    %c0_i32_0 = arith.constant 0 : i32
    %c0_i32_1 = arith.constant 0 : i32
    return %c0_i32, %c0_i32_0 : i32, i32
  }
  func.func @transform_3(%arg0: i32) -> (i32, i32, i32) {
    %c0_i32 = arith.constant 0 : i32
    %c0_i32_0 = arith.constant 0 : i32
    %c0_i32_1 = arith.constant 0 : i32
    return %arg0, %c0_i32, %c0_i32_0 : i32, i32, i32
  }
}

module attributes {stable_mosaic.version = 11 : i64} {
  func.func @_conv_pool_relu_kernel(%arg0: i32, %arg1: memref<8x64x800xbf16, #tpu.memory_space<vmem>>, %arg2: memref<800x64xbf16, #tpu.memory_space<vmem>>, %arg3: memref<1x64xf32, #tpu.memory_space<vmem>>, %arg4: memref<8x16x64xbf16, #tpu.memory_space<vmem>>) attributes {dimension_semantics = [#tpu.dimension_semantics<parallel>], iteration_bounds = array<i64: 1>, scalar_prefetch = 0 : i64, scratch_operands = 0 : i64, tpu.core_type = #tpu.core_type<tc>, window_params = [{transform_indices = @transform_0, window_bounds = array<i64: 8, 64, 800>}, {pipeline_mode = #tpu.pipeline_mode<synchronous>, transform_indices = @transform_1, window_bounds = array<i64: 800, 64>}, {pipeline_mode = #tpu.pipeline_mode<synchronous>, transform_indices = @transform_2, window_bounds = array<i64: 1, 64>}, {transform_indices = @transform_3, window_bounds = array<i64: 8, 16, 64>}]} {
    %c0 = arith.constant 0 : index
    %c0_0 = arith.constant 0 : index
    %c0_1 = arith.constant 0 : index
    %0 = vector.load %arg1[%c0, %c0_0, %c0_1] : memref<8x64x800xbf16, #tpu.memory_space<vmem>>, vector<8x64x800xbf16>
    %1 = vector.shape_cast %0 : vector<8x64x800xbf16> to vector<512x800xbf16>
    %c0_2 = arith.constant 0 : index
    %c0_3 = arith.constant 0 : index
    %2 = vector.load %arg2[%c0_2, %c0_3] : memref<800x64xbf16, #tpu.memory_space<vmem>>, vector<800x64xbf16>
    %cst = arith.constant dense<0.000000e+00> : vector<512x64xf32>
    %3 = tpu.matmul %1, %2, %cst {dimension_numbers = #tpu.dot_dimension_numbers<[1], [0], [0], [1], [0, 0, 1, 1], [], []>} : vector<512x800xbf16>, vector<800x64xbf16>, vector<512x64xf32> -> vector<512x64xf32>
    %4 = vector.shape_cast %3 : vector<512x64xf32> to vector<8x4x16x64xf32>
    %cst_4 = arith.constant dense<0xFF800000> : vector<8x16x64xf32>
    %5 = vector.multi_reduction <maximumf>, %4, %cst_4 [1] : vector<8x4x16x64xf32> to vector<8x16x64xf32>
    %c0_5 = arith.constant 0 : index
    %c0_6 = arith.constant 0 : index
    %6 = vector.load %arg3[%c0_5, %c0_6] : memref<1x64xf32, #tpu.memory_space<vmem>>, vector<1x64xf32>
    %7 = vector.shape_cast %6 : vector<1x64xf32> to vector<1x1x64xf32>
    %8 = vector.broadcast %7 : vector<1x1x64xf32> to vector<8x16x64xf32>
    %9 = arith.addf %5, %8 : vector<8x16x64xf32>
    %cst_7 = arith.constant 0.000000e+00 : f32
    %10 = vector.broadcast %cst_7 : f32 to vector<8x16x64xf32>
    %11 = arith.maximumf %9, %10 : vector<8x16x64xf32>
    %12 = arith.truncf %11 : vector<8x16x64xf32> to vector<8x16x64xbf16>
    %c0_8 = arith.constant 0 : index
    %c0_9 = arith.constant 0 : index
    %c0_10 = arith.constant 0 : index
    %13 = vector.load %arg4[%c0_8, %c0_9, %c0_10] : memref<8x16x64xbf16, #tpu.memory_space<vmem>>, vector<8x16x64xbf16>
    tpu.vector_store %arg4[%c0_8, %c0_9, %c0_10], %12 {strides = array<i32>} : memref<8x16x64xbf16, #tpu.memory_space<vmem>>, vector<8x16x64xbf16>,
    return
  }
  func.func @transform_0(%arg0: i32) -> (i32, i32, i32) {
    %c0_i32 = arith.constant 0 : i32
    %c0_i32_0 = arith.constant 0 : i32
    %c0_i32_1 = arith.constant 0 : i32
    return %arg0, %c0_i32, %c0_i32_0 : i32, i32, i32
  }
  func.func @transform_1(%arg0: i32) -> (i32, i32) {
    %c0_i32 = arith.constant 0 : i32
    %c0_i32_0 = arith.constant 0 : i32
    %c0_i32_1 = arith.constant 0 : i32
    return %c0_i32, %c0_i32_0 : i32, i32
  }
  func.func @transform_2(%arg0: i32) -> (i32, i32) {
    %c0_i32 = arith.constant 0 : i32
    %c0_i32_0 = arith.constant 0 : i32
    %c0_i32_1 = arith.constant 0 : i32
    return %c0_i32, %c0_i32_0 : i32, i32
  }
  func.func @transform_3(%arg0: i32) -> (i32, i32, i32) {
    %c0_i32 = arith.constant 0 : i32
    %c0_i32_0 = arith.constant 0 : i32
    %c0_i32_1 = arith.constant 0 : i32
    return %arg0, %c0_i32, %c0_i32_0 : i32, i32, i32
  }
}

module attributes {stable_mosaic.version = 11 : i64} {
  func.func @_fc_head_kernel(%arg0: i32, %arg1: memref<8x1024xbf16, #tpu.memory_space<vmem>>, %arg2: memref<1024x128xbf16, #tpu.memory_space<vmem>>, %arg3: memref<1x128xf32, #tpu.memory_space<vmem>>, %arg4: memref<128x128xbf16, #tpu.memory_space<vmem>>, %arg5: memref<1x128xf32, #tpu.memory_space<vmem>>, %arg6: memref<8x128xf32, #tpu.memory_space<vmem>>) attributes {dimension_semantics = [#tpu.dimension_semantics<parallel>], iteration_bounds = array<i64: 1>, scalar_prefetch = 0 : i64, scratch_operands = 0 : i64, tpu.core_type = #tpu.core_type<tc>, window_params = [{transform_indices = @transform_0, window_bounds = array<i64: 8, 1024>}, {pipeline_mode = #tpu.pipeline_mode<synchronous>, transform_indices = @transform_1, window_bounds = array<i64: 1024, 128>}, {pipeline_mode = #tpu.pipeline_mode<synchronous>, transform_indices = @transform_2, window_bounds = array<i64: 1, 128>}, {pipeline_mode = #tpu.pipeline_mode<synchronous>, transform_indices = @transform_3, window_bounds = array<i64: 128, 128>}, {pipeline_mode = #tpu.pipeline_mode<synchronous>, transform_indices = @transform_4, window_bounds = array<i64: 1, 128>}, {transform_indices = @transform_5, window_bounds = array<i64: 8, 128>}]} {
    %c0 = arith.constant 0 : index
    %c0_0 = arith.constant 0 : index
    %0 = vector.load %arg1[%c0, %c0_0] : memref<8x1024xbf16, #tpu.memory_space<vmem>>, vector<8x1024xbf16>
    %c0_1 = arith.constant 0 : index
    %c0_2 = arith.constant 0 : index
    %1 = vector.load %arg2[%c0_1, %c0_2] : memref<1024x128xbf16, #tpu.memory_space<vmem>>, vector<1024x128xbf16>
    %cst = arith.constant dense<0.000000e+00> : vector<8x128xf32>
    %2 = tpu.matmul %0, %1, %cst {dimension_numbers = #tpu.dot_dimension_numbers<[1], [0], [0], [1], [0, 0, 1, 1], [], []>} : vector<8x1024xbf16>, vector<1024x128xbf16>, vector<8x128xf32> -> vector<8x128xf32>
    %c0_3 = arith.constant 0 : index
    %c0_4 = arith.constant 0 : index
    %3 = vector.load %arg3[%c0_3, %c0_4] : memref<1x128xf32, #tpu.memory_space<vmem>>, vector<1x128xf32>
    %4 = vector.broadcast %3 : vector<1x128xf32> to vector<8x128xf32>
    %5 = arith.addf %2, %4 : vector<8x128xf32>
    %cst_5 = arith.constant 0.000000e+00 : f32
    %6 = vector.broadcast %cst_5 : f32 to vector<8x128xf32>
    %7 = arith.maximumf %5, %6 : vector<8x128xf32>
    %8 = arith.truncf %7 : vector<8x128xf32> to vector<8x128xbf16>
    %c0_6 = arith.constant 0 : index
    %c0_7 = arith.constant 0 : index
    %9 = vector.load %arg4[%c0_6, %c0_7] : memref<128x128xbf16, #tpu.memory_space<vmem>>, vector<128x128xbf16>
    %cst_8 = arith.constant dense<0.000000e+00> : vector<8x128xf32>
    %10 = tpu.matmul %8, %9, %cst_8 {dimension_numbers = #tpu.dot_dimension_numbers<[1], [0], [0], [1], [0, 0, 1, 1], [], []>} : vector<8x128xbf16>, vector<128x128xbf16>, vector<8x128xf32> -> vector<8x128xf32>
    %c0_9 = arith.constant 0 : index
    %c0_10 = arith.constant 0 : index
    %11 = vector.load %arg5[%c0_9, %c0_10] : memref<1x128xf32, #tpu.memory_space<vmem>>, vector<1x128xf32>
    %12 = vector.broadcast %11 : vector<1x128xf32> to vector<8x128xf32>
    %13 = arith.addf %10, %12 : vector<8x128xf32>
    %c0_11 = arith.constant 0 : index
    %c0_12 = arith.constant 0 : index
    %14 = vector.load %arg6[%c0_11, %c0_12] : memref<8x128xf32, #tpu.memory_space<vmem>>, vector<8x128xf32>
    tpu.vector_store %arg6[%c0_11, %c0_12], %13 {strides = array<i32>} : memref<8x128xf32, #tpu.memory_space<vmem>>, vector<8x128xf32>,
    return
  }
  func.func @transform_0(%arg0: i32) -> (i32, i32) {
    %c0_i32 = arith.constant 0 : i32
    %c0_i32_0 = arith.constant 0 : i32
    return %arg0, %c0_i32 : i32, i32
  }
  func.func @transform_1(%arg0: i32) -> (i32, i32) {
    %c0_i32 = arith.constant 0 : i32
    %c0_i32_0 = arith.constant 0 : i32
    %c0_i32_1 = arith.constant 0 : i32
    return %c0_i32, %c0_i32_0 : i32, i32
  }
  func.func @transform_2(%arg0: i32) -> (i32, i32) {
    %c0_i32 = arith.constant 0 : i32
    %c0_i32_0 = arith.constant 0 : i32
    %c0_i32_1 = arith.constant 0 : i32
    return %c0_i32, %c0_i32_0 : i32, i32
  }
  func.func @transform_3(%arg0: i32) -> (i32, i32) {
    %c0_i32 = arith.constant 0 : i32
    %c0_i32_0 = arith.constant 0 : i32
    %c0_i32_1 = arith.constant 0 : i32
    return %c0_i32, %c0_i32_0 : i32, i32
  }
  func.func @transform_4(%arg0: i32) -> (i32, i32) {
    %c0_i32 = arith.constant 0 : i32
    %c0_i32_0 = arith.constant 0 : i32
    %c0_i32_1 = arith.constant 0 : i32
    return %c0_i32, %c0_i32_0 : i32, i32
  }
  func.func @transform_5(%arg0: i32) -> (i32, i32) {
    %c0_i32 = arith.constant 0 : i32
    %c0_i32_0 = arith.constant 0 : i32
    return %arg0, %c0_i32 : i32, i32
  }
}

</mosaic_0001>

<llo_original>
// kernel: simple_cnn_forward.3
$region0: #{simple_cnn_forward.3}
  #allocation0 [shape = 'u32[]', space=smem, size = 0x4, offset = 0x4, fixed_abs, tag = 'smem constant byte address 0x4 - core index']
  #allocation1 [shape = 'u32[144,128]{1,0:T(1,128)}', space=vmem, size = 0x12000, scoped, tag = 'internal scratch']
  %s0 = inlined_call_operand.vmem [shape: bf16[8,576,25], index: 0, kind: input, shape index: {}]
  %s1 = inlined_call_operand.vmem [shape: bf16[25,32], index: 1, kind: input, shape index: {}]
  %s2 = inlined_call_operand.vmem [shape: f32[1,32], index: 2, kind: input, shape index: {}]
  %s3 = inlined_call_operand.vmem [shape: bf16[8,144,32], index: 3, kind: output, shape index: {}]
  %s4 = sld [smem:[#allocation0]]
  $region22: #{simple_cnn_forward.3} parent=0
    _
  %s6 = ssub.s32 1, %s4
  %s7 = scalar_select 0, %s6, %s4
  // Predicated region
  $region2: #{simple_cnn_forward.3} parent=0 // pred_check
    _
  $region3: #{simple_cnn_forward.3} parent=0 // pred_check_branch
    %9 = sbr.rel (0) target = $region5
  $region4: #{simple_cnn_forward.3} parent=0 // pred_region
    _
  $region5: #{simple_cnn_forward.3} parent=0 // pred_fallthru
    _
  // Predicated region
  $region6: #{simple_cnn_forward.3} parent=0 // pred_check
    _
  $region7: #{simple_cnn_forward.3} parent=0 // pred_check_branch
    %11 = sbr.rel (0) target = $region9
  $region8: #{simple_cnn_forward.3} parent=0 // pred_region
    _
  $region9: #{simple_cnn_forward.3} parent=0 // pred_fallthru
    _
  // Predicated region
  $region10: #{simple_cnn_forward.3} parent=0 // pred_check
    _
  $region11: #{simple_cnn_forward.3} parent=0 // pred_check_branch
    %13 = sbr.rel (0) target = $region13
  $region12: #{simple_cnn_forward.3} parent=0 // pred_region
    _
  $region13: #{simple_cnn_forward.3} parent=0 // pred_fallthru
    _
  %v15 = vld [vmem:[%s0] sm:$0xf]
  %v16 = vld [vmem:[%s0 + $0x4] sm:$0xf]
  %v17 = vld [vmem:[%s0 + $0x8] sm:$0xf]
  %v18 = vld [vmem:[%s0 + $0xc] sm:$0xf]
  %v19 = vld [vmem:[%s0 + $0x10] sm:$0xf]
  %v20 = vld [vmem:[%s0 + $0x14] sm:$0xf]
  %v21 = vld [vmem:[%s0 + $0x18] sm:$0xf]
  %v22 = vld [vmem:[%s0 + $0x1c] sm:$0xf]
  %v23 = vld [vmem:[%s0 + $0x20] sm:$0xf]
  %v24 = vld [vmem:[%s0 + $0x24] sm:$0xf]
  %v25 = vld [vmem:[%s0 + $0x28] sm:$0xf]
  %v26 = vld [vmem:[%s0 + $0x2c] sm:$0xf]
  %v27 = vld [vmem:[%s0 + $0x30] sm:$0xf]
  %v28 = vld [vmem:[%s0 + $0x34] sm:$0xf]
  %v29 = vld [vmem:[%s0 + $0x38] sm:$0xf]
  %v30 = vld [vmem:[%s0 + $0x3c] sm:$0xf]
  %v31 = vld [vmem:[%s0 + $0x40] sm:$0xf]
  %v32 = vld [vmem:[%s0 + $0x44] sm:$0xf]
  %v33 = vld [vmem:[%s0 + $0x48] sm:$0xf]
  %v34 = vld [vmem:[%s0 + $0x4c] sm:$0xf]
  %v35 = vld [vmem:[%s0 + $0x50] sm:$0xf]
  %v36 = vld [vmem:[%s0 + $0x54] sm:$0xf]
  %v37 = vld [vmem:[%s0 + $0x58] sm:$0xf]
  %v38 = vld [vmem:[%s0 + $0x5c] sm:$0xf]
  %v39 = vld [vmem:[%s0 + $0x60] sm:$0xf]
  %v40 = vld [vmem:[%s0 + $0x64] sm:$0xf]
  %v41 = vld [vmem:[%s0 + $0x68] sm:$0xf]
  %v42 = vld [vmem:[%s0 + $0x6c] sm:$0xf]
  %v43 = vld [vmem:[%s0 + $0x70] sm:$0xf]
  %v44 = vld [vmem:[%s0 + $0x74] sm:$0xf]
  %v45 = vld [vmem:[%s0 + $0x78] sm:$0xf]
  %v46 = vld [vmem:[%s0 + $0x7c] sm:$0xf]
  %v47 = vld [vmem:[%s0 + $0x80] sm:$0xf]
  %v48 = vld [vmem:[%s0 + $0x84] sm:$0xf]
  %v49 = vld [vmem:[%s0 + $0x88] sm:$0xf]
  %v50 = vld [vmem:[%s0 + $0x8c] sm:$0xf]
  %v51 = vld [vmem:[%s0 + $0x90] sm:$0xf]
  %v52 = vld [vmem:[%s0 + $0x94] sm:$0xf]
  %v53 = vld [vmem:[%s0 + $0x98] sm:$0xf]
  %v54 = vld [vmem:[%s0 + $0x9c] sm:$0xf]
  %v55 = vld [vmem:[%s0 + $0xa0] sm:$0xf]
  %v56 = vld [vmem:[%s0 + $0xa4] sm:$0xf]
  %v57 = vld [vmem:[%s0 + $0xa8] sm:$0xf]
  %v58 = vld [vmem:[%s0 + $0xac] sm:$0xf]
  %v59 = vld [vmem:[%s0 + $0xb0] sm:$0xf]
  %v60 = vld [vmem:[%s0 + $0xb4] sm:$0xf]
  %v61 = vld [vmem:[%s0 + $0xb8] sm:$0xf]
  %v62 = vld [vmem:[%s0 + $0xbc] sm:$0xf]
  %v63 = vld [vmem:[%s0 + $0xc0] sm:$0xf]
  %v64 = vld [vmem:[%s0 + $0xc4] sm:$0xf]
  %v65 = vld [vmem:[%s0 + $0xc8] sm:$0xf]
  %v66 = vld [vmem:[%s0 + $0xcc] sm:$0xf]
  %v67 = vld [vmem:[%s0 + $0xd0] sm:$0xf]
  %v68 = vld [vmem:[%s0 + $0xd4] sm:$0xf]
  %v69 = vld [vmem:[%s0 + $0xd8] sm:$0xf]
  %v70 = vld [vmem:[%s0 + $0xdc] sm:$0xf]
  %v71 = vld [vmem:[%s0 + $0xe0] sm:$0xf]
  %v72 = vld [vmem:[%s0 + $0xe4] sm:$0xf]
  %v73 = vld [vmem:[%s0 + $0xe8] sm:$0xf]
  %v74 = vld [vmem:[%s0 + $0xec] sm:$0xf]
  %v75 = vld [vmem:[%s0 + $0xf0] sm:$0xf]
  %v76 = vld [vmem:[%s0 + $0xf4] sm:$0xf]
  %v77 = vld [vmem:[%s0 + $0xf8] sm:$0xf]
  %v78 = vld [vmem:[%s0 + $0xfc] sm:$0xf]
  %v79 = vld [vmem:[%s0 + $0x100] sm:$0xf]
  %v80 = vld [vmem:[%s0 + $0x104] sm:$0xf]
  %v81 = vld [vmem:[%s0 + $0x108] sm:$0xf]
  %v82 = vld [vmem:[%s0 + $0x10c] sm:$0xf]
  %v83 = vld [vmem:[%s0 + $0x110] sm:$0xf]
  %v84 = vld [vmem:[%s0 + $0x114] sm:$0xf]
  %v85 = vld [vmem:[%s0 + $0x118] sm:$0xf]
  %v86 = vld [vmem:[%s0 + $0x11c] sm:$0xf]
  %v87 = vld [vmem:[%s0 + $0x120] sm:$0xf]
  %v88 = vld [vmem:[%s0 + $0x124] sm:$0xf]
  %v89 = vld [vmem:[%s0 + $0x128] sm:$0xf]
  %v90 = vld [vmem:[%s0 + $0x12c] sm:$0xf]
  %v91 = vld [vmem:[%s0 + $0x130] sm:$0xf]
  %v92 = vld [vmem:[%s0 + $0x134] sm:$0xf]
  %v93 = vld [vmem:[%s0 + $0x138] sm:$0xf]
  %v94 = vld [vmem:[%s0 + $0x13c] sm:$0xf]
  %v95 = vld [vmem:[%s0 + $0x140] sm:$0xf]
  %v96 = vld [vmem:[%s0 + $0x144] sm:$0xf]
  %v97 = vld [vmem:[%s0 + $0x148] sm:$0xf]
  %v98 = vld [vmem:[%s0 + $0x14c] sm:$0xf]
  %v99 = vld [vmem:[%s0 + $0x150] sm:$0xf]
  %v100 = vld [vmem:[%s0 + $0x154] sm:$0xf]
  %v101 = vld [vmem:[%s0 + $0x158] sm:$0xf]
  %v102 = vld [vmem:[%s0 + $0x15c] sm:$0xf]
  %v103 = vld [vmem:[%s0 + $0x160] sm:$0xf]
  %v104 = vld [vmem:[%s0 + $0x164] sm:$0xf]
  %v105 = vld [vmem:[%s0 + $0x168] sm:$0xf]
  %v106 = vld [vmem:[%s0 + $0x16c] sm:$0xf]
  %v107 = vld [vmem:[%s0 + $0x170] sm:$0xf]
  %v108 = vld [vmem:[%s0 + $0x174] sm:$0xf]
  %v109 = vld [vmem:[%s0 + $0x178] sm:$0xf]
  %v110 = vld [vmem:[%s0 + $0x17c] sm:$0xf]
  %v111 = vld [vmem:[%s0 + $0x180] sm:$0xf]
  %v112 = vld [vmem:[%s0 + $0x184] sm:$0xf]
  %v113 = vld [vmem:[%s0 + $0x188] sm:$0xf]
  %v114 = vld [vmem:[%s0 + $0x18c] sm:$0xf]
  %v115 = vld [vmem:[%s0 + $0x190] sm:$0xf]
  %v116 = vld [vmem:[%s0 + $0x194] sm:$0xf]
  %v117 = vld [vmem:[%s0 + $0x198] sm:$0xf]
  %v118 = vld [vmem:[%s0 + $0x19c] sm:$0xf]
  %v119 = vld [vmem:[%s0 + $0x1a0] sm:$0xf]
  %v120 = vld [vmem:[%s0 + $0x1a4] sm:$0xf]
  %v121 = vld [vmem:[%s0 + $0x1a8] sm:$0xf]
  %v122 = vld [vmem:[%s0 + $0x1ac] sm:$0xf]
  %v123 = vld [vmem:[%s0 + $0x1b0] sm:$0xf]
  %v124 = vld [vmem:[%s0 + $0x1b4] sm:$0xf]
  %v125 = vld [vmem:[%s0 + $0x1b8] sm:$0xf]
  %v126 = vld [vmem:[%s0 + $0x1bc] sm:$0xf]
  %v127 = vld [vmem:[%s0 + $0x1c0] sm:$0xf]
  %v128 = vld [vmem:[%s0 + $0x1c4] sm:$0xf]
  %v129 = vld [vmem:[%s0 + $0x1c8] sm:$0xf]
  %v130 = vld [vmem:[%s0 + $0x1cc] sm:$0xf]
  %v131 = vld [vmem:[%s0 + $0x1d0] sm:$0xf]
  %v132 = vld [vmem:[%s0 + $0x1d4] sm:$0xf]
  %v133 = vld [vmem:[%s0 + $0x1d8] sm:$0xf]
  %v134 = vld [vmem:[%s0 + $0x1dc] sm:$0xf]
  %v135 = vld [vmem:[%s0 + $0x1e0] sm:$0xf]
  %v136 = vld [vmem:[%s0 + $0x1e4] sm:$0xf]
  %v137 = vld [vmem:[%s0 + $0x1e8] sm:$0xf]
  %v138 = vld [vmem:[%s0 + $0x1ec] sm:$0xf]
  %v139 = vld [vmem:[%s0 + $0x1f0] sm:$0xf]
  %v140 = vld [vmem:[%s0 + $0x1f4] sm:$0xf]
  %v141 = vld [vmem:[%s0 + $0x1f8] sm:$0xf]
  %v142 = vld [vmem:[%s0 + $0x1fc] sm:$0xf]
  %v143 = vld [vmem:[%s0 + $0x200] sm:$0xf]
  %v144 = vld [vmem:[%s0 + $0x204] sm:$0xf]
  %v145 = vld [vmem:[%s0 + $0x208] sm:$0xf]
  %v146 = vld [vmem:[%s0 + $0x20c] sm:$0xf]
  %v147 = vld [vmem:[%s0 + $0x210] sm:$0xf]
  %v148 = vld [vmem:[%s0 + $0x214] sm:$0xf]
  %v149 = vld [vmem:[%s0 + $0x218] sm:$0xf]
  %v150 = vld [vmem:[%s0 + $0x21c] sm:$0xf]
  %v151 = vld [vmem:[%s0 + $0x220] sm:$0xf]
  %v152 = vld [vmem:[%s0 + $0x224] sm:$0xf]
  %v153 = vld [vmem:[%s0 + $0x228] sm:$0xf]
  %v154 = vld [vmem:[%s0 + $0x22c] sm:$0xf]
  %v155 = vld [vmem:[%s0 + $0x230] sm:$0xf]
  %v156 = vld [vmem:[%s0 + $0x234] sm:$0xf]
  %v157 = vld [vmem:[%s0 + $0x238] sm:$0xf]
  %v158 = vld [vmem:[%s0 + $0x23c] sm:$0xf]
  %v159 = vld [vmem:[%s0 + $0x240] sm:$0xf]
  %v160 = vld [vmem:[%s0 + $0x244] sm:$0xf]
  %v161 = vld [vmem:[%s0 + $0x248] sm:$0xf]
  %v162 = vld [vmem:[%s0 + $0x24c] sm:$0xf]
  %v163 = vld [vmem:[%s0 + $0x250] sm:$0xf]
  %v164 = vld [vmem:[%s0 + $0x254] sm:$0xf]
  %v165 = vld [vmem:[%s0 + $0x258] sm:$0xf]
  %v166 = vld [vmem:[%s0 + $0x25c] sm:$0xf]
  %v167 = vld [vmem:[%s0 + $0x260] sm:$0xf]
  %v168 = vld [vmem:[%s0 + $0x264] sm:$0xf]
  %v169 = vld [vmem:[%s0 + $0x268] sm:$0xf]
  %v170 = vld [vmem:[%s0 + $0x26c] sm:$0xf]
  %v171 = vld [vmem:[%s0 + $0x270] sm:$0xf]
  %v172 = vld [vmem:[%s0 + $0x274] sm:$0xf]
  %v173 = vld [vmem:[%s0 + $0x278] sm:$0xf]
  %v174 = vld [vmem:[%s0 + $0x27c] sm:$0xf]
  %v175 = vld [vmem:[%s0 + $0x280] sm:$0xf]
  %v176 = vld [vmem:[%s0 + $0x284] sm:$0xf]
  %v177 = vld [vmem:[%s0 + $0x288] sm:$0xf]
  %v178 = vld [vmem:[%s0 + $0x28c] sm:$0xf]
  %v179 = vld [vmem:[%s0 + $0x290] sm:$0xf]
  %v180 = vld [vmem:[%s0 + $0x294] sm:$0xf]
  %v181 = vld [vmem:[%s0 + $0x298] sm:$0xf]
  %v182 = vld [vmem:[%s0 + $0x29c] sm:$0xf]
  %v183 = vld [vmem:[%s0 + $0x2a0] sm:$0xf]
  %v184 = vld [vmem:[%s0 + $0x2a4] sm:$0xf]
  %v185 = vld [vmem:[%s0 + $0x2a8] sm:$0xf]
  %v186 = vld [vmem:[%s0 + $0x2ac] sm:$0xf]
  %v187 = vld [vmem:[%s0 + $0x2b0] sm:$0xf]
  %v188 = vld [vmem:[%s0 + $0x2b4] sm:$0xf]
  %v189 = vld [vmem:[%s0 + $0x2b8] sm:$0xf]
  %v190 = vld [vmem:[%s0 + $0x2bc] sm:$0xf]
  %v191 = vld [vmem:[%s0 + $0x2c0] sm:$0xf]
  %v192 = vld [vmem:[%s0 + $0x2c4] sm:$0xf]
  %v193 = vld [vmem:[%s0 + $0x2c8] sm:$0xf]
  %v194 = vld [vmem:[%s0 + $0x2cc] sm:$0xf]
  %v195 = vld [vmem:[%s0 + $0x2d0] sm:$0xf]
  %v196 = vld [vmem:[%s0 + $0x2d4] sm:$0xf]
  %v197 = vld [vmem:[%s0 + $0x2d8] sm:$0xf]
  %v198 = vld [vmem:[%s0 + $0x2dc] sm:$0xf]
  %v199 = vld [vmem:[%s0 + $0x2e0] sm:$0xf]
  %v200 = vld [vmem:[%s0 + $0x2e4] sm:$0xf]
  %v201 = vld [vmem:[%s0 + $0x2e8] sm:$0xf]
  %v202 = vld [vmem:[%s0 + $0x2ec] sm:$0xf]
  %v203 = vld [vmem:[%s0 + $0x2f0] sm:$0xf]
  %v204 = vld [vmem:[%s0 + $0x2f4] sm:$0xf]
  %v205 = vld [vmem:[%s0 + $0x2f8] sm:$0xf]
  %v206 = vld [vmem:[%s0 + $0x2fc] sm:$0xf]
  %v207 = vld [vmem:[%s0 + $0x300] sm:$0xf]
  %v208 = vld [vmem:[%s0 + $0x304] sm:$0xf]
  %v209 = vld [vmem:[%s0 + $0x308] sm:$0xf]
  %v210 = vld [vmem:[%s0 + $0x30c] sm:$0xf]
  %v211 = vld [vmem:[%s0 + $0x310] sm:$0xf]
  %v212 = vld [vmem:[%s0 + $0x314] sm:$0xf]
  %v213 = vld [vmem:[%s0 + $0x318] sm:$0xf]
  %v214 = vld [vmem:[%s0 + $0x31c] sm:$0xf]
  %v215 = vld [vmem:[%s0 + $0x320] sm:$0xf]
  %v216 = vld [vmem:[%s0 + $0x324] sm:$0xf]
  %v217 = vld [vmem:[%s0 + $0x328] sm:$0xf]
  %v218 = vld [vmem:[%s0 + $0x32c] sm:$0xf]
  %v219 = vld [vmem:[%s0 + $0x330] sm:$0xf]
  %v220 = vld [vmem:[%s0 + $0x334] sm:$0xf]
  %v221 = vld [vmem:[%s0 + $0x338] sm:$0xf]
  %v222 = vld [vmem:[%s0 + $0x33c] sm:$0xf]
  %v223 = vld [vmem:[%s0 + $0x340] sm:$0xf]
  %v224 = vld [vmem:[%s0 + $0x344] sm:$0xf]
  %v225 = vld [vmem:[%s0 + $0x348] sm:$0xf]
  %v226 = vld [vmem:[%s0 + $0x34c] sm:$0xf]
  %v227 = vld [vmem:[%s0 + $0x350] sm:$0xf]
  %v228 = vld [vmem:[%s0 + $0x354] sm:$0xf]
  %v229 = vld [vmem:[%s0 + $0x358] sm:$0xf]
  %v230 = vld [vmem:[%s0 + $0x35c] sm:$0xf]
  %v231 = vld [vmem:[%s0 + $0x360] sm:$0xf]
  %v232 = vld [vmem:[%s0 + $0x364] sm:$0xf]
  %v233 = vld [vmem:[%s0 + $0x368] sm:$0xf]
  %v234 = vld [vmem:[%s0 + $0x36c] sm:$0xf]
  %v235 = vld [vmem:[%s0 + $0x370] sm:$0xf]
  %v236 = vld [vmem:[%s0 + $0x374] sm:$0xf]
  %v237 = vld [vmem:[%s0 + $0x378] sm:$0xf]
  %v238 = vld [vmem:[%s0 + $0x37c] sm:$0xf]
  %v239 = vld [vmem:[%s0 + $0x380] sm:$0xf]
  %v240 = vld [vmem:[%s0 + $0x384] sm:$0xf]
  %v241 = vld [vmem:[%s0 + $0x388] sm:$0xf]
  %v242 = vld [vmem:[%s0 + $0x38c] sm:$0xf]
  %v243 = vld [vmem:[%s0 + $0x390] sm:$0xf]
  %v244 = vld [vmem:[%s0 + $0x394] sm:$0xf]
  %v245 = vld [vmem:[%s0 + $0x398] sm:$0xf]
  %v246 = vld [vmem:[%s0 + $0x39c] sm:$0xf]
  %v247 = vld [vmem:[%s0 + $0x3a0] sm:$0xf]
  %v248 = vld [vmem:[%s0 + $0x3a4] sm:$0xf]
  %v249 = vld [vmem:[%s0 + $0x3a8] sm:$0xf]
  %v250 = vld [vmem:[%s0 + $0x3ac] sm:$0xf]
  %v251 = vld [vmem:[%s0 + $0x3b0] sm:$0xf]
  %v252 = vld [vmem:[%s0 + $0x3b4] sm:$0xf]
  %v253 = vld [vmem:[%s0 + $0x3b8] sm:$0xf]
  %v254 = vld [vmem:[%s0 + $0x3bc] sm:$0xf]
  %v255 = vld [vmem:[%s0 + $0x3c0] sm:$0xf]
  %v256 = vld [vmem:[%s0 + $0x3c4] sm:$0xf]
  %v257 = vld [vmem:[%s0 + $0x3c8] sm:$0xf]
  %v258 = vld [vmem:[%s0 + $0x3cc] sm:$0xf]
  %v259 = vld [vmem:[%s0 + $0x3d0] sm:$0xf]
  %v260 = vld [vmem:[%s0 + $0x3d4] sm:$0xf]
  %v261 = vld [vmem:[%s0 + $0x3d8] sm:$0xf]
  %v262 = vld [vmem:[%s0 + $0x3dc] sm:$0xf]
  %v263 = vld [vmem:[%s0 + $0x3e0] sm:$0xf]
  %v264 = vld [vmem:[%s0 + $0x3e4] sm:$0xf]
  %v265 = vld [vmem:[%s0 + $0x3e8] sm:$0xf]
  %v266 = vld [vmem:[%s0 + $0x3ec] sm:$0xf]
  %v267 = vld [vmem:[%s0 + $0x3f0] sm:$0xf]
  %v268 = vld [vmem:[%s0 + $0x3f4] sm:$0xf]
  %v269 = vld [vmem:[%s0 + $0x3f8] sm:$0xf]
  %v270 = vld [vmem:[%s0 + $0x3fc] sm:$0xf]
  %v271 = vld [vmem:[%s0 + $0x400] sm:$0xf]
  %v272 = vld [vmem:[%s0 + $0x404] sm:$0xf]
  %v273 = vld [vmem:[%s0 + $0x408] sm:$0xf]
  %v274 = vld [vmem:[%s0 + $0x40c] sm:$0xf]
  %v275 = vld [vmem:[%s0 + $0x410] sm:$0xf]
  %v276 = vld [vmem:[%s0 + $0x414] sm:$0xf]
  %v277 = vld [vmem:[%s0 + $0x418] sm:$0xf]
  %v278 = vld [vmem:[%s0 + $0x41c] sm:$0xf]
  %v279 = vld [vmem:[%s0 + $0x420] sm:$0xf]
  %v280 = vld [vmem:[%s0 + $0x424] sm:$0xf]
  %v281 = vld [vmem:[%s0 + $0x428] sm:$0xf]
  %v282 = vld [vmem:[%s0 + $0x42c] sm:$0xf]
  %v283 = vld [vmem:[%s0 + $0x430] sm:$0xf]
  %v284 = vld [vmem:[%s0 + $0x434] sm:$0xf]
  %v285 = vld [vmem:[%s0 + $0x438] sm:$0xf]
  %v286 = vld [vmem:[%s0 + $0x43c] sm:$0xf]
  %v287 = vld [vmem:[%s0 + $0x440] sm:$0xf]
  %v288 = vld [vmem:[%s0 + $0x444] sm:$0xf]
  %v289 = vld [vmem:[%s0 + $0x448] sm:$0xf]
  %v290 = vld [vmem:[%s0 + $0x44c] sm:$0xf]
  %v291 = vld [vmem:[%s0 + $0x450] sm:$0xf]
  %v292 = vld [vmem:[%s0 + $0x454] sm:$0xf]
  %v293 = vld [vmem:[%s0 + $0x458] sm:$0xf]
  %v294 = vld [vmem:[%s0 + $0x45c] sm:$0xf]
  %v295 = vld [vmem:[%s0 + $0x460] sm:$0xf]
  %v296 = vld [vmem:[%s0 + $0x464] sm:$0xf]
  %v297 = vld [vmem:[%s0 + $0x468] sm:$0xf]
  %v298 = vld [vmem:[%s0 + $0x46c] sm:$0xf]
  %v299 = vld [vmem:[%s0 + $0x470] sm:$0xf]
  %v300 = vld [vmem:[%s0 + $0x474] sm:$0xf]
  %v301 = vld [vmem:[%s0 + $0x478] sm:$0xf]
  %v302 = vld [vmem:[%s0 + $0x47c] sm:$0xf]
  %v303 = vld [vmem:[%s0 + $0x480] sm:$0xf]
  %v304 = vld [vmem:[%s0 + $0x484] sm:$0xf]
  %v305 = vld [vmem:[%s0 + $0x488] sm:$0xf]
  %v306 = vld [vmem:[%s0 + $0x48c] sm:$0xf]
  %v307 = vld [vmem:[%s0 + $0x490] sm:$0xf]
  %v308 = vld [vmem:[%s0 + $0x494] sm:$0xf]
  %v309 = vld [vmem:[%s0 + $0x498] sm:$0xf]
  %v310 = vld [vmem:[%s0 + $0x49c] sm:$0xf]
  %v311 = vld [vmem:[%s0 + $0x4a0] sm:$0xf]
  %v312 = vld [vmem:[%s0 + $0x4a4] sm:$0xf]
  %v313 = vld [vmem:[%s0 + $0x4a8] sm:$0xf]
  %v314 = vld [vmem:[%s0 + $0x4ac] sm:$0xf]
  %v315 = vld [vmem:[%s0 + $0x4b0] sm:$0xf]
  %v316 = vld [vmem:[%s0 + $0x4b4] sm:$0xf]
  %v317 = vld [vmem:[%s0 + $0x4b8] sm:$0xf]
  %v318 = vld [vmem:[%s0 + $0x4bc] sm:$0xf]
  %v319 = vld [vmem:[%s0 + $0x4c0] sm:$0xf]
  %v320 = vld [vmem:[%s0 + $0x4c4] sm:$0xf]
  %v321 = vld [vmem:[%s0 + $0x4c8] sm:$0xf]
  %v322 = vld [vmem:[%s0 + $0x4cc] sm:$0xf]
  %v323 = vld [vmem:[%s0 + $0x4d0] sm:$0xf]
  %v324 = vld [vmem:[%s0 + $0x4d4] sm:$0xf]
  %v325 = vld [vmem:[%s0 + $0x4d8] sm:$0xf]
  %v326 = vld [vmem:[%s0 + $0x4dc] sm:$0xf]
  %v327 = vld [vmem:[%s0 + $0x4e0] sm:$0xf]
  %v328 = vld [vmem:[%s0 + $0x4e4] sm:$0xf]
  %v329 = vld [vmem:[%s0 + $0x4e8] sm:$0xf]
  %v330 = vld [vmem:[%s0 + $0x4ec] sm:$0xf]
  %v331 = vld [vmem:[%s0 + $0x4f0] sm:$0xf]
  %v332 = vld [vmem:[%s0 + $0x4f4] sm:$0xf]
  %v333 = vld [vmem:[%s0 + $0x4f8] sm:$0xf]
  %v334 = vld [vmem:[%s0 + $0x4fc] sm:$0xf]
  %v335 = vld [vmem:[%s0 + $0x500] sm:$0xf]
  %v336 = vld [vmem:[%s0 + $0x504] sm:$0xf]
  %v337 = vld [vmem:[%s0 + $0x508] sm:$0xf]
  %v338 = vld [vmem:[%s0 + $0x50c] sm:$0xf]
  %v339 = vld [vmem:[%s0 + $0x510] sm:$0xf]
  %v340 = vld [vmem:[%s0 + $0x514] sm:$0xf]
  %v341 = vld [vmem:[%s0 + $0x518] sm:$0xf]
  %v342 = vld [vmem:[%s0 + $0x51c] sm:$0xf]
  %v343 = vld [vmem:[%s0 + $0x520] sm:$0xf]
  %v344 = vld [vmem:[%s0 + $0x524] sm:$0xf]
  %v345 = vld [vmem:[%s0 + $0x528] sm:$0xf]
  %v346 = vld [vmem:[%s0 + $0x52c] sm:$0xf]
  %v347 = vld [vmem:[%s0 + $0x530] sm:$0xf]
  %v348 = vld [vmem:[%s0 + $0x534] sm:$0xf]
  %v349 = vld [vmem:[%s0 + $0x538] sm:$0xf]
  %v350 = vld [vmem:[%s0 + $0x53c] sm:$0xf]
  %v351 = vld [vmem:[%s0 + $0x540] sm:$0xf]
  %v352 = vld [vmem:[%s0 + $0x544] sm:$0xf]
  %v353 = vld [vmem:[%s0 + $0x548] sm:$0xf]
  %v354 = vld [vmem:[%s0 + $0x54c] sm:$0xf]
  %v355 = vld [vmem:[%s0 + $0x550] sm:$0xf]
  %v356 = vld [vmem:[%s0 + $0x554] sm:$0xf]
  %v357 = vld [vmem:[%s0 + $0x558] sm:$0xf]
  %v358 = vld [vmem:[%s0 + $0x55c] sm:$0xf]
  %v359 = vld [vmem:[%s0 + $0x560] sm:$0xf]
  %v360 = vld [vmem:[%s0 + $0x564] sm:$0xf]
  %v361 = vld [vmem:[%s0 + $0x568] sm:$0xf]
  %v362 = vld [vmem:[%s0 + $0x56c] sm:$0xf]
  %v363 = vld [vmem:[%s0 + $0x570] sm:$0xf]
  %v364 = vld [vmem:[%s0 + $0x574] sm:$0xf]
  %v365 = vld [vmem:[%s0 + $0x578] sm:$0xf]
  %v366 = vld [vmem:[%s0 + $0x57c] sm:$0xf]
  %v367 = vld [vmem:[%s0 + $0x580] sm:$0xf]
  %v368 = vld [vmem:[%s0 + $0x584] sm:$0xf]
  %v369 = vld [vmem:[%s0 + $0x588] sm:$0xf]
  %v370 = vld [vmem:[%s0 + $0x58c] sm:$0xf]
  %v371 = vld [vmem:[%s0 + $0x590] sm:$0xf]
  %v372 = vld [vmem:[%s0 + $0x594] sm:$0xf]
  %v373 = vld [vmem:[%s0 + $0x598] sm:$0xf]
  %v374 = vld [vmem:[%s0 + $0x59c] sm:$0xf]
  %v375 = vld [vmem:[%s0 + $0x5a0] sm:$0xf]
  %v376 = vld [vmem:[%s0 + $0x5a4] sm:$0xf]
  %v377 = vld [vmem:[%s0 + $0x5a8] sm:$0xf]
  %v378 = vld [vmem:[%s0 + $0x5ac] sm:$0xf]
  %v379 = vld [vmem:[%s0 + $0x5b0] sm:$0xf]
  %v380 = vld [vmem:[%s0 + $0x5b4] sm:$0xf]
  %v381 = vld [vmem:[%s0 + $0x5b8] sm:$0xf]
  %v382 = vld [vmem:[%s0 + $0x5bc] sm:$0xf]
  %v383 = vld [vmem:[%s0 + $0x5c0] sm:$0xf]
  %v384 = vld [vmem:[%s0 + $0x5c4] sm:$0xf]
  %v385 = vld [vmem:[%s0 + $0x5c8] sm:$0xf]
  %v386 = vld [vmem:[%s0 + $0x5cc] sm:$0xf]
  %v387 = vld [vmem:[%s0 + $0x5d0] sm:$0xf]
  %v388 = vld [vmem:[%s0 + $0x5d4] sm:$0xf]
  %v389 = vld [vmem:[%s0 + $0x5d8] sm:$0xf]
  %v390 = vld [vmem:[%s0 + $0x5dc] sm:$0xf]
  %v391 = vld [vmem:[%s0 + $0x5e0] sm:$0xf]
  %v392 = vld [vmem:[%s0 + $0x5e4] sm:$0xf]
  %v393 = vld [vmem:[%s0 + $0x5e8] sm:$0xf]
  %v394 = vld [vmem:[%s0 + $0x5ec] sm:$0xf]
  %v395 = vld [vmem:[%s0 + $0x5f0] sm:$0xf]
  %v396 = vld [vmem:[%s0 + $0x5f4] sm:$0xf]
  %v397 = vld [vmem:[%s0 + $0x5f8] sm:$0xf]
  %v398 = vld [vmem:[%s0 + $0x5fc] sm:$0xf]
  %v399 = vld [vmem:[%s0 + $0x600] sm:$0xf]
  %v400 = vld [vmem:[%s0 + $0x604] sm:$0xf]
  %v401 = vld [vmem:[%s0 + $0x608] sm:$0xf]
  %v402 = vld [vmem:[%s0 + $0x60c] sm:$0xf]
  %v403 = vld [vmem:[%s0 + $0x610] sm:$0xf]
  %v404 = vld [vmem:[%s0 + $0x614] sm:$0xf]
  %v405 = vld [vmem:[%s0 + $0x618] sm:$0xf]
  %v406 = vld [vmem:[%s0 + $0x61c] sm:$0xf]
  %v407 = vld [vmem:[%s0 + $0x620] sm:$0xf]
  %v408 = vld [vmem:[%s0 + $0x624] sm:$0xf]
  %v409 = vld [vmem:[%s0 + $0x628] sm:$0xf]
  %v410 = vld [vmem:[%s0 + $0x62c] sm:$0xf]
  %v411 = vld [vmem:[%s0 + $0x630] sm:$0xf]
  %v412 = vld [vmem:[%s0 + $0x634] sm:$0xf]
  %v413 = vld [vmem:[%s0 + $0x638] sm:$0xf]
  %v414 = vld [vmem:[%s0 + $0x63c] sm:$0xf]
  %v415 = vld [vmem:[%s0 + $0x640] sm:$0xf]
  %v416 = vld [vmem:[%s0 + $0x644] sm:$0xf]
  %v417 = vld [vmem:[%s0 + $0x648] sm:$0xf]
  %v418 = vld [vmem:[%s0 + $0x64c] sm:$0xf]
  %v419 = vld [vmem:[%s0 + $0x650] sm:$0xf]
  %v420 = vld [vmem:[%s0 + $0x654] sm:$0xf]
  %v421 = vld [vmem:[%s0 + $0x658] sm:$0xf]
  %v422 = vld [vmem:[%s0 + $0x65c] sm:$0xf]
  %v423 = vld [vmem:[%s0 + $0x660] sm:$0xf]
  %v424 = vld [vmem:[%s0 + $0x664] sm:$0xf]
  %v425 = vld [vmem:[%s0 + $0x668] sm:$0xf]
  %v426 = vld [vmem:[%s0 + $0x66c] sm:$0xf]
  %v427 = vld [vmem:[%s0 + $0x670] sm:$0xf]
  %v428 = vld [vmem:[%s0 + $0x674] sm:$0xf]
  %v429 = vld [vmem:[%s0 + $0x678] sm:$0xf]
  %v430 = vld [vmem:[%s0 + $0x67c] sm:$0xf]
  %v431 = vld [vmem:[%s0 + $0x680] sm:$0xf]
  %v432 = vld [vmem:[%s0 + $0x684] sm:$0xf]
  %v433 = vld [vmem:[%s0 + $0x688] sm:$0xf]
  %v434 = vld [vmem:[%s0 + $0x68c] sm:$0xf]
  %v435 = vld [vmem:[%s0 + $0x690] sm:$0xf]
  %v436 = vld [vmem:[%s0 + $0x694] sm:$0xf]
  %v437 = vld [vmem:[%s0 + $0x698] sm:$0xf]
  %v438 = vld [vmem:[%s0 + $0x69c] sm:$0xf]
  %v439 = vld [vmem:[%s0 + $0x6a0] sm:$0xf]
  %v440 = vld [vmem:[%s0 + $0x6a4] sm:$0xf]
  %v441 = vld [vmem:[%s0 + $0x6a8] sm:$0xf]
  %v442 = vld [vmem:[%s0 + $0x6ac] sm:$0xf]
  %v443 = vld [vmem:[%s0 + $0x6b0] sm:$0xf]
  %v444 = vld [vmem:[%s0 + $0x6b4] sm:$0xf]
  %v445 = vld [vmem:[%s0 + $0x6b8] sm:$0xf]
  %v446 = vld [vmem:[%s0 + $0x6bc] sm:$0xf]
  %v447 = vld [vmem:[%s0 + $0x6c0] sm:$0xf]
  %v448 = vld [vmem:[%s0 + $0x6c4] sm:$0xf]
  %v449 = vld [vmem:[%s0 + $0x6c8] sm:$0xf]
  %v450 = vld [vmem:[%s0 + $0x6cc] sm:$0xf]
  %v451 = vld [vmem:[%s0 + $0x6d0] sm:$0xf]
  %v452 = vld [vmem:[%s0 + $0x6d4] sm:$0xf]
  %v453 = vld [vmem:[%s0 + $0x6d8] sm:$0xf]
  %v454 = vld [vmem:[%s0 + $0x6dc] sm:$0xf]
  %v455 = vld [vmem:[%s0 + $0x6e0] sm:$0xf]
  %v456 = vld [vmem:[%s0 + $0x6e4] sm:$0xf]
  %v457 = vld [vmem:[%s0 + $0x6e8] sm:$0xf]
  %v458 = vld [vmem:[%s0 + $0x6ec] sm:$0xf]
  %v459 = vld [vmem:[%s0 + $0x6f0] sm:$0xf]
  %v460 = vld [vmem:[%s0 + $0x6f4] sm:$0xf]
  %v461 = vld [vmem:[%s0 + $0x6f8] sm:$0xf]
  %v462 = vld [vmem:[%s0 + $0x6fc] sm:$0xf]
  %v463 = vld [vmem:[%s0 + $0x700] sm:$0xf]
  %v464 = vld [vmem:[%s0 + $0x704] sm:$0xf]
  %v465 = vld [vmem:[%s0 + $0x708] sm:$0xf]
  %v466 = vld [vmem:[%s0 + $0x70c] sm:$0xf]
  %v467 = vld [vmem:[%s0 + $0x710] sm:$0xf]
  %v468 = vld [vmem:[%s0 + $0x714] sm:$0xf]
  %v469 = vld [vmem:[%s0 + $0x718] sm:$0xf]
  %v470 = vld [vmem:[%s0 + $0x71c] sm:$0xf]
  %v471 = vld [vmem:[%s0 + $0x720] sm:$0xf]
  %v472 = vld [vmem:[%s0 + $0x724] sm:$0xf]
  %v473 = vld [vmem:[%s0 + $0x728] sm:$0xf]
  %v474 = vld [vmem:[%s0 + $0x72c] sm:$0xf]
  %v475 = vld [vmem:[%s0 + $0x730] sm:$0xf]
  %v476 = vld [vmem:[%s0 + $0x734] sm:$0xf]
  %v477 = vld [vmem:[%s0 + $0x738] sm:$0xf]
  %v478 = vld [vmem:[%s0 + $0x73c] sm:$0xf]
  %v479 = vld [vmem:[%s0 + $0x740] sm:$0xf]
  %v480 = vld [vmem:[%s0 + $0x744] sm:$0xf]
  %v481 = vld [vmem:[%s0 + $0x748] sm:$0xf]
  %v482 = vld [vmem:[%s0 + $0x74c] sm:$0xf]
  %v483 = vld [vmem:[%s0 + $0x750] sm:$0xf]
  %v484 = vld [vmem:[%s0 + $0x754] sm:$0xf]
  %v485 = vld [vmem:[%s0 + $0x758] sm:$0xf]
  %v486 = vld [vmem:[%s0 + $0x75c] sm:$0xf]
  %v487 = vld [vmem:[%s0 + $0x760] sm:$0xf]
  %v488 = vld [vmem:[%s0 + $0x764] sm:$0xf]
  %v489 = vld [vmem:[%s0 + $0x768] sm:$0xf]
  %v490 = vld [vmem:[%s0 + $0x76c] sm:$0xf]
  %v491 = vld [vmem:[%s0 + $0x770] sm:$0xf]
  %v492 = vld [vmem:[%s0 + $0x774] sm:$0xf]
  %v493 = vld [vmem:[%s0 + $0x778] sm:$0xf]
  %v494 = vld [vmem:[%s0 + $0x77c] sm:$0xf]
  %v495 = vld [vmem:[%s0 + $0x780] sm:$0xf]
  %v496 = vld [vmem:[%s0 + $0x784] sm:$0xf]
  %v497 = vld [vmem:[%s0 + $0x788] sm:$0xf]
  %v498 = vld [vmem:[%s0 + $0x78c] sm:$0xf]
  %v499 = vld [vmem:[%s0 + $0x790] sm:$0xf]
  %v500 = vld [vmem:[%s0 + $0x794] sm:$0xf]
  %v501 = vld [vmem:[%s0 + $0x798] sm:$0xf]
  %v502 = vld [vmem:[%s0 + $0x79c] sm:$0xf]
  %v503 = vld [vmem:[%s0 + $0x7a0] sm:$0xf]
  %v504 = vld [vmem:[%s0 + $0x7a4] sm:$0xf]
  %v505 = vld [vmem:[%s0 + $0x7a8] sm:$0xf]
  %v506 = vld [vmem:[%s0 + $0x7ac] sm:$0xf]
  %v507 = vld [vmem:[%s0 + $0x7b0] sm:$0xf]
  %v508 = vld [vmem:[%s0 + $0x7b4] sm:$0xf]
  %v509 = vld [vmem:[%s0 + $0x7b8] sm:$0xf]
  %v510 = vld [vmem:[%s0 + $0x7bc] sm:$0xf]
  %v511 = vld [vmem:[%s0 + $0x7c0] sm:$0xf]
  %v512 = vld [vmem:[%s0 + $0x7c4] sm:$0xf]
  %v513 = vld [vmem:[%s0 + $0x7c8] sm:$0xf]
  %v514 = vld [vmem:[%s0 + $0x7cc] sm:$0xf]
  %v515 = vld [vmem:[%s0 + $0x7d0] sm:$0xf]
  %v516 = vld [vmem:[%s0 + $0x7d4] sm:$0xf]
  %v517 = vld [vmem:[%s0 + $0x7d8] sm:$0xf]
  %v518 = vld [vmem:[%s0 + $0x7dc] sm:$0xf]
  %v519 = vld [vmem:[%s0 + $0x7e0] sm:$0xf]
  %v520 = vld [vmem:[%s0 + $0x7e4] sm:$0xf]
  %v521 = vld [vmem:[%s0 + $0x7e8] sm:$0xf]
  %v522 = vld [vmem:[%s0 + $0x7ec] sm:$0xf]
  %v523 = vld [vmem:[%s0 + $0x7f0] sm:$0xf]
  %v524 = vld [vmem:[%s0 + $0x7f4] sm:$0xf]
  %v525 = vld [vmem:[%s0 + $0x7f8] sm:$0xf]
  %v526 = vld [vmem:[%s0 + $0x7fc] sm:$0xf]
  %v527 = vld [vmem:[%s0 + $0x800] sm:$0xf]
  %v528 = vld [vmem:[%s0 + $0x804] sm:$0xf]
  %v529 = vld [vmem:[%s0 + $0x808] sm:$0xf]
  %v530 = vld [vmem:[%s0 + $0x80c] sm:$0xf]
  %v531 = vld [vmem:[%s0 + $0x810] sm:$0xf]
  %v532 = vld [vmem:[%s0 + $0x814] sm:$0xf]
  %v533 = vld [vmem:[%s0 + $0x818] sm:$0xf]
  %v534 = vld [vmem:[%s0 + $0x81c] sm:$0xf]
  %v535 = vld [vmem:[%s0 + $0x820] sm:$0xf]
  %v536 = vld [vmem:[%s0 + $0x824] sm:$0xf]
  %v537 = vld [vmem:[%s0 + $0x828] sm:$0xf]
  %v538 = vld [vmem:[%s0 + $0x82c] sm:$0xf]
  %v539 = vld [vmem:[%s0 + $0x830] sm:$0xf]
  %v540 = vld [vmem:[%s0 + $0x834] sm:$0xf]
  %v541 = vld [vmem:[%s0 + $0x838] sm:$0xf]
  %v542 = vld [vmem:[%s0 + $0x83c] sm:$0xf]
  %v543 = vld [vmem:[%s0 + $0x840] sm:$0xf]
  %v544 = vld [vmem:[%s0 + $0x844] sm:$0xf]
  %v545 = vld [vmem:[%s0 + $0x848] sm:$0xf]
  %v546 = vld [vmem:[%s0 + $0x84c] sm:$0xf]
  %v547 = vld [vmem:[%s0 + $0x850] sm:$0xf]
  %v548 = vld [vmem:[%s0 + $0x854] sm:$0xf]
  %v549 = vld [vmem:[%s0 + $0x858] sm:$0xf]
  %v550 = vld [vmem:[%s0 + $0x85c] sm:$0xf]
  %v551 = vld [vmem:[%s0 + $0x860] sm:$0xf]
  %v552 = vld [vmem:[%s0 + $0x864] sm:$0xf]
  %v553 = vld [vmem:[%s0 + $0x868] sm:$0xf]
  %v554 = vld [vmem:[%s0 + $0x86c] sm:$0xf]
  %v555 = vld [vmem:[%s0 + $0x870] sm:$0xf]
  %v556 = vld [vmem:[%s0 + $0x874] sm:$0xf]
  %v557 = vld [vmem:[%s0 + $0x878] sm:$0xf]
  %v558 = vld [vmem:[%s0 + $0x87c] sm:$0xf]
  %v559 = vld [vmem:[%s0 + $0x880] sm:$0xf]
  %v560 = vld [vmem:[%s0 + $0x884] sm:$0xf]
  %v561 = vld [vmem:[%s0 + $0x888] sm:$0xf]
  %v562 = vld [vmem:[%s0 + $0x88c] sm:$0xf]
  %v563 = vld [vmem:[%s0 + $0x890] sm:$0xf]
  %v564 = vld [vmem:[%s0 + $0x894] sm:$0xf]
  %v565 = vld [vmem:[%s0 + $0x898] sm:$0xf]
  %v566 = vld [vmem:[%s0 + $0x89c] sm:$0xf]
  %v567 = vld [vmem:[%s0 + $0x8a0] sm:$0xf]
  %v568 = vld [vmem:[%s0 + $0x8a4] sm:$0xf]
  %v569 = vld [vmem:[%s0 + $0x8a8] sm:$0xf]
  %v570 = vld [vmem:[%s0 + $0x8ac] sm:$0xf]
  %v571 = vld [vmem:[%s0 + $0x8b0] sm:$0xf]
  %v572 = vld [vmem:[%s0 + $0x8b4] sm:$0xf]
  %v573 = vld [vmem:[%s0 + $0x8b8] sm:$0xf]
  %v574 = vld [vmem:[%s0 + $0x8bc] sm:$0xf]
  %v575 = vld [vmem:[%s0 + $0x8c0] sm:$0xf]
  %v576 = vld [vmem:[%s0 + $0x8c4] sm:$0xf]
  %v577 = vld [vmem:[%s0 + $0x8c8] sm:$0xf]
  %v578 = vld [vmem:[%s0 + $0x8cc] sm:$0xf]
  %v579 = vld [vmem:[%s0 + $0x8d0] sm:$0xf]
  %v580 = vld [vmem:[%s0 + $0x8d4] sm:$0xf]
  %v581 = vld [vmem:[%s0 + $0x8d8] sm:$0xf]
  %v582 = vld [vmem:[%s0 + $0x8dc] sm:$0xf]
  %v583 = vld [vmem:[%s0 + $0x8e0] sm:$0xf]
  %v584 = vld [vmem:[%s0 + $0x8e4] sm:$0xf]
  %v585 = vld [vmem:[%s0 + $0x8e8] sm:$0xf]
  %v586 = vld [vmem:[%s0 + $0x8ec] sm:$0xf]
  %v587 = vld [vmem:[%s0 + $0x8f0] sm:$0xf]
  %v588 = vld [vmem:[%s0 + $0x8f4] sm:$0xf]
  %v589 = vld [vmem:[%s0 + $0x8f8] sm:$0xf]
  %v590 = vld [vmem:[%s0 + $0x8fc] sm:$0xf]
  %v591 = vld [vmem:[%s1] sm:$0xf]
  %v592 = vld [vmem:[%s1 + $0x4] sm:$0xf]
  %v593 = vld [vmem:[%s1 + $0x8] sm:$0xf]
  %v594 = vld [vmem:[%s1 + $0xc] sm:$0x1]
  %v1171 = vunpack.c.l.b16 %v15
  %v1172 = vunpack.c.l.b16 %v16
  %v1173 = vunpack.c.l.b16 %v17
  %v1174 = vunpack.c.l.b16 %v18
  %v1175 = vunpack.c.l.b16 %v19
  %v1176 = vunpack.c.l.b16 %v20
  %v1177 = vunpack.c.l.b16 %v21
  %v1178 = vunpack.c.l.b16 %v22
  %v1179 = vunpack.c.l.b16 %v23
  %v1180 = vunpack.c.l.b16 %v24
  %v1181 = vunpack.c.l.b16 %v25
  %v1182 = vunpack.c.l.b16 %v26
  %v1183 = vunpack.c.l.b16 %v27
  %v1184 = vunpack.c.l.b16 %v28
  %v1185 = vunpack.c.l.b16 %v29
  %v1186 = vunpack.c.l.b16 %v30
  %v1187 = vunpack.c.l.b16 %v31
  %v1188 = vunpack.c.l.b16 %v32
  %v1189 = vunpack.c.l.b16 %v33
  %v1190 = vunpack.c.l.b16 %v34
  %v1191 = vunpack.c.l.b16 %v35
  %v1192 = vunpack.c.l.b16 %v36
  %v1193 = vunpack.c.l.b16 %v37
  %v1194 = vunpack.c.l.b16 %v38
  %v1195 = vunpack.c.l.b16 %v39
  %v1196 = vunpack.c.l.b16 %v40
  %v1197 = vunpack.c.l.b16 %v41
  %v1198 = vunpack.c.l.b16 %v42
  %v1199 = vunpack.c.l.b16 %v43
  %v1200 = vunpack.c.l.b16 %v44
  %v1201 = vunpack.c.l.b16 %v45
  %v1202 = vunpack.c.l.b16 %v46
  %v1203 = vunpack.c.l.b16 %v47
  %v1204 = vunpack.c.l.b16 %v48
  %v1205 = vunpack.c.l.b16 %v49
  %v1206 = vunpack.c.l.b16 %v50
  %v1207 = vunpack.c.l.b16 %v51
  %v1208 = vunpack.c.l.b16 %v52
  %v1209 = vunpack.c.l.b16 %v53
  %v1210 = vunpack.c.l.b16 %v54
  %v1211 = vunpack.c.l.b16 %v55
  %v1212 = vunpack.c.l.b16 %v56
  %v1213 = vunpack.c.l.b16 %v57
  %v1214 = vunpack.c.l.b16 %v58
  %v1215 = vunpack.c.l.b16 %v59
  %v1216 = vunpack.c.l.b16 %v60
  %v1217 = vunpack.c.l.b16 %v61
  %v1218 = vunpack.c.l.b16 %v62
  %v1219 = vunpack.c.l.b16 %v63
  %v1220 = vunpack.c.l.b16 %v64
  %v1221 = vunpack.c.l.b16 %v65
  %v1222 = vunpack.c.l.b16 %v66
  %v1223 = vunpack.c.l.b16 %v67
  %v1224 = vunpack.c.l.b16 %v68
  %v1225 = vunpack.c.l.b16 %v69
  %v1226 = vunpack.c.l.b16 %v70
  %v1227 = vunpack.c.l.b16 %v71
  %v1228 = vunpack.c.l.b16 %v72
  %v1229 = vunpack.c.l.b16 %v73
  %v1230 = vunpack.c.l.b16 %v74
  %v1231 = vunpack.c.l.b16 %v75
  %v1232 = vunpack.c.l.b16 %v76
  %v1233 = vunpack.c.l.b16 %v77
  %v1234 = vunpack.c.l.b16 %v78
  %v1235 = vunpack.c.l.b16 %v79
  %v1236 = vunpack.c.l.b16 %v80
  %v1237 = vunpack.c.l.b16 %v81
  %v1238 = vunpack.c.l.b16 %v82
  %v1239 = vunpack.c.l.b16 %v83
  %v1240 = vunpack.c.l.b16 %v84
  %v1241 = vunpack.c.l.b16 %v85
  %v1242 = vunpack.c.l.b16 %v86
  %v1243 = vunpack.c.l.b16 %v87
  %v1244 = vunpack.c.l.b16 %v88
  %v1245 = vunpack.c.l.b16 %v89
  %v1246 = vunpack.c.l.b16 %v90
  %v1247 = vunpack.c.l.b16 %v91
  %v1248 = vunpack.c.l.b16 %v92
  %v1249 = vunpack.c.l.b16 %v93
  %v1250 = vunpack.c.l.b16 %v94
  %v1251 = vunpack.c.l.b16 %v95
  %v1252 = vunpack.c.l.b16 %v96
  %v1253 = vunpack.c.l.b16 %v97
  %v1254 = vunpack.c.l.b16 %v98
  %v1255 = vunpack.c.l.b16 %v99
  %v1256 = vunpack.c.l.b16 %v100
  %v1257 = vunpack.c.l.b16 %v101
  %v1258 = vunpack.c.l.b16 %v102
  %v1259 = vunpack.c.l.b16 %v103
  %v1260 = vunpack.c.l.b16 %v104
  %v1261 = vunpack.c.l.b16 %v105
  %v1262 = vunpack.c.l.b16 %v106
  %v1263 = vunpack.c.l.b16 %v107
  %v1264 = vunpack.c.l.b16 %v108
  %v1265 = vunpack.c.l.b16 %v109
  %v1266 = vunpack.c.l.b16 %v110
  %v1267 = vunpack.c.l.b16 %v111
  %v1268 = vunpack.c.l.b16 %v112
  %v1269 = vunpack.c.l.b16 %v113
  %v1270 = vunpack.c.l.b16 %v114
  %v1271 = vunpack.c.l.b16 %v115
  %v1272 = vunpack.c.l.b16 %v116
  %v1273 = vunpack.c.l.b16 %v117
  %v1274 = vunpack.c.l.b16 %v118
  %v1275 = vunpack.c.l.b16 %v119
  %v1276 = vunpack.c.l.b16 %v120
  %v1277 = vunpack.c.l.b16 %v121
  %v1278 = vunpack.c.l.b16 %v122
  %v1279 = vunpack.c.l.b16 %v123
  %v1280 = vunpack.c.l.b16 %v124
  %v1281 = vunpack.c.l.b16 %v125
  %v1282 = vunpack.c.l.b16 %v126
  %v1283 = vunpack.c.l.b16 %v127
  %v1284 = vunpack.c.l.b16 %v128
  %v1285 = vunpack.c.l.b16 %v129
  %v1286 = vunpack.c.l.b16 %v130
  %v1287 = vunpack.c.l.b16 %v131
  %v1288 = vunpack.c.l.b16 %v132
  %v1289 = vunpack.c.l.b16 %v133
  %v1290 = vunpack.c.l.b16 %v134
  %v1291 = vunpack.c.l.b16 %v135
  %v1292 = vunpack.c.l.b16 %v136
  %v1293 = vunpack.c.l.b16 %v137
  %v1294 = vunpack.c.l.b16 %v138
  %v1295 = vunpack.c.l.b16 %v139
  %v1296 = vunpack.c.l.b16 %v140
  %v1297 = vunpack.c.l.b16 %v141
  %v1298 = vunpack.c.l.b16 %v142
  %v1299 = vunpack.c.l.b16 %v143
  %v1300 = vunpack.c.l.b16 %v144
  %v1301 = vunpack.c.l.b16 %v145
  %v1302 = vunpack.c.l.b16 %v146
  %v1303 = vunpack.c.l.b16 %v147
  %v1304 = vunpack.c.l.b16 %v148
  %v1305 = vunpack.c.l.b16 %v149
  %v1306 = vunpack.c.l.b16 %v150
  %v1307 = vunpack.c.l.b16 %v151
  %v1308 = vunpack.c.l.b16 %v152
  %v1309 = vunpack.c.l.b16 %v153
  %v1310 = vunpack.c.l.b16 %v154
  %v1311 = vunpack.c.l.b16 %v155
  %v1312 = vunpack.c.l.b16 %v156
  %v1313 = vunpack.c.l.b16 %v157
  %v1314 = vunpack.c.l.b16 %v158
  %v1315 = vunpack.c.l.b16 %v159
  %v1316 = vunpack.c.l.b16 %v160
  %v1317 = vunpack.c.l.b16 %v161
  %v1318 = vunpack.c.l.b16 %v162
  %v1319 = vunpack.c.l.b16 %v163
  %v1320 = vunpack.c.l.b16 %v164
  %v1321 = vunpack.c.l.b16 %v165
  %v1322 = vunpack.c.l.b16 %v166
  %v1323 = vunpack.c.l.b16 %v167
  %v1324 = vunpack.c.l.b16 %v168
  %v1325 = vunpack.c.l.b16 %v169
  %v1326 = vunpack.c.l.b16 %v170
  %v1327 = vunpack.c.l.b16 %v171
  %v1328 = vunpack.c.l.b16 %v172
  %v1329 = vunpack.c.l.b16 %v173
  %v1330 = vunpack.c.l.b16 %v174
  %v1331 = vunpack.c.l.b16 %v175
  %v1332 = vunpack.c.l.b16 %v176
  %v1333 = vunpack.c.l.b16 %v177
  %v1334 = vunpack.c.l.b16 %v178
  %v1335 = vunpack.c.l.b16 %v179
  %v1336 = vunpack.c.l.b16 %v180
  %v1337 = vunpack.c.l.b16 %v181
  %v1338 = vunpack.c.l.b16 %v182
  %v1339 = vunpack.c.l.b16 %v183
  %v1340 = vunpack.c.l.b16 %v184
  %v1341 = vunpack.c.l.b16 %v185
  %v1342 = vunpack.c.l.b16 %v186
  %v1343 = vunpack.c.l.b16 %v187
  %v1344 = vunpack.c.l.b16 %v188
  %v1345 = vunpack.c.l.b16 %v189
  %v1346 = vunpack.c.l.b16 %v190
  %v1347 = vunpack.c.l.b16 %v191
  %v1348 = vunpack.c.l.b16 %v192
  %v1349 = vunpack.c.l.b16 %v193
  %v1350 = vunpack.c.l.b16 %v194
  %v1351 = vunpack.c.l.b16 %v195
  %v1352 = vunpack.c.l.b16 %v196
  %v1353 = vunpack.c.l.b16 %v197
  %v1354 = vunpack.c.l.b16 %v198
  %v1355 = vunpack.c.l.b16 %v199
  %v1356 = vunpack.c.l.b16 %v200
  %v1357 = vunpack.c.l.b16 %v201
  %v1358 = vunpack.c.l.b16 %v202
  %v1359 = vunpack.c.l.b16 %v203
  %v1360 = vunpack.c.l.b16 %v204
  %v1361 = vunpack.c.l.b16 %v205
  %v1362 = vunpack.c.l.b16 %v206
  %v1363 = vunpack.c.l.b16 %v207
  %v1364 = vunpack.c.l.b16 %v208
  %v1365 = vunpack.c.l.b16 %v209
  %v1366 = vunpack.c.l.b16 %v210
  %v1367 = vunpack.c.l.b16 %v211
  %v1368 = vunpack.c.l.b16 %v212
  %v1369 = vunpack.c.l.b16 %v213
  %v1370 = vunpack.c.l.b16 %v214
  %v1371 = vunpack.c.l.b16 %v215
  %v1372 = vunpack.c.l.b16 %v216
  %v1373 = vunpack.c.l.b16 %v217
  %v1374 = vunpack.c.l.b16 %v218
  %v1375 = vunpack.c.l.b16 %v219
  %v1376 = vunpack.c.l.b16 %v220
  %v1377 = vunpack.c.l.b16 %v221
  %v1378 = vunpack.c.l.b16 %v222
  %v1379 = vunpack.c.l.b16 %v223
  %v1380 = vunpack.c.l.b16 %v224
  %v1381 = vunpack.c.l.b16 %v225
  %v1382 = vunpack.c.l.b16 %v226
  %v1383 = vunpack.c.l.b16 %v227
  %v1384 = vunpack.c.l.b16 %v228
  %v1385 = vunpack.c.l.b16 %v229
  %v1386 = vunpack.c.l.b16 %v230
  %v1387 = vunpack.c.l.b16 %v231
  %v1388 = vunpack.c.l.b16 %v232
  %v1389 = vunpack.c.l.b16 %v233
  %v1390 = vunpack.c.l.b16 %v234
  %v1391 = vunpack.c.l.b16 %v235
  %v1392 = vunpack.c.l.b16 %v236
  %v1393 = vunpack.c.l.b16 %v237
  %v1394 = vunpack.c.l.b16 %v238
  %v1395 = vunpack.c.l.b16 %v239
  %v1396 = vunpack.c.l.b16 %v240
  %v1397 = vunpack.c.l.b16 %v241
  %v1398 = vunpack.c.l.b16 %v242
  %v1399 = vunpack.c.l.b16 %v243
  %v1400 = vunpack.c.l.b16 %v244
  %v1401 = vunpack.c.l.b16 %v245
  %v1402 = vunpack.c.l.b16 %v246
  %v1403 = vunpack.c.l.b16 %v247
  %v1404 = vunpack.c.l.b16 %v248
  %v1405 = vunpack.c.l.b16 %v249
  %v1406 = vunpack.c.l.b16 %v250
  %v1407 = vunpack.c.l.b16 %v251
  %v1408 = vunpack.c.l.b16 %v252
  %v1409 = vunpack.c.l.b16 %v253
  %v1410 = vunpack.c.l.b16 %v254
  %v1411 = vunpack.c.l.b16 %v255
  %v1412 = vunpack.c.l.b16 %v256
  %v1413 = vunpack.c.l.b16 %v257
  %v1414 = vunpack.c.l.b16 %v258
  %v1415 = vunpack.c.l.b16 %v259
  %v1416 = vunpack.c.l.b16 %v260
  %v1417 = vunpack.c.l.b16 %v261
  %v1418 = vunpack.c.l.b16 %v262
  %v1419 = vunpack.c.l.b16 %v263
  %v1420 = vunpack.c.l.b16 %v264
  %v1421 = vunpack.c.l.b16 %v265
  %v1422 = vunpack.c.l.b16 %v266
  %v1423 = vunpack.c.l.b16 %v267
  %v1424 = vunpack.c.l.b16 %v268
  %v1425 = vunpack.c.l.b16 %v269
  %v1426 = vunpack.c.l.b16 %v270
  %v1427 = vunpack.c.l.b16 %v271
  %v1428 = vunpack.c.l.b16 %v272
  %v1429 = vunpack.c.l.b16 %v273
  %v1430 = vunpack.c.l.b16 %v274
  %v1431 = vunpack.c.l.b16 %v275
  %v1432 = vunpack.c.l.b16 %v276
  %v1433 = vunpack.c.l.b16 %v277
  %v1434 = vunpack.c.l.b16 %v278
  %v1435 = vunpack.c.l.b16 %v279
  %v1436 = vunpack.c.l.b16 %v280
  %v1437 = vunpack.c.l.b16 %v281
  %v1438 = vunpack.c.l.b16 %v282
  %v1439 = vunpack.c.l.b16 %v283
  %v1440 = vunpack.c.l.b16 %v284
  %v1441 = vunpack.c.l.b16 %v285
  %v1442 = vunpack.c.l.b16 %v286
  %v1443 = vunpack.c.l.b16 %v287
  %v1444 = vunpack.c.l.b16 %v288
  %v1445 = vunpack.c.l.b16 %v289
  %v1446 = vunpack.c.l.b16 %v290
  %v1447 = vunpack.c.l.b16 %v291
  %v1448 = vunpack.c.l.b16 %v292
  %v1449 = vunpack.c.l.b16 %v293
  %v1450 = vunpack.c.l.b16 %v294
  %v1451 = vunpack.c.l.b16 %v295
  %v1452 = vunpack.c.l.b16 %v296
  %v1453 = vunpack.c.l.b16 %v297
  %v1454 = vunpack.c.l.b16 %v298
  %v1455 = vunpack.c.l.b16 %v299
  %v1456 = vunpack.c.l.b16 %v300
  %v1457 = vunpack.c.l.b16 %v301
  %v1458 = vunpack.c.l.b16 %v302
  %v1459 = vunpack.c.l.b16 %v303
  %v1460 = vunpack.c.l.b16 %v304
  %v1461 = vunpack.c.l.b16 %v305
  %v1462 = vunpack.c.l.b16 %v306
  %v1463 = vunpack.c.l.b16 %v307
  %v1464 = vunpack.c.l.b16 %v308
  %v1465 = vunpack.c.l.b16 %v309
  %v1466 = vunpack.c.l.b16 %v310
  %v1467 = vunpack.c.l.b16 %v311
  %v1468 = vunpack.c.l.b16 %v312
  %v1469 = vunpack.c.l.b16 %v313
  %v1470 = vunpack.c.l.b16 %v314
  %v1471 = vunpack.c.l.b16 %v315
  %v1472 = vunpack.c.l.b16 %v316
  %v1473 = vunpack.c.l.b16 %v317
  %v1474 = vunpack.c.l.b16 %v318
  %v1475 = vunpack.c.l.b16 %v319
  %v1476 = vunpack.c.l.b16 %v320
  %v1477 = vunpack.c.l.b16 %v321
  %v1478 = vunpack.c.l.b16 %v322
  %v1479 = vunpack.c.l.b16 %v323
  %v1480 = vunpack.c.l.b16 %v324
  %v1481 = vunpack.c.l.b16 %v325
  %v1482 = vunpack.c.l.b16 %v326
  %v1483 = vunpack.c.l.b16 %v327
  %v1484 = vunpack.c.l.b16 %v328
  %v1485 = vunpack.c.l.b16 %v329
  %v1486 = vunpack.c.l.b16 %v330
  %v1487 = vunpack.c.l.b16 %v331
  %v1488 = vunpack.c.l.b16 %v332
  %v1489 = vunpack.c.l.b16 %v333
  %v1490 = vunpack.c.l.b16 %v334
  %v1491 = vunpack.c.l.b16 %v335
  %v1492 = vunpack.c.l.b16 %v336
  %v1493 = vunpack.c.l.b16 %v337
  %v1494 = vunpack.c.l.b16 %v338
  %v1495 = vunpack.c.l.b16 %v339
  %v1496 = vunpack.c.l.b16 %v340
  %v1497 = vunpack.c.l.b16 %v341
  %v1498 = vunpack.c.l.b16 %v342
  %v1499 = vunpack.c.l.b16 %v343
  %v1500 = vunpack.c.l.b16 %v344
  %v1501 = vunpack.c.l.b16 %v345
  %v1502 = vunpack.c.l.b16 %v346
  %v1503 = vunpack.c.l.b16 %v347
  %v1504 = vunpack.c.l.b16 %v348
  %v1505 = vunpack.c.l.b16 %v349
  %v1506 = vunpack.c.l.b16 %v350
  %v1507 = vunpack.c.l.b16 %v351
  %v1508 = vunpack.c.l.b16 %v352
  %v1509 = vunpack.c.l.b16 %v353
  %v1510 = vunpack.c.l.b16 %v354
  %v1511 = vunpack.c.l.b16 %v355
  %v1512 = vunpack.c.l.b16 %v356
  %v1513 = vunpack.c.l.b16 %v357
  %v1514 = vunpack.c.l.b16 %v358
  %v1515 = vunpack.c.l.b16 %v359
  %v1516 = vunpack.c.l.b16 %v360
  %v1517 = vunpack.c.l.b16 %v361
  %v1518 = vunpack.c.l.b16 %v362
  %v1519 = vunpack.c.l.b16 %v363
  %v1520 = vunpack.c.l.b16 %v364
  %v1521 = vunpack.c.l.b16 %v365
  %v1522 = vunpack.c.l.b16 %v366
  %v1523 = vunpack.c.l.b16 %v367
  %v1524 = vunpack.c.l.b16 %v368
  %v1525 = vunpack.c.l.b16 %v369
  %v1526 = vunpack.c.l.b16 %v370
  %v1527 = vunpack.c.l.b16 %v371
  %v1528 = vunpack.c.l.b16 %v372
  %v1529 = vunpack.c.l.b16 %v373
  %v1530 = vunpack.c.l.b16 %v374
  %v1531 = vunpack.c.l.b16 %v375
  %v1532 = vunpack.c.l.b16 %v376
  %v1533 = vunpack.c.l.b16 %v377
  %v1534 = vunpack.c.l.b16 %v378
  %v1535 = vunpack.c.l.b16 %v379
  %v1536 = vunpack.c.l.b16 %v380
  %v1537 = vunpack.c.l.b16 %v381
  %v1538 = vunpack.c.l.b16 %v382
  %v1539 = vunpack.c.l.b16 %v383
  %v1540 = vunpack.c.l.b16 %v384
  %v1541 = vunpack.c.l.b16 %v385
  %v1542 = vunpack.c.l.b16 %v386
  %v1543 = vunpack.c.l.b16 %v387
  %v1544 = vunpack.c.l.b16 %v388
  %v1545 = vunpack.c.l.b16 %v389
  %v1546 = vunpack.c.l.b16 %v390
  %v1547 = vunpack.c.l.b16 %v391
  %v1548 = vunpack.c.l.b16 %v392
  %v1549 = vunpack.c.l.b16 %v393
  %v1550 = vunpack.c.l.b16 %v394
  %v1551 = vunpack.c.l.b16 %v395
  %v1552 = vunpack.c.l.b16 %v396
  %v1553 = vunpack.c.l.b16 %v397
  %v1554 = vunpack.c.l.b16 %v398
  %v1555 = vunpack.c.l.b16 %v399
  %v1556 = vunpack.c.l.b16 %v400
  %v1557 = vunpack.c.l.b16 %v401
  %v1558 = vunpack.c.l.b16 %v402
  %v1559 = vunpack.c.l.b16 %v403
  %v1560 = vunpack.c.l.b16 %v404
  %v1561 = vunpack.c.l.b16 %v405
  %v1562 = vunpack.c.l.b16 %v406
  %v1563 = vunpack.c.l.b16 %v407
  %v1564 = vunpack.c.l.b16 %v408
  %v1565 = vunpack.c.l.b16 %v409
  %v1566 = vunpack.c.l.b16 %v410
  %v1567 = vunpack.c.l.b16 %v411
  %v1568 = vunpack.c.l.b16 %v412
  %v1569 = vunpack.c.l.b16 %v413
  %v1570 = vunpack.c.l.b16 %v414
  %v1571 = vunpack.c.l.b16 %v415
  %v1572 = vunpack.c.l.b16 %v416
  %v1573 = vunpack.c.l.b16 %v417
  %v1574 = vunpack.c.l.b16 %v418
  %v1575 = vunpack.c.l.b16 %v419
  %v1576 = vunpack.c.l.b16 %v420
  %v1577 = vunpack.c.l.b16 %v421
  %v1578 = vunpack.c.l.b16 %v422
  %v1579 = vunpack.c.l.b16 %v423
  %v1580 = vunpack.c.l.b16 %v424
  %v1581 = vunpack.c.l.b16 %v425
  %v1582 = vunpack.c.l.b16 %v426
  %v1583 = vunpack.c.l.b16 %v427
  %v1584 = vunpack.c.l.b16 %v428
  %v1585 = vunpack.c.l.b16 %v429
  %v1586 = vunpack.c.l.b16 %v430
  %v1587 = vunpack.c.l.b16 %v431
  %v1588 = vunpack.c.l.b16 %v432
  %v1589 = vunpack.c.l.b16 %v433
  %v1590 = vunpack.c.l.b16 %v434
  %v1591 = vunpack.c.l.b16 %v435
  %v1592 = vunpack.c.l.b16 %v436
  %v1593 = vunpack.c.l.b16 %v437
  %v1594 = vunpack.c.l.b16 %v438
  %v1595 = vunpack.c.l.b16 %v439
  %v1596 = vunpack.c.l.b16 %v440
  %v1597 = vunpack.c.l.b16 %v441
  %v1598 = vunpack.c.l.b16 %v442
  %v1599 = vunpack.c.l.b16 %v443
  %v1600 = vunpack.c.l.b16 %v444
  %v1601 = vunpack.c.l.b16 %v445
  %v1602 = vunpack.c.l.b16 %v446
  %v1603 = vunpack.c.l.b16 %v447
  %v1604 = vunpack.c.l.b16 %v448
  %v1605 = vunpack.c.l.b16 %v449
  %v1606 = vunpack.c.l.b16 %v450
  %v1607 = vunpack.c.l.b16 %v451
  %v1608 = vunpack.c.l.b16 %v452
  %v1609 = vunpack.c.l.b16 %v453
  %v1610 = vunpack.c.l.b16 %v454
  %v1611 = vunpack.c.l.b16 %v455
  %v1612 = vunpack.c.l.b16 %v456
  %v1613 = vunpack.c.l.b16 %v457
  %v1614 = vunpack.c.l.b16 %v458
  %v1615 = vunpack.c.l.b16 %v459
  %v1616 = vunpack.c.l.b16 %v460
  %v1617 = vunpack.c.l.b16 %v461
  %v1618 = vunpack.c.l.b16 %v462
  %v1619 = vunpack.c.l.b16 %v463
  %v1620 = vunpack.c.l.b16 %v464
  %v1621 = vunpack.c.l.b16 %v465
  %v1622 = vunpack.c.l.b16 %v466
  %v1623 = vunpack.c.l.b16 %v467
  %v1624 = vunpack.c.l.b16 %v468
  %v1625 = vunpack.c.l.b16 %v469
  %v1626 = vunpack.c.l.b16 %v470
  %v1627 = vunpack.c.l.b16 %v471
  %v1628 = vunpack.c.l.b16 %v472
  %v1629 = vunpack.c.l.b16 %v473
  %v1630 = vunpack.c.l.b16 %v474
  %v1631 = vunpack.c.l.b16 %v475
  %v1632 = vunpack.c.l.b16 %v476
  %v1633 = vunpack.c.l.b16 %v477
  %v1634 = vunpack.c.l.b16 %v478
  %v1635 = vunpack.c.l.b16 %v479
  %v1636 = vunpack.c.l.b16 %v480
  %v1637 = vunpack.c.l.b16 %v481
  %v1638 = vunpack.c.l.b16 %v482
  %v1639 = vunpack.c.l.b16 %v483
  %v1640 = vunpack.c.l.b16 %v484
  %v1641 = vunpack.c.l.b16 %v485
  %v1642 = vunpack.c.l.b16 %v486
  %v1643 = vunpack.c.l.b16 %v487
  %v1644 = vunpack.c.l.b16 %v488
  %v1645 = vunpack.c.l.b16 %v489
  %v1646 = vunpack.c.l.b16 %v490
  %v1647 = vunpack.c.l.b16 %v491
  %v1648 = vunpack.c.l.b16 %v492
  %v1649 = vunpack.c.l.b16 %v493
  %v1650 = vunpack.c.l.b16 %v494
  %v1651 = vunpack.c.l.b16 %v495
  %v1652 = vunpack.c.l.b16 %v496
  %v1653 = vunpack.c.l.b16 %v497
  %v1654 = vunpack.c.l.b16 %v498
  %v1655 = vunpack.c.l.b16 %v499
  %v1656 = vunpack.c.l.b16 %v500
  %v1657 = vunpack.c.l.b16 %v501
  %v1658 = vunpack.c.l.b16 %v502
  %v1659 = vunpack.c.l.b16 %v503
  %v1660 = vunpack.c.l.b16 %v504
  %v1661 = vunpack.c.l.b16 %v505
  %v1662 = vunpack.c.l.b16 %v506
  %v1663 = vunpack.c.l.b16 %v507
  %v1664 = vunpack.c.l.b16 %v508
  %v1665 = vunpack.c.l.b16 %v509
  %v1666 = vunpack.c.l.b16 %v510
  %v1667 = vunpack.c.l.b16 %v511
  %v1668 = vunpack.c.l.b16 %v512
  %v1669 = vunpack.c.l.b16 %v513
  %v1670 = vunpack.c.l.b16 %v514
  %v1671 = vunpack.c.l.b16 %v515
  %v1672 = vunpack.c.l.b16 %v516
  %v1673 = vunpack.c.l.b16 %v517
  %v1674 = vunpack.c.l.b16 %v518
  %v1675 = vunpack.c.l.b16 %v519
  %v1676 = vunpack.c.l.b16 %v520
  %v1677 = vunpack.c.l.b16 %v521
  %v1678 = vunpack.c.l.b16 %v522
  %v1679 = vunpack.c.l.b16 %v523
  %v1680 = vunpack.c.l.b16 %v524
  %v1681 = vunpack.c.l.b16 %v525
  %v1682 = vunpack.c.l.b16 %v526
  %v1683 = vunpack.c.l.b16 %v527
  %v1684 = vunpack.c.l.b16 %v528
  %v1685 = vunpack.c.l.b16 %v529
  %v1686 = vunpack.c.l.b16 %v530
  %v1687 = vunpack.c.l.b16 %v531
  %v1688 = vunpack.c.l.b16 %v532
  %v1689 = vunpack.c.l.b16 %v533
  %v1690 = vunpack.c.l.b16 %v534
  %v1691 = vunpack.c.l.b16 %v535
  %v1692 = vunpack.c.l.b16 %v536
  %v1693 = vunpack.c.l.b16 %v537
  %v1694 = vunpack.c.l.b16 %v538
  %v1695 = vunpack.c.l.b16 %v539
  %v1696 = vunpack.c.l.b16 %v540
  %v1697 = vunpack.c.l.b16 %v541
  %v1698 = vunpack.c.l.b16 %v542
  %v1699 = vunpack.c.l.b16 %v543
  %v1700 = vunpack.c.l.b16 %v544
  %v1701 = vunpack.c.l.b16 %v545
  %v1702 = vunpack.c.l.b16 %v546
  %v1703 = vunpack.c.l.b16 %v547
  %v1704 = vunpack.c.l.b16 %v548
  %v1705 = vunpack.c.l.b16 %v549
  %v1706 = vunpack.c.l.b16 %v550
  %v1707 = vunpack.c.l.b16 %v551
  %v1708 = vunpack.c.l.b16 %v552
  %v1709 = vunpack.c.l.b16 %v553
  %v1710 = vunpack.c.l.b16 %v554
  %v1711 = vunpack.c.l.b16 %v555
  %v1712 = vunpack.c.l.b16 %v556
  %v1713 = vunpack.c.l.b16 %v557
  %v1714 = vunpack.c.l.b16 %v558
  %v1715 = vunpack.c.l.b16 %v559
  %v1716 = vunpack.c.l.b16 %v560
  %v1717 = vunpack.c.l.b16 %v561
  %v1718 = vunpack.c.l.b16 %v562
  %v1719 = vunpack.c.l.b16 %v563
  %v1720 = vunpack.c.l.b16 %v564
  %v1721 = vunpack.c.l.b16 %v565
  %v1722 = vunpack.c.l.b16 %v566
  %v1723 = vunpack.c.l.b16 %v567
  %v1724 = vunpack.c.l.b16 %v568
  %v1725 = vunpack.c.l.b16 %v569
  %v1726 = vunpack.c.l.b16 %v570
  %v1727 = vunpack.c.l.b16 %v571
  %v1728 = vunpack.c.l.b16 %v572
  %v1729 = vunpack.c.l.b16 %v573
  %v1730 = vunpack.c.l.b16 %v574
  %v1731 = vunpack.c.l.b16 %v575
  %v1732 = vunpack.c.l.b16 %v576
  %v1733 = vunpack.c.l.b16 %v577
  %v1734 = vunpack.c.l.b16 %v578
  %v1735 = vunpack.c.l.b16 %v579
  %v1736 = vunpack.c.l.b16 %v580
  %v1737 = vunpack.c.l.b16 %v581
  %v1738 = vunpack.c.l.b16 %v582
  %v1739 = vunpack.c.l.b16 %v583
  %v1740 = vunpack.c.l.b16 %v584
  %v1741 = vunpack.c.l.b16 %v585
  %v1742 = vunpack.c.l.b16 %v586
  %v1743 = vunpack.c.l.b16 %v587
  %v1744 = vunpack.c.l.b16 %v588
  %v1745 = vunpack.c.l.b16 %v589
  %v1746 = vunpack.c.l.b16 %v590
  %v1747 = vpack.c.b16 %v1172, %v1171
  %v1748 = vpack.c.b16 %v1174, %v1173
  %v1749 = vpack.c.b16 %v1176, %v1175
  %v1750 = vpack.c.b16 %v1178, %v1177
  %v1751 = vpack.c.b16 %v1180, %v1179
  %v1752 = vpack.c.b16 %v1182, %v1181
  %v1753 = vpack.c.b16 %v1184, %v1183
  %v1754 = vpack.c.b16 %v1186, %v1185
  %v1755 = vpack.c.b16 %v1188, %v1187
  %v1756 = vpack.c.b16 %v1190, %v1189
  %v1757 = vpack.c.b16 %v1192, %v1191
  %v1758 = vpack.c.b16 %v1194, %v1193
  %v1759 = vpack.c.b16 %v1196, %v1195
  %v1760 = vpack.c.b16 %v1198, %v1197
  %v1761 = vpack.c.b16 %v1200, %v1199
  %v1762 = vpack.c.b16 %v1202, %v1201
  %v1763 = vpack.c.b16 %v1204, %v1203
  %v1764 = vpack.c.b16 %v1206, %v1205
  %v1765 = vpack.c.b16 %v1208, %v1207
  %v1766 = vpack.c.b16 %v1210, %v1209
  %v1767 = vpack.c.b16 %v1212, %v1211
  %v1768 = vpack.c.b16 %v1214, %v1213
  %v1769 = vpack.c.b16 %v1216, %v1215
  %v1770 = vpack.c.b16 %v1218, %v1217
  %v1771 = vpack.c.b16 %v1220, %v1219
  %v1772 = vpack.c.b16 %v1222, %v1221
  %v1773 = vpack.c.b16 %v1224, %v1223
  %v1774 = vpack.c.b16 %v1226, %v1225
  %v1775 = vpack.c.b16 %v1228, %v1227
  %v1776 = vpack.c.b16 %v1230, %v1229
  %v1777 = vpack.c.b16 %v1232, %v1231
  %v1778 = vpack.c.b16 %v1234, %v1233
  %v1779 = vpack.c.b16 %v1236, %v1235
  %v1780 = vpack.c.b16 %v1238, %v1237
  %v1781 = vpack.c.b16 %v1240, %v1239
  %v1782 = vpack.c.b16 %v1242, %v1241
  %v1783 = vpack.c.b16 %v1244, %v1243
  %v1784 = vpack.c.b16 %v1246, %v1245
  %v1785 = vpack.c.b16 %v1248, %v1247
  %v1786 = vpack.c.b16 %v1250, %v1249
  %v1787 = vpack.c.b16 %v1252, %v1251
  %v1788 = vpack.c.b16 %v1254, %v1253
  %v1789 = vpack.c.b16 %v1256, %v1255
  %v1790 = vpack.c.b16 %v1258, %v1257
  %v1791 = vpack.c.b16 %v1260, %v1259
  %v1792 = vpack.c.b16 %v1262, %v1261
  %v1793 = vpack.c.b16 %v1264, %v1263
  %v1794 = vpack.c.b16 %v1266, %v1265
  %v1795 = vpack.c.b16 %v1268, %v1267
  %v1796 = vpack.c.b16 %v1270, %v1269
  %v1797 = vpack.c.b16 %v1272, %v1271
  %v1798 = vpack.c.b16 %v1274, %v1273
  %v1799 = vpack.c.b16 %v1276, %v1275
  %v1800 = vpack.c.b16 %v1278, %v1277
  %v1801 = vpack.c.b16 %v1280, %v1279
  %v1802 = vpack.c.b16 %v1282, %v1281
  %v1803 = vpack.c.b16 %v1284, %v1283
  %v1804 = vpack.c.b16 %v1286, %v1285
  %v1805 = vpack.c.b16 %v1288, %v1287
  %v1806 = vpack.c.b16 %v1290, %v1289
  %v1807 = vpack.c.b16 %v1292, %v1291
  %v1808 = vpack.c.b16 %v1294, %v1293
  %v1809 = vpack.c.b16 %v1296, %v1295
  %v1810 = vpack.c.b16 %v1298, %v1297
  %v1811 = vpack.c.b16 %v1300, %v1299
  %v1812 = vpack.c.b16 %v1302, %v1301
  %v1813 = vpack.c.b16 %v1304, %v1303
  %v1814 = vpack.c.b16 %v1306, %v1305
  %v1815 = vpack.c.b16 %v1308, %v1307
  %v1816 = vpack.c.b16 %v1310, %v1309
  %v1817 = vpack.c.b16 %v1312, %v1311
  %v1818 = vpack.c.b16 %v1314, %v1313
  %v1819 = vpack.c.b16 %v1316, %v1315
  %v1820 = vpack.c.b16 %v1318, %v1317
  %v1821 = vpack.c.b16 %v1320, %v1319
  %v1822 = vpack.c.b16 %v1322, %v1321
  %v1823 = vpack.c.b16 %v1324, %v1323
  %v1824 = vpack.c.b16 %v1326, %v1325
  %v1825 = vpack.c.b16 %v1328, %v1327
  %v1826 = vpack.c.b16 %v1330, %v1329
  %v1827 = vpack.c.b16 %v1332, %v1331
  %v1828 = vpack.c.b16 %v1334, %v1333
  %v1829 = vpack.c.b16 %v1336, %v1335
  %v1830 = vpack.c.b16 %v1338, %v1337
  %v1831 = vpack.c.b16 %v1340, %v1339
  %v1832 = vpack.c.b16 %v1342, %v1341
  %v1833 = vpack.c.b16 %v1344, %v1343
  %v1834 = vpack.c.b16 %v1346, %v1345
  %v1835 = vpack.c.b16 %v1348, %v1347
  %v1836 = vpack.c.b16 %v1350, %v1349
  %v1837 = vpack.c.b16 %v1352, %v1351
  %v1838 = vpack.c.b16 %v1354, %v1353
  %v1839 = vpack.c.b16 %v1356, %v1355
  %v1840 = vpack.c.b16 %v1358, %v1357
  %v1841 = vpack.c.b16 %v1360, %v1359
  %v1842 = vpack.c.b16 %v1362, %v1361
  %v1843 = vpack.c.b16 %v1364, %v1363
  %v1844 = vpack.c.b16 %v1366, %v1365
  %v1845 = vpack.c.b16 %v1368, %v1367
  %v1846 = vpack.c.b16 %v1370, %v1369
  %v1847 = vpack.c.b16 %v1372, %v1371
  %v1848 = vpack.c.b16 %v1374, %v1373
  %v1849 = vpack.c.b16 %v1376, %v1375
  %v1850 = vpack.c.b16 %v1378, %v1377
  %v1851 = vpack.c.b16 %v1380, %v1379
  %v1852 = vpack.c.b16 %v1382, %v1381
  %v1853 = vpack.c.b16 %v1384, %v1383
  %v1854 = vpack.c.b16 %v1386, %v1385
  %v1855 = vpack.c.b16 %v1388, %v1387
  %v1856 = vpack.c.b16 %v1390, %v1389
  %v1857 = vpack.c.b16 %v1392, %v1391
  %v1858 = vpack.c.b16 %v1394, %v1393
  %v1859 = vpack.c.b16 %v1396, %v1395
  %v1860 = vpack.c.b16 %v1398, %v1397
  %v1861 = vpack.c.b16 %v1400, %v1399
  %v1862 = vpack.c.b16 %v1402, %v1401
  %v1863 = vpack.c.b16 %v1404, %v1403
  %v1864 = vpack.c.b16 %v1406, %v1405
  %v1865 = vpack.c.b16 %v1408, %v1407
  %v1866 = vpack.c.b16 %v1410, %v1409
  %v1867 = vpack.c.b16 %v1412, %v1411
  %v1868 = vpack.c.b16 %v1414, %v1413
  %v1869 = vpack.c.b16 %v1416, %v1415
  %v1870 = vpack.c.b16 %v1418, %v1417
  %v1871 = vpack.c.b16 %v1420, %v1419
  %v1872 = vpack.c.b16 %v1422, %v1421
  %v1873 = vpack.c.b16 %v1424, %v1423
  %v1874 = vpack.c.b16 %v1426, %v1425
  %v1875 = vpack.c.b16 %v1428, %v1427
  %v1876 = vpack.c.b16 %v1430, %v1429
  %v1877 = vpack.c.b16 %v1432, %v1431
  %v1878 = vpack.c.b16 %v1434, %v1433
  %v1879 = vpack.c.b16 %v1436, %v1435
  %v1880 = vpack.c.b16 %v1438, %v1437
  %v1881 = vpack.c.b16 %v1440, %v1439
  %v1882 = vpack.c.b16 %v1442, %v1441
  %v1883 = vpack.c.b16 %v1444, %v1443
  %v1884 = vpack.c.b16 %v1446, %v1445
  %v1885 = vpack.c.b16 %v1448, %v1447
  %v1886 = vpack.c.b16 %v1450, %v1449
  %v1887 = vpack.c.b16 %v1452, %v1451
  %v1888 = vpack.c.b16 %v1454, %v1453
  %v1889 = vpack.c.b16 %v1456, %v1455
  %v1890 = vpack.c.b16 %v1458, %v1457
  %v1891 = vpack.c.b16 %v1460, %v1459
  %v1892 = vpack.c.b16 %v1462, %v1461
  %v1893 = vpack.c.b16 %v1464, %v1463
  %v1894 = vpack.c.b16 %v1466, %v1465
  %v1895 = vpack.c.b16 %v1468, %v1467
  %v1896 = vpack.c.b16 %v1470, %v1469
  %v1897 = vpack.c.b16 %v1472, %v1471
  %v1898 = vpack.c.b16 %v1474, %v1473
  %v1899 = vpack.c.b16 %v1476, %v1475
  %v1900 = vpack.c.b16 %v1478, %v1477
  %v1901 = vpack.c.b16 %v1480, %v1479
  %v1902 = vpack.c.b16 %v1482, %v1481
  %v1903 = vpack.c.b16 %v1484, %v1483
  %v1904 = vpack.c.b16 %v1486, %v1485
  %v1905 = vpack.c.b16 %v1488, %v1487
  %v1906 = vpack.c.b16 %v1490, %v1489
  %v1907 = vpack.c.b16 %v1492, %v1491
  %v1908 = vpack.c.b16 %v1494, %v1493
  %v1909 = vpack.c.b16 %v1496, %v1495
  %v1910 = vpack.c.b16 %v1498, %v1497
  %v1911 = vpack.c.b16 %v1500, %v1499
  %v1912 = vpack.c.b16 %v1502, %v1501
  %v1913 = vpack.c.b16 %v1504, %v1503
  %v1914 = vpack.c.b16 %v1506, %v1505
  %v1915 = vpack.c.b16 %v1508, %v1507
  %v1916 = vpack.c.b16 %v1510, %v1509
  %v1917 = vpack.c.b16 %v1512, %v1511
  %v1918 = vpack.c.b16 %v1514, %v1513
  %v1919 = vpack.c.b16 %v1516, %v1515
  %v1920 = vpack.c.b16 %v1518, %v1517
  %v1921 = vpack.c.b16 %v1520, %v1519
  %v1922 = vpack.c.b16 %v1522, %v1521
  %v1923 = vpack.c.b16 %v1524, %v1523
  %v1924 = vpack.c.b16 %v1526, %v1525
  %v1925 = vpack.c.b16 %v1528, %v1527
  %v1926 = vpack.c.b16 %v1530, %v1529
  %v1927 = vpack.c.b16 %v1532, %v1531
  %v1928 = vpack.c.b16 %v1534, %v1533
  %v1929 = vpack.c.b16 %v1536, %v1535
  %v1930 = vpack.c.b16 %v1538, %v1537
  %v1931 = vpack.c.b16 %v1540, %v1539
  %v1932 = vpack.c.b16 %v1542, %v1541
  %v1933 = vpack.c.b16 %v1544, %v1543
  %v1934 = vpack.c.b16 %v1546, %v1545
  %v1935 = vpack.c.b16 %v1548, %v1547
  %v1936 = vpack.c.b16 %v1550, %v1549
  %v1937 = vpack.c.b16 %v1552, %v1551
  %v1938 = vpack.c.b16 %v1554, %v1553
  %v1939 = vpack.c.b16 %v1556, %v1555
  %v1940 = vpack.c.b16 %v1558, %v1557
  %v1941 = vpack.c.b16 %v1560, %v1559
  %v1942 = vpack.c.b16 %v1562, %v1561
  %v1943 = vpack.c.b16 %v1564, %v1563
  %v1944 = vpack.c.b16 %v1566, %v1565
  %v1945 = vpack.c.b16 %v1568, %v1567
  %v1946 = vpack.c.b16 %v1570, %v1569
  %v1947 = vpack.c.b16 %v1572, %v1571
  %v1948 = vpack.c.b16 %v1574, %v1573
  %v1949 = vpack.c.b16 %v1576, %v1575
  %v1950 = vpack.c.b16 %v1578, %v1577
  %v1951 = vpack.c.b16 %v1580, %v1579
  %v1952 = vpack.c.b16 %v1582, %v1581
  %v1953 = vpack.c.b16 %v1584, %v1583
  %v1954 = vpack.c.b16 %v1586, %v1585
  %v1955 = vpack.c.b16 %v1588, %v1587
  %v1956 = vpack.c.b16 %v1590, %v1589
  %v1957 = vpack.c.b16 %v1592, %v1591
  %v1958 = vpack.c.b16 %v1594, %v1593
  %v1959 = vpack.c.b16 %v1596, %v1595
  %v1960 = vpack.c.b16 %v1598, %v1597
  %v1961 = vpack.c.b16 %v1600, %v1599
  %v1962 = vpack.c.b16 %v1602, %v1601
  %v1963 = vpack.c.b16 %v1604, %v1603
  %v1964 = vpack.c.b16 %v1606, %v1605
  %v1965 = vpack.c.b16 %v1608, %v1607
  %v1966 = vpack.c.b16 %v1610, %v1609
  %v1967 = vpack.c.b16 %v1612, %v1611
  %v1968 = vpack.c.b16 %v1614, %v1613
  %v1969 = vpack.c.b16 %v1616, %v1615
  %v1970 = vpack.c.b16 %v1618, %v1617
  %v1971 = vpack.c.b16 %v1620, %v1619
  %v1972 = vpack.c.b16 %v1622, %v1621
  %v1973 = vpack.c.b16 %v1624, %v1623
  %v1974 = vpack.c.b16 %v1626, %v1625
  %v1975 = vpack.c.b16 %v1628, %v1627
  %v1976 = vpack.c.b16 %v1630, %v1629
  %v1977 = vpack.c.b16 %v1632, %v1631
  %v1978 = vpack.c.b16 %v1634, %v1633
  %v1979 = vpack.c.b16 %v1636, %v1635
  %v1980 = vpack.c.b16 %v1638, %v1637
  %v1981 = vpack.c.b16 %v1640, %v1639
  %v1982 = vpack.c.b16 %v1642, %v1641
  %v1983 = vpack.c.b16 %v1644, %v1643
  %v1984 = vpack.c.b16 %v1646, %v1645
  %v1985 = vpack.c.b16 %v1648, %v1647
  %v1986 = vpack.c.b16 %v1650, %v1649
  %v1987 = vpack.c.b16 %v1652, %v1651
  %v1988 = vpack.c.b16 %v1654, %v1653
  %v1989 = vpack.c.b16 %v1656, %v1655
  %v1990 = vpack.c.b16 %v1658, %v1657
  %v1991 = vpack.c.b16 %v1660, %v1659
  %v1992 = vpack.c.b16 %v1662, %v1661
  %v1993 = vpack.c.b16 %v1664, %v1663
  %v1994 = vpack.c.b16 %v1666, %v1665
  %v1995 = vpack.c.b16 %v1668, %v1667
  %v1996 = vpack.c.b16 %v1670, %v1669
  %v1997 = vpack.c.b16 %v1672, %v1671
  %v1998 = vpack.c.b16 %v1674, %v1673
  %v1999 = vpack.c.b16 %v1676, %v1675
  %v2000 = vpack.c.b16 %v1678, %v1677
  %v2001 = vpack.c.b16 %v1680, %v1679
  %v2002 = vpack.c.b16 %v1682, %v1681
  %v2003 = vpack.c.b16 %v1684, %v1683
  %v2004 = vpack.c.b16 %v1686, %v1685
  %v2005 = vpack.c.b16 %v1688, %v1687
  %v2006 = vpack.c.b16 %v1690, %v1689
  %v2007 = vpack.c.b16 %v1692, %v1691
  %v2008 = vpack.c.b16 %v1694, %v1693
  %v2009 = vpack.c.b16 %v1696, %v1695
  %v2010 = vpack.c.b16 %v1698, %v1697
  %v2011 = vpack.c.b16 %v1700, %v1699
  %v2012 = vpack.c.b16 %v1702, %v1701
  %v2013 = vpack.c.b16 %v1704, %v1703
  %v2014 = vpack.c.b16 %v1706, %v1705
  %v2015 = vpack.c.b16 %v1708, %v1707
  %v2016 = vpack.c.b16 %v1710, %v1709
  %v2017 = vpack.c.b16 %v1712, %v1711
  %v2018 = vpack.c.b16 %v1714, %v1713
  %v2019 = vpack.c.b16 %v1716, %v1715
  %v2020 = vpack.c.b16 %v1718, %v1717
  %v2021 = vpack.c.b16 %v1720, %v1719
  %v2022 = vpack.c.b16 %v1722, %v1721
  %v2023 = vpack.c.b16 %v1724, %v1723
  %v2024 = vpack.c.b16 %v1726, %v1725
  %v2025 = vpack.c.b16 %v1728, %v1727
  %v2026 = vpack.c.b16 %v1730, %v1729
  %v2027 = vpack.c.b16 %v1732, %v1731
  %v2028 = vpack.c.b16 %v1734, %v1733
  %v2029 = vpack.c.b16 %v1736, %v1735
  %v2030 = vpack.c.b16 %v1738, %v1737
  %v2031 = vpack.c.b16 %v1740, %v1739
  %v2032 = vpack.c.b16 %v1742, %v1741
  %v2033 = vpack.c.b16 %v1744, %v1743
  %v2034 = vpack.c.b16 %v1746, %v1745
  %v2039 = vunpack.c.l.b16 %v591
  %v2040 = vunpack.c.l.b16 %v592
  %v2041 = vunpack.c.l.b16 %v593
  %v2042 = vunpack.c.l.b16 %v594
  %v2043 = vpack.c.b16 %v2040, %v2039
  %v2044 = vpack.c.b16 %v2042, %v2041
  %vm2046 = vcmask 203776
  %v2048 = vsel %vm2046, %v1747, 0
  %v2051 = vsel %vm2046, %v1748, 0
  %v2054 = vsel %vm2046, %v1749, 0
  %v2057 = vsel %vm2046, %v1750, 0
  %v2060 = vsel %vm2046, %v1751, 0
  %v2063 = vsel %vm2046, %v1752, 0
  %v2066 = vsel %vm2046, %v1753, 0
  %v2069 = vsel %vm2046, %v1754, 0
  %v2072 = vsel %vm2046, %v1755, 0
  %v2075 = vsel %vm2046, %v1756, 0
  %v2078 = vsel %vm2046, %v1757, 0
  %v2081 = vsel %vm2046, %v1758, 0
  %v2084 = vsel %vm2046, %v1759, 0
  %v2087 = vsel %vm2046, %v1760, 0
  %v2090 = vsel %vm2046, %v1761, 0
  %v2093 = vsel %vm2046, %v1762, 0
  %v2096 = vsel %vm2046, %v1763, 0
  %v2099 = vsel %vm2046, %v1764, 0
  %v2102 = vsel %vm2046, %v1765, 0
  %v2105 = vsel %vm2046, %v1766, 0
  %v2108 = vsel %vm2046, %v1767, 0
  %v2111 = vsel %vm2046, %v1768, 0
  %v2114 = vsel %vm2046, %v1769, 0
  %v2117 = vsel %vm2046, %v1770, 0
  %v2120 = vsel %vm2046, %v1771, 0
  %v2123 = vsel %vm2046, %v1772, 0
  %v2126 = vsel %vm2046, %v1773, 0
  %v2129 = vsel %vm2046, %v1774, 0
  %v2132 = vsel %vm2046, %v1775, 0
  %v2135 = vsel %vm2046, %v1776, 0
  %v2138 = vsel %vm2046, %v1777, 0
  %v2141 = vsel %vm2046, %v1778, 0
  %v2144 = vsel %vm2046, %v1779, 0
  %v2147 = vsel %vm2046, %v1780, 0
  %v2150 = vsel %vm2046, %v1781, 0
  %v2153 = vsel %vm2046, %v1782, 0
  %v2156 = vsel %vm2046, %v1783, 0
  %v2159 = vsel %vm2046, %v1784, 0
  %v2162 = vsel %vm2046, %v1785, 0
  %v2165 = vsel %vm2046, %v1786, 0
  %v2168 = vsel %vm2046, %v1787, 0
  %v2171 = vsel %vm2046, %v1788, 0
  %v2174 = vsel %vm2046, %v1789, 0
  %v2177 = vsel %vm2046, %v1790, 0
  %v2180 = vsel %vm2046, %v1791, 0
  %v2183 = vsel %vm2046, %v1792, 0
  %v2186 = vsel %vm2046, %v1793, 0
  %v2189 = vsel %vm2046, %v1794, 0
  %v2192 = vsel %vm2046, %v1795, 0
  %v2195 = vsel %vm2046, %v1796, 0
  %v2198 = vsel %vm2046, %v1797, 0
  %v2201 = vsel %vm2046, %v1798, 0
  %v2204 = vsel %vm2046, %v1799, 0
  %v2207 = vsel %vm2046, %v1800, 0
  %v2210 = vsel %vm2046, %v1801, 0
  %v2213 = vsel %vm2046, %v1802, 0
  %v2216 = vsel %vm2046, %v1803, 0
  %v2219 = vsel %vm2046, %v1804, 0
  %v2222 = vsel %vm2046, %v1805, 0
  %v2225 = vsel %vm2046, %v1806, 0
  %v2228 = vsel %vm2046, %v1807, 0
  %v2231 = vsel %vm2046, %v1808, 0
  %v2234 = vsel %vm2046, %v1809, 0
  %v2237 = vsel %vm2046, %v1810, 0
  %v2240 = vsel %vm2046, %v1811, 0
  %v2243 = vsel %vm2046, %v1812, 0
  %v2246 = vsel %vm2046, %v1813, 0
  %v2249 = vsel %vm2046, %v1814, 0
  %v2252 = vsel %vm2046, %v1815, 0
  %v2255 = vsel %vm2046, %v1816, 0
  %v2258 = vsel %vm2046, %v1817, 0
  %v2261 = vsel %vm2046, %v1818, 0
  %v2264 = vsel %vm2046, %v1819, 0
  %v2267 = vsel %vm2046, %v1820, 0
  %v2270 = vsel %vm2046, %v1821, 0
  %v2273 = vsel %vm2046, %v1822, 0
  %v2276 = vsel %vm2046, %v1823, 0
  %v2279 = vsel %vm2046, %v1824, 0
  %v2282 = vsel %vm2046, %v1825, 0
  %v2285 = vsel %vm2046, %v1826, 0
  %v2288 = vsel %vm2046, %v1827, 0
  %v2291 = vsel %vm2046, %v1828, 0
  %v2294 = vsel %vm2046, %v1829, 0
  %v2297 = vsel %vm2046, %v1830, 0
  %v2300 = vsel %vm2046, %v1831, 0
  %v2303 = vsel %vm2046, %v1832, 0
  %v2306 = vsel %vm2046, %v1833, 0
  %v2309 = vsel %vm2046, %v1834, 0
  %v2312 = vsel %vm2046, %v1835, 0
  %v2315 = vsel %vm2046, %v1836, 0
  %v2318 = vsel %vm2046, %v1837, 0
  %v2321 = vsel %vm2046, %v1838, 0
  %v2324 = vsel %vm2046, %v1839, 0
  %v2327 = vsel %vm2046, %v1840, 0
  %v2330 = vsel %vm2046, %v1841, 0
  %v2333 = vsel %vm2046, %v1842, 0
  %v2336 = vsel %vm2046, %v1843, 0
  %v2339 = vsel %vm2046, %v1844, 0
  %v2342 = vsel %vm2046, %v1845, 0
  %v2345 = vsel %vm2046, %v1846, 0
  %v2348 = vsel %vm2046, %v1847, 0
  %v2351 = vsel %vm2046, %v1848, 0
  %v2354 = vsel %vm2046, %v1849, 0
  %v2357 = vsel %vm2046, %v1850, 0
  %v2360 = vsel %vm2046, %v1851, 0
  %v2363 = vsel %vm2046, %v1852, 0
  %v2366 = vsel %vm2046, %v1853, 0
  %v2369 = vsel %vm2046, %v1854, 0
  %v2372 = vsel %vm2046, %v1855, 0
  %v2375 = vsel %vm2046, %v1856, 0
  %v2378 = vsel %vm2046, %v1857, 0
  %v2381 = vsel %vm2046, %v1858, 0
  %v2384 = vsel %vm2046, %v1859, 0
  %v2387 = vsel %vm2046, %v1860, 0
  %v2390 = vsel %vm2046, %v1861, 0
  %v2393 = vsel %vm2046, %v1862, 0
  %v2396 = vsel %vm2046, %v1863, 0
  %v2399 = vsel %vm2046, %v1864, 0
  %v2402 = vsel %vm2046, %v1865, 0
  %v2405 = vsel %vm2046, %v1866, 0
  %v2408 = vsel %vm2046, %v1867, 0
  %v2411 = vsel %vm2046, %v1868, 0
  %v2414 = vsel %vm2046, %v1869, 0
  %v2417 = vsel %vm2046, %v1870, 0
  %v2420 = vsel %vm2046, %v1871, 0
  %v2423 = vsel %vm2046, %v1872, 0
  %v2426 = vsel %vm2046, %v1873, 0
  %v2429 = vsel %vm2046, %v1874, 0
  %v2432 = vsel %vm2046, %v1875, 0
  %v2435 = vsel %vm2046, %v1876, 0
  %v2438 = vsel %vm2046, %v1877, 0
  %v2441 = vsel %vm2046, %v1878, 0
  %v2444 = vsel %vm2046, %v1879, 0
  %v2447 = vsel %vm2046, %v1880, 0
  %v2450 = vsel %vm2046, %v1881, 0
  %v2453 = vsel %vm2046, %v1882, 0
  %v2456 = vsel %vm2046, %v1883, 0
  %v2459 = vsel %vm2046, %v1884, 0
  %v2462 = vsel %vm2046, %v1885, 0
  %v2465 = vsel %vm2046, %v1886, 0
  %v2468 = vsel %vm2046, %v1887, 0
  %v2471 = vsel %vm2046, %v1888, 0
  %v2474 = vsel %vm2046, %v1889, 0
  %v2477 = vsel %vm2046, %v1890, 0
  %v2480 = vsel %vm2046, %v1891, 0
  %v2483 = vsel %vm2046, %v1892, 0
  %v2486 = vsel %vm2046, %v1893, 0
  %v2489 = vsel %vm2046, %v1894, 0
  %v2492 = vsel %vm2046, %v1895, 0
  %v2495 = vsel %vm2046, %v1896, 0
  %v2498 = vsel %vm2046, %v1897, 0
  %v2501 = vsel %vm2046, %v1898, 0
  %v2504 = vsel %vm2046, %v1899, 0
  %v2507 = vsel %vm2046, %v1900, 0
  %v2510 = vsel %vm2046, %v1901, 0
  %v2513 = vsel %vm2046, %v1902, 0
  %v2516 = vsel %vm2046, %v1903, 0
  %v2519 = vsel %vm2046, %v1904, 0
  %v2522 = vsel %vm2046, %v1905, 0
  %v2525 = vsel %vm2046, %v1906, 0
  %v2528 = vsel %vm2046, %v1907, 0
  %v2531 = vsel %vm2046, %v1908, 0
  %v2534 = vsel %vm2046, %v1909, 0
  %v2537 = vsel %vm2046, %v1910, 0
  %v2540 = vsel %vm2046, %v1911, 0
  %v2543 = vsel %vm2046, %v1912, 0
  %v2546 = vsel %vm2046, %v1913, 0
  %v2549 = vsel %vm2046, %v1914, 0
  %v2552 = vsel %vm2046, %v1915, 0
  %v2555 = vsel %vm2046, %v1916, 0
  %v2558 = vsel %vm2046, %v1917, 0
  %v2561 = vsel %vm2046, %v1918, 0
  %v2564 = vsel %vm2046, %v1919, 0
  %v2567 = vsel %vm2046, %v1920, 0
  %v2570 = vsel %vm2046, %v1921, 0
  %v2573 = vsel %vm2046, %v1922, 0
  %v2576 = vsel %vm2046, %v1923, 0
  %v2579 = vsel %vm2046, %v1924, 0
  %v2582 = vsel %vm2046, %v1925, 0
  %v2585 = vsel %vm2046, %v1926, 0
  %v2588 = vsel %vm2046, %v1927, 0
  %v2591 = vsel %vm2046, %v1928, 0
  %v2594 = vsel %vm2046, %v1929, 0
  %v2597 = vsel %vm2046, %v1930, 0
  %v2600 = vsel %vm2046, %v1931, 0
  %v2603 = vsel %vm2046, %v1932, 0
  %v2606 = vsel %vm2046, %v1933, 0
  %v2609 = vsel %vm2046, %v1934, 0
  %v2612 = vsel %vm2046, %v1935, 0
  %v2615 = vsel %vm2046, %v1936, 0
  %v2618 = vsel %vm2046, %v1937, 0
  %v2621 = vsel %vm2046, %v1938, 0
  %v2624 = vsel %vm2046, %v1939, 0
  %v2627 = vsel %vm2046, %v1940, 0
  %v2630 = vsel %vm2046, %v1941, 0
  %v2633 = vsel %vm2046, %v1942, 0
  %v2636 = vsel %vm2046, %v1943, 0
  %v2639 = vsel %vm2046, %v1944, 0
  %v2642 = vsel %vm2046, %v1945, 0
  %v2645 = vsel %vm2046, %v1946, 0
  %v2648 = vsel %vm2046, %v1947, 0
  %v2651 = vsel %vm2046, %v1948, 0
  %v2654 = vsel %vm2046, %v1949, 0
  %v2657 = vsel %vm2046, %v1950, 0
  %v2660 = vsel %vm2046, %v1951, 0
  %v2663 = vsel %vm2046, %v1952, 0
  %v2666 = vsel %vm2046, %v1953, 0
  %v2669 = vsel %vm2046, %v1954, 0
  %v2672 = vsel %vm2046, %v1955, 0
  %v2675 = vsel %vm2046, %v1956, 0
  %v2678 = vsel %vm2046, %v1957, 0
  %v2681 = vsel %vm2046, %v1958, 0
  %v2684 = vsel %vm2046, %v1959, 0
  %v2687 = vsel %vm2046, %v1960, 0
  %v2690 = vsel %vm2046, %v1961, 0
  %v2693 = vsel %vm2046, %v1962, 0
  %v2696 = vsel %vm2046, %v1963, 0
  %v2699 = vsel %vm2046, %v1964, 0
  %v2702 = vsel %vm2046, %v1965, 0
  %v2705 = vsel %vm2046, %v1966, 0
  %v2708 = vsel %vm2046, %v1967, 0
  %v2711 = vsel %vm2046, %v1968, 0
  %v2714 = vsel %vm2046, %v1969, 0
  %v2717 = vsel %vm2046, %v1970, 0
  %v2720 = vsel %vm2046, %v1971, 0
  %v2723 = vsel %vm2046, %v1972, 0
  %v2726 = vsel %vm2046, %v1973, 0
  %v2729 = vsel %vm2046, %v1974, 0
  %v2732 = vsel %vm2046, %v1975, 0
  %v2735 = vsel %vm2046, %v1976, 0
  %v2738 = vsel %vm2046, %v1977, 0
  %v2741 = vsel %vm2046, %v1978, 0
  %v2744 = vsel %vm2046, %v1979, 0
  %v2747 = vsel %vm2046, %v1980, 0
  %v2750 = vsel %vm2046, %v1981, 0
  %v2753 = vsel %vm2046, %v1982, 0
  %v2756 = vsel %vm2046, %v1983, 0
  %v2759 = vsel %vm2046, %v1984, 0
  %v2762 = vsel %vm2046, %v1985, 0
  %v2765 = vsel %vm2046, %v1986, 0
  %v2768 = vsel %vm2046, %v1987, 0
  %v2771 = vsel %vm2046, %v1988, 0
  %v2774 = vsel %vm2046, %v1989, 0
  %v2777 = vsel %vm2046, %v1990, 0
  %v2780 = vsel %vm2046, %v1991, 0
  %v2783 = vsel %vm2046, %v1992, 0
  %v2786 = vsel %vm2046, %v1993, 0
  %v2789 = vsel %vm2046, %v1994, 0
  %v2792 = vsel %vm2046, %v1995, 0
  %v2795 = vsel %vm2046, %v1996, 0
  %v2798 = vsel %vm2046, %v1997, 0
  %v2801 = vsel %vm2046, %v1998, 0
  %v2804 = vsel %vm2046, %v1999, 0
  %v2807 = vsel %vm2046, %v2000, 0
  %v2810 = vsel %vm2046, %v2001, 0
  %v2813 = vsel %vm2046, %v2002, 0
  %v2816 = vsel %vm2046, %v2003, 0
  %v2819 = vsel %vm2046, %v2004, 0
  %v2822 = vsel %vm2046, %v2005, 0
  %v2825 = vsel %vm2046, %v2006, 0
  %v2828 = vsel %vm2046, %v2007, 0
  %v2831 = vsel %vm2046, %v2008, 0
  %v2834 = vsel %vm2046, %v2009, 0
  %v2837 = vsel %vm2046, %v2010, 0
  %v2840 = vsel %vm2046, %v2011, 0
  %v2843 = vsel %vm2046, %v2012, 0
  %v2846 = vsel %vm2046, %v2013, 0
  %v2849 = vsel %vm2046, %v2014, 0
  %v2852 = vsel %vm2046, %v2015, 0
  %v2855 = vsel %vm2046, %v2016, 0
  %v2858 = vsel %vm2046, %v2017, 0
  %v2861 = vsel %vm2046, %v2018, 0
  %v2864 = vsel %vm2046, %v2019, 0
  %v2867 = vsel %vm2046, %v2020, 0
  %v2870 = vsel %vm2046, %v2021, 0
  %v2873 = vsel %vm2046, %v2022, 0
  %v2876 = vsel %vm2046, %v2023, 0
  %v2879 = vsel %vm2046, %v2024, 0
  %v2882 = vsel %vm2046, %v2025, 0
  %v2885 = vsel %vm2046, %v2026, 0
  %v2888 = vsel %vm2046, %v2027, 0
  %v2891 = vsel %vm2046, %v2028, 0
  %v2894 = vsel %vm2046, %v2029, 0
  %v2897 = vsel %vm2046, %v2030, 0
  %v2900 = vsel %vm2046, %v2031, 0
  %v2903 = vsel %vm2046, %v2032, 0
  %v2906 = vsel %vm2046, %v2033, 0
  %v2909 = vsel %vm2046, %v2034, 0
  %vm2911 = vcmask 1043456
  %vm2912 = vcmask 1044480
  %v2913 = vsel %vm2911, 4294967295, 65535
  %v2914 = vsel %vm2912, %v2913, 0
  %v2916 = vand.u32 %v2044, %v2914
  %2918 = vmatprep.subr.bf16.mxu0 0
  %2919 = vmatpush1.bf16.msra.mxu0 0
  %2920 = vmatprep.subr.bf16.mxu0 0
  %2921 = vmatpush1.bf16.msra.mxu0 0
  %2922 = vmatprep.subr.bf16.mxu0 0
  %2923 = vmatpush1.bf16.msra.mxu0 0
  %2924 = vmatprep.subr.bf16.mxu0 0
  %2925 = vmatpush1.bf16.msra.mxu0 0
  %2926 = vmatprep.subr.bf16.mxu0 0
  %2927 = vmatpush1.bf16.msra.mxu0 0
  %2928 = vmatprep.subr.bf16.mxu0 0
  %2929 = vmatpush1.bf16.msra.mxu0 0
  %2930 = vmatprep.subr.bf16.mxu0 0
  %2931 = vmatpush1.bf16.msra.mxu0 %v2916
  %2932 = vmatprep.subr.bf16.mxu0 0
  %2933 = vmatpush1.bf16.msra.mxu0 %v2043
  %2934 = vmatprep.subr.bf16.mxu0 0
  %2935 = vmatpush2.bf16.msra.mxu0 0
  %2936 = vmatprep.subr.bf16.mxu0 0
  %2937 = vmatpush2.bf16.msra.mxu0 0
  %2938 = vmatprep.subr.bf16.mxu0 0
  %2939 = vmatpush2.bf16.msra.mxu0 0
  %2940 = vmatprep.subr.bf16.mxu0 0
  %2941 = vmatpush2.bf16.msra.mxu0 0
  %2942 = vmatprep.subr.bf16.mxu0 0
  %2943 = vmatpush2.bf16.msra.mxu0 0
  %2944 = vmatprep.subr.bf16.mxu0 0
  %2945 = vmatpush2.bf16.msra.mxu0 0
  %2946 = vmatprep.subr.bf16.mxu0 0
  %2947 = vmatpush2.bf16.msra.mxu0 0
  %2948 = vmatprep.subr.bf16.mxu0 0
  %2949 = vmatpush2.bf16.msra.mxu0 0
  %2950 = vmatprep.mubr.bf16.mxu0 0
  %2951 = vmatmul.mubr.bf16.gmra.mxu0 %v2048
  %v2952 = vpop.f32.mrf.mxu0
  %v2953 = vadd.f32 0.0, %v2952
  %v2954 = vpop.f32.mrf.mxu0
  %v2955 = vpop.f32.mrf.mxu0
  %v2956 = vadd.f32 0.0, %v2955
  %v2957 = vpop.f32.mrf.mxu0
  %2958 = vmatprep.mubr.bf16.mxu0 0
  %2959 = vmatmul.mubr.bf16.gmra.mxu0 %v2051
  %v2960 = vpop.f32.mrf.mxu0
  %v2961 = vadd.f32 0.0, %v2960
  %v2962 = vpop.f32.mrf.mxu0
  %v2963 = vpop.f32.mrf.mxu0
  %v2964 = vadd.f32 0.0, %v2963
  %v2965 = vpop.f32.mrf.mxu0
  %2966 = vmatprep.mubr.bf16.mxu0 0
  %2967 = vmatmul.mubr.bf16.gmra.mxu0 %v2054
  %v2968 = vpop.f32.mrf.mxu0
  %v2969 = vadd.f32 0.0, %v2968
  %v2970 = vpop.f32.mrf.mxu0
  %v2971 = vpop.f32.mrf.mxu0
  %v2972 = vadd.f32 0.0, %v2971
  %v2973 = vpop.f32.mrf.mxu0
  %2974 = vmatprep.mubr.bf16.mxu0 0
  %2975 = vmatmul.mubr.bf16.gmra.mxu0 %v2057
  %v2976 = vpop.f32.mrf.mxu0
  %v2977 = vadd.f32 0.0, %v2976
  %v2978 = vpop.f32.mrf.mxu0
  %v2979 = vpop.f32.mrf.mxu0
  %v2980 = vadd.f32 0.0, %v2979
  %v2981 = vpop.f32.mrf.mxu0
  %2982 = vmatprep.mubr.bf16.mxu0 0
  %2983 = vmatmul.mubr.bf16.gmra.mxu0 %v2060
  %v2984 = vpop.f32.mrf.mxu0
  %v2985 = vadd.f32 0.0, %v2984
  %v2986 = vpop.f32.mrf.mxu0
  %v2987 = vpop.f32.mrf.mxu0
  %v2988 = vadd.f32 0.0, %v2987
  %v2989 = vpop.f32.mrf.mxu0
  %2990 = vmatprep.mubr.bf16.mxu0 0
  %2991 = vmatmul.mubr.bf16.gmra.mxu0 %v2063
  %v2992 = vpop.f32.mrf.mxu0
  %v2993 = vadd.f32 0.0, %v2992
  %v2994 = vpop.f32.mrf.mxu0
  %v2995 = vpop.f32.mrf.mxu0
  %v2996 = vadd.f32 0.0, %v2995
  %v2997 = vpop.f32.mrf.mxu0
  %2998 = vmatprep.mubr.bf16.mxu0 0
  %2999 = vmatmul.mubr.bf16.gmra.mxu0 %v2066
  %v3000 = vpop.f32.mrf.mxu0
  %v3001 = vadd.f32 0.0, %v3000
  %v3002 = vpop.f32.mrf.mxu0
  %v3003 = vpop.f32.mrf.mxu0
  %v3004 = vadd.f32 0.0, %v3003
  %v3005 = vpop.f32.mrf.mxu0
  %3006 = vmatprep.mubr.bf16.mxu0 0
  %3007 = vmatmul.mubr.bf16.gmra.mxu0 %v2069
  %v3008 = vpop.f32.mrf.mxu0
  %v3009 = vadd.f32 0.0, %v3008
  %v3010 = vpop.f32.mrf.mxu0
  %v3011 = vpop.f32.mrf.mxu0
  %v3012 = vadd.f32 0.0, %v3011
  %v3013 = vpop.f32.mrf.mxu0
  %3014 = vmatprep.mubr.bf16.mxu0 0
  %3015 = vmatmul.mubr.bf16.gmra.mxu0 %v2072
  %v3016 = vpop.f32.mrf.mxu0
  %v3017 = vadd.f32 0.0, %v3016
  %v3018 = vpop.f32.mrf.mxu0
  %v3019 = vpop.f32.mrf.mxu0
  %v3020 = vadd.f32 0.0, %v3019
  %v3021 = vpop.f32.mrf.mxu0
  %3022 = vmatprep.mubr.bf16.mxu0 0
  %3023 = vmatmul.mubr.bf16.gmra.mxu0 %v2075
  %v3024 = vpop.f32.mrf.mxu0
  %v3025 = vadd.f32 0.0, %v3024
  %v3026 = vpop.f32.mrf.mxu0
  %v3027 = vpop.f32.mrf.mxu0
  %v3028 = vadd.f32 0.0, %v3027
  %v3029 = vpop.f32.mrf.mxu0
  %3030 = vmatprep.mubr.bf16.mxu0 0
  %3031 = vmatmul.mubr.bf16.gmra.mxu0 %v2078
  %v3032 = vpop.f32.mrf.mxu0
  %v3033 = vadd.f32 0.0, %v3032
  %v3034 = vpop.f32.mrf.mxu0
  %v3035 = vpop.f32.mrf.mxu0
  %v3036 = vadd.f32 0.0, %v3035
  %v3037 = vpop.f32.mrf.mxu0
  %3038 = vmatprep.mubr.bf16.mxu0 0
  %3039 = vmatmul.mubr.bf16.gmra.mxu0 %v2081
  %v3040 = vpop.f32.mrf.mxu0
  %v3041 = vadd.f32 0.0, %v3040
  %v3042 = vpop.f32.mrf.mxu0
  %v3043 = vpop.f32.mrf.mxu0
  %v3044 = vadd.f32 0.0, %v3043
  %v3045 = vpop.f32.mrf.mxu0
  %3046 = vmatprep.mubr.bf16.mxu0 0
  %3047 = vmatmul.mubr.bf16.gmra.mxu0 %v2084
  %v3048 = vpop.f32.mrf.mxu0
  %v3049 = vadd.f32 0.0, %v3048
  %v3050 = vpop.f32.mrf.mxu0
  %v3051 = vpop.f32.mrf.mxu0
  %v3052 = vadd.f32 0.0, %v3051
  %v3053 = vpop.f32.mrf.mxu0
  %3054 = vmatprep.mubr.bf16.mxu0 0
  %3055 = vmatmul.mubr.bf16.gmra.mxu0 %v2087
  %v3056 = vpop.f32.mrf.mxu0
  %v3057 = vadd.f32 0.0, %v3056
  %v3058 = vpop.f32.mrf.mxu0
  %v3059 = vpop.f32.mrf.mxu0
  %v3060 = vadd.f32 0.0, %v3059
  %v3061 = vpop.f32.mrf.mxu0
  %3062 = vmatprep.mubr.bf16.mxu0 0
  %3063 = vmatmul.mubr.bf16.gmra.mxu0 %v2090
  %v3064 = vpop.f32.mrf.mxu0
  %v3065 = vadd.f32 0.0, %v3064
  %v3066 = vpop.f32.mrf.mxu0
  %v3067 = vpop.f32.mrf.mxu0
  %v3068 = vadd.f32 0.0, %v3067
  %v3069 = vpop.f32.mrf.mxu0
  %3070 = vmatprep.mubr.bf16.mxu0 0
  %3071 = vmatmul.mubr.bf16.gmra.mxu0 %v2093
  %v3072 = vpop.f32.mrf.mxu0
  %v3073 = vadd.f32 0.0, %v3072
  %v3074 = vpop.f32.mrf.mxu0
  %v3075 = vpop.f32.mrf.mxu0
  %v3076 = vadd.f32 0.0, %v3075
  %v3077 = vpop.f32.mrf.mxu0
  %3078 = vmatprep.mubr.bf16.mxu0 0
  %3079 = vmatmul.mubr.bf16.gmra.mxu0 %v2096
  %v3080 = vpop.f32.mrf.mxu0
  %v3081 = vadd.f32 0.0, %v3080
  %v3082 = vpop.f32.mrf.mxu0
  %v3083 = vpop.f32.mrf.mxu0
  %v3084 = vadd.f32 0.0, %v3083
  %v3085 = vpop.f32.mrf.mxu0
  %3086 = vmatprep.mubr.bf16.mxu0 0
  %3087 = vmatmul.mubr.bf16.gmra.mxu0 %v2099
  %v3088 = vpop.f32.mrf.mxu0
  %v3089 = vadd.f32 0.0, %v3088
  %v3090 = vpop.f32.mrf.mxu0
  %v3091 = vpop.f32.mrf.mxu0
  %v3092 = vadd.f32 0.0, %v3091
  %v3093 = vpop.f32.mrf.mxu0
  %3094 = vmatprep.mubr.bf16.mxu0 0
  %3095 = vmatmul.mubr.bf16.gmra.mxu0 %v2102
  %v3096 = vpop.f32.mrf.mxu0
  %v3097 = vadd.f32 0.0, %v3096
  %v3098 = vpop.f32.mrf.mxu0
  %v3099 = vpop.f32.mrf.mxu0
  %v3100 = vadd.f32 0.0, %v3099
  %v3101 = vpop.f32.mrf.mxu0
  %3102 = vmatprep.mubr.bf16.mxu0 0
  %3103 = vmatmul.mubr.bf16.gmra.mxu0 %v2105
  %v3104 = vpop.f32.mrf.mxu0
  %v3105 = vadd.f32 0.0, %v3104
  %v3106 = vpop.f32.mrf.mxu0
  %v3107 = vpop.f32.mrf.mxu0
  %v3108 = vadd.f32 0.0, %v3107
  %v3109 = vpop.f32.mrf.mxu0
  %3110 = vmatprep.mubr.bf16.mxu0 0
  %3111 = vmatmul.mubr.bf16.gmra.mxu0 %v2108
  %v3112 = vpop.f32.mrf.mxu0
  %v3113 = vadd.f32 0.0, %v3112
  %v3114 = vpop.f32.mrf.mxu0
  %v3115 = vpop.f32.mrf.mxu0
  %v3116 = vadd.f32 0.0, %v3115
  %v3117 = vpop.f32.mrf.mxu0
  %3118 = vmatprep.mubr.bf16.mxu0 0
  %3119 = vmatmul.mubr.bf16.gmra.mxu0 %v2111
  %v3120 = vpop.f32.mrf.mxu0
  %v3121 = vadd.f32 0.0, %v3120
  %v3122 = vpop.f32.mrf.mxu0
  %v3123 = vpop.f32.mrf.mxu0
  %v3124 = vadd.f32 0.0, %v3123
  %v3125 = vpop.f32.mrf.mxu0
  %3126 = vmatprep.mubr.bf16.mxu0 0
  %3127 = vmatmul.mubr.bf16.gmra.mxu0 %v2114
  %v3128 = vpop.f32.mrf.mxu0
  %v3129 = vadd.f32 0.0, %v3128
  %v3130 = vpop.f32.mrf.mxu0
  %v3131 = vpop.f32.mrf.mxu0
  %v3132 = vadd.f32 0.0, %v3131
  %v3133 = vpop.f32.mrf.mxu0
  %3134 = vmatprep.mubr.bf16.mxu0 0
  %3135 = vmatmul.mubr.bf16.gmra.mxu0 %v2117
  %v3136 = vpop.f32.mrf.mxu0
  %v3137 = vadd.f32 0.0, %v3136
  %v3138 = vpop.f32.mrf.mxu0
  %v3139 = vpop.f32.mrf.mxu0
  %v3140 = vadd.f32 0.0, %v3139
  %v3141 = vpop.f32.mrf.mxu0
  %3142 = vmatprep.mubr.bf16.mxu0 0
  %3143 = vmatmul.mubr.bf16.gmra.mxu0 %v2120
  %v3144 = vpop.f32.mrf.mxu0
  %v3145 = vadd.f32 0.0, %v3144
  %v3146 = vpop.f32.mrf.mxu0
  %v3147 = vpop.f32.mrf.mxu0
  %v3148 = vadd.f32 0.0, %v3147
  %v3149 = vpop.f32.mrf.mxu0
  %3150 = vmatprep.mubr.bf16.mxu0 0
  %3151 = vmatmul.mubr.bf16.gmra.mxu0 %v2123
  %v3152 = vpop.f32.mrf.mxu0
  %v3153 = vadd.f32 0.0, %v3152
  %v3154 = vpop.f32.mrf.mxu0
  %v3155 = vpop.f32.mrf.mxu0
  %v3156 = vadd.f32 0.0, %v3155
  %v3157 = vpop.f32.mrf.mxu0
  %3158 = vmatprep.mubr.bf16.mxu0 0
  %3159 = vmatmul.mubr.bf16.gmra.mxu0 %v2126
  %v3160 = vpop.f32.mrf.mxu0
  %v3161 = vadd.f32 0.0, %v3160
  %v3162 = vpop.f32.mrf.mxu0
  %v3163 = vpop.f32.mrf.mxu0
  %v3164 = vadd.f32 0.0, %v3163
  %v3165 = vpop.f32.mrf.mxu0
  %3166 = vmatprep.mubr.bf16.mxu0 0
  %3167 = vmatmul.mubr.bf16.gmra.mxu0 %v2129
  %v3168 = vpop.f32.mrf.mxu0
  %v3169 = vadd.f32 0.0, %v3168
  %v3170 = vpop.f32.mrf.mxu0
  %v3171 = vpop.f32.mrf.mxu0
  %v3172 = vadd.f32 0.0, %v3171
  %v3173 = vpop.f32.mrf.mxu0
  %3174 = vmatprep.mubr.bf16.mxu0 0
  %3175 = vmatmul.mubr.bf16.gmra.mxu0 %v2132
  %v3176 = vpop.f32.mrf.mxu0
  %v3177 = vadd.f32 0.0, %v3176
  %v3178 = vpop.f32.mrf.mxu0
  %v3179 = vpop.f32.mrf.mxu0
  %v3180 = vadd.f32 0.0, %v3179
  %v3181 = vpop.f32.mrf.mxu0
  %3182 = vmatprep.mubr.bf16.mxu0 0
  %3183 = vmatmul.mubr.bf16.gmra.mxu0 %v2135
  %v3184 = vpop.f32.mrf.mxu0
  %v3185 = vadd.f32 0.0, %v3184
  %v3186 = vpop.f32.mrf.mxu0
  %v3187 = vpop.f32.mrf.mxu0
  %v3188 = vadd.f32 0.0, %v3187
  %v3189 = vpop.f32.mrf.mxu0
  %3190 = vmatprep.mubr.bf16.mxu0 0
  %3191 = vmatmul.mubr.bf16.gmra.mxu0 %v2138
  %v3192 = vpop.f32.mrf.mxu0
  %v3193 = vadd.f32 0.0, %v3192
  %v3194 = vpop.f32.mrf.mxu0
  %v3195 = vpop.f32.mrf.mxu0
  %v3196 = vadd.f32 0.0, %v3195
  %v3197 = vpop.f32.mrf.mxu0
  %3198 = vmatprep.mubr.bf16.mxu0 0
  %3199 = vmatmul.mubr.bf16.gmra.mxu0 %v2141
  %v3200 = vpop.f32.mrf.mxu0
  %v3201 = vadd.f32 0.0, %v3200
  %v3202 = vpop.f32.mrf.mxu0
  %v3203 = vpop.f32.mrf.mxu0
  %v3204 = vadd.f32 0.0, %v3203
  %v3205 = vpop.f32.mrf.mxu0
  %3206 = vmatprep.mubr.bf16.mxu0 0
  %3207 = vmatmul.mubr.bf16.gmra.mxu0 %v2144
  %v3208 = vpop.f32.mrf.mxu0
  %v3209 = vadd.f32 0.0, %v3208
  %v3210 = vpop.f32.mrf.mxu0
  %v3211 = vpop.f32.mrf.mxu0
  %v3212 = vadd.f32 0.0, %v3211
  %v3213 = vpop.f32.mrf.mxu0
  %3214 = vmatprep.mubr.bf16.mxu0 0
  %3215 = vmatmul.mubr.bf16.gmra.mxu0 %v2147
  %v3216 = vpop.f32.mrf.mxu0
  %v3217 = vadd.f32 0.0, %v3216
  %v3218 = vpop.f32.mrf.mxu0
  %v3219 = vpop.f32.mrf.mxu0
  %v3220 = vadd.f32 0.0, %v3219
  %v3221 = vpop.f32.mrf.mxu0
  %3222 = vmatprep.mubr.bf16.mxu0 0
  %3223 = vmatmul.mubr.bf16.gmra.mxu0 %v2150
  %v3224 = vpop.f32.mrf.mxu0
  %v3225 = vadd.f32 0.0, %v3224
  %v3226 = vpop.f32.mrf.mxu0
  %v3227 = vpop.f32.mrf.mxu0
  %v3228 = vadd.f32 0.0, %v3227
  %v3229 = vpop.f32.mrf.mxu0
  %3230 = vmatprep.mubr.bf16.mxu0 0
  %3231 = vmatmul.mubr.bf16.gmra.mxu0 %v2153
  %v3232 = vpop.f32.mrf.mxu0
  %v3233 = vadd.f32 0.0, %v3232
  %v3234 = vpop.f32.mrf.mxu0
  %v3235 = vpop.f32.mrf.mxu0
  %v3236 = vadd.f32 0.0, %v3235
  %v3237 = vpop.f32.mrf.mxu0
  %3238 = vmatprep.mubr.bf16.mxu0 0
  %3239 = vmatmul.mubr.bf16.gmra.mxu0 %v2156
  %v3240 = vpop.f32.mrf.mxu0
  %v3241 = vadd.f32 0.0, %v3240
  %v3242 = vpop.f32.mrf.mxu0
  %v3243 = vpop.f32.mrf.mxu0
  %v3244 = vadd.f32 0.0, %v3243
  %v3245 = vpop.f32.mrf.mxu0
  %3246 = vmatprep.mubr.bf16.mxu0 0
  %3247 = vmatmul.mubr.bf16.gmra.mxu0 %v2159
  %v3248 = vpop.f32.mrf.mxu0
  %v3249 = vadd.f32 0.0, %v3248
  %v3250 = vpop.f32.mrf.mxu0
  %v3251 = vpop.f32.mrf.mxu0
  %v3252 = vadd.f32 0.0, %v3251
  %v3253 = vpop.f32.mrf.mxu0
  %3254 = vmatprep.mubr.bf16.mxu0 0
  %3255 = vmatmul.mubr.bf16.gmra.mxu0 %v2162
  %v3256 = vpop.f32.mrf.mxu0
  %v3257 = vadd.f32 0.0, %v3256
  %v3258 = vpop.f32.mrf.mxu0
  %v3259 = vpop.f32.mrf.mxu0
  %v3260 = vadd.f32 0.0, %v3259
  %v3261 = vpop.f32.mrf.mxu0
  %3262 = vmatprep.mubr.bf16.mxu0 0
  %3263 = vmatmul.mubr.bf16.gmra.mxu0 %v2165
  %v3264 = vpop.f32.mrf.mxu0
  %v3265 = vadd.f32 0.0, %v3264
  %v3266 = vpop.f32.mrf.mxu0
  %v3267 = vpop.f32.mrf.mxu0
  %v3268 = vadd.f32 0.0, %v3267
  %v3269 = vpop.f32.mrf.mxu0
  %3270 = vmatprep.mubr.bf16.mxu0 0
  %3271 = vmatmul.mubr.bf16.gmra.mxu0 %v2168
  %v3272 = vpop.f32.mrf.mxu0
  %v3273 = vadd.f32 0.0, %v3272
  %v3274 = vpop.f32.mrf.mxu0
  %v3275 = vpop.f32.mrf.mxu0
  %v3276 = vadd.f32 0.0, %v3275
  %v3277 = vpop.f32.mrf.mxu0
  %3278 = vmatprep.mubr.bf16.mxu0 0
  %3279 = vmatmul.mubr.bf16.gmra.mxu0 %v2171
  %v3280 = vpop.f32.mrf.mxu0
  %v3281 = vadd.f32 0.0, %v3280
  %v3282 = vpop.f32.mrf.mxu0
  %v3283 = vpop.f32.mrf.mxu0
  %v3284 = vadd.f32 0.0, %v3283
  %v3285 = vpop.f32.mrf.mxu0
  %3286 = vmatprep.mubr.bf16.mxu0 0
  %3287 = vmatmul.mubr.bf16.gmra.mxu0 %v2174
  %v3288 = vpop.f32.mrf.mxu0
  %v3289 = vadd.f32 0.0, %v3288
  %v3290 = vpop.f32.mrf.mxu0
  %v3291 = vpop.f32.mrf.mxu0
  %v3292 = vadd.f32 0.0, %v3291
  %v3293 = vpop.f32.mrf.mxu0
  %3294 = vmatprep.mubr.bf16.mxu0 0
  %3295 = vmatmul.mubr.bf16.gmra.mxu0 %v2177
  %v3296 = vpop.f32.mrf.mxu0
  %v3297 = vadd.f32 0.0, %v3296
  %v3298 = vpop.f32.mrf.mxu0
  %v3299 = vpop.f32.mrf.mxu0
  %v3300 = vadd.f32 0.0, %v3299
  %v3301 = vpop.f32.mrf.mxu0
  %3302 = vmatprep.mubr.bf16.mxu0 0
  %3303 = vmatmul.mubr.bf16.gmra.mxu0 %v2180
  %v3304 = vpop.f32.mrf.mxu0
  %v3305 = vadd.f32 0.0, %v3304
  %v3306 = vpop.f32.mrf.mxu0
  %v3307 = vpop.f32.mrf.mxu0
  %v3308 = vadd.f32 0.0, %v3307
  %v3309 = vpop.f32.mrf.mxu0
  %3310 = vmatprep.mubr.bf16.mxu0 0
  %3311 = vmatmul.mubr.bf16.gmra.mxu0 %v2183
  %v3312 = vpop.f32.mrf.mxu0
  %v3313 = vadd.f32 0.0, %v3312
  %v3314 = vpop.f32.mrf.mxu0
  %v3315 = vpop.f32.mrf.mxu0
  %v3316 = vadd.f32 0.0, %v3315
  %v3317 = vpop.f32.mrf.mxu0
  %3318 = vmatprep.mubr.bf16.mxu0 0
  %3319 = vmatmul.mubr.bf16.gmra.mxu0 %v2186
  %v3320 = vpop.f32.mrf.mxu0
  %v3321 = vadd.f32 0.0, %v3320
  %v3322 = vpop.f32.mrf.mxu0
  %v3323 = vpop.f32.mrf.mxu0
  %v3324 = vadd.f32 0.0, %v3323
  %v3325 = vpop.f32.mrf.mxu0
  %3326 = vmatprep.mubr.bf16.mxu0 0
  %3327 = vmatmul.mubr.bf16.gmra.mxu0 %v2189
  %v3328 = vpop.f32.mrf.mxu0
  %v3329 = vadd.f32 0.0, %v3328
  %v3330 = vpop.f32.mrf.mxu0
  %v3331 = vpop.f32.mrf.mxu0
  %v3332 = vadd.f32 0.0, %v3331
  %v3333 = vpop.f32.mrf.mxu0
  %3334 = vmatprep.mubr.bf16.mxu0 0
  %3335 = vmatmul.mubr.bf16.gmra.mxu0 %v2192
  %v3336 = vpop.f32.mrf.mxu0
  %v3337 = vadd.f32 0.0, %v3336
  %v3338 = vpop.f32.mrf.mxu0
  %v3339 = vpop.f32.mrf.mxu0
  %v3340 = vadd.f32 0.0, %v3339
  %v3341 = vpop.f32.mrf.mxu0
  %3342 = vmatprep.mubr.bf16.mxu0 0
  %3343 = vmatmul.mubr.bf16.gmra.mxu0 %v2195
  %v3344 = vpop.f32.mrf.mxu0
  %v3345 = vadd.f32 0.0, %v3344
  %v3346 = vpop.f32.mrf.mxu0
  %v3347 = vpop.f32.mrf.mxu0
  %v3348 = vadd.f32 0.0, %v3347
  %v3349 = vpop.f32.mrf.mxu0
  %3350 = vmatprep.mubr.bf16.mxu0 0
  %3351 = vmatmul.mubr.bf16.gmra.mxu0 %v2198
  %v3352 = vpop.f32.mrf.mxu0
  %v3353 = vadd.f32 0.0, %v3352
  %v3354 = vpop.f32.mrf.mxu0
  %v3355 = vpop.f32.mrf.mxu0
  %v3356 = vadd.f32 0.0, %v3355
  %v3357 = vpop.f32.mrf.mxu0
  %3358 = vmatprep.mubr.bf16.mxu0 0
  %3359 = vmatmul.mubr.bf16.gmra.mxu0 %v2201
  %v3360 = vpop.f32.mrf.mxu0
  %v3361 = vadd.f32 0.0, %v3360
  %v3362 = vpop.f32.mrf.mxu0
  %v3363 = vpop.f32.mrf.mxu0
  %v3364 = vadd.f32 0.0, %v3363
  %v3365 = vpop.f32.mrf.mxu0
  %3366 = vmatprep.mubr.bf16.mxu0 0
  %3367 = vmatmul.mubr.bf16.gmra.mxu0 %v2204
  %v3368 = vpop.f32.mrf.mxu0
  %v3369 = vadd.f32 0.0, %v3368
  %v3370 = vpop.f32.mrf.mxu0
  %v3371 = vpop.f32.mrf.mxu0
  %v3372 = vadd.f32 0.0, %v3371
  %v3373 = vpop.f32.mrf.mxu0
  %3374 = vmatprep.mubr.bf16.mxu0 0
  %3375 = vmatmul.mubr.bf16.gmra.mxu0 %v2207
  %v3376 = vpop.f32.mrf.mxu0
  %v3377 = vadd.f32 0.0, %v3376
  %v3378 = vpop.f32.mrf.mxu0
  %v3379 = vpop.f32.mrf.mxu0
  %v3380 = vadd.f32 0.0, %v3379
  %v3381 = vpop.f32.mrf.mxu0
  %3382 = vmatprep.mubr.bf16.mxu0 0
  %3383 = vmatmul.mubr.bf16.gmra.mxu0 %v2210
  %v3384 = vpop.f32.mrf.mxu0
  %v3385 = vadd.f32 0.0, %v3384
  %v3386 = vpop.f32.mrf.mxu0
  %v3387 = vpop.f32.mrf.mxu0
  %v3388 = vadd.f32 0.0, %v3387
  %v3389 = vpop.f32.mrf.mxu0
  %3390 = vmatprep.mubr.bf16.mxu0 0
  %3391 = vmatmul.mubr.bf16.gmra.mxu0 %v2213
  %v3392 = vpop.f32.mrf.mxu0
  %v3393 = vadd.f32 0.0, %v3392
  %v3394 = vpop.f32.mrf.mxu0
  %v3395 = vpop.f32.mrf.mxu0
  %v3396 = vadd.f32 0.0, %v3395
  %v3397 = vpop.f32.mrf.mxu0
  %3398 = vmatprep.mubr.bf16.mxu0 0
  %3399 = vmatmul.mubr.bf16.gmra.mxu0 %v2216
  %v3400 = vpop.f32.mrf.mxu0
  %v3401 = vadd.f32 0.0, %v3400
  %v3402 = vpop.f32.mrf.mxu0
  %v3403 = vpop.f32.mrf.mxu0
  %v3404 = vadd.f32 0.0, %v3403
  %v3405 = vpop.f32.mrf.mxu0
  %3406 = vmatprep.mubr.bf16.mxu0 0
  %3407 = vmatmul.mubr.bf16.gmra.mxu0 %v2219
  %v3408 = vpop.f32.mrf.mxu0
  %v3409 = vadd.f32 0.0, %v3408
  %v3410 = vpop.f32.mrf.mxu0
  %v3411 = vpop.f32.mrf.mxu0
  %v3412 = vadd.f32 0.0, %v3411
  %v3413 = vpop.f32.mrf.mxu0
  %3414 = vmatprep.mubr.bf16.mxu0 0
  %3415 = vmatmul.mubr.bf16.gmra.mxu0 %v2222
  %v3416 = vpop.f32.mrf.mxu0
  %v3417 = vadd.f32 0.0, %v3416
  %v3418 = vpop.f32.mrf.mxu0
  %v3419 = vpop.f32.mrf.mxu0
  %v3420 = vadd.f32 0.0, %v3419
  %v3421 = vpop.f32.mrf.mxu0
  %3422 = vmatprep.mubr.bf16.mxu0 0
  %3423 = vmatmul.mubr.bf16.gmra.mxu0 %v2225
  %v3424 = vpop.f32.mrf.mxu0
  %v3425 = vadd.f32 0.0, %v3424
  %v3426 = vpop.f32.mrf.mxu0
  %v3427 = vpop.f32.mrf.mxu0
  %v3428 = vadd.f32 0.0, %v3427
  %v3429 = vpop.f32.mrf.mxu0
  %3430 = vmatprep.mubr.bf16.mxu0 0
  %3431 = vmatmul.mubr.bf16.gmra.mxu0 %v2228
  %v3432 = vpop.f32.mrf.mxu0
  %v3433 = vadd.f32 0.0, %v3432
  %v3434 = vpop.f32.mrf.mxu0
  %v3435 = vpop.f32.mrf.mxu0
  %v3436 = vadd.f32 0.0, %v3435
  %v3437 = vpop.f32.mrf.mxu0
  %3438 = vmatprep.mubr.bf16.mxu0 0
  %3439 = vmatmul.mubr.bf16.gmra.mxu0 %v2231
  %v3440 = vpop.f32.mrf.mxu0
  %v3441 = vadd.f32 0.0, %v3440
  %v3442 = vpop.f32.mrf.mxu0
  %v3443 = vpop.f32.mrf.mxu0
  %v3444 = vadd.f32 0.0, %v3443
  %v3445 = vpop.f32.mrf.mxu0
  %3446 = vmatprep.mubr.bf16.mxu0 0
  %3447 = vmatmul.mubr.bf16.gmra.mxu0 %v2234
  %v3448 = vpop.f32.mrf.mxu0
  %v3449 = vadd.f32 0.0, %v3448
  %v3450 = vpop.f32.mrf.mxu0
  %v3451 = vpop.f32.mrf.mxu0
  %v3452 = vadd.f32 0.0, %v3451
  %v3453 = vpop.f32.mrf.mxu0
  %3454 = vmatprep.mubr.bf16.mxu0 0
  %3455 = vmatmul.mubr.bf16.gmra.mxu0 %v2237
  %v3456 = vpop.f32.mrf.mxu0
  %v3457 = vadd.f32 0.0, %v3456
  %v3458 = vpop.f32.mrf.mxu0
  %v3459 = vpop.f32.mrf.mxu0
  %v3460 = vadd.f32 0.0, %v3459
  %v3461 = vpop.f32.mrf.mxu0
  %3462 = vmatprep.mubr.bf16.mxu0 0
  %3463 = vmatmul.mubr.bf16.gmra.mxu0 %v2240
  %v3464 = vpop.f32.mrf.mxu0
  %v3465 = vadd.f32 0.0, %v3464
  %v3466 = vpop.f32.mrf.mxu0
  %v3467 = vpop.f32.mrf.mxu0
  %v3468 = vadd.f32 0.0, %v3467
  %v3469 = vpop.f32.mrf.mxu0
  %3470 = vmatprep.mubr.bf16.mxu0 0
  %3471 = vmatmul.mubr.bf16.gmra.mxu0 %v2243
  %v3472 = vpop.f32.mrf.mxu0
  %v3473 = vadd.f32 0.0, %v3472
  %v3474 = vpop.f32.mrf.mxu0
  %v3475 = vpop.f32.mrf.mxu0
  %v3476 = vadd.f32 0.0, %v3475
  %v3477 = vpop.f32.mrf.mxu0
  %3478 = vmatprep.mubr.bf16.mxu0 0
  %3479 = vmatmul.mubr.bf16.gmra.mxu0 %v2246
  %v3480 = vpop.f32.mrf.mxu0
  %v3481 = vadd.f32 0.0, %v3480
  %v3482 = vpop.f32.mrf.mxu0
  %v3483 = vpop.f32.mrf.mxu0
  %v3484 = vadd.f32 0.0, %v3483
  %v3485 = vpop.f32.mrf.mxu0
  %3486 = vmatprep.mubr.bf16.mxu0 0
  %3487 = vmatmul.mubr.bf16.gmra.mxu0 %v2249
  %v3488 = vpop.f32.mrf.mxu0
  %v3489 = vadd.f32 0.0, %v3488
  %v3490 = vpop.f32.mrf.mxu0
  %v3491 = vpop.f32.mrf.mxu0
  %v3492 = vadd.f32 0.0, %v3491
  %v3493 = vpop.f32.mrf.mxu0
  %3494 = vmatprep.mubr.bf16.mxu0 0
  %3495 = vmatmul.mubr.bf16.gmra.mxu0 %v2252
  %v3496 = vpop.f32.mrf.mxu0
  %v3497 = vadd.f32 0.0, %v3496
  %v3498 = vpop.f32.mrf.mxu0
  %v3499 = vpop.f32.mrf.mxu0
  %v3500 = vadd.f32 0.0, %v3499
  %v3501 = vpop.f32.mrf.mxu0
  %3502 = vmatprep.mubr.bf16.mxu0 0
  %3503 = vmatmul.mubr.bf16.gmra.mxu0 %v2255
  %v3504 = vpop.f32.mrf.mxu0
  %v3505 = vadd.f32 0.0, %v3504
  %v3506 = vpop.f32.mrf.mxu0
  %v3507 = vpop.f32.mrf.mxu0
  %v3508 = vadd.f32 0.0, %v3507
  %v3509 = vpop.f32.mrf.mxu0
  %3510 = vmatprep.mubr.bf16.mxu0 0
  %3511 = vmatmul.mubr.bf16.gmra.mxu0 %v2258
  %v3512 = vpop.f32.mrf.mxu0
  %v3513 = vadd.f32 0.0, %v3512
  %v3514 = vpop.f32.mrf.mxu0
  %v3515 = vpop.f32.mrf.mxu0
  %v3516 = vadd.f32 0.0, %v3515
  %v3517 = vpop.f32.mrf.mxu0
  %3518 = vmatprep.mubr.bf16.mxu0 0
  %3519 = vmatmul.mubr.bf16.gmra.mxu0 %v2261
  %v3520 = vpop.f32.mrf.mxu0
  %v3521 = vadd.f32 0.0, %v3520
  %v3522 = vpop.f32.mrf.mxu0
  %v3523 = vpop.f32.mrf.mxu0
  %v3524 = vadd.f32 0.0, %v3523
  %v3525 = vpop.f32.mrf.mxu0
  %3526 = vmatprep.mubr.bf16.mxu0 0
  %3527 = vmatmul.mubr.bf16.gmra.mxu0 %v2264
  %v3528 = vpop.f32.mrf.mxu0
  %v3529 = vadd.f32 0.0, %v3528
  %v3530 = vpop.f32.mrf.mxu0
  %v3531 = vpop.f32.mrf.mxu0
  %v3532 = vadd.f32 0.0, %v3531
  %v3533 = vpop.f32.mrf.mxu0
  %3534 = vmatprep.mubr.bf16.mxu0 0
  %3535 = vmatmul.mubr.bf16.gmra.mxu0 %v2267
  %v3536 = vpop.f32.mrf.mxu0
  %v3537 = vadd.f32 0.0, %v3536
  %v3538 = vpop.f32.mrf.mxu0
  %v3539 = vpop.f32.mrf.mxu0
  %v3540 = vadd.f32 0.0, %v3539
  %v3541 = vpop.f32.mrf.mxu0
  %3542 = vmatprep.mubr.bf16.mxu0 0
  %3543 = vmatmul.mubr.bf16.gmra.mxu0 %v2270
  %v3544 = vpop.f32.mrf.mxu0
  %v3545 = vadd.f32 0.0, %v3544
  %v3546 = vpop.f32.mrf.mxu0
  %v3547 = vpop.f32.mrf.mxu0
  %v3548 = vadd.f32 0.0, %v3547
  %v3549 = vpop.f32.mrf.mxu0
  %3550 = vmatprep.mubr.bf16.mxu0 0
  %3551 = vmatmul.mubr.bf16.gmra.mxu0 %v2273
  %v3552 = vpop.f32.mrf.mxu0
  %v3553 = vadd.f32 0.0, %v3552
  %v3554 = vpop.f32.mrf.mxu0
  %v3555 = vpop.f32.mrf.mxu0
  %v3556 = vadd.f32 0.0, %v3555
  %v3557 = vpop.f32.mrf.mxu0
  %3558 = vmatprep.mubr.bf16.mxu0 0
  %3559 = vmatmul.mubr.bf16.gmra.mxu0 %v2276
  %v3560 = vpop.f32.mrf.mxu0
  %v3561 = vadd.f32 0.0, %v3560
  %v3562 = vpop.f32.mrf.mxu0
  %v3563 = vpop.f32.mrf.mxu0
  %v3564 = vadd.f32 0.0, %v3563
  %v3565 = vpop.f32.mrf.mxu0
  %3566 = vmatprep.mubr.bf16.mxu0 0
  %3567 = vmatmul.mubr.bf16.gmra.mxu0 %v2279
  %v3568 = vpop.f32.mrf.mxu0
  %v3569 = vadd.f32 0.0, %v3568
  %v3570 = vpop.f32.mrf.mxu0
  %v3571 = vpop.f32.mrf.mxu0
  %v3572 = vadd.f32 0.0, %v3571
  %v3573 = vpop.f32.mrf.mxu0
  %3574 = vmatprep.mubr.bf16.mxu0 0
  %3575 = vmatmul.mubr.bf16.gmra.mxu0 %v2282
  %v3576 = vpop.f32.mrf.mxu0
  %v3577 = vadd.f32 0.0, %v3576
  %v3578 = vpop.f32.mrf.mxu0
  %v3579 = vpop.f32.mrf.mxu0
  %v3580 = vadd.f32 0.0, %v3579
  %v3581 = vpop.f32.mrf.mxu0
  %3582 = vmatprep.mubr.bf16.mxu0 0
  %3583 = vmatmul.mubr.bf16.gmra.mxu0 %v2285
  %v3584 = vpop.f32.mrf.mxu0
  %v3585 = vadd.f32 0.0, %v3584
  %v3586 = vpop.f32.mrf.mxu0
  %v3587 = vpop.f32.mrf.mxu0
  %v3588 = vadd.f32 0.0, %v3587
  %v3589 = vpop.f32.mrf.mxu0
  %3590 = vmatprep.mubr.bf16.mxu0 0
  %3591 = vmatmul.mubr.bf16.gmra.mxu0 %v2288
  %v3592 = vpop.f32.mrf.mxu0
  %v3593 = vadd.f32 0.0, %v3592
  %v3594 = vpop.f32.mrf.mxu0
  %v3595 = vpop.f32.mrf.mxu0
  %v3596 = vadd.f32 0.0, %v3595
  %v3597 = vpop.f32.mrf.mxu0
  %3598 = vmatprep.mubr.bf16.mxu0 0
  %3599 = vmatmul.mubr.bf16.gmra.mxu0 %v2291
  %v3600 = vpop.f32.mrf.mxu0
  %v3601 = vadd.f32 0.0, %v3600
  %v3602 = vpop.f32.mrf.mxu0
  %v3603 = vpop.f32.mrf.mxu0
  %v3604 = vadd.f32 0.0, %v3603
  %v3605 = vpop.f32.mrf.mxu0
  %3606 = vmatprep.mubr.bf16.mxu0 0
  %3607 = vmatmul.mubr.bf16.gmra.mxu0 %v2294
  %v3608 = vpop.f32.mrf.mxu0
  %v3609 = vadd.f32 0.0, %v3608
  %v3610 = vpop.f32.mrf.mxu0
  %v3611 = vpop.f32.mrf.mxu0
  %v3612 = vadd.f32 0.0, %v3611
  %v3613 = vpop.f32.mrf.mxu0
  %3614 = vmatprep.mubr.bf16.mxu0 0
  %3615 = vmatmul.mubr.bf16.gmra.mxu0 %v2297
  %v3616 = vpop.f32.mrf.mxu0
  %v3617 = vadd.f32 0.0, %v3616
  %v3618 = vpop.f32.mrf.mxu0
  %v3619 = vpop.f32.mrf.mxu0
  %v3620 = vadd.f32 0.0, %v3619
  %v3621 = vpop.f32.mrf.mxu0
  %3622 = vmatprep.mubr.bf16.mxu0 0
  %3623 = vmatmul.mubr.bf16.gmra.mxu0 %v2300
  %v3624 = vpop.f32.mrf.mxu0
  %v3625 = vadd.f32 0.0, %v3624
  %v3626 = vpop.f32.mrf.mxu0
  %v3627 = vpop.f32.mrf.mxu0
  %v3628 = vadd.f32 0.0, %v3627
  %v3629 = vpop.f32.mrf.mxu0
  %3630 = vmatprep.mubr.bf16.mxu0 0
  %3631 = vmatmul.mubr.bf16.gmra.mxu0 %v2303
  %v3632 = vpop.f32.mrf.mxu0
  %v3633 = vadd.f32 0.0, %v3632
  %v3634 = vpop.f32.mrf.mxu0
  %v3635 = vpop.f32.mrf.mxu0
  %v3636 = vadd.f32 0.0, %v3635
  %v3637 = vpop.f32.mrf.mxu0
  %3638 = vmatprep.mubr.bf16.mxu0 0
  %3639 = vmatmul.mubr.bf16.gmra.mxu0 %v2306
  %v3640 = vpop.f32.mrf.mxu0
  %v3641 = vadd.f32 0.0, %v3640
  %v3642 = vpop.f32.mrf.mxu0
  %v3643 = vpop.f32.mrf.mxu0
  %v3644 = vadd.f32 0.0, %v3643
  %v3645 = vpop.f32.mrf.mxu0
  %3646 = vmatprep.mubr.bf16.mxu0 0
  %3647 = vmatmul.mubr.bf16.gmra.mxu0 %v2309
  %v3648 = vpop.f32.mrf.mxu0
  %v3649 = vadd.f32 0.0, %v3648
  %v3650 = vpop.f32.mrf.mxu0
  %v3651 = vpop.f32.mrf.mxu0
  %v3652 = vadd.f32 0.0, %v3651
  %v3653 = vpop.f32.mrf.mxu0
  %3654 = vmatprep.mubr.bf16.mxu0 0
  %3655 = vmatmul.mubr.bf16.gmra.mxu0 %v2312
  %v3656 = vpop.f32.mrf.mxu0
  %v3657 = vadd.f32 0.0, %v3656
  %v3658 = vpop.f32.mrf.mxu0
  %v3659 = vpop.f32.mrf.mxu0
  %v3660 = vadd.f32 0.0, %v3659
  %v3661 = vpop.f32.mrf.mxu0
  %3662 = vmatprep.mubr.bf16.mxu0 0
  %3663 = vmatmul.mubr.bf16.gmra.mxu0 %v2315
  %v3664 = vpop.f32.mrf.mxu0
  %v3665 = vadd.f32 0.0, %v3664
  %v3666 = vpop.f32.mrf.mxu0
  %v3667 = vpop.f32.mrf.mxu0
  %v3668 = vadd.f32 0.0, %v3667
  %v3669 = vpop.f32.mrf.mxu0
  %3670 = vmatprep.mubr.bf16.mxu0 0
  %3671 = vmatmul.mubr.bf16.gmra.mxu0 %v2318
  %v3672 = vpop.f32.mrf.mxu0
  %v3673 = vadd.f32 0.0, %v3672
  %v3674 = vpop.f32.mrf.mxu0
  %v3675 = vpop.f32.mrf.mxu0
  %v3676 = vadd.f32 0.0, %v3675
  %v3677 = vpop.f32.mrf.mxu0
  %3678 = vmatprep.mubr.bf16.mxu0 0
  %3679 = vmatmul.mubr.bf16.gmra.mxu0 %v2321
  %v3680 = vpop.f32.mrf.mxu0
  %v3681 = vadd.f32 0.0, %v3680
  %v3682 = vpop.f32.mrf.mxu0
  %v3683 = vpop.f32.mrf.mxu0
  %v3684 = vadd.f32 0.0, %v3683
  %v3685 = vpop.f32.mrf.mxu0
  %3686 = vmatprep.mubr.bf16.mxu0 0
  %3687 = vmatmul.mubr.bf16.gmra.mxu0 %v2324
  %v3688 = vpop.f32.mrf.mxu0
  %v3689 = vadd.f32 0.0, %v3688
  %v3690 = vpop.f32.mrf.mxu0
  %v3691 = vpop.f32.mrf.mxu0
  %v3692 = vadd.f32 0.0, %v3691
  %v3693 = vpop.f32.mrf.mxu0
  %3694 = vmatprep.mubr.bf16.mxu0 0
  %3695 = vmatmul.mubr.bf16.gmra.mxu0 %v2327
  %v3696 = vpop.f32.mrf.mxu0
  %v3697 = vadd.f32 0.0, %v3696
  %v3698 = vpop.f32.mrf.mxu0
  %v3699 = vpop.f32.mrf.mxu0
  %v3700 = vadd.f32 0.0, %v3699
  %v3701 = vpop.f32.mrf.mxu0
  %3702 = vmatprep.mubr.bf16.mxu0 0
  %3703 = vmatmul.mubr.bf16.gmra.mxu0 %v2330
  %v3704 = vpop.f32.mrf.mxu0
  %v3705 = vadd.f32 0.0, %v3704
  %v3706 = vpop.f32.mrf.mxu0
  %v3707 = vpop.f32.mrf.mxu0
  %v3708 = vadd.f32 0.0, %v3707
  %v3709 = vpop.f32.mrf.mxu0
  %3710 = vmatprep.mubr.bf16.mxu0 0
  %3711 = vmatmul.mubr.bf16.gmra.mxu0 %v2333
  %v3712 = vpop.f32.mrf.mxu0
  %v3713 = vadd.f32 0.0, %v3712
  %v3714 = vpop.f32.mrf.mxu0
  %v3715 = vpop.f32.mrf.mxu0
  %v3716 = vadd.f32 0.0, %v3715
  %v3717 = vpop.f32.mrf.mxu0
  %3718 = vmatprep.mubr.bf16.mxu0 0
  %3719 = vmatmul.mubr.bf16.gmra.mxu0 %v2336
  %v3720 = vpop.f32.mrf.mxu0
  %v3721 = vadd.f32 0.0, %v3720
  %v3722 = vpop.f32.mrf.mxu0
  %v3723 = vpop.f32.mrf.mxu0
  %v3724 = vadd.f32 0.0, %v3723
  %v3725 = vpop.f32.mrf.mxu0
  %3726 = vmatprep.mubr.bf16.mxu0 0
  %3727 = vmatmul.mubr.bf16.gmra.mxu0 %v2339
  %v3728 = vpop.f32.mrf.mxu0
  %v3729 = vadd.f32 0.0, %v3728
  %v3730 = vpop.f32.mrf.mxu0
  %v3731 = vpop.f32.mrf.mxu0
  %v3732 = vadd.f32 0.0, %v3731
  %v3733 = vpop.f32.mrf.mxu0
  %3734 = vmatprep.mubr.bf16.mxu0 0
  %3735 = vmatmul.mubr.bf16.gmra.mxu0 %v2342
  %v3736 = vpop.f32.mrf.mxu0
  %v3737 = vadd.f32 0.0, %v3736
  %v3738 = vpop.f32.mrf.mxu0
  %v3739 = vpop.f32.mrf.mxu0
  %v3740 = vadd.f32 0.0, %v3739
  %v3741 = vpop.f32.mrf.mxu0
  %3742 = vmatprep.mubr.bf16.mxu0 0
  %3743 = vmatmul.mubr.bf16.gmra.mxu0 %v2345
  %v3744 = vpop.f32.mrf.mxu0
  %v3745 = vadd.f32 0.0, %v3744
  %v3746 = vpop.f32.mrf.mxu0
  %v3747 = vpop.f32.mrf.mxu0
  %v3748 = vadd.f32 0.0, %v3747
  %v3749 = vpop.f32.mrf.mxu0
  %3750 = vmatprep.mubr.bf16.mxu0 0
  %3751 = vmatmul.mubr.bf16.gmra.mxu0 %v2348
  %v3752 = vpop.f32.mrf.mxu0
  %v3753 = vadd.f32 0.0, %v3752
  %v3754 = vpop.f32.mrf.mxu0
  %v3755 = vpop.f32.mrf.mxu0
  %v3756 = vadd.f32 0.0, %v3755
  %v3757 = vpop.f32.mrf.mxu0
  %3758 = vmatprep.mubr.bf16.mxu0 0
  %3759 = vmatmul.mubr.bf16.gmra.mxu0 %v2351
  %v3760 = vpop.f32.mrf.mxu0
  %v3761 = vadd.f32 0.0, %v3760
  %v3762 = vpop.f32.mrf.mxu0
  %v3763 = vpop.f32.mrf.mxu0
  %v3764 = vadd.f32 0.0, %v3763
  %v3765 = vpop.f32.mrf.mxu0
  %3766 = vmatprep.mubr.bf16.mxu0 0
  %3767 = vmatmul.mubr.bf16.gmra.mxu0 %v2354
  %v3768 = vpop.f32.mrf.mxu0
  %v3769 = vadd.f32 0.0, %v3768
  %v3770 = vpop.f32.mrf.mxu0
  %v3771 = vpop.f32.mrf.mxu0
  %v3772 = vadd.f32 0.0, %v3771
  %v3773 = vpop.f32.mrf.mxu0
  %3774 = vmatprep.mubr.bf16.mxu0 0
  %3775 = vmatmul.mubr.bf16.gmra.mxu0 %v2357
  %v3776 = vpop.f32.mrf.mxu0
  %v3777 = vadd.f32 0.0, %v3776
  %v3778 = vpop.f32.mrf.mxu0
  %v3779 = vpop.f32.mrf.mxu0
  %v3780 = vadd.f32 0.0, %v3779
  %v3781 = vpop.f32.mrf.mxu0
  %3782 = vmatprep.mubr.bf16.mxu0 0
  %3783 = vmatmul.mubr.bf16.gmra.mxu0 %v2360
  %v3784 = vpop.f32.mrf.mxu0
  %v3785 = vadd.f32 0.0, %v3784
  %v3786 = vpop.f32.mrf.mxu0
  %v3787 = vpop.f32.mrf.mxu0
  %v3788 = vadd.f32 0.0, %v3787
  %v3789 = vpop.f32.mrf.mxu0
  %3790 = vmatprep.mubr.bf16.mxu0 0
  %3791 = vmatmul.mubr.bf16.gmra.mxu0 %v2363
  %v3792 = vpop.f32.mrf.mxu0
  %v3793 = vadd.f32 0.0, %v3792
  %v3794 = vpop.f32.mrf.mxu0
  %v3795 = vpop.f32.mrf.mxu0
  %v3796 = vadd.f32 0.0, %v3795
  %v3797 = vpop.f32.mrf.mxu0
  %3798 = vmatprep.mubr.bf16.mxu0 0
  %3799 = vmatmul.mubr.bf16.gmra.mxu0 %v2366
  %v3800 = vpop.f32.mrf.mxu0
  %v3801 = vadd.f32 0.0, %v3800
  %v3802 = vpop.f32.mrf.mxu0
  %v3803 = vpop.f32.mrf.mxu0
  %v3804 = vadd.f32 0.0, %v3803
  %v3805 = vpop.f32.mrf.mxu0
  %3806 = vmatprep.mubr.bf16.mxu0 0
  %3807 = vmatmul.mubr.bf16.gmra.mxu0 %v2369
  %v3808 = vpop.f32.mrf.mxu0
  %v3809 = vadd.f32 0.0, %v3808
  %v3810 = vpop.f32.mrf.mxu0
  %v3811 = vpop.f32.mrf.mxu0
  %v3812 = vadd.f32 0.0, %v3811
  %v3813 = vpop.f32.mrf.mxu0
  %3814 = vmatprep.mubr.bf16.mxu0 0
  %3815 = vmatmul.mubr.bf16.gmra.mxu0 %v2372
  %v3816 = vpop.f32.mrf.mxu0
  %v3817 = vadd.f32 0.0, %v3816
  %v3818 = vpop.f32.mrf.mxu0
  %v3819 = vpop.f32.mrf.mxu0
  %v3820 = vadd.f32 0.0, %v3819
  %v3821 = vpop.f32.mrf.mxu0
  %3822 = vmatprep.mubr.bf16.mxu0 0
  %3823 = vmatmul.mubr.bf16.gmra.mxu0 %v2375
  %v3824 = vpop.f32.mrf.mxu0
  %v3825 = vadd.f32 0.0, %v3824
  %v3826 = vpop.f32.mrf.mxu0
  %v3827 = vpop.f32.mrf.mxu0
  %v3828 = vadd.f32 0.0, %v3827
  %v3829 = vpop.f32.mrf.mxu0
  %3830 = vmatprep.mubr.bf16.mxu0 0
  %3831 = vmatmul.mubr.bf16.gmra.mxu0 %v2378
  %v3832 = vpop.f32.mrf.mxu0
  %v3833 = vadd.f32 0.0, %v3832
  %v3834 = vpop.f32.mrf.mxu0
  %v3835 = vpop.f32.mrf.mxu0
  %v3836 = vadd.f32 0.0, %v3835
  %v3837 = vpop.f32.mrf.mxu0
  %3838 = vmatprep.mubr.bf16.mxu0 0
  %3839 = vmatmul.mubr.bf16.gmra.mxu0 %v2381
  %v3840 = vpop.f32.mrf.mxu0
  %v3841 = vadd.f32 0.0, %v3840
  %v3842 = vpop.f32.mrf.mxu0
  %v3843 = vpop.f32.mrf.mxu0
  %v3844 = vadd.f32 0.0, %v3843
  %v3845 = vpop.f32.mrf.mxu0
  %3846 = vmatprep.mubr.bf16.mxu0 0
  %3847 = vmatmul.mubr.bf16.gmra.mxu0 %v2384
  %v3848 = vpop.f32.mrf.mxu0
  %v3849 = vadd.f32 0.0, %v3848
  %v3850 = vpop.f32.mrf.mxu0
  %v3851 = vpop.f32.mrf.mxu0
  %v3852 = vadd.f32 0.0, %v3851
  %v3853 = vpop.f32.mrf.mxu0
  %3854 = vmatprep.mubr.bf16.mxu0 0
  %3855 = vmatmul.mubr.bf16.gmra.mxu0 %v2387
  %v3856 = vpop.f32.mrf.mxu0
  %v3857 = vadd.f32 0.0, %v3856
  %v3858 = vpop.f32.mrf.mxu0
  %v3859 = vpop.f32.mrf.mxu0
  %v3860 = vadd.f32 0.0, %v3859
  %v3861 = vpop.f32.mrf.mxu0
  %3862 = vmatprep.mubr.bf16.mxu0 0
  %3863 = vmatmul.mubr.bf16.gmra.mxu0 %v2390
  %v3864 = vpop.f32.mrf.mxu0
  %v3865 = vadd.f32 0.0, %v3864
  %v3866 = vpop.f32.mrf.mxu0
  %v3867 = vpop.f32.mrf.mxu0
  %v3868 = vadd.f32 0.0, %v3867
  %v3869 = vpop.f32.mrf.mxu0
  %3870 = vmatprep.mubr.bf16.mxu0 0
  %3871 = vmatmul.mubr.bf16.gmra.mxu0 %v2393
  %v3872 = vpop.f32.mrf.mxu0
  %v3873 = vadd.f32 0.0, %v3872
  %v3874 = vpop.f32.mrf.mxu0
  %v3875 = vpop.f32.mrf.mxu0
  %v3876 = vadd.f32 0.0, %v3875
  %v3877 = vpop.f32.mrf.mxu0
  %3878 = vmatprep.mubr.bf16.mxu0 0
  %3879 = vmatmul.mubr.bf16.gmra.mxu0 %v2396
  %v3880 = vpop.f32.mrf.mxu0
  %v3881 = vadd.f32 0.0, %v3880
  %v3882 = vpop.f32.mrf.mxu0
  %v3883 = vpop.f32.mrf.mxu0
  %v3884 = vadd.f32 0.0, %v3883
  %v3885 = vpop.f32.mrf.mxu0
  %3886 = vmatprep.mubr.bf16.mxu0 0
  %3887 = vmatmul.mubr.bf16.gmra.mxu0 %v2399
  %v3888 = vpop.f32.mrf.mxu0
  %v3889 = vadd.f32 0.0, %v3888
  %v3890 = vpop.f32.mrf.mxu0
  %v3891 = vpop.f32.mrf.mxu0
  %v3892 = vadd.f32 0.0, %v3891
  %v3893 = vpop.f32.mrf.mxu0
  %3894 = vmatprep.mubr.bf16.mxu0 0
  %3895 = vmatmul.mubr.bf16.gmra.mxu0 %v2402
  %v3896 = vpop.f32.mrf.mxu0
  %v3897 = vadd.f32 0.0, %v3896
  %v3898 = vpop.f32.mrf.mxu0
  %v3899 = vpop.f32.mrf.mxu0
  %v3900 = vadd.f32 0.0, %v3899
  %v3901 = vpop.f32.mrf.mxu0
  %3902 = vmatprep.mubr.bf16.mxu0 0
  %3903 = vmatmul.mubr.bf16.gmra.mxu0 %v2405
  %v3904 = vpop.f32.mrf.mxu0
  %v3905 = vadd.f32 0.0, %v3904
  %v3906 = vpop.f32.mrf.mxu0
  %v3907 = vpop.f32.mrf.mxu0
  %v3908 = vadd.f32 0.0, %v3907
  %v3909 = vpop.f32.mrf.mxu0
  %3910 = vmatprep.mubr.bf16.mxu0 0
  %3911 = vmatmul.mubr.bf16.gmra.mxu0 %v2408
  %v3912 = vpop.f32.mrf.mxu0
  %v3913 = vadd.f32 0.0, %v3912
  %v3914 = vpop.f32.mrf.mxu0
  %v3915 = vpop.f32.mrf.mxu0
  %v3916 = vadd.f32 0.0, %v3915
  %v3917 = vpop.f32.mrf.mxu0
  %3918 = vmatprep.mubr.bf16.mxu0 0
  %3919 = vmatmul.mubr.bf16.gmra.mxu0 %v2411
  %v3920 = vpop.f32.mrf.mxu0
  %v3921 = vadd.f32 0.0, %v3920
  %v3922 = vpop.f32.mrf.mxu0
  %v3923 = vpop.f32.mrf.mxu0
  %v3924 = vadd.f32 0.0, %v3923
  %v3925 = vpop.f32.mrf.mxu0
  %3926 = vmatprep.mubr.bf16.mxu0 0
  %3927 = vmatmul.mubr.bf16.gmra.mxu0 %v2414
  %v3928 = vpop.f32.mrf.mxu0
  %v3929 = vadd.f32 0.0, %v3928
  %v3930 = vpop.f32.mrf.mxu0
  %v3931 = vpop.f32.mrf.mxu0
  %v3932 = vadd.f32 0.0, %v3931
  %v3933 = vpop.f32.mrf.mxu0
  %3934 = vmatprep.mubr.bf16.mxu0 0
  %3935 = vmatmul.mubr.bf16.gmra.mxu0 %v2417
  %v3936 = vpop.f32.mrf.mxu0
  %v3937 = vadd.f32 0.0, %v3936
  %v3938 = vpop.f32.mrf.mxu0
  %v3939 = vpop.f32.mrf.mxu0
  %v3940 = vadd.f32 0.0, %v3939
  %v3941 = vpop.f32.mrf.mxu0
  %3942 = vmatprep.mubr.bf16.mxu0 0
  %3943 = vmatmul.mubr.bf16.gmra.mxu0 %v2420
  %v3944 = vpop.f32.mrf.mxu0
  %v3945 = vadd.f32 0.0, %v3944
  %v3946 = vpop.f32.mrf.mxu0
  %v3947 = vpop.f32.mrf.mxu0
  %v3948 = vadd.f32 0.0, %v3947
  %v3949 = vpop.f32.mrf.mxu0
  %3950 = vmatprep.mubr.bf16.mxu0 0
  %3951 = vmatmul.mubr.bf16.gmra.mxu0 %v2423
  %v3952 = vpop.f32.mrf.mxu0
  %v3953 = vadd.f32 0.0, %v3952
  %v3954 = vpop.f32.mrf.mxu0
  %v3955 = vpop.f32.mrf.mxu0
  %v3956 = vadd.f32 0.0, %v3955
  %v3957 = vpop.f32.mrf.mxu0
  %3958 = vmatprep.mubr.bf16.mxu0 0
  %3959 = vmatmul.mubr.bf16.gmra.mxu0 %v2426
  %v3960 = vpop.f32.mrf.mxu0
  %v3961 = vadd.f32 0.0, %v3960
  %v3962 = vpop.f32.mrf.mxu0
  %v3963 = vpop.f32.mrf.mxu0
  %v3964 = vadd.f32 0.0, %v3963
  %v3965 = vpop.f32.mrf.mxu0
  %3966 = vmatprep.mubr.bf16.mxu0 0
  %3967 = vmatmul.mubr.bf16.gmra.mxu0 %v2429
  %v3968 = vpop.f32.mrf.mxu0
  %v3969 = vadd.f32 0.0, %v3968
  %v3970 = vpop.f32.mrf.mxu0
  %v3971 = vpop.f32.mrf.mxu0
  %v3972 = vadd.f32 0.0, %v3971
  %v3973 = vpop.f32.mrf.mxu0
  %3974 = vmatprep.mubr.bf16.mxu0 0
  %3975 = vmatmul.mubr.bf16.gmra.mxu0 %v2432
  %v3976 = vpop.f32.mrf.mxu0
  %v3977 = vadd.f32 0.0, %v3976
  %v3978 = vpop.f32.mrf.mxu0
  %v3979 = vpop.f32.mrf.mxu0
  %v3980 = vadd.f32 0.0, %v3979
  %v3981 = vpop.f32.mrf.mxu0
  %3982 = vmatprep.mubr.bf16.mxu0 0
  %3983 = vmatmul.mubr.bf16.gmra.mxu0 %v2435
  %v3984 = vpop.f32.mrf.mxu0
  %v3985 = vadd.f32 0.0, %v3984
  %v3986 = vpop.f32.mrf.mxu0
  %v3987 = vpop.f32.mrf.mxu0
  %v3988 = vadd.f32 0.0, %v3987
  %v3989 = vpop.f32.mrf.mxu0
  %3990 = vmatprep.mubr.bf16.mxu0 0
  %3991 = vmatmul.mubr.bf16.gmra.mxu0 %v2438
  %v3992 = vpop.f32.mrf.mxu0
  %v3993 = vadd.f32 0.0, %v3992
  %v3994 = vpop.f32.mrf.mxu0
  %v3995 = vpop.f32.mrf.mxu0
  %v3996 = vadd.f32 0.0, %v3995
  %v3997 = vpop.f32.mrf.mxu0
  %3998 = vmatprep.mubr.bf16.mxu0 0
  %3999 = vmatmul.mubr.bf16.gmra.mxu0 %v2441
  %v4000 = vpop.f32.mrf.mxu0
  %v4001 = vadd.f32 0.0, %v4000
  %v4002 = vpop.f32.mrf.mxu0
  %v4003 = vpop.f32.mrf.mxu0
  %v4004 = vadd.f32 0.0, %v4003
  %v4005 = vpop.f32.mrf.mxu0
  %4006 = vmatprep.mubr.bf16.mxu0 0
  %4007 = vmatmul.mubr.bf16.gmra.mxu0 %v2444
  %v4008 = vpop.f32.mrf.mxu0
  %v4009 = vadd.f32 0.0, %v4008
  %v4010 = vpop.f32.mrf.mxu0
  %v4011 = vpop.f32.mrf.mxu0
  %v4012 = vadd.f32 0.0, %v4011
  %v4013 = vpop.f32.mrf.mxu0
  %4014 = vmatprep.mubr.bf16.mxu0 0
  %4015 = vmatmul.mubr.bf16.gmra.mxu0 %v2447
  %v4016 = vpop.f32.mrf.mxu0
  %v4017 = vadd.f32 0.0, %v4016
  %v4018 = vpop.f32.mrf.mxu0
  %v4019 = vpop.f32.mrf.mxu0
  %v4020 = vadd.f32 0.0, %v4019
  %v4021 = vpop.f32.mrf.mxu0
  %4022 = vmatprep.mubr.bf16.mxu0 0
  %4023 = vmatmul.mubr.bf16.gmra.mxu0 %v2450
  %v4024 = vpop.f32.mrf.mxu0
  %v4025 = vadd.f32 0.0, %v4024
  %v4026 = vpop.f32.mrf.mxu0
  %v4027 = vpop.f32.mrf.mxu0
  %v4028 = vadd.f32 0.0, %v4027
  %v4029 = vpop.f32.mrf.mxu0
  %4030 = vmatprep.mubr.bf16.mxu0 0
  %4031 = vmatmul.mubr.bf16.gmra.mxu0 %v2453
  %v4032 = vpop.f32.mrf.mxu0
  %v4033 = vadd.f32 0.0, %v4032
  %v4034 = vpop.f32.mrf.mxu0
  %v4035 = vpop.f32.mrf.mxu0
  %v4036 = vadd.f32 0.0, %v4035
  %v4037 = vpop.f32.mrf.mxu0
  %4038 = vmatprep.mubr.bf16.mxu0 0
  %4039 = vmatmul.mubr.bf16.gmra.mxu0 %v2456
  %v4040 = vpop.f32.mrf.mxu0
  %v4041 = vadd.f32 0.0, %v4040
  %v4042 = vpop.f32.mrf.mxu0
  %v4043 = vpop.f32.mrf.mxu0
  %v4044 = vadd.f32 0.0, %v4043
  %v4045 = vpop.f32.mrf.mxu0
  %4046 = vmatprep.mubr.bf16.mxu0 0
  %4047 = vmatmul.mubr.bf16.gmra.mxu0 %v2459
  %v4048 = vpop.f32.mrf.mxu0
  %v4049 = vadd.f32 0.0, %v4048
  %v4050 = vpop.f32.mrf.mxu0
  %v4051 = vpop.f32.mrf.mxu0
  %v4052 = vadd.f32 0.0, %v4051
  %v4053 = vpop.f32.mrf.mxu0
  %4054 = vmatprep.mubr.bf16.mxu0 0
  %4055 = vmatmul.mubr.bf16.gmra.mxu0 %v2462
  %v4056 = vpop.f32.mrf.mxu0
  %v4057 = vadd.f32 0.0, %v4056
  %v4058 = vpop.f32.mrf.mxu0
  %v4059 = vpop.f32.mrf.mxu0
  %v4060 = vadd.f32 0.0, %v4059
  %v4061 = vpop.f32.mrf.mxu0
  %4062 = vmatprep.mubr.bf16.mxu0 0
  %4063 = vmatmul.mubr.bf16.gmra.mxu0 %v2465
  %v4064 = vpop.f32.mrf.mxu0
  %v4065 = vadd.f32 0.0, %v4064
  %v4066 = vpop.f32.mrf.mxu0
  %v4067 = vpop.f32.mrf.mxu0
  %v4068 = vadd.f32 0.0, %v4067
  %v4069 = vpop.f32.mrf.mxu0
  %4070 = vmatprep.mubr.bf16.mxu0 0
  %4071 = vmatmul.mubr.bf16.gmra.mxu0 %v2468
  %v4072 = vpop.f32.mrf.mxu0
  %v4073 = vadd.f32 0.0, %v4072
  %v4074 = vpop.f32.mrf.mxu0
  %v4075 = vpop.f32.mrf.mxu0
  %v4076 = vadd.f32 0.0, %v4075
  %v4077 = vpop.f32.mrf.mxu0
  %4078 = vmatprep.mubr.bf16.mxu0 0
  %4079 = vmatmul.mubr.bf16.gmra.mxu0 %v2471
  %v4080 = vpop.f32.mrf.mxu0
  %v4081 = vadd.f32 0.0, %v4080
  %v4082 = vpop.f32.mrf.mxu0
  %v4083 = vpop.f32.mrf.mxu0
  %v4084 = vadd.f32 0.0, %v4083
  %v4085 = vpop.f32.mrf.mxu0
  %4086 = vmatprep.mubr.bf16.mxu0 0
  %4087 = vmatmul.mubr.bf16.gmra.mxu0 %v2474
  %v4088 = vpop.f32.mrf.mxu0
  %v4089 = vadd.f32 0.0, %v4088
  %v4090 = vpop.f32.mrf.mxu0
  %v4091 = vpop.f32.mrf.mxu0
  %v4092 = vadd.f32 0.0, %v4091
  %v4093 = vpop.f32.mrf.mxu0
  %4094 = vmatprep.mubr.bf16.mxu0 0
  %4095 = vmatmul.mubr.bf16.gmra.mxu0 %v2477
  %v4096 = vpop.f32.mrf.mxu0
  %v4097 = vadd.f32 0.0, %v4096
  %v4098 = vpop.f32.mrf.mxu0
  %v4099 = vpop.f32.mrf.mxu0
  %v4100 = vadd.f32 0.0, %v4099
  %v4101 = vpop.f32.mrf.mxu0
  %4102 = vmatprep.mubr.bf16.mxu0 0
  %4103 = vmatmul.mubr.bf16.gmra.mxu0 %v2480
  %v4104 = vpop.f32.mrf.mxu0
  %v4105 = vadd.f32 0.0, %v4104
  %v4106 = vpop.f32.mrf.mxu0
  %v4107 = vpop.f32.mrf.mxu0
  %v4108 = vadd.f32 0.0, %v4107
  %v4109 = vpop.f32.mrf.mxu0
  %4110 = vmatprep.mubr.bf16.mxu0 0
  %4111 = vmatmul.mubr.bf16.gmra.mxu0 %v2483
  %v4112 = vpop.f32.mrf.mxu0
  %v4113 = vadd.f32 0.0, %v4112
  %v4114 = vpop.f32.mrf.mxu0
  %v4115 = vpop.f32.mrf.mxu0
  %v4116 = vadd.f32 0.0, %v4115
  %v4117 = vpop.f32.mrf.mxu0
  %4118 = vmatprep.mubr.bf16.mxu0 0
  %4119 = vmatmul.mubr.bf16.gmra.mxu0 %v2486
  %v4120 = vpop.f32.mrf.mxu0
  %v4121 = vadd.f32 0.0, %v4120
  %v4122 = vpop.f32.mrf.mxu0
  %v4123 = vpop.f32.mrf.mxu0
  %v4124 = vadd.f32 0.0, %v4123
  %v4125 = vpop.f32.mrf.mxu0
  %4126 = vmatprep.mubr.bf16.mxu0 0
  %4127 = vmatmul.mubr.bf16.gmra.mxu0 %v2489
  %v4128 = vpop.f32.mrf.mxu0
  %v4129 = vadd.f32 0.0, %v4128
  %v4130 = vpop.f32.mrf.mxu0
  %v4131 = vpop.f32.mrf.mxu0
  %v4132 = vadd.f32 0.0, %v4131
  %v4133 = vpop.f32.mrf.mxu0
  %4134 = vmatprep.mubr.bf16.mxu0 0
  %4135 = vmatmul.mubr.bf16.gmra.mxu0 %v2492
  %v4136 = vpop.f32.mrf.mxu0
  %v4137 = vadd.f32 0.0, %v4136
  %v4138 = vpop.f32.mrf.mxu0
  %v4139 = vpop.f32.mrf.mxu0
  %v4140 = vadd.f32 0.0, %v4139
  %v4141 = vpop.f32.mrf.mxu0
  %4142 = vmatprep.mubr.bf16.mxu0 0
  %4143 = vmatmul.mubr.bf16.gmra.mxu0 %v2495
  %v4144 = vpop.f32.mrf.mxu0
  %v4145 = vadd.f32 0.0, %v4144
  %v4146 = vpop.f32.mrf.mxu0
  %v4147 = vpop.f32.mrf.mxu0
  %v4148 = vadd.f32 0.0, %v4147
  %v4149 = vpop.f32.mrf.mxu0
  %4150 = vmatprep.mubr.bf16.mxu0 0
  %4151 = vmatmul.mubr.bf16.gmra.mxu0 %v2498
  %v4152 = vpop.f32.mrf.mxu0
  %v4153 = vadd.f32 0.0, %v4152
  %v4154 = vpop.f32.mrf.mxu0
  %v4155 = vpop.f32.mrf.mxu0
  %v4156 = vadd.f32 0.0, %v4155
  %v4157 = vpop.f32.mrf.mxu0
  %4158 = vmatprep.mubr.bf16.mxu0 0
  %4159 = vmatmul.mubr.bf16.gmra.mxu0 %v2501
  %v4160 = vpop.f32.mrf.mxu0
  %v4161 = vadd.f32 0.0, %v4160
  %v4162 = vpop.f32.mrf.mxu0
  %v4163 = vpop.f32.mrf.mxu0
  %v4164 = vadd.f32 0.0, %v4163
  %v4165 = vpop.f32.mrf.mxu0
  %4166 = vmatprep.mubr.bf16.mxu0 0
  %4167 = vmatmul.mubr.bf16.gmra.mxu0 %v2504
  %v4168 = vpop.f32.mrf.mxu0
  %v4169 = vadd.f32 0.0, %v4168
  %v4170 = vpop.f32.mrf.mxu0
  %v4171 = vpop.f32.mrf.mxu0
  %v4172 = vadd.f32 0.0, %v4171
  %v4173 = vpop.f32.mrf.mxu0
  %4174 = vmatprep.mubr.bf16.mxu0 0
  %4175 = vmatmul.mubr.bf16.gmra.mxu0 %v2507
  %v4176 = vpop.f32.mrf.mxu0
  %v4177 = vadd.f32 0.0, %v4176
  %v4178 = vpop.f32.mrf.mxu0
  %v4179 = vpop.f32.mrf.mxu0
  %v4180 = vadd.f32 0.0, %v4179
  %v4181 = vpop.f32.mrf.mxu0
  %4182 = vmatprep.mubr.bf16.mxu0 0
  %4183 = vmatmul.mubr.bf16.gmra.mxu0 %v2510
  %v4184 = vpop.f32.mrf.mxu0
  %v4185 = vadd.f32 0.0, %v4184
  %v4186 = vpop.f32.mrf.mxu0
  %v4187 = vpop.f32.mrf.mxu0
  %v4188 = vadd.f32 0.0, %v4187
  %v4189 = vpop.f32.mrf.mxu0
  %4190 = vmatprep.mubr.bf16.mxu0 0
  %4191 = vmatmul.mubr.bf16.gmra.mxu0 %v2513
  %v4192 = vpop.f32.mrf.mxu0
  %v4193 = vadd.f32 0.0, %v4192
  %v4194 = vpop.f32.mrf.mxu0
  %v4195 = vpop.f32.mrf.mxu0
  %v4196 = vadd.f32 0.0, %v4195
  %v4197 = vpop.f32.mrf.mxu0
  %4198 = vmatprep.mubr.bf16.mxu0 0
  %4199 = vmatmul.mubr.bf16.gmra.mxu0 %v2516
  %v4200 = vpop.f32.mrf.mxu0
  %v4201 = vadd.f32 0.0, %v4200
  %v4202 = vpop.f32.mrf.mxu0
  %v4203 = vpop.f32.mrf.mxu0
  %v4204 = vadd.f32 0.0, %v4203
  %v4205 = vpop.f32.mrf.mxu0
  %4206 = vmatprep.mubr.bf16.mxu0 0
  %4207 = vmatmul.mubr.bf16.gmra.mxu0 %v2519
  %v4208 = vpop.f32.mrf.mxu0
  %v4209 = vadd.f32 0.0, %v4208
  %v4210 = vpop.f32.mrf.mxu0
  %v4211 = vpop.f32.mrf.mxu0
  %v4212 = vadd.f32 0.0, %v4211
  %v4213 = vpop.f32.mrf.mxu0
  %4214 = vmatprep.mubr.bf16.mxu0 0
  %4215 = vmatmul.mubr.bf16.gmra.mxu0 %v2522
  %v4216 = vpop.f32.mrf.mxu0
  %v4217 = vadd.f32 0.0, %v4216
  %v4218 = vpop.f32.mrf.mxu0
  %v4219 = vpop.f32.mrf.mxu0
  %v4220 = vadd.f32 0.0, %v4219
  %v4221 = vpop.f32.mrf.mxu0
  %4222 = vmatprep.mubr.bf16.mxu0 0
  %4223 = vmatmul.mubr.bf16.gmra.mxu0 %v2525
  %v4224 = vpop.f32.mrf.mxu0
  %v4225 = vadd.f32 0.0, %v4224
  %v4226 = vpop.f32.mrf.mxu0
  %v4227 = vpop.f32.mrf.mxu0
  %v4228 = vadd.f32 0.0, %v4227
  %v4229 = vpop.f32.mrf.mxu0
  %4230 = vmatprep.mubr.bf16.mxu0 0
  %4231 = vmatmul.mubr.bf16.gmra.mxu0 %v2528
  %v4232 = vpop.f32.mrf.mxu0
  %v4233 = vadd.f32 0.0, %v4232
  %v4234 = vpop.f32.mrf.mxu0
  %v4235 = vpop.f32.mrf.mxu0
  %v4236 = vadd.f32 0.0, %v4235
  %v4237 = vpop.f32.mrf.mxu0
  %4238 = vmatprep.mubr.bf16.mxu0 0
  %4239 = vmatmul.mubr.bf16.gmra.mxu0 %v2531
  %v4240 = vpop.f32.mrf.mxu0
  %v4241 = vadd.f32 0.0, %v4240
  %v4242 = vpop.f32.mrf.mxu0
  %v4243 = vpop.f32.mrf.mxu0
  %v4244 = vadd.f32 0.0, %v4243
  %v4245 = vpop.f32.mrf.mxu0
  %4246 = vmatprep.mubr.bf16.mxu0 0
  %4247 = vmatmul.mubr.bf16.gmra.mxu0 %v2534
  %v4248 = vpop.f32.mrf.mxu0
  %v4249 = vadd.f32 0.0, %v4248
  %v4250 = vpop.f32.mrf.mxu0
  %v4251 = vpop.f32.mrf.mxu0
  %v4252 = vadd.f32 0.0, %v4251
  %v4253 = vpop.f32.mrf.mxu0
  %4254 = vmatprep.mubr.bf16.mxu0 0
  %4255 = vmatmul.mubr.bf16.gmra.mxu0 %v2537
  %v4256 = vpop.f32.mrf.mxu0
  %v4257 = vadd.f32 0.0, %v4256
  %v4258 = vpop.f32.mrf.mxu0
  %v4259 = vpop.f32.mrf.mxu0
  %v4260 = vadd.f32 0.0, %v4259
  %v4261 = vpop.f32.mrf.mxu0
  %4262 = vmatprep.mubr.bf16.mxu0 0
  %4263 = vmatmul.mubr.bf16.gmra.mxu0 %v2540
  %v4264 = vpop.f32.mrf.mxu0
  %v4265 = vadd.f32 0.0, %v4264
  %v4266 = vpop.f32.mrf.mxu0
  %v4267 = vpop.f32.mrf.mxu0
  %v4268 = vadd.f32 0.0, %v4267
  %v4269 = vpop.f32.mrf.mxu0
  %4270 = vmatprep.mubr.bf16.mxu0 0
  %4271 = vmatmul.mubr.bf16.gmra.mxu0 %v2543
  %v4272 = vpop.f32.mrf.mxu0
  %v4273 = vadd.f32 0.0, %v4272
  %v4274 = vpop.f32.mrf.mxu0
  %v4275 = vpop.f32.mrf.mxu0
  %v4276 = vadd.f32 0.0, %v4275
  %v4277 = vpop.f32.mrf.mxu0
  %4278 = vmatprep.mubr.bf16.mxu0 0
  %4279 = vmatmul.mubr.bf16.gmra.mxu0 %v2546
  %v4280 = vpop.f32.mrf.mxu0
  %v4281 = vadd.f32 0.0, %v4280
  %v4282 = vpop.f32.mrf.mxu0
  %v4283 = vpop.f32.mrf.mxu0
  %v4284 = vadd.f32 0.0, %v4283
  %v4285 = vpop.f32.mrf.mxu0
  %4286 = vmatprep.mubr.bf16.mxu0 0
  %4287 = vmatmul.mubr.bf16.gmra.mxu0 %v2549
  %v4288 = vpop.f32.mrf.mxu0
  %v4289 = vadd.f32 0.0, %v4288
  %v4290 = vpop.f32.mrf.mxu0
  %v4291 = vpop.f32.mrf.mxu0
  %v4292 = vadd.f32 0.0, %v4291
  %v4293 = vpop.f32.mrf.mxu0
  %4294 = vmatprep.mubr.bf16.mxu0 0
  %4295 = vmatmul.mubr.bf16.gmra.mxu0 %v2552
  %v4296 = vpop.f32.mrf.mxu0
  %v4297 = vadd.f32 0.0, %v4296
  %v4298 = vpop.f32.mrf.mxu0
  %v4299 = vpop.f32.mrf.mxu0
  %v4300 = vadd.f32 0.0, %v4299
  %v4301 = vpop.f32.mrf.mxu0
  %4302 = vmatprep.mubr.bf16.mxu0 0
  %4303 = vmatmul.mubr.bf16.gmra.mxu0 %v2555
  %v4304 = vpop.f32.mrf.mxu0
  %v4305 = vadd.f32 0.0, %v4304
  %v4306 = vpop.f32.mrf.mxu0
  %v4307 = vpop.f32.mrf.mxu0
  %v4308 = vadd.f32 0.0, %v4307
  %v4309 = vpop.f32.mrf.mxu0
  %4310 = vmatprep.mubr.bf16.mxu0 0
  %4311 = vmatmul.mubr.bf16.gmra.mxu0 %v2558
  %v4312 = vpop.f32.mrf.mxu0
  %v4313 = vadd.f32 0.0, %v4312
  %v4314 = vpop.f32.mrf.mxu0
  %v4315 = vpop.f32.mrf.mxu0
  %v4316 = vadd.f32 0.0, %v4315
  %v4317 = vpop.f32.mrf.mxu0
  %4318 = vmatprep.mubr.bf16.mxu0 0
  %4319 = vmatmul.mubr.bf16.gmra.mxu0 %v2561
  %v4320 = vpop.f32.mrf.mxu0
  %v4321 = vadd.f32 0.0, %v4320
  %v4322 = vpop.f32.mrf.mxu0
  %v4323 = vpop.f32.mrf.mxu0
  %v4324 = vadd.f32 0.0, %v4323
  %v4325 = vpop.f32.mrf.mxu0
  %4326 = vmatprep.mubr.bf16.mxu0 0
  %4327 = vmatmul.mubr.bf16.gmra.mxu0 %v2564
  %v4328 = vpop.f32.mrf.mxu0
  %v4329 = vadd.f32 0.0, %v4328
  %v4330 = vpop.f32.mrf.mxu0
  %v4331 = vpop.f32.mrf.mxu0
  %v4332 = vadd.f32 0.0, %v4331
  %v4333 = vpop.f32.mrf.mxu0
  %4334 = vmatprep.mubr.bf16.mxu0 0
  %4335 = vmatmul.mubr.bf16.gmra.mxu0 %v2567
  %v4336 = vpop.f32.mrf.mxu0
  %v4337 = vadd.f32 0.0, %v4336
  %v4338 = vpop.f32.mrf.mxu0
  %v4339 = vpop.f32.mrf.mxu0
  %v4340 = vadd.f32 0.0, %v4339
  %v4341 = vpop.f32.mrf.mxu0
  %4342 = vmatprep.mubr.bf16.mxu0 0
  %4343 = vmatmul.mubr.bf16.gmra.mxu0 %v2570
  %v4344 = vpop.f32.mrf.mxu0
  %v4345 = vadd.f32 0.0, %v4344
  %v4346 = vpop.f32.mrf.mxu0
  %v4347 = vpop.f32.mrf.mxu0
  %v4348 = vadd.f32 0.0, %v4347
  %v4349 = vpop.f32.mrf.mxu0
  %4350 = vmatprep.mubr.bf16.mxu0 0
  %4351 = vmatmul.mubr.bf16.gmra.mxu0 %v2573
  %v4352 = vpop.f32.mrf.mxu0
  %v4353 = vadd.f32 0.0, %v4352
  %v4354 = vpop.f32.mrf.mxu0
  %v4355 = vpop.f32.mrf.mxu0
  %v4356 = vadd.f32 0.0, %v4355
  %v4357 = vpop.f32.mrf.mxu0
  %4358 = vmatprep.mubr.bf16.mxu0 0
  %4359 = vmatmul.mubr.bf16.gmra.mxu0 %v2576
  %v4360 = vpop.f32.mrf.mxu0
  %v4361 = vadd.f32 0.0, %v4360
  %v4362 = vpop.f32.mrf.mxu0
  %v4363 = vpop.f32.mrf.mxu0
  %v4364 = vadd.f32 0.0, %v4363
  %v4365 = vpop.f32.mrf.mxu0
  %4366 = vmatprep.mubr.bf16.mxu0 0
  %4367 = vmatmul.mubr.bf16.gmra.mxu0 %v2579
  %v4368 = vpop.f32.mrf.mxu0
  %v4369 = vadd.f32 0.0, %v4368
  %v4370 = vpop.f32.mrf.mxu0
  %v4371 = vpop.f32.mrf.mxu0
  %v4372 = vadd.f32 0.0, %v4371
  %v4373 = vpop.f32.mrf.mxu0
  %4374 = vmatprep.mubr.bf16.mxu0 0
  %4375 = vmatmul.mubr.bf16.gmra.mxu0 %v2582
  %v4376 = vpop.f32.mrf.mxu0
  %v4377 = vadd.f32 0.0, %v4376
  %v4378 = vpop.f32.mrf.mxu0
  %v4379 = vpop.f32.mrf.mxu0
  %v4380 = vadd.f32 0.0, %v4379
  %v4381 = vpop.f32.mrf.mxu0
  %4382 = vmatprep.mubr.bf16.mxu0 0
  %4383 = vmatmul.mubr.bf16.gmra.mxu0 %v2585
  %v4384 = vpop.f32.mrf.mxu0
  %v4385 = vadd.f32 0.0, %v4384
  %v4386 = vpop.f32.mrf.mxu0
  %v4387 = vpop.f32.mrf.mxu0
  %v4388 = vadd.f32 0.0, %v4387
  %v4389 = vpop.f32.mrf.mxu0
  %4390 = vmatprep.mubr.bf16.mxu0 0
  %4391 = vmatmul.mubr.bf16.gmra.mxu0 %v2588
  %v4392 = vpop.f32.mrf.mxu0
  %v4393 = vadd.f32 0.0, %v4392
  %v4394 = vpop.f32.mrf.mxu0
  %v4395 = vpop.f32.mrf.mxu0
  %v4396 = vadd.f32 0.0, %v4395
  %v4397 = vpop.f32.mrf.mxu0
  %4398 = vmatprep.mubr.bf16.mxu0 0
  %4399 = vmatmul.mubr.bf16.gmra.mxu0 %v2591
  %v4400 = vpop.f32.mrf.mxu0
  %v4401 = vadd.f32 0.0, %v4400
  %v4402 = vpop.f32.mrf.mxu0
  %v4403 = vpop.f32.mrf.mxu0
  %v4404 = vadd.f32 0.0, %v4403
  %v4405 = vpop.f32.mrf.mxu0
  %4406 = vmatprep.mubr.bf16.mxu0 0
  %4407 = vmatmul.mubr.bf16.gmra.mxu0 %v2594
  %v4408 = vpop.f32.mrf.mxu0
  %v4409 = vadd.f32 0.0, %v4408
  %v4410 = vpop.f32.mrf.mxu0
  %v4411 = vpop.f32.mrf.mxu0
  %v4412 = vadd.f32 0.0, %v4411
  %v4413 = vpop.f32.mrf.mxu0
  %4414 = vmatprep.mubr.bf16.mxu0 0
  %4415 = vmatmul.mubr.bf16.gmra.mxu0 %v2597
  %v4416 = vpop.f32.mrf.mxu0
  %v4417 = vadd.f32 0.0, %v4416
  %v4418 = vpop.f32.mrf.mxu0
  %v4419 = vpop.f32.mrf.mxu0
  %v4420 = vadd.f32 0.0, %v4419
  %v4421 = vpop.f32.mrf.mxu0
  %4422 = vmatprep.mubr.bf16.mxu0 0
  %4423 = vmatmul.mubr.bf16.gmra.mxu0 %v2600
  %v4424 = vpop.f32.mrf.mxu0
  %v4425 = vadd.f32 0.0, %v4424
  %v4426 = vpop.f32.mrf.mxu0
  %v4427 = vpop.f32.mrf.mxu0
  %v4428 = vadd.f32 0.0, %v4427
  %v4429 = vpop.f32.mrf.mxu0
  %4430 = vmatprep.mubr.bf16.mxu0 0
  %4431 = vmatmul.mubr.bf16.gmra.mxu0 %v2603
  %v4432 = vpop.f32.mrf.mxu0
  %v4433 = vadd.f32 0.0, %v4432
  %v4434 = vpop.f32.mrf.mxu0
  %v4435 = vpop.f32.mrf.mxu0
  %v4436 = vadd.f32 0.0, %v4435
  %v4437 = vpop.f32.mrf.mxu0
  %4438 = vmatprep.mubr.bf16.mxu0 0
  %4439 = vmatmul.mubr.bf16.gmra.mxu0 %v2606
  %v4440 = vpop.f32.mrf.mxu0
  %v4441 = vadd.f32 0.0, %v4440
  %v4442 = vpop.f32.mrf.mxu0
  %v4443 = vpop.f32.mrf.mxu0
  %v4444 = vadd.f32 0.0, %v4443
  %v4445 = vpop.f32.mrf.mxu0
  %4446 = vmatprep.mubr.bf16.mxu0 0
  %4447 = vmatmul.mubr.bf16.gmra.mxu0 %v2609
  %v4448 = vpop.f32.mrf.mxu0
  %v4449 = vadd.f32 0.0, %v4448
  %v4450 = vpop.f32.mrf.mxu0
  %v4451 = vpop.f32.mrf.mxu0
  %v4452 = vadd.f32 0.0, %v4451
  %v4453 = vpop.f32.mrf.mxu0
  %4454 = vmatprep.mubr.bf16.mxu0 0
  %4455 = vmatmul.mubr.bf16.gmra.mxu0 %v2612
  %v4456 = vpop.f32.mrf.mxu0
  %v4457 = vadd.f32 0.0, %v4456
  %v4458 = vpop.f32.mrf.mxu0
  %v4459 = vpop.f32.mrf.mxu0
  %v4460 = vadd.f32 0.0, %v4459
  %v4461 = vpop.f32.mrf.mxu0
  %4462 = vmatprep.mubr.bf16.mxu0 0
  %4463 = vmatmul.mubr.bf16.gmra.mxu0 %v2615
  %v4464 = vpop.f32.mrf.mxu0
  %v4465 = vadd.f32 0.0, %v4464
  %v4466 = vpop.f32.mrf.mxu0
  %v4467 = vpop.f32.mrf.mxu0
  %v4468 = vadd.f32 0.0, %v4467
  %v4469 = vpop.f32.mrf.mxu0
  %4470 = vmatprep.mubr.bf16.mxu0 0
  %4471 = vmatmul.mubr.bf16.gmra.mxu0 %v2618
  %v4472 = vpop.f32.mrf.mxu0
  %v4473 = vadd.f32 0.0, %v4472
  %v4474 = vpop.f32.mrf.mxu0
  %v4475 = vpop.f32.mrf.mxu0
  %v4476 = vadd.f32 0.0, %v4475
  %v4477 = vpop.f32.mrf.mxu0
  %4478 = vmatprep.mubr.bf16.mxu0 0
  %4479 = vmatmul.mubr.bf16.gmra.mxu0 %v2621
  %v4480 = vpop.f32.mrf.mxu0
  %v4481 = vadd.f32 0.0, %v4480
  %v4482 = vpop.f32.mrf.mxu0
  %v4483 = vpop.f32.mrf.mxu0
  %v4484 = vadd.f32 0.0, %v4483
  %v4485 = vpop.f32.mrf.mxu0
  %4486 = vmatprep.mubr.bf16.mxu0 0
  %4487 = vmatmul.mubr.bf16.gmra.mxu0 %v2624
  %v4488 = vpop.f32.mrf.mxu0
  %v4489 = vadd.f32 0.0, %v4488
  %v4490 = vpop.f32.mrf.mxu0
  %v4491 = vpop.f32.mrf.mxu0
  %v4492 = vadd.f32 0.0, %v4491
  %v4493 = vpop.f32.mrf.mxu0
  %4494 = vmatprep.mubr.bf16.mxu0 0
  %4495 = vmatmul.mubr.bf16.gmra.mxu0 %v2627
  %v4496 = vpop.f32.mrf.mxu0
  %v4497 = vadd.f32 0.0, %v4496
  %v4498 = vpop.f32.mrf.mxu0
  %v4499 = vpop.f32.mrf.mxu0
  %v4500 = vadd.f32 0.0, %v4499
  %v4501 = vpop.f32.mrf.mxu0
  %4502 = vmatprep.mubr.bf16.mxu0 0
  %4503 = vmatmul.mubr.bf16.gmra.mxu0 %v2630
  %v4504 = vpop.f32.mrf.mxu0
  %v4505 = vadd.f32 0.0, %v4504
  %v4506 = vpop.f32.mrf.mxu0
  %v4507 = vpop.f32.mrf.mxu0
  %v4508 = vadd.f32 0.0, %v4507
  %v4509 = vpop.f32.mrf.mxu0
  %4510 = vmatprep.mubr.bf16.mxu0 0
  %4511 = vmatmul.mubr.bf16.gmra.mxu0 %v2633
  %v4512 = vpop.f32.mrf.mxu0
  %v4513 = vadd.f32 0.0, %v4512
  %v4514 = vpop.f32.mrf.mxu0
  %v4515 = vpop.f32.mrf.mxu0
  %v4516 = vadd.f32 0.0, %v4515
  %v4517 = vpop.f32.mrf.mxu0
  %4518 = vmatprep.mubr.bf16.mxu0 0
  %4519 = vmatmul.mubr.bf16.gmra.mxu0 %v2636
  %v4520 = vpop.f32.mrf.mxu0
  %v4521 = vadd.f32 0.0, %v4520
  %v4522 = vpop.f32.mrf.mxu0
  %v4523 = vpop.f32.mrf.mxu0
  %v4524 = vadd.f32 0.0, %v4523
  %v4525 = vpop.f32.mrf.mxu0
  %4526 = vmatprep.mubr.bf16.mxu0 0
  %4527 = vmatmul.mubr.bf16.gmra.mxu0 %v2639
  %v4528 = vpop.f32.mrf.mxu0
  %v4529 = vadd.f32 0.0, %v4528
  %v4530 = vpop.f32.mrf.mxu0
  %v4531 = vpop.f32.mrf.mxu0
  %v4532 = vadd.f32 0.0, %v4531
  %v4533 = vpop.f32.mrf.mxu0
  %4534 = vmatprep.mubr.bf16.mxu0 0
  %4535 = vmatmul.mubr.bf16.gmra.mxu0 %v2642
  %v4536 = vpop.f32.mrf.mxu0
  %v4537 = vadd.f32 0.0, %v4536
  %v4538 = vpop.f32.mrf.mxu0
  %v4539 = vpop.f32.mrf.mxu0
  %v4540 = vadd.f32 0.0, %v4539
  %v4541 = vpop.f32.mrf.mxu0
  %4542 = vmatprep.mubr.bf16.mxu0 0
  %4543 = vmatmul.mubr.bf16.gmra.mxu0 %v2645
  %v4544 = vpop.f32.mrf.mxu0
  %v4545 = vadd.f32 0.0, %v4544
  %v4546 = vpop.f32.mrf.mxu0
  %v4547 = vpop.f32.mrf.mxu0
  %v4548 = vadd.f32 0.0, %v4547
  %v4549 = vpop.f32.mrf.mxu0
  %4550 = vmatprep.mubr.bf16.mxu0 0
  %4551 = vmatmul.mubr.bf16.gmra.mxu0 %v2648
  %v4552 = vpop.f32.mrf.mxu0
  %v4553 = vadd.f32 0.0, %v4552
  %v4554 = vpop.f32.mrf.mxu0
  %v4555 = vpop.f32.mrf.mxu0
  %v4556 = vadd.f32 0.0, %v4555
  %v4557 = vpop.f32.mrf.mxu0
  %4558 = vmatprep.mubr.bf16.mxu0 0
  %4559 = vmatmul.mubr.bf16.gmra.mxu0 %v2651
  %v4560 = vpop.f32.mrf.mxu0
  %v4561 = vadd.f32 0.0, %v4560
  %v4562 = vpop.f32.mrf.mxu0
  %v4563 = vpop.f32.mrf.mxu0
  %v4564 = vadd.f32 0.0, %v4563
  %v4565 = vpop.f32.mrf.mxu0
  %4566 = vmatprep.mubr.bf16.mxu0 0
  %4567 = vmatmul.mubr.bf16.gmra.mxu0 %v2654
  %v4568 = vpop.f32.mrf.mxu0
  %v4569 = vadd.f32 0.0, %v4568
  %v4570 = vpop.f32.mrf.mxu0
  %v4571 = vpop.f32.mrf.mxu0
  %v4572 = vadd.f32 0.0, %v4571
  %v4573 = vpop.f32.mrf.mxu0
  %4574 = vmatprep.mubr.bf16.mxu0 0
  %4575 = vmatmul.mubr.bf16.gmra.mxu0 %v2657
  %v4576 = vpop.f32.mrf.mxu0
  %v4577 = vadd.f32 0.0, %v4576
  %v4578 = vpop.f32.mrf.mxu0
  %v4579 = vpop.f32.mrf.mxu0
  %v4580 = vadd.f32 0.0, %v4579
  %v4581 = vpop.f32.mrf.mxu0
  %4582 = vmatprep.mubr.bf16.mxu0 0
  %4583 = vmatmul.mubr.bf16.gmra.mxu0 %v2660
  %v4584 = vpop.f32.mrf.mxu0
  %v4585 = vadd.f32 0.0, %v4584
  %v4586 = vpop.f32.mrf.mxu0
  %v4587 = vpop.f32.mrf.mxu0
  %v4588 = vadd.f32 0.0, %v4587
  %v4589 = vpop.f32.mrf.mxu0
  %4590 = vmatprep.mubr.bf16.mxu0 0
  %4591 = vmatmul.mubr.bf16.gmra.mxu0 %v2663
  %v4592 = vpop.f32.mrf.mxu0
  %v4593 = vadd.f32 0.0, %v4592
  %v4594 = vpop.f32.mrf.mxu0
  %v4595 = vpop.f32.mrf.mxu0
  %v4596 = vadd.f32 0.0, %v4595
  %v4597 = vpop.f32.mrf.mxu0
  %4598 = vmatprep.mubr.bf16.mxu0 0
  %4599 = vmatmul.mubr.bf16.gmra.mxu0 %v2666
  %v4600 = vpop.f32.mrf.mxu0
  %v4601 = vadd.f32 0.0, %v4600
  %v4602 = vpop.f32.mrf.mxu0
  %v4603 = vpop.f32.mrf.mxu0
  %v4604 = vadd.f32 0.0, %v4603
  %v4605 = vpop.f32.mrf.mxu0
  %4606 = vmatprep.mubr.bf16.mxu0 0
  %4607 = vmatmul.mubr.bf16.gmra.mxu0 %v2669
  %v4608 = vpop.f32.mrf.mxu0
  %v4609 = vadd.f32 0.0, %v4608
  %v4610 = vpop.f32.mrf.mxu0
  %v4611 = vpop.f32.mrf.mxu0
  %v4612 = vadd.f32 0.0, %v4611
  %v4613 = vpop.f32.mrf.mxu0
  %4614 = vmatprep.mubr.bf16.mxu0 0
  %4615 = vmatmul.mubr.bf16.gmra.mxu0 %v2672
  %v4616 = vpop.f32.mrf.mxu0
  %v4617 = vadd.f32 0.0, %v4616
  %v4618 = vpop.f32.mrf.mxu0
  %v4619 = vpop.f32.mrf.mxu0
  %v4620 = vadd.f32 0.0, %v4619
  %v4621 = vpop.f32.mrf.mxu0
  %4622 = vmatprep.mubr.bf16.mxu0 0
  %4623 = vmatmul.mubr.bf16.gmra.mxu0 %v2675
  %v4624 = vpop.f32.mrf.mxu0
  %v4625 = vadd.f32 0.0, %v4624
  %v4626 = vpop.f32.mrf.mxu0
  %v4627 = vpop.f32.mrf.mxu0
  %v4628 = vadd.f32 0.0, %v4627
  %v4629 = vpop.f32.mrf.mxu0
  %4630 = vmatprep.mubr.bf16.mxu0 0
  %4631 = vmatmul.mubr.bf16.gmra.mxu0 %v2678
  %v4632 = vpop.f32.mrf.mxu0
  %v4633 = vadd.f32 0.0, %v4632
  %v4634 = vpop.f32.mrf.mxu0
  %v4635 = vpop.f32.mrf.mxu0
  %v4636 = vadd.f32 0.0, %v4635
  %v4637 = vpop.f32.mrf.mxu0
  %4638 = vmatprep.mubr.bf16.mxu0 0
  %4639 = vmatmul.mubr.bf16.gmra.mxu0 %v2681
  %v4640 = vpop.f32.mrf.mxu0
  %v4641 = vadd.f32 0.0, %v4640
  %v4642 = vpop.f32.mrf.mxu0
  %v4643 = vpop.f32.mrf.mxu0
  %v4644 = vadd.f32 0.0, %v4643
  %v4645 = vpop.f32.mrf.mxu0
  %4646 = vmatprep.mubr.bf16.mxu0 0
  %4647 = vmatmul.mubr.bf16.gmra.mxu0 %v2684
  %v4648 = vpop.f32.mrf.mxu0
  %v4649 = vadd.f32 0.0, %v4648
  %v4650 = vpop.f32.mrf.mxu0
  %v4651 = vpop.f32.mrf.mxu0
  %v4652 = vadd.f32 0.0, %v4651
  %v4653 = vpop.f32.mrf.mxu0
  %4654 = vmatprep.mubr.bf16.mxu0 0
  %4655 = vmatmul.mubr.bf16.gmra.mxu0 %v2687
  %v4656 = vpop.f32.mrf.mxu0
  %v4657 = vadd.f32 0.0, %v4656
  %v4658 = vpop.f32.mrf.mxu0
  %v4659 = vpop.f32.mrf.mxu0
  %v4660 = vadd.f32 0.0, %v4659
  %v4661 = vpop.f32.mrf.mxu0
  %4662 = vmatprep.mubr.bf16.mxu0 0
  %4663 = vmatmul.mubr.bf16.gmra.mxu0 %v2690
  %v4664 = vpop.f32.mrf.mxu0
  %v4665 = vadd.f32 0.0, %v4664
  %v4666 = vpop.f32.mrf.mxu0
  %v4667 = vpop.f32.mrf.mxu0
  %v4668 = vadd.f32 0.0, %v4667
  %v4669 = vpop.f32.mrf.mxu0
  %4670 = vmatprep.mubr.bf16.mxu0 0
  %4671 = vmatmul.mubr.bf16.gmra.mxu0 %v2693
  %v4672 = vpop.f32.mrf.mxu0
  %v4673 = vadd.f32 0.0, %v4672
  %v4674 = vpop.f32.mrf.mxu0
  %v4675 = vpop.f32.mrf.mxu0
  %v4676 = vadd.f32 0.0, %v4675
  %v4677 = vpop.f32.mrf.mxu0
  %4678 = vmatprep.mubr.bf16.mxu0 0
  %4679 = vmatmul.mubr.bf16.gmra.mxu0 %v2696
  %v4680 = vpop.f32.mrf.mxu0
  %v4681 = vadd.f32 0.0, %v4680
  %v4682 = vpop.f32.mrf.mxu0
  %v4683 = vpop.f32.mrf.mxu0
  %v4684 = vadd.f32 0.0, %v4683
  %v4685 = vpop.f32.mrf.mxu0
  %4686 = vmatprep.mubr.bf16.mxu0 0
  %4687 = vmatmul.mubr.bf16.gmra.mxu0 %v2699
  %v4688 = vpop.f32.mrf.mxu0
  %v4689 = vadd.f32 0.0, %v4688
  %v4690 = vpop.f32.mrf.mxu0
  %v4691 = vpop.f32.mrf.mxu0
  %v4692 = vadd.f32 0.0, %v4691
  %v4693 = vpop.f32.mrf.mxu0
  %4694 = vmatprep.mubr.bf16.mxu0 0
  %4695 = vmatmul.mubr.bf16.gmra.mxu0 %v2702
  %v4696 = vpop.f32.mrf.mxu0
  %v4697 = vadd.f32 0.0, %v4696
  %v4698 = vpop.f32.mrf.mxu0
  %v4699 = vpop.f32.mrf.mxu0
  %v4700 = vadd.f32 0.0, %v4699
  %v4701 = vpop.f32.mrf.mxu0
  %4702 = vmatprep.mubr.bf16.mxu0 0
  %4703 = vmatmul.mubr.bf16.gmra.mxu0 %v2705
  %v4704 = vpop.f32.mrf.mxu0
  %v4705 = vadd.f32 0.0, %v4704
  %v4706 = vpop.f32.mrf.mxu0
  %v4707 = vpop.f32.mrf.mxu0
  %v4708 = vadd.f32 0.0, %v4707
  %v4709 = vpop.f32.mrf.mxu0
  %4710 = vmatprep.mubr.bf16.mxu0 0
  %4711 = vmatmul.mubr.bf16.gmra.mxu0 %v2708
  %v4712 = vpop.f32.mrf.mxu0
  %v4713 = vadd.f32 0.0, %v4712
  %v4714 = vpop.f32.mrf.mxu0
  %v4715 = vpop.f32.mrf.mxu0
  %v4716 = vadd.f32 0.0, %v4715
  %v4717 = vpop.f32.mrf.mxu0
  %4718 = vmatprep.mubr.bf16.mxu0 0
  %4719 = vmatmul.mubr.bf16.gmra.mxu0 %v2711
  %v4720 = vpop.f32.mrf.mxu0
  %v4721 = vadd.f32 0.0, %v4720
  %v4722 = vpop.f32.mrf.mxu0
  %v4723 = vpop.f32.mrf.mxu0
  %v4724 = vadd.f32 0.0, %v4723
  %v4725 = vpop.f32.mrf.mxu0
  %4726 = vmatprep.mubr.bf16.mxu0 0
  %4727 = vmatmul.mubr.bf16.gmra.mxu0 %v2714
  %v4728 = vpop.f32.mrf.mxu0
  %v4729 = vadd.f32 0.0, %v4728
  %v4730 = vpop.f32.mrf.mxu0
  %v4731 = vpop.f32.mrf.mxu0
  %v4732 = vadd.f32 0.0, %v4731
  %v4733 = vpop.f32.mrf.mxu0
  %4734 = vmatprep.mubr.bf16.mxu0 0
  %4735 = vmatmul.mubr.bf16.gmra.mxu0 %v2717
  %v4736 = vpop.f32.mrf.mxu0
  %v4737 = vadd.f32 0.0, %v4736
  %v4738 = vpop.f32.mrf.mxu0
  %v4739 = vpop.f32.mrf.mxu0
  %v4740 = vadd.f32 0.0, %v4739
  %v4741 = vpop.f32.mrf.mxu0
  %4742 = vmatprep.mubr.bf16.mxu0 0
  %4743 = vmatmul.mubr.bf16.gmra.mxu0 %v2720
  %v4744 = vpop.f32.mrf.mxu0
  %v4745 = vadd.f32 0.0, %v4744
  %v4746 = vpop.f32.mrf.mxu0
  %v4747 = vpop.f32.mrf.mxu0
  %v4748 = vadd.f32 0.0, %v4747
  %v4749 = vpop.f32.mrf.mxu0
  %4750 = vmatprep.mubr.bf16.mxu0 0
  %4751 = vmatmul.mubr.bf16.gmra.mxu0 %v2723
  %v4752 = vpop.f32.mrf.mxu0
  %v4753 = vadd.f32 0.0, %v4752
  %v4754 = vpop.f32.mrf.mxu0
  %v4755 = vpop.f32.mrf.mxu0
  %v4756 = vadd.f32 0.0, %v4755
  %v4757 = vpop.f32.mrf.mxu0
  %4758 = vmatprep.mubr.bf16.mxu0 0
  %4759 = vmatmul.mubr.bf16.gmra.mxu0 %v2726
  %v4760 = vpop.f32.mrf.mxu0
  %v4761 = vadd.f32 0.0, %v4760
  %v4762 = vpop.f32.mrf.mxu0
  %v4763 = vpop.f32.mrf.mxu0
  %v4764 = vadd.f32 0.0, %v4763
  %v4765 = vpop.f32.mrf.mxu0
  %4766 = vmatprep.mubr.bf16.mxu0 0
  %4767 = vmatmul.mubr.bf16.gmra.mxu0 %v2729
  %v4768 = vpop.f32.mrf.mxu0
  %v4769 = vadd.f32 0.0, %v4768
  %v4770 = vpop.f32.mrf.mxu0
  %v4771 = vpop.f32.mrf.mxu0
  %v4772 = vadd.f32 0.0, %v4771
  %v4773 = vpop.f32.mrf.mxu0
  %4774 = vmatprep.mubr.bf16.mxu0 0
  %4775 = vmatmul.mubr.bf16.gmra.mxu0 %v2732
  %v4776 = vpop.f32.mrf.mxu0
  %v4777 = vadd.f32 0.0, %v4776
  %v4778 = vpop.f32.mrf.mxu0
  %v4779 = vpop.f32.mrf.mxu0
  %v4780 = vadd.f32 0.0, %v4779
  %v4781 = vpop.f32.mrf.mxu0
  %4782 = vmatprep.mubr.bf16.mxu0 0
  %4783 = vmatmul.mubr.bf16.gmra.mxu0 %v2735
  %v4784 = vpop.f32.mrf.mxu0
  %v4785 = vadd.f32 0.0, %v4784
  %v4786 = vpop.f32.mrf.mxu0
  %v4787 = vpop.f32.mrf.mxu0
  %v4788 = vadd.f32 0.0, %v4787
  %v4789 = vpop.f32.mrf.mxu0
  %4790 = vmatprep.mubr.bf16.mxu0 0
  %4791 = vmatmul.mubr.bf16.gmra.mxu0 %v2738
  %v4792 = vpop.f32.mrf.mxu0
  %v4793 = vadd.f32 0.0, %v4792
  %v4794 = vpop.f32.mrf.mxu0
  %v4795 = vpop.f32.mrf.mxu0
  %v4796 = vadd.f32 0.0, %v4795
  %v4797 = vpop.f32.mrf.mxu0
  %4798 = vmatprep.mubr.bf16.mxu0 0
  %4799 = vmatmul.mubr.bf16.gmra.mxu0 %v2741
  %v4800 = vpop.f32.mrf.mxu0
  %v4801 = vadd.f32 0.0, %v4800
  %v4802 = vpop.f32.mrf.mxu0
  %v4803 = vpop.f32.mrf.mxu0
  %v4804 = vadd.f32 0.0, %v4803
  %v4805 = vpop.f32.mrf.mxu0
  %4806 = vmatprep.mubr.bf16.mxu0 0
  %4807 = vmatmul.mubr.bf16.gmra.mxu0 %v2744
  %v4808 = vpop.f32.mrf.mxu0
  %v4809 = vadd.f32 0.0, %v4808
  %v4810 = vpop.f32.mrf.mxu0
  %v4811 = vpop.f32.mrf.mxu0
  %v4812 = vadd.f32 0.0, %v4811
  %v4813 = vpop.f32.mrf.mxu0
  %4814 = vmatprep.mubr.bf16.mxu0 0
  %4815 = vmatmul.mubr.bf16.gmra.mxu0 %v2747
  %v4816 = vpop.f32.mrf.mxu0
  %v4817 = vadd.f32 0.0, %v4816
  %v4818 = vpop.f32.mrf.mxu0
  %v4819 = vpop.f32.mrf.mxu0
  %v4820 = vadd.f32 0.0, %v4819
  %v4821 = vpop.f32.mrf.mxu0
  %4822 = vmatprep.mubr.bf16.mxu0 0
  %4823 = vmatmul.mubr.bf16.gmra.mxu0 %v2750
  %v4824 = vpop.f32.mrf.mxu0
  %v4825 = vadd.f32 0.0, %v4824
  %v4826 = vpop.f32.mrf.mxu0
  %v4827 = vpop.f32.mrf.mxu0
  %v4828 = vadd.f32 0.0, %v4827
  %v4829 = vpop.f32.mrf.mxu0
  %4830 = vmatprep.mubr.bf16.mxu0 0
  %4831 = vmatmul.mubr.bf16.gmra.mxu0 %v2753
  %v4832 = vpop.f32.mrf.mxu0
  %v4833 = vadd.f32 0.0, %v4832
  %v4834 = vpop.f32.mrf.mxu0
  %v4835 = vpop.f32.mrf.mxu0
  %v4836 = vadd.f32 0.0, %v4835
  %v4837 = vpop.f32.mrf.mxu0
  %4838 = vmatprep.mubr.bf16.mxu0 0
  %4839 = vmatmul.mubr.bf16.gmra.mxu0 %v2756
  %v4840 = vpop.f32.mrf.mxu0
  %v4841 = vadd.f32 0.0, %v4840
  %v4842 = vpop.f32.mrf.mxu0
  %v4843 = vpop.f32.mrf.mxu0
  %v4844 = vadd.f32 0.0, %v4843
  %v4845 = vpop.f32.mrf.mxu0
  %4846 = vmatprep.mubr.bf16.mxu0 0
  %4847 = vmatmul.mubr.bf16.gmra.mxu0 %v2759
  %v4848 = vpop.f32.mrf.mxu0
  %v4849 = vadd.f32 0.0, %v4848
  %v4850 = vpop.f32.mrf.mxu0
  %v4851 = vpop.f32.mrf.mxu0
  %v4852 = vadd.f32 0.0, %v4851
  %v4853 = vpop.f32.mrf.mxu0
  %4854 = vmatprep.mubr.bf16.mxu0 0
  %4855 = vmatmul.mubr.bf16.gmra.mxu0 %v2762
  %v4856 = vpop.f32.mrf.mxu0
  %v4857 = vadd.f32 0.0, %v4856
  %v4858 = vpop.f32.mrf.mxu0
  %v4859 = vpop.f32.mrf.mxu0
  %v4860 = vadd.f32 0.0, %v4859
  %v4861 = vpop.f32.mrf.mxu0
  %4862 = vmatprep.mubr.bf16.mxu0 0
  %4863 = vmatmul.mubr.bf16.gmra.mxu0 %v2765
  %v4864 = vpop.f32.mrf.mxu0
  %v4865 = vadd.f32 0.0, %v4864
  %v4866 = vpop.f32.mrf.mxu0
  %v4867 = vpop.f32.mrf.mxu0
  %v4868 = vadd.f32 0.0, %v4867
  %v4869 = vpop.f32.mrf.mxu0
  %4870 = vmatprep.mubr.bf16.mxu0 0
  %4871 = vmatmul.mubr.bf16.gmra.mxu0 %v2768
  %v4872 = vpop.f32.mrf.mxu0
  %v4873 = vadd.f32 0.0, %v4872
  %v4874 = vpop.f32.mrf.mxu0
  %v4875 = vpop.f32.mrf.mxu0
  %v4876 = vadd.f32 0.0, %v4875
  %v4877 = vpop.f32.mrf.mxu0
  %4878 = vmatprep.mubr.bf16.mxu0 0
  %4879 = vmatmul.mubr.bf16.gmra.mxu0 %v2771
  %v4880 = vpop.f32.mrf.mxu0
  %v4881 = vadd.f32 0.0, %v4880
  %v4882 = vpop.f32.mrf.mxu0
  %v4883 = vpop.f32.mrf.mxu0
  %v4884 = vadd.f32 0.0, %v4883
  %v4885 = vpop.f32.mrf.mxu0
  %4886 = vmatprep.mubr.bf16.mxu0 0
  %4887 = vmatmul.mubr.bf16.gmra.mxu0 %v2774
  %v4888 = vpop.f32.mrf.mxu0
  %v4889 = vadd.f32 0.0, %v4888
  %v4890 = vpop.f32.mrf.mxu0
  %v4891 = vpop.f32.mrf.mxu0
  %v4892 = vadd.f32 0.0, %v4891
  %v4893 = vpop.f32.mrf.mxu0
  %4894 = vmatprep.mubr.bf16.mxu0 0
  %4895 = vmatmul.mubr.bf16.gmra.mxu0 %v2777
  %v4896 = vpop.f32.mrf.mxu0
  %v4897 = vadd.f32 0.0, %v4896
  %v4898 = vpop.f32.mrf.mxu0
  %v4899 = vpop.f32.mrf.mxu0
  %v4900 = vadd.f32 0.0, %v4899
  %v4901 = vpop.f32.mrf.mxu0
  %4902 = vmatprep.mubr.bf16.mxu0 0
  %4903 = vmatmul.mubr.bf16.gmra.mxu0 %v2780
  %v4904 = vpop.f32.mrf.mxu0
  %v4905 = vadd.f32 0.0, %v4904
  %v4906 = vpop.f32.mrf.mxu0
  %v4907 = vpop.f32.mrf.mxu0
  %v4908 = vadd.f32 0.0, %v4907
  %v4909 = vpop.f32.mrf.mxu0
  %4910 = vmatprep.mubr.bf16.mxu0 0
  %4911 = vmatmul.mubr.bf16.gmra.mxu0 %v2783
  %v4912 = vpop.f32.mrf.mxu0
  %v4913 = vadd.f32 0.0, %v4912
  %v4914 = vpop.f32.mrf.mxu0
  %v4915 = vpop.f32.mrf.mxu0
  %v4916 = vadd.f32 0.0, %v4915
  %v4917 = vpop.f32.mrf.mxu0
  %4918 = vmatprep.mubr.bf16.mxu0 0
  %4919 = vmatmul.mubr.bf16.gmra.mxu0 %v2786
  %v4920 = vpop.f32.mrf.mxu0
  %v4921 = vadd.f32 0.0, %v4920
  %v4922 = vpop.f32.mrf.mxu0
  %v4923 = vpop.f32.mrf.mxu0
  %v4924 = vadd.f32 0.0, %v4923
  %v4925 = vpop.f32.mrf.mxu0
  %4926 = vmatprep.mubr.bf16.mxu0 0
  %4927 = vmatmul.mubr.bf16.gmra.mxu0 %v2789
  %v4928 = vpop.f32.mrf.mxu0
  %v4929 = vadd.f32 0.0, %v4928
  %v4930 = vpop.f32.mrf.mxu0
  %v4931 = vpop.f32.mrf.mxu0
  %v4932 = vadd.f32 0.0, %v4931
  %v4933 = vpop.f32.mrf.mxu0
  %4934 = vmatprep.mubr.bf16.mxu0 0
  %4935 = vmatmul.mubr.bf16.gmra.mxu0 %v2792
  %v4936 = vpop.f32.mrf.mxu0
  %v4937 = vadd.f32 0.0, %v4936
  %v4938 = vpop.f32.mrf.mxu0
  %v4939 = vpop.f32.mrf.mxu0
  %v4940 = vadd.f32 0.0, %v4939
  %v4941 = vpop.f32.mrf.mxu0
  %4942 = vmatprep.mubr.bf16.mxu0 0
  %4943 = vmatmul.mubr.bf16.gmra.mxu0 %v2795
  %v4944 = vpop.f32.mrf.mxu0
  %v4945 = vadd.f32 0.0, %v4944
  %v4946 = vpop.f32.mrf.mxu0
  %v4947 = vpop.f32.mrf.mxu0
  %v4948 = vadd.f32 0.0, %v4947
  %v4949 = vpop.f32.mrf.mxu0
  %4950 = vmatprep.mubr.bf16.mxu0 0
  %4951 = vmatmul.mubr.bf16.gmra.mxu0 %v2798
  %v4952 = vpop.f32.mrf.mxu0
  %v4953 = vadd.f32 0.0, %v4952
  %v4954 = vpop.f32.mrf.mxu0
  %v4955 = vpop.f32.mrf.mxu0
  %v4956 = vadd.f32 0.0, %v4955
  %v4957 = vpop.f32.mrf.mxu0
  %4958 = vmatprep.mubr.bf16.mxu0 0
  %4959 = vmatmul.mubr.bf16.gmra.mxu0 %v2801
  %v4960 = vpop.f32.mrf.mxu0
  %v4961 = vadd.f32 0.0, %v4960
  %v4962 = vpop.f32.mrf.mxu0
  %v4963 = vpop.f32.mrf.mxu0
  %v4964 = vadd.f32 0.0, %v4963
  %v4965 = vpop.f32.mrf.mxu0
  %4966 = vmatprep.mubr.bf16.mxu0 0
  %4967 = vmatmul.mubr.bf16.gmra.mxu0 %v2804
  %v4968 = vpop.f32.mrf.mxu0
  %v4969 = vadd.f32 0.0, %v4968
  %v4970 = vpop.f32.mrf.mxu0
  %v4971 = vpop.f32.mrf.mxu0
  %v4972 = vadd.f32 0.0, %v4971
  %v4973 = vpop.f32.mrf.mxu0
  %4974 = vmatprep.mubr.bf16.mxu0 0
  %4975 = vmatmul.mubr.bf16.gmra.mxu0 %v2807
  %v4976 = vpop.f32.mrf.mxu0
  %v4977 = vadd.f32 0.0, %v4976
  %v4978 = vpop.f32.mrf.mxu0
  %v4979 = vpop.f32.mrf.mxu0
  %v4980 = vadd.f32 0.0, %v4979
  %v4981 = vpop.f32.mrf.mxu0
  %4982 = vmatprep.mubr.bf16.mxu0 0
  %4983 = vmatmul.mubr.bf16.gmra.mxu0 %v2810
  %v4984 = vpop.f32.mrf.mxu0
  %v4985 = vadd.f32 0.0, %v4984
  %v4986 = vpop.f32.mrf.mxu0
  %v4987 = vpop.f32.mrf.mxu0
  %v4988 = vadd.f32 0.0, %v4987
  %v4989 = vpop.f32.mrf.mxu0
  %4990 = vmatprep.mubr.bf16.mxu0 0
  %4991 = vmatmul.mubr.bf16.gmra.mxu0 %v2813
  %v4992 = vpop.f32.mrf.mxu0
  %v4993 = vadd.f32 0.0, %v4992
  %v4994 = vpop.f32.mrf.mxu0
  %v4995 = vpop.f32.mrf.mxu0
  %v4996 = vadd.f32 0.0, %v4995
  %v4997 = vpop.f32.mrf.mxu0
  %4998 = vmatprep.mubr.bf16.mxu0 0
  %4999 = vmatmul.mubr.bf16.gmra.mxu0 %v2816
  %v5000 = vpop.f32.mrf.mxu0
  %v5001 = vadd.f32 0.0, %v5000
  %v5002 = vpop.f32.mrf.mxu0
  %v5003 = vpop.f32.mrf.mxu0
  %v5004 = vadd.f32 0.0, %v5003
  %v5005 = vpop.f32.mrf.mxu0
  %5006 = vmatprep.mubr.bf16.mxu0 0
  %5007 = vmatmul.mubr.bf16.gmra.mxu0 %v2819
  %v5008 = vpop.f32.mrf.mxu0
  %v5009 = vadd.f32 0.0, %v5008
  %v5010 = vpop.f32.mrf.mxu0
  %v5011 = vpop.f32.mrf.mxu0
  %v5012 = vadd.f32 0.0, %v5011
  %v5013 = vpop.f32.mrf.mxu0
  %5014 = vmatprep.mubr.bf16.mxu0 0
  %5015 = vmatmul.mubr.bf16.gmra.mxu0 %v2822
  %v5016 = vpop.f32.mrf.mxu0
  %v5017 = vadd.f32 0.0, %v5016
  %v5018 = vpop.f32.mrf.mxu0
  %v5019 = vpop.f32.mrf.mxu0
  %v5020 = vadd.f32 0.0, %v5019
  %v5021 = vpop.f32.mrf.mxu0
  %5022 = vmatprep.mubr.bf16.mxu0 0
  %5023 = vmatmul.mubr.bf16.gmra.mxu0 %v2825
  %v5024 = vpop.f32.mrf.mxu0
  %v5025 = vadd.f32 0.0, %v5024
  %v5026 = vpop.f32.mrf.mxu0
  %v5027 = vpop.f32.mrf.mxu0
  %v5028 = vadd.f32 0.0, %v5027
  %v5029 = vpop.f32.mrf.mxu0
  %5030 = vmatprep.mubr.bf16.mxu0 0
  %5031 = vmatmul.mubr.bf16.gmra.mxu0 %v2828
  %v5032 = vpop.f32.mrf.mxu0
  %v5033 = vadd.f32 0.0, %v5032
  %v5034 = vpop.f32.mrf.mxu0
  %v5035 = vpop.f32.mrf.mxu0
  %v5036 = vadd.f32 0.0, %v5035
  %v5037 = vpop.f32.mrf.mxu0
  %5038 = vmatprep.mubr.bf16.mxu0 0
  %5039 = vmatmul.mubr.bf16.gmra.mxu0 %v2831
  %v5040 = vpop.f32.mrf.mxu0
  %v5041 = vadd.f32 0.0, %v5040
  %v5042 = vpop.f32.mrf.mxu0
  %v5043 = vpop.f32.mrf.mxu0
  %v5044 = vadd.f32 0.0, %v5043
  %v5045 = vpop.f32.mrf.mxu0
  %5046 = vmatprep.mubr.bf16.mxu0 0
  %5047 = vmatmul.mubr.bf16.gmra.mxu0 %v2834
  %v5048 = vpop.f32.mrf.mxu0
  %v5049 = vadd.f32 0.0, %v5048
  %v5050 = vpop.f32.mrf.mxu0
  %v5051 = vpop.f32.mrf.mxu0
  %v5052 = vadd.f32 0.0, %v5051
  %v5053 = vpop.f32.mrf.mxu0
  %5054 = vmatprep.mubr.bf16.mxu0 0
  %5055 = vmatmul.mubr.bf16.gmra.mxu0 %v2837
  %v5056 = vpop.f32.mrf.mxu0
  %v5057 = vadd.f32 0.0, %v5056
  %v5058 = vpop.f32.mrf.mxu0
  %v5059 = vpop.f32.mrf.mxu0
  %v5060 = vadd.f32 0.0, %v5059
  %v5061 = vpop.f32.mrf.mxu0
  %5062 = vmatprep.mubr.bf16.mxu0 0
  %5063 = vmatmul.mubr.bf16.gmra.mxu0 %v2840
  %v5064 = vpop.f32.mrf.mxu0
  %v5065 = vadd.f32 0.0, %v5064
  %v5066 = vpop.f32.mrf.mxu0
  %v5067 = vpop.f32.mrf.mxu0
  %v5068 = vadd.f32 0.0, %v5067
  %v5069 = vpop.f32.mrf.mxu0
  %5070 = vmatprep.mubr.bf16.mxu0 0
  %5071 = vmatmul.mubr.bf16.gmra.mxu0 %v2843
  %v5072 = vpop.f32.mrf.mxu0
  %v5073 = vadd.f32 0.0, %v5072
  %v5074 = vpop.f32.mrf.mxu0
  %v5075 = vpop.f32.mrf.mxu0
  %v5076 = vadd.f32 0.0, %v5075
  %v5077 = vpop.f32.mrf.mxu0
  %5078 = vmatprep.mubr.bf16.mxu0 0
  %5079 = vmatmul.mubr.bf16.gmra.mxu0 %v2846
  %v5080 = vpop.f32.mrf.mxu0
  %v5081 = vadd.f32 0.0, %v5080
  %v5082 = vpop.f32.mrf.mxu0
  %v5083 = vpop.f32.mrf.mxu0
  %v5084 = vadd.f32 0.0, %v5083
  %v5085 = vpop.f32.mrf.mxu0
  %5086 = vmatprep.mubr.bf16.mxu0 0
  %5087 = vmatmul.mubr.bf16.gmra.mxu0 %v2849
  %v5088 = vpop.f32.mrf.mxu0
  %v5089 = vadd.f32 0.0, %v5088
  %v5090 = vpop.f32.mrf.mxu0
  %v5091 = vpop.f32.mrf.mxu0
  %v5092 = vadd.f32 0.0, %v5091
  %v5093 = vpop.f32.mrf.mxu0
  %5094 = vmatprep.mubr.bf16.mxu0 0
  %5095 = vmatmul.mubr.bf16.gmra.mxu0 %v2852
  %v5096 = vpop.f32.mrf.mxu0
  %v5097 = vadd.f32 0.0, %v5096
  %v5098 = vpop.f32.mrf.mxu0
  %v5099 = vpop.f32.mrf.mxu0
  %v5100 = vadd.f32 0.0, %v5099
  %v5101 = vpop.f32.mrf.mxu0
  %5102 = vmatprep.mubr.bf16.mxu0 0
  %5103 = vmatmul.mubr.bf16.gmra.mxu0 %v2855
  %v5104 = vpop.f32.mrf.mxu0
  %v5105 = vadd.f32 0.0, %v5104
  %v5106 = vpop.f32.mrf.mxu0
  %v5107 = vpop.f32.mrf.mxu0
  %v5108 = vadd.f32 0.0, %v5107
  %v5109 = vpop.f32.mrf.mxu0
  %5110 = vmatprep.mubr.bf16.mxu0 0
  %5111 = vmatmul.mubr.bf16.gmra.mxu0 %v2858
  %v5112 = vpop.f32.mrf.mxu0
  %v5113 = vadd.f32 0.0, %v5112
  %v5114 = vpop.f32.mrf.mxu0
  %v5115 = vpop.f32.mrf.mxu0
  %v5116 = vadd.f32 0.0, %v5115
  %v5117 = vpop.f32.mrf.mxu0
  %5118 = vmatprep.mubr.bf16.mxu0 0
  %5119 = vmatmul.mubr.bf16.gmra.mxu0 %v2861
  %v5120 = vpop.f32.mrf.mxu0
  %v5121 = vadd.f32 0.0, %v5120
  %v5122 = vpop.f32.mrf.mxu0
  %v5123 = vpop.f32.mrf.mxu0
  %v5124 = vadd.f32 0.0, %v5123
  %v5125 = vpop.f32.mrf.mxu0
  %5126 = vmatprep.mubr.bf16.mxu0 0
  %5127 = vmatmul.mubr.bf16.gmra.mxu0 %v2864
  %v5128 = vpop.f32.mrf.mxu0
  %v5129 = vadd.f32 0.0, %v5128
  %v5130 = vpop.f32.mrf.mxu0
  %v5131 = vpop.f32.mrf.mxu0
  %v5132 = vadd.f32 0.0, %v5131
  %v5133 = vpop.f32.mrf.mxu0
  %5134 = vmatprep.mubr.bf16.mxu0 0
  %5135 = vmatmul.mubr.bf16.gmra.mxu0 %v2867
  %v5136 = vpop.f32.mrf.mxu0
  %v5137 = vadd.f32 0.0, %v5136
  %v5138 = vpop.f32.mrf.mxu0
  %v5139 = vpop.f32.mrf.mxu0
  %v5140 = vadd.f32 0.0, %v5139
  %v5141 = vpop.f32.mrf.mxu0
  %5142 = vmatprep.mubr.bf16.mxu0 0
  %5143 = vmatmul.mubr.bf16.gmra.mxu0 %v2870
  %v5144 = vpop.f32.mrf.mxu0
  %v5145 = vadd.f32 0.0, %v5144
  %v5146 = vpop.f32.mrf.mxu0
  %v5147 = vpop.f32.mrf.mxu0
  %v5148 = vadd.f32 0.0, %v5147
  %v5149 = vpop.f32.mrf.mxu0
  %5150 = vmatprep.mubr.bf16.mxu0 0
  %5151 = vmatmul.mubr.bf16.gmra.mxu0 %v2873
  %v5152 = vpop.f32.mrf.mxu0
  %v5153 = vadd.f32 0.0, %v5152
  %v5154 = vpop.f32.mrf.mxu0
  %v5155 = vpop.f32.mrf.mxu0
  %v5156 = vadd.f32 0.0, %v5155
  %v5157 = vpop.f32.mrf.mxu0
  %5158 = vmatprep.mubr.bf16.mxu0 0
  %5159 = vmatmul.mubr.bf16.gmra.mxu0 %v2876
  %v5160 = vpop.f32.mrf.mxu0
  %v5161 = vadd.f32 0.0, %v5160
  %v5162 = vpop.f32.mrf.mxu0
  %v5163 = vpop.f32.mrf.mxu0
  %v5164 = vadd.f32 0.0, %v5163
  %v5165 = vpop.f32.mrf.mxu0
  %5166 = vmatprep.mubr.bf16.mxu0 0
  %5167 = vmatmul.mubr.bf16.gmra.mxu0 %v2879
  %v5168 = vpop.f32.mrf.mxu0
  %v5169 = vadd.f32 0.0, %v5168
  %v5170 = vpop.f32.mrf.mxu0
  %v5171 = vpop.f32.mrf.mxu0
  %v5172 = vadd.f32 0.0, %v5171
  %v5173 = vpop.f32.mrf.mxu0
  %5174 = vmatprep.mubr.bf16.mxu0 0
  %5175 = vmatmul.mubr.bf16.gmra.mxu0 %v2882
  %v5176 = vpop.f32.mrf.mxu0
  %v5177 = vadd.f32 0.0, %v5176
  %v5178 = vpop.f32.mrf.mxu0
  %v5179 = vpop.f32.mrf.mxu0
  %v5180 = vadd.f32 0.0, %v5179
  %v5181 = vpop.f32.mrf.mxu0
  %5182 = vmatprep.mubr.bf16.mxu0 0
  %5183 = vmatmul.mubr.bf16.gmra.mxu0 %v2885
  %v5184 = vpop.f32.mrf.mxu0
  %v5185 = vadd.f32 0.0, %v5184
  %v5186 = vpop.f32.mrf.mxu0
  %v5187 = vpop.f32.mrf.mxu0
  %v5188 = vadd.f32 0.0, %v5187
  %v5189 = vpop.f32.mrf.mxu0
  %5190 = vmatprep.mubr.bf16.mxu0 0
  %5191 = vmatmul.mubr.bf16.gmra.mxu0 %v2888
  %v5192 = vpop.f32.mrf.mxu0
  %v5193 = vadd.f32 0.0, %v5192
  %v5194 = vpop.f32.mrf.mxu0
  %v5195 = vpop.f32.mrf.mxu0
  %v5196 = vadd.f32 0.0, %v5195
  %v5197 = vpop.f32.mrf.mxu0
  %5198 = vmatprep.mubr.bf16.mxu0 0
  %5199 = vmatmul.mubr.bf16.gmra.mxu0 %v2891
  %v5200 = vpop.f32.mrf.mxu0
  %v5201 = vadd.f32 0.0, %v5200
  %v5202 = vpop.f32.mrf.mxu0
  %v5203 = vpop.f32.mrf.mxu0
  %v5204 = vadd.f32 0.0, %v5203
  %v5205 = vpop.f32.mrf.mxu0
  %5206 = vmatprep.mubr.bf16.mxu0 0
  %5207 = vmatmul.mubr.bf16.gmra.mxu0 %v2894
  %v5208 = vpop.f32.mrf.mxu0
  %v5209 = vadd.f32 0.0, %v5208
  %v5210 = vpop.f32.mrf.mxu0
  %v5211 = vpop.f32.mrf.mxu0
  %v5212 = vadd.f32 0.0, %v5211
  %v5213 = vpop.f32.mrf.mxu0
  %5214 = vmatprep.mubr.bf16.mxu0 0
  %5215 = vmatmul.mubr.bf16.gmra.mxu0 %v2897
  %v5216 = vpop.f32.mrf.mxu0
  %v5217 = vadd.f32 0.0, %v5216
  %v5218 = vpop.f32.mrf.mxu0
  %v5219 = vpop.f32.mrf.mxu0
  %v5220 = vadd.f32 0.0, %v5219
  %v5221 = vpop.f32.mrf.mxu0
  %5222 = vmatprep.mubr.bf16.mxu0 0
  %5223 = vmatmul.mubr.bf16.gmra.mxu0 %v2900
  %v5224 = vpop.f32.mrf.mxu0
  %v5225 = vadd.f32 0.0, %v5224
  %v5226 = vpop.f32.mrf.mxu0
  %v5227 = vpop.f32.mrf.mxu0
  %v5228 = vadd.f32 0.0, %v5227
  %v5229 = vpop.f32.mrf.mxu0
  %5230 = vmatprep.mubr.bf16.mxu0 0
  %5231 = vmatmul.mubr.bf16.gmra.mxu0 %v2903
  %v5232 = vpop.f32.mrf.mxu0
  %v5233 = vadd.f32 0.0, %v5232
  %v5234 = vpop.f32.mrf.mxu0
  %v5235 = vpop.f32.mrf.mxu0
  %v5236 = vadd.f32 0.0, %v5235
  %v5237 = vpop.f32.mrf.mxu0
  %5238 = vmatprep.mubr.bf16.mxu0 0
  %5239 = vmatmul.mubr.bf16.gmra.mxu0 %v2906
  %v5240 = vpop.f32.mrf.mxu0
  %v5241 = vadd.f32 0.0, %v5240
  %v5242 = vpop.f32.mrf.mxu0
  %v5243 = vpop.f32.mrf.mxu0
  %v5244 = vadd.f32 0.0, %v5243
  %v5245 = vpop.f32.mrf.mxu0
  %5246 = vmatprep.mubr.bf16.mxu0 0
  %5247 = vmatmul.mubr.bf16.gmra.mxu0 %v2909
  %v5248 = vpop.f32.mrf.mxu0
  %v5249 = vadd.f32 0.0, %v5248
  %v5250 = vpop.f32.mrf.mxu0
  %v5251 = vpop.f32.mrf.mxu0
  %v5252 = vadd.f32 0.0, %v5251
  %v5253 = vpop.f32.mrf.mxu0
  %5254 = vdwg.mxu0
  %vm5255 = vcmask 261120
  %v5256 = vsel %vm5255, %v2953, -inf
  %v5257 = vsel %vm5255, %v3025, -inf
  %v5258 = vmax.f32 %v5256, %v5257
  %v5259 = vsel %vm5255, %v3097, -inf
  %v5260 = vmax.f32 %v5258, %v5259
  %v5261 = vsel %vm5255, %v3169, -inf
  %v5262 = vmax.f32 %v5260, %v5261
  %v5263 = vsel %vm5255, %v2956, -inf
  %v5264 = vsel %vm5255, %v3028, -inf
  %v5265 = vmax.f32 %v5263, %v5264
  %v5266 = vsel %vm5255, %v3100, -inf
  %v5267 = vmax.f32 %v5265, %v5266
  %v5268 = vsel %vm5255, %v3172, -inf
  %v5269 = vmax.f32 %v5267, %v5268
  %v5270 = vsel %vm5255, %v2961, -inf
  %v5271 = vsel %vm5255, %v3033, -inf
  %v5272 = vmax.f32 %v5270, %v5271
  %v5273 = vsel %vm5255, %v3105, -inf
  %v5274 = vmax.f32 %v5272, %v5273
  %v5275 = vsel %vm5255, %v3177, -inf
  %v5276 = vmax.f32 %v5274, %v5275
  %v5277 = vsel %vm5255, %v2964, -inf
  %v5278 = vsel %vm5255, %v3036, -inf
  %v5279 = vmax.f32 %v5277, %v5278
  %v5280 = vsel %vm5255, %v3108, -inf
  %v5281 = vmax.f32 %v5279, %v5280
  %v5282 = vsel %vm5255, %v3180, -inf
  %v5283 = vmax.f32 %v5281, %v5282
  %v5284 = vsel %vm5255, %v2969, -inf
  %v5285 = vsel %vm5255, %v3041, -inf
  %v5286 = vmax.f32 %v5284, %v5285
  %v5287 = vsel %vm5255, %v3113, -inf
  %v5288 = vmax.f32 %v5286, %v5287
  %v5289 = vsel %vm5255, %v3185, -inf
  %v5290 = vmax.f32 %v5288, %v5289
  %v5291 = vsel %vm5255, %v2972, -inf
  %v5292 = vsel %vm5255, %v3044, -inf
  %v5293 = vmax.f32 %v5291, %v5292
  %v5294 = vsel %vm5255, %v3116, -inf
  %v5295 = vmax.f32 %v5293, %v5294
  %v5296 = vsel %vm5255, %v3188, -inf
  %v5297 = vmax.f32 %v5295, %v5296
  %v5298 = vsel %vm5255, %v2977, -inf
  %v5299 = vsel %vm5255, %v3049, -inf
  %v5300 = vmax.f32 %v5298, %v5299
  %v5301 = vsel %vm5255, %v3121, -inf
  %v5302 = vmax.f32 %v5300, %v5301
  %v5303 = vsel %vm5255, %v3193, -inf
  %v5304 = vmax.f32 %v5302, %v5303
  %v5305 = vsel %vm5255, %v2980, -inf
  %v5306 = vsel %vm5255, %v3052, -inf
  %v5307 = vmax.f32 %v5305, %v5306
  %v5308 = vsel %vm5255, %v3124, -inf
  %v5309 = vmax.f32 %v5307, %v5308
  %v5310 = vsel %vm5255, %v3196, -inf
  %v5311 = vmax.f32 %v5309, %v5310
  %v5312 = vsel %vm5255, %v2985, -inf
  %v5313 = vsel %vm5255, %v3057, -inf
  %v5314 = vmax.f32 %v5312, %v5313
  %v5315 = vsel %vm5255, %v3129, -inf
  %v5316 = vmax.f32 %v5314, %v5315
  %v5317 = vsel %vm5255, %v3201, -inf
  %v5318 = vmax.f32 %v5316, %v5317
  %v5319 = vsel %vm5255, %v2988, -inf
  %v5320 = vsel %vm5255, %v3060, -inf
  %v5321 = vmax.f32 %v5319, %v5320
  %v5322 = vsel %vm5255, %v3132, -inf
  %v5323 = vmax.f32 %v5321, %v5322
  %v5324 = vsel %vm5255, %v3204, -inf
  %v5325 = vmax.f32 %v5323, %v5324
  %v5326 = vsel %vm5255, %v2993, -inf
  %v5327 = vsel %vm5255, %v3065, -inf
  %v5328 = vmax.f32 %v5326, %v5327
  %v5329 = vsel %vm5255, %v3137, -inf
  %v5330 = vmax.f32 %v5328, %v5329
  %v5331 = vsel %vm5255, %v3209, -inf
  %v5332 = vmax.f32 %v5330, %v5331
  %v5333 = vsel %vm5255, %v2996, -inf
  %v5334 = vsel %vm5255, %v3068, -inf
  %v5335 = vmax.f32 %v5333, %v5334
  %v5336 = vsel %vm5255, %v3140, -inf
  %v5337 = vmax.f32 %v5335, %v5336
  %v5338 = vsel %vm5255, %v3212, -inf
  %v5339 = vmax.f32 %v5337, %v5338
  %v5340 = vsel %vm5255, %v3001, -inf
  %v5341 = vsel %vm5255, %v3073, -inf
  %v5342 = vmax.f32 %v5340, %v5341
  %v5343 = vsel %vm5255, %v3145, -inf
  %v5344 = vmax.f32 %v5342, %v5343
  %v5345 = vsel %vm5255, %v3217, -inf
  %v5346 = vmax.f32 %v5344, %v5345
  %v5347 = vsel %vm5255, %v3004, -inf
  %v5348 = vsel %vm5255, %v3076, -inf
  %v5349 = vmax.f32 %v5347, %v5348
  %v5350 = vsel %vm5255, %v3148, -inf
  %v5351 = vmax.f32 %v5349, %v5350
  %v5352 = vsel %vm5255, %v3220, -inf
  %v5353 = vmax.f32 %v5351, %v5352
  %v5354 = vsel %vm5255, %v3009, -inf
  %v5355 = vsel %vm5255, %v3081, -inf
  %v5356 = vmax.f32 %v5354, %v5355
  %v5357 = vsel %vm5255, %v3153, -inf
  %v5358 = vmax.f32 %v5356, %v5357
  %v5359 = vsel %vm5255, %v3225, -inf
  %v5360 = vmax.f32 %v5358, %v5359
  %v5361 = vsel %vm5255, %v3012, -inf
  %v5362 = vsel %vm5255, %v3084, -inf
  %v5363 = vmax.f32 %v5361, %v5362
  %v5364 = vsel %vm5255, %v3156, -inf
  %v5365 = vmax.f32 %v5363, %v5364
  %v5366 = vsel %vm5255, %v3228, -inf
  %v5367 = vmax.f32 %v5365, %v5366
  %v5368 = vsel %vm5255, %v3017, -inf
  %v5369 = vsel %vm5255, %v3089, -inf
  %v5370 = vmax.f32 %v5368, %v5369
  %v5371 = vsel %vm5255, %v3161, -inf
  %v5372 = vmax.f32 %v5370, %v5371
  %v5373 = vsel %vm5255, %v3233, -inf
  %v5374 = vmax.f32 %v5372, %v5373
  %v5375 = vsel %vm5255, %v3020, -inf
  %v5376 = vsel %vm5255, %v3092, -inf
  %v5377 = vmax.f32 %v5375, %v5376
  %v5378 = vsel %vm5255, %v3164, -inf
  %v5379 = vmax.f32 %v5377, %v5378
  %v5380 = vsel %vm5255, %v3236, -inf
  %v5381 = vmax.f32 %v5379, %v5380
  %v5382 = vsel %vm5255, %v3241, -inf
  %v5383 = vsel %vm5255, %v3313, -inf
  %v5384 = vmax.f32 %v5382, %v5383
  %v5385 = vsel %vm5255, %v3385, -inf
  %v5386 = vmax.f32 %v5384, %v5385
  %v5387 = vsel %vm5255, %v3457, -inf
  %v5388 = vmax.f32 %v5386, %v5387
  %v5389 = vsel %vm5255, %v3244, -inf
  %v5390 = vsel %vm5255, %v3316, -inf
  %v5391 = vmax.f32 %v5389, %v5390
  %v5392 = vsel %vm5255, %v3388, -inf
  %v5393 = vmax.f32 %v5391, %v5392
  %v5394 = vsel %vm5255, %v3460, -inf
  %v5395 = vmax.f32 %v5393, %v5394
  %v5396 = vsel %vm5255, %v3249, -inf
  %v5397 = vsel %vm5255, %v3321, -inf
  %v5398 = vmax.f32 %v5396, %v5397
  %v5399 = vsel %vm5255, %v3393, -inf
  %v5400 = vmax.f32 %v5398, %v5399
  %v5401 = vsel %vm5255, %v3465, -inf
  %v5402 = vmax.f32 %v5400, %v5401
  %v5403 = vsel %vm5255, %v3252, -inf
  %v5404 = vsel %vm5255, %v3324, -inf
  %v5405 = vmax.f32 %v5403, %v5404
  %v5406 = vsel %vm5255, %v3396, -inf
  %v5407 = vmax.f32 %v5405, %v5406
  %v5408 = vsel %vm5255, %v3468, -inf
  %v5409 = vmax.f32 %v5407, %v5408
  %v5410 = vsel %vm5255, %v3257, -inf
  %v5411 = vsel %vm5255, %v3329, -inf
  %v5412 = vmax.f32 %v5410, %v5411
  %v5413 = vsel %vm5255, %v3401, -inf
  %v5414 = vmax.f32 %v5412, %v5413
  %v5415 = vsel %vm5255, %v3473, -inf
  %v5416 = vmax.f32 %v5414, %v5415
  %v5417 = vsel %vm5255, %v3260, -inf
  %v5418 = vsel %vm5255, %v3332, -inf
  %v5419 = vmax.f32 %v5417, %v5418
  %v5420 = vsel %vm5255, %v3404, -inf
  %v5421 = vmax.f32 %v5419, %v5420
  %v5422 = vsel %vm5255, %v3476, -inf
  %v5423 = vmax.f32 %v5421, %v5422
  %v5424 = vsel %vm5255, %v3265, -inf
  %v5425 = vsel %vm5255, %v3337, -inf
  %v5426 = vmax.f32 %v5424, %v5425
  %v5427 = vsel %vm5255, %v3409, -inf
  %v5428 = vmax.f32 %v5426, %v5427
  %v5429 = vsel %vm5255, %v3481, -inf
  %v5430 = vmax.f32 %v5428, %v5429
  %v5431 = vsel %vm5255, %v3268, -inf
  %v5432 = vsel %vm5255, %v3340, -inf
  %v5433 = vmax.f32 %v5431, %v5432
  %v5434 = vsel %vm5255, %v3412, -inf
  %v5435 = vmax.f32 %v5433, %v5434
  %v5436 = vsel %vm5255, %v3484, -inf
  %v5437 = vmax.f32 %v5435, %v5436
  %v5438 = vsel %vm5255, %v3273, -inf
  %v5439 = vsel %vm5255, %v3345, -inf
  %v5440 = vmax.f32 %v5438, %v5439
  %v5441 = vsel %vm5255, %v3417, -inf
  %v5442 = vmax.f32 %v5440, %v5441
  %v5443 = vsel %vm5255, %v3489, -inf
  %v5444 = vmax.f32 %v5442, %v5443
  %v5445 = vsel %vm5255, %v3276, -inf
  %v5446 = vsel %vm5255, %v3348, -inf
  %v5447 = vmax.f32 %v5445, %v5446
  %v5448 = vsel %vm5255, %v3420, -inf
  %v5449 = vmax.f32 %v5447, %v5448
  %v5450 = vsel %vm5255, %v3492, -inf
  %v5451 = vmax.f32 %v5449, %v5450
  %v5452 = vsel %vm5255, %v3281, -inf
  %v5453 = vsel %vm5255, %v3353, -inf
  %v5454 = vmax.f32 %v5452, %v5453
  %v5455 = vsel %vm5255, %v3425, -inf
  %v5456 = vmax.f32 %v5454, %v5455
  %v5457 = vsel %vm5255, %v3497, -inf
  %v5458 = vmax.f32 %v5456, %v5457
  %v5459 = vsel %vm5255, %v3284, -inf
  %v5460 = vsel %vm5255, %v3356, -inf
  %v5461 = vmax.f32 %v5459, %v5460
  %v5462 = vsel %vm5255, %v3428, -inf
  %v5463 = vmax.f32 %v5461, %v5462
  %v5464 = vsel %vm5255, %v3500, -inf
  %v5465 = vmax.f32 %v5463, %v5464
  %v5466 = vsel %vm5255, %v3289, -inf
  %v5467 = vsel %vm5255, %v3361, -inf
  %v5468 = vmax.f32 %v5466, %v5467
  %v5469 = vsel %vm5255, %v3433, -inf
  %v5470 = vmax.f32 %v5468, %v5469
  %v5471 = vsel %vm5255, %v3505, -inf
  %v5472 = vmax.f32 %v5470, %v5471
  %v5473 = vsel %vm5255, %v3292, -inf
  %v5474 = vsel %vm5255, %v3364, -inf
  %v5475 = vmax.f32 %v5473, %v5474
  %v5476 = vsel %vm5255, %v3436, -inf
  %v5477 = vmax.f32 %v5475, %v5476
  %v5478 = vsel %vm5255, %v3508, -inf
  %v5479 = vmax.f32 %v5477, %v5478
  %v5480 = vsel %vm5255, %v3297, -inf
  %v5481 = vsel %vm5255, %v3369, -inf
  %v5482 = vmax.f32 %v5480, %v5481
  %v5483 = vsel %vm5255, %v3441, -inf
  %v5484 = vmax.f32 %v5482, %v5483
  %v5485 = vsel %vm5255, %v3513, -inf
  %v5486 = vmax.f32 %v5484, %v5485
  %v5487 = vsel %vm5255, %v3300, -inf
  %v5488 = vsel %vm5255, %v3372, -inf
  %v5489 = vmax.f32 %v5487, %v5488
  %v5490 = vsel %vm5255, %v3444, -inf
  %v5491 = vmax.f32 %v5489, %v5490
  %v5492 = vsel %vm5255, %v3516, -inf
  %v5493 = vmax.f32 %v5491, %v5492
  %v5494 = vsel %vm5255, %v3305, -inf
  %v5495 = vsel %vm5255, %v3377, -inf
  %v5496 = vmax.f32 %v5494, %v5495
  %v5497 = vsel %vm5255, %v3449, -inf
  %v5498 = vmax.f32 %v5496, %v5497
  %v5499 = vsel %vm5255, %v3521, -inf
  %v5500 = vmax.f32 %v5498, %v5499
  %v5501 = vsel %vm5255, %v3308, -inf
  %v5502 = vsel %vm5255, %v3380, -inf
  %v5503 = vmax.f32 %v5501, %v5502
  %v5504 = vsel %vm5255, %v3452, -inf
  %v5505 = vmax.f32 %v5503, %v5504
  %v5506 = vsel %vm5255, %v3524, -inf
  %v5507 = vmax.f32 %v5505, %v5506
  %v5508 = vsel %vm5255, %v3529, -inf
  %v5509 = vsel %vm5255, %v3601, -inf
  %v5510 = vmax.f32 %v5508, %v5509
  %v5511 = vsel %vm5255, %v3673, -inf
  %v5512 = vmax.f32 %v5510, %v5511
  %v5513 = vsel %vm5255, %v3745, -inf
  %v5514 = vmax.f32 %v5512, %v5513
  %v5515 = vsel %vm5255, %v3532, -inf
  %v5516 = vsel %vm5255, %v3604, -inf
  %v5517 = vmax.f32 %v5515, %v5516
  %v5518 = vsel %vm5255, %v3676, -inf
  %v5519 = vmax.f32 %v5517, %v5518
  %v5520 = vsel %vm5255, %v3748, -inf
  %v5521 = vmax.f32 %v5519, %v5520
  %v5522 = vsel %vm5255, %v3537, -inf
  %v5523 = vsel %vm5255, %v3609, -inf
  %v5524 = vmax.f32 %v5522, %v5523
  %v5525 = vsel %vm5255, %v3681, -inf
  %v5526 = vmax.f32 %v5524, %v5525
  %v5527 = vsel %vm5255, %v3753, -inf
  %v5528 = vmax.f32 %v5526, %v5527
  %v5529 = vsel %vm5255, %v3540, -inf
  %v5530 = vsel %vm5255, %v3612, -inf
  %v5531 = vmax.f32 %v5529, %v5530
  %v5532 = vsel %vm5255, %v3684, -inf
  %v5533 = vmax.f32 %v5531, %v5532
  %v5534 = vsel %vm5255, %v3756, -inf
  %v5535 = vmax.f32 %v5533, %v5534
  %v5536 = vsel %vm5255, %v3545, -inf
  %v5537 = vsel %vm5255, %v3617, -inf
  %v5538 = vmax.f32 %v5536, %v5537
  %v5539 = vsel %vm5255, %v3689, -inf
  %v5540 = vmax.f32 %v5538, %v5539
  %v5541 = vsel %vm5255, %v3761, -inf
  %v5542 = vmax.f32 %v5540, %v5541
  %v5543 = vsel %vm5255, %v3548, -inf
  %v5544 = vsel %vm5255, %v3620, -inf
  %v5545 = vmax.f32 %v5543, %v5544
  %v5546 = vsel %vm5255, %v3692, -inf
  %v5547 = vmax.f32 %v5545, %v5546
  %v5548 = vsel %vm5255, %v3764, -inf
  %v5549 = vmax.f32 %v5547, %v5548
  %v5550 = vsel %vm5255, %v3553, -inf
  %v5551 = vsel %vm5255, %v3625, -inf
  %v5552 = vmax.f32 %v5550, %v5551
  %v5553 = vsel %vm5255, %v3697, -inf
  %v5554 = vmax.f32 %v5552, %v5553
  %v5555 = vsel %vm5255, %v3769, -inf
  %v5556 = vmax.f32 %v5554, %v5555
  %v5557 = vsel %vm5255, %v3556, -inf
  %v5558 = vsel %vm5255, %v3628, -inf
  %v5559 = vmax.f32 %v5557, %v5558
  %v5560 = vsel %vm5255, %v3700, -inf
  %v5561 = vmax.f32 %v5559, %v5560
  %v5562 = vsel %vm5255, %v3772, -inf
  %v5563 = vmax.f32 %v5561, %v5562
  %v5564 = vsel %vm5255, %v3561, -inf
  %v5565 = vsel %vm5255, %v3633, -inf
  %v5566 = vmax.f32 %v5564, %v5565
  %v5567 = vsel %vm5255, %v3705, -inf
  %v5568 = vmax.f32 %v5566, %v5567
  %v5569 = vsel %vm5255, %v3777, -inf
  %v5570 = vmax.f32 %v5568, %v5569
  %v5571 = vsel %vm5255, %v3564, -inf
  %v5572 = vsel %vm5255, %v3636, -inf
  %v5573 = vmax.f32 %v5571, %v5572
  %v5574 = vsel %vm5255, %v3708, -inf
  %v5575 = vmax.f32 %v5573, %v5574
  %v5576 = vsel %vm5255, %v3780, -inf
  %v5577 = vmax.f32 %v5575, %v5576
  %v5578 = vsel %vm5255, %v3569, -inf
  %v5579 = vsel %vm5255, %v3641, -inf
  %v5580 = vmax.f32 %v5578, %v5579
  %v5581 = vsel %vm5255, %v3713, -inf
  %v5582 = vmax.f32 %v5580, %v5581
  %v5583 = vsel %vm5255, %v3785, -inf
  %v5584 = vmax.f32 %v5582, %v5583
  %v5585 = vsel %vm5255, %v3572, -inf
  %v5586 = vsel %vm5255, %v3644, -inf
  %v5587 = vmax.f32 %v5585, %v5586
  %v5588 = vsel %vm5255, %v3716, -inf
  %v5589 = vmax.f32 %v5587, %v5588
  %v5590 = vsel %vm5255, %v3788, -inf
  %v5591 = vmax.f32 %v5589, %v5590
  %v5592 = vsel %vm5255, %v3577, -inf
  %v5593 = vsel %vm5255, %v3649, -inf
  %v5594 = vmax.f32 %v5592, %v5593
  %v5595 = vsel %vm5255, %v3721, -inf
  %v5596 = vmax.f32 %v5594, %v5595
  %v5597 = vsel %vm5255, %v3793, -inf
  %v5598 = vmax.f32 %v5596, %v5597
  %v5599 = vsel %vm5255, %v3580, -inf
  %v5600 = vsel %vm5255, %v3652, -inf
  %v5601 = vmax.f32 %v5599, %v5600
  %v5602 = vsel %vm5255, %v3724, -inf
  %v5603 = vmax.f32 %v5601, %v5602
  %v5604 = vsel %vm5255, %v3796, -inf
  %v5605 = vmax.f32 %v5603, %v5604
  %v5606 = vsel %vm5255, %v3585, -inf
  %v5607 = vsel %vm5255, %v3657, -inf
  %v5608 = vmax.f32 %v5606, %v5607
  %v5609 = vsel %vm5255, %v3729, -inf
  %v5610 = vmax.f32 %v5608, %v5609
  %v5611 = vsel %vm5255, %v3801, -inf
  %v5612 = vmax.f32 %v5610, %v5611
  %v5613 = vsel %vm5255, %v3588, -inf
  %v5614 = vsel %vm5255, %v3660, -inf
  %v5615 = vmax.f32 %v5613, %v5614
  %v5616 = vsel %vm5255, %v3732, -inf
  %v5617 = vmax.f32 %v5615, %v5616
  %v5618 = vsel %vm5255, %v3804, -inf
  %v5619 = vmax.f32 %v5617, %v5618
  %v5620 = vsel %vm5255, %v3593, -inf
  %v5621 = vsel %vm5255, %v3665, -inf
  %v5622 = vmax.f32 %v5620, %v5621
  %v5623 = vsel %vm5255, %v3737, -inf
  %v5624 = vmax.f32 %v5622, %v5623
  %v5625 = vsel %vm5255, %v3809, -inf
  %v5626 = vmax.f32 %v5624, %v5625
  %v5627 = vsel %vm5255, %v3596, -inf
  %v5628 = vsel %vm5255, %v3668, -inf
  %v5629 = vmax.f32 %v5627, %v5628
  %v5630 = vsel %vm5255, %v3740, -inf
  %v5631 = vmax.f32 %v5629, %v5630
  %v5632 = vsel %vm5255, %v3812, -inf
  %v5633 = vmax.f32 %v5631, %v5632
  %v5634 = vsel %vm5255, %v3817, -inf
  %v5635 = vsel %vm5255, %v3889, -inf
  %v5636 = vmax.f32 %v5634, %v5635
  %v5637 = vsel %vm5255, %v3961, -inf
  %v5638 = vmax.f32 %v5636, %v5637
  %v5639 = vsel %vm5255, %v4033, -inf
  %v5640 = vmax.f32 %v5638, %v5639
  %v5641 = vsel %vm5255, %v3820, -inf
  %v5642 = vsel %vm5255, %v3892, -inf
  %v5643 = vmax.f32 %v5641, %v5642
  %v5644 = vsel %vm5255, %v3964, -inf
  %v5645 = vmax.f32 %v5643, %v5644
  %v5646 = vsel %vm5255, %v4036, -inf
  %v5647 = vmax.f32 %v5645, %v5646
  %v5648 = vsel %vm5255, %v3825, -inf
  %v5649 = vsel %vm5255, %v3897, -inf
  %v5650 = vmax.f32 %v5648, %v5649
  %v5651 = vsel %vm5255, %v3969, -inf
  %v5652 = vmax.f32 %v5650, %v5651
  %v5653 = vsel %vm5255, %v4041, -inf
  %v5654 = vmax.f32 %v5652, %v5653
  %v5655 = vsel %vm5255, %v3828, -inf
  %v5656 = vsel %vm5255, %v3900, -inf
  %v5657 = vmax.f32 %v5655, %v5656
  %v5658 = vsel %vm5255, %v3972, -inf
  %v5659 = vmax.f32 %v5657, %v5658
  %v5660 = vsel %vm5255, %v4044, -inf
  %v5661 = vmax.f32 %v5659, %v5660
  %v5662 = vsel %vm5255, %v3833, -inf
  %v5663 = vsel %vm5255, %v3905, -inf
  %v5664 = vmax.f32 %v5662, %v5663
  %v5665 = vsel %vm5255, %v3977, -inf
  %v5666 = vmax.f32 %v5664, %v5665
  %v5667 = vsel %vm5255, %v4049, -inf
  %v5668 = vmax.f32 %v5666, %v5667
  %v5669 = vsel %vm5255, %v3836, -inf
  %v5670 = vsel %vm5255, %v3908, -inf
  %v5671 = vmax.f32 %v5669, %v5670
  %v5672 = vsel %vm5255, %v3980, -inf
  %v5673 = vmax.f32 %v5671, %v5672
  %v5674 = vsel %vm5255, %v4052, -inf
  %v5675 = vmax.f32 %v5673, %v5674
  %v5676 = vsel %vm5255, %v3841, -inf
  %v5677 = vsel %vm5255, %v3913, -inf
  %v5678 = vmax.f32 %v5676, %v5677
  %v5679 = vsel %vm5255, %v3985, -inf
  %v5680 = vmax.f32 %v5678, %v5679
  %v5681 = vsel %vm5255, %v4057, -inf
  %v5682 = vmax.f32 %v5680, %v5681
  %v5683 = vsel %vm5255, %v3844, -inf
  %v5684 = vsel %vm5255, %v3916, -inf
  %v5685 = vmax.f32 %v5683, %v5684
  %v5686 = vsel %vm5255, %v3988, -inf
  %v5687 = vmax.f32 %v5685, %v5686
  %v5688 = vsel %vm5255, %v4060, -inf
  %v5689 = vmax.f32 %v5687, %v5688
  %v5690 = vsel %vm5255, %v3849, -inf
  %v5691 = vsel %vm5255, %v3921, -inf
  %v5692 = vmax.f32 %v5690, %v5691
  %v5693 = vsel %vm5255, %v3993, -inf
  %v5694 = vmax.f32 %v5692, %v5693
  %v5695 = vsel %vm5255, %v4065, -inf
  %v5696 = vmax.f32 %v5694, %v5695
  %v5697 = vsel %vm5255, %v3852, -inf
  %v5698 = vsel %vm5255, %v3924, -inf
  %v5699 = vmax.f32 %v5697, %v5698
  %v5700 = vsel %vm5255, %v3996, -inf
  %v5701 = vmax.f32 %v5699, %v5700
  %v5702 = vsel %vm5255, %v4068, -inf
  %v5703 = vmax.f32 %v5701, %v5702
  %v5704 = vsel %vm5255, %v3857, -inf
  %v5705 = vsel %vm5255, %v3929, -inf
  %v5706 = vmax.f32 %v5704, %v5705
  %v5707 = vsel %vm5255, %v4001, -inf
  %v5708 = vmax.f32 %v5706, %v5707
  %v5709 = vsel %vm5255, %v4073, -inf
  %v5710 = vmax.f32 %v5708, %v5709
  %v5711 = vsel %vm5255, %v3860, -inf
  %v5712 = vsel %vm5255, %v3932, -inf
  %v5713 = vmax.f32 %v5711, %v5712
  %v5714 = vsel %vm5255, %v4004, -inf
  %v5715 = vmax.f32 %v5713, %v5714
  %v5716 = vsel %vm5255, %v4076, -inf
  %v5717 = vmax.f32 %v5715, %v5716
  %v5718 = vsel %vm5255, %v3865, -inf
  %v5719 = vsel %vm5255, %v3937, -inf
  %v5720 = vmax.f32 %v5718, %v5719
  %v5721 = vsel %vm5255, %v4009, -inf
  %v5722 = vmax.f32 %v5720, %v5721
  %v5723 = vsel %vm5255, %v4081, -inf
  %v5724 = vmax.f32 %v5722, %v5723
  %v5725 = vsel %vm5255, %v3868, -inf
  %v5726 = vsel %vm5255, %v3940, -inf
  %v5727 = vmax.f32 %v5725, %v5726
  %v5728 = vsel %vm5255, %v4012, -inf
  %v5729 = vmax.f32 %v5727, %v5728
  %v5730 = vsel %vm5255, %v4084, -inf
  %v5731 = vmax.f32 %v5729, %v5730
  %v5732 = vsel %vm5255, %v3873, -inf
  %v5733 = vsel %vm5255, %v3945, -inf
  %v5734 = vmax.f32 %v5732, %v5733
  %v5735 = vsel %vm5255, %v4017, -inf
  %v5736 = vmax.f32 %v5734, %v5735
  %v5737 = vsel %vm5255, %v4089, -inf
  %v5738 = vmax.f32 %v5736, %v5737
  %v5739 = vsel %vm5255, %v3876, -inf
  %v5740 = vsel %vm5255, %v3948, -inf
  %v5741 = vmax.f32 %v5739, %v5740
  %v5742 = vsel %vm5255, %v4020, -inf
  %v5743 = vmax.f32 %v5741, %v5742
  %v5744 = vsel %vm5255, %v4092, -inf
  %v5745 = vmax.f32 %v5743, %v5744
  %v5746 = vsel %vm5255, %v3881, -inf
  %v5747 = vsel %vm5255, %v3953, -inf
  %v5748 = vmax.f32 %v5746, %v5747
  %v5749 = vsel %vm5255, %v4025, -inf
  %v5750 = vmax.f32 %v5748, %v5749
  %v5751 = vsel %vm5255, %v4097, -inf
  %v5752 = vmax.f32 %v5750, %v5751
  %v5753 = vsel %vm5255, %v3884, -inf
  %v5754 = vsel %vm5255, %v3956, -inf
  %v5755 = vmax.f32 %v5753, %v5754
  %v5756 = vsel %vm5255, %v4028, -inf
  %v5757 = vmax.f32 %v5755, %v5756
  %v5758 = vsel %vm5255, %v4100, -inf
  %v5759 = vmax.f32 %v5757, %v5758
  %v5760 = vsel %vm5255, %v4105, -inf
  %v5761 = vsel %vm5255, %v4177, -inf
  %v5762 = vmax.f32 %v5760, %v5761
  %v5763 = vsel %vm5255, %v4249, -inf
  %v5764 = vmax.f32 %v5762, %v5763
  %v5765 = vsel %vm5255, %v4321, -inf
  %v5766 = vmax.f32 %v5764, %v5765
  %v5767 = vsel %vm5255, %v4108, -inf
  %v5768 = vsel %vm5255, %v4180, -inf
  %v5769 = vmax.f32 %v5767, %v5768
  %v5770 = vsel %vm5255, %v4252, -inf
  %v5771 = vmax.f32 %v5769, %v5770
  %v5772 = vsel %vm5255, %v4324, -inf
  %v5773 = vmax.f32 %v5771, %v5772
  %v5774 = vsel %vm5255, %v4113, -inf
  %v5775 = vsel %vm5255, %v4185, -inf
  %v5776 = vmax.f32 %v5774, %v5775
  %v5777 = vsel %vm5255, %v4257, -inf
  %v5778 = vmax.f32 %v5776, %v5777
  %v5779 = vsel %vm5255, %v4329, -inf
  %v5780 = vmax.f32 %v5778, %v5779
  %v5781 = vsel %vm5255, %v4116, -inf
  %v5782 = vsel %vm5255, %v4188, -inf
  %v5783 = vmax.f32 %v5781, %v5782
  %v5784 = vsel %vm5255, %v4260, -inf
  %v5785 = vmax.f32 %v5783, %v5784
  %v5786 = vsel %vm5255, %v4332, -inf
  %v5787 = vmax.f32 %v5785, %v5786
  %v5788 = vsel %vm5255, %v4121, -inf
  %v5789 = vsel %vm5255, %v4193, -inf
  %v5790 = vmax.f32 %v5788, %v5789
  %v5791 = vsel %vm5255, %v4265, -inf
  %v5792 = vmax.f32 %v5790, %v5791
  %v5793 = vsel %vm5255, %v4337, -inf
  %v5794 = vmax.f32 %v5792, %v5793
  %v5795 = vsel %vm5255, %v4124, -inf
  %v5796 = vsel %vm5255, %v4196, -inf
  %v5797 = vmax.f32 %v5795, %v5796
  %v5798 = vsel %vm5255, %v4268, -inf
  %v5799 = vmax.f32 %v5797, %v5798
  %v5800 = vsel %vm5255, %v4340, -inf
  %v5801 = vmax.f32 %v5799, %v5800
  %v5802 = vsel %vm5255, %v4129, -inf
  %v5803 = vsel %vm5255, %v4201, -inf
  %v5804 = vmax.f32 %v5802, %v5803
  %v5805 = vsel %vm5255, %v4273, -inf
  %v5806 = vmax.f32 %v5804, %v5805
  %v5807 = vsel %vm5255, %v4345, -inf
  %v5808 = vmax.f32 %v5806, %v5807
  %v5809 = vsel %vm5255, %v4132, -inf
  %v5810 = vsel %vm5255, %v4204, -inf
  %v5811 = vmax.f32 %v5809, %v5810
  %v5812 = vsel %vm5255, %v4276, -inf
  %v5813 = vmax.f32 %v5811, %v5812
  %v5814 = vsel %vm5255, %v4348, -inf
  %v5815 = vmax.f32 %v5813, %v5814
  %v5816 = vsel %vm5255, %v4137, -inf
  %v5817 = vsel %vm5255, %v4209, -inf
  %v5818 = vmax.f32 %v5816, %v5817
  %v5819 = vsel %vm5255, %v4281, -inf
  %v5820 = vmax.f32 %v5818, %v5819
  %v5821 = vsel %vm5255, %v4353, -inf
  %v5822 = vmax.f32 %v5820, %v5821
  %v5823 = vsel %vm5255, %v4140, -inf
  %v5824 = vsel %vm5255, %v4212, -inf
  %v5825 = vmax.f32 %v5823, %v5824
  %v5826 = vsel %vm5255, %v4284, -inf
  %v5827 = vmax.f32 %v5825, %v5826
  %v5828 = vsel %vm5255, %v4356, -inf
  %v5829 = vmax.f32 %v5827, %v5828
  %v5830 = vsel %vm5255, %v4145, -inf
  %v5831 = vsel %vm5255, %v4217, -inf
  %v5832 = vmax.f32 %v5830, %v5831
  %v5833 = vsel %vm5255, %v4289, -inf
  %v5834 = vmax.f32 %v5832, %v5833
  %v5835 = vsel %vm5255, %v4361, -inf
  %v5836 = vmax.f32 %v5834, %v5835
  %v5837 = vsel %vm5255, %v4148, -inf
  %v5838 = vsel %vm5255, %v4220, -inf
  %v5839 = vmax.f32 %v5837, %v5838
  %v5840 = vsel %vm5255, %v4292, -inf
  %v5841 = vmax.f32 %v5839, %v5840
  %v5842 = vsel %vm5255, %v4364, -inf
  %v5843 = vmax.f32 %v5841, %v5842
  %v5844 = vsel %vm5255, %v4153, -inf
  %v5845 = vsel %vm5255, %v4225, -inf
  %v5846 = vmax.f32 %v5844, %v5845
  %v5847 = vsel %vm5255, %v4297, -inf
  %v5848 = vmax.f32 %v5846, %v5847
  %v5849 = vsel %vm5255, %v4369, -inf
  %v5850 = vmax.f32 %v5848, %v5849
  %v5851 = vsel %vm5255, %v4156, -inf
  %v5852 = vsel %vm5255, %v4228, -inf
  %v5853 = vmax.f32 %v5851, %v5852
  %v5854 = vsel %vm5255, %v4300, -inf
  %v5855 = vmax.f32 %v5853, %v5854
  %v5856 = vsel %vm5255, %v4372, -inf
  %v5857 = vmax.f32 %v5855, %v5856
  %v5858 = vsel %vm5255, %v4161, -inf
  %v5859 = vsel %vm5255, %v4233, -inf
  %v5860 = vmax.f32 %v5858, %v5859
  %v5861 = vsel %vm5255, %v4305, -inf
  %v5862 = vmax.f32 %v5860, %v5861
  %v5863 = vsel %vm5255, %v4377, -inf
  %v5864 = vmax.f32 %v5862, %v5863
  %v5865 = vsel %vm5255, %v4164, -inf
  %v5866 = vsel %vm5255, %v4236, -inf
  %v5867 = vmax.f32 %v5865, %v5866
  %v5868 = vsel %vm5255, %v4308, -inf
  %v5869 = vmax.f32 %v5867, %v5868
  %v5870 = vsel %vm5255, %v4380, -inf
  %v5871 = vmax.f32 %v5869, %v5870
  %v5872 = vsel %vm5255, %v4169, -inf
  %v5873 = vsel %vm5255, %v4241, -inf
  %v5874 = vmax.f32 %v5872, %v5873
  %v5875 = vsel %vm5255, %v4313, -inf
  %v5876 = vmax.f32 %v5874, %v5875
  %v5877 = vsel %vm5255, %v4385, -inf
  %v5878 = vmax.f32 %v5876, %v5877
  %v5879 = vsel %vm5255, %v4172, -inf
  %v5880 = vsel %vm5255, %v4244, -inf
  %v5881 = vmax.f32 %v5879, %v5880
  %v5882 = vsel %vm5255, %v4316, -inf
  %v5883 = vmax.f32 %v5881, %v5882
  %v5884 = vsel %vm5255, %v4388, -inf
  %v5885 = vmax.f32 %v5883, %v5884
  %v5886 = vsel %vm5255, %v4393, -inf
  %v5887 = vsel %vm5255, %v4465, -inf
  %v5888 = vmax.f32 %v5886, %v5887
  %v5889 = vsel %vm5255, %v4537, -inf
  %v5890 = vmax.f32 %v5888, %v5889
  %v5891 = vsel %vm5255, %v4609, -inf
  %v5892 = vmax.f32 %v5890, %v5891
  %v5893 = vsel %vm5255, %v4396, -inf
  %v5894 = vsel %vm5255, %v4468, -inf
  %v5895 = vmax.f32 %v5893, %v5894
  %v5896 = vsel %vm5255, %v4540, -inf
  %v5897 = vmax.f32 %v5895, %v5896
  %v5898 = vsel %vm5255, %v4612, -inf
  %v5899 = vmax.f32 %v5897, %v5898
  %v5900 = vsel %vm5255, %v4401, -inf
  %v5901 = vsel %vm5255, %v4473, -inf
  %v5902 = vmax.f32 %v5900, %v5901
  %v5903 = vsel %vm5255, %v4545, -inf
  %v5904 = vmax.f32 %v5902, %v5903
  %v5905 = vsel %vm5255, %v4617, -inf
  %v5906 = vmax.f32 %v5904, %v5905
  %v5907 = vsel %vm5255, %v4404, -inf
  %v5908 = vsel %vm5255, %v4476, -inf
  %v5909 = vmax.f32 %v5907, %v5908
  %v5910 = vsel %vm5255, %v4548, -inf
  %v5911 = vmax.f32 %v5909, %v5910
  %v5912 = vsel %vm5255, %v4620, -inf
  %v5913 = vmax.f32 %v5911, %v5912
  %v5914 = vsel %vm5255, %v4409, -inf
  %v5915 = vsel %vm5255, %v4481, -inf
  %v5916 = vmax.f32 %v5914, %v5915
  %v5917 = vsel %vm5255, %v4553, -inf
  %v5918 = vmax.f32 %v5916, %v5917
  %v5919 = vsel %vm5255, %v4625, -inf
  %v5920 = vmax.f32 %v5918, %v5919
  %v5921 = vsel %vm5255, %v4412, -inf
  %v5922 = vsel %vm5255, %v4484, -inf
  %v5923 = vmax.f32 %v5921, %v5922
  %v5924 = vsel %vm5255, %v4556, -inf
  %v5925 = vmax.f32 %v5923, %v5924
  %v5926 = vsel %vm5255, %v4628, -inf
  %v5927 = vmax.f32 %v5925, %v5926
  %v5928 = vsel %vm5255, %v4417, -inf
  %v5929 = vsel %vm5255, %v4489, -inf
  %v5930 = vmax.f32 %v5928, %v5929
  %v5931 = vsel %vm5255, %v4561, -inf
  %v5932 = vmax.f32 %v5930, %v5931
  %v5933 = vsel %vm5255, %v4633, -inf
  %v5934 = vmax.f32 %v5932, %v5933
  %v5935 = vsel %vm5255, %v4420, -inf
  %v5936 = vsel %vm5255, %v4492, -inf
  %v5937 = vmax.f32 %v5935, %v5936
  %v5938 = vsel %vm5255, %v4564, -inf
  %v5939 = vmax.f32 %v5937, %v5938
  %v5940 = vsel %vm5255, %v4636, -inf
  %v5941 = vmax.f32 %v5939, %v5940
  %v5942 = vsel %vm5255, %v4425, -inf
  %v5943 = vsel %vm5255, %v4497, -inf
  %v5944 = vmax.f32 %v5942, %v5943
  %v5945 = vsel %vm5255, %v4569, -inf
  %v5946 = vmax.f32 %v5944, %v5945
  %v5947 = vsel %vm5255, %v4641, -inf
  %v5948 = vmax.f32 %v5946, %v5947
  %v5949 = vsel %vm5255, %v4428, -inf
  %v5950 = vsel %vm5255, %v4500, -inf
  %v5951 = vmax.f32 %v5949, %v5950
  %v5952 = vsel %vm5255, %v4572, -inf
  %v5953 = vmax.f32 %v5951, %v5952
  %v5954 = vsel %vm5255, %v4644, -inf
  %v5955 = vmax.f32 %v5953, %v5954
  %v5956 = vsel %vm5255, %v4433, -inf
  %v5957 = vsel %vm5255, %v4505, -inf
  %v5958 = vmax.f32 %v5956, %v5957
  %v5959 = vsel %vm5255, %v4577, -inf
  %v5960 = vmax.f32 %v5958, %v5959
  %v5961 = vsel %vm5255, %v4649, -inf
  %v5962 = vmax.f32 %v5960, %v5961
  %v5963 = vsel %vm5255, %v4436, -inf
  %v5964 = vsel %vm5255, %v4508, -inf
  %v5965 = vmax.f32 %v5963, %v5964
  %v5966 = vsel %vm5255, %v4580, -inf
  %v5967 = vmax.f32 %v5965, %v5966
  %v5968 = vsel %vm5255, %v4652, -inf
  %v5969 = vmax.f32 %v5967, %v5968
  %v5970 = vsel %vm5255, %v4441, -inf
  %v5971 = vsel %vm5255, %v4513, -inf
  %v5972 = vmax.f32 %v5970, %v5971
  %v5973 = vsel %vm5255, %v4585, -inf
  %v5974 = vmax.f32 %v5972, %v5973
  %v5975 = vsel %vm5255, %v4657, -inf
  %v5976 = vmax.f32 %v5974, %v5975
  %v5977 = vsel %vm5255, %v4444, -inf
  %v5978 = vsel %vm5255, %v4516, -inf
  %v5979 = vmax.f32 %v5977, %v5978
  %v5980 = vsel %vm5255, %v4588, -inf
  %v5981 = vmax.f32 %v5979, %v5980
  %v5982 = vsel %vm5255, %v4660, -inf
  %v5983 = vmax.f32 %v5981, %v5982
  %v5984 = vsel %vm5255, %v4449, -inf
  %v5985 = vsel %vm5255, %v4521, -inf
  %v5986 = vmax.f32 %v5984, %v5985
  %v5987 = vsel %vm5255, %v4593, -inf
  %v5988 = vmax.f32 %v5986, %v5987
  %v5989 = vsel %vm5255, %v4665, -inf
  %v5990 = vmax.f32 %v5988, %v5989
  %v5991 = vsel %vm5255, %v4452, -inf
  %v5992 = vsel %vm5255, %v4524, -inf
  %v5993 = vmax.f32 %v5991, %v5992
  %v5994 = vsel %vm5255, %v4596, -inf
  %v5995 = vmax.f32 %v5993, %v5994
  %v5996 = vsel %vm5255, %v4668, -inf
  %v5997 = vmax.f32 %v5995, %v5996
  %v5998 = vsel %vm5255, %v4457, -inf
  %v5999 = vsel %vm5255, %v4529, -inf
  %v6000 = vmax.f32 %v5998, %v5999
  %v6001 = vsel %vm5255, %v4601, -inf
  %v6002 = vmax.f32 %v6000, %v6001
  %v6003 = vsel %vm5255, %v4673, -inf
  %v6004 = vmax.f32 %v6002, %v6003
  %v6005 = vsel %vm5255, %v4460, -inf
  %v6006 = vsel %vm5255, %v4532, -inf
  %v6007 = vmax.f32 %v6005, %v6006
  %v6008 = vsel %vm5255, %v4604, -inf
  %v6009 = vmax.f32 %v6007, %v6008
  %v6010 = vsel %vm5255, %v4676, -inf
  %v6011 = vmax.f32 %v6009, %v6010
  %v6012 = vsel %vm5255, %v4681, -inf
  %v6013 = vsel %vm5255, %v4753, -inf
  %v6014 = vmax.f32 %v6012, %v6013
  %v6015 = vsel %vm5255, %v4825, -inf
  %v6016 = vmax.f32 %v6014, %v6015
  %v6017 = vsel %vm5255, %v4897, -inf
  %v6018 = vmax.f32 %v6016, %v6017
  %v6019 = vsel %vm5255, %v4684, -inf
  %v6020 = vsel %vm5255, %v4756, -inf
  %v6021 = vmax.f32 %v6019, %v6020
  %v6022 = vsel %vm5255, %v4828, -inf
  %v6023 = vmax.f32 %v6021, %v6022
  %v6024 = vsel %vm5255, %v4900, -inf
  %v6025 = vmax.f32 %v6023, %v6024
  %v6026 = vsel %vm5255, %v4689, -inf
  %v6027 = vsel %vm5255, %v4761, -inf
  %v6028 = vmax.f32 %v6026, %v6027
  %v6029 = vsel %vm5255, %v4833, -inf
  %v6030 = vmax.f32 %v6028, %v6029
  %v6031 = vsel %vm5255, %v4905, -inf
  %v6032 = vmax.f32 %v6030, %v6031
  %v6033 = vsel %vm5255, %v4692, -inf
  %v6034 = vsel %vm5255, %v4764, -inf
  %v6035 = vmax.f32 %v6033, %v6034
  %v6036 = vsel %vm5255, %v4836, -inf
  %v6037 = vmax.f32 %v6035, %v6036
  %v6038 = vsel %vm5255, %v4908, -inf
  %v6039 = vmax.f32 %v6037, %v6038
  %v6040 = vsel %vm5255, %v4697, -inf
  %v6041 = vsel %vm5255, %v4769, -inf
  %v6042 = vmax.f32 %v6040, %v6041
  %v6043 = vsel %vm5255, %v4841, -inf
  %v6044 = vmax.f32 %v6042, %v6043
  %v6045 = vsel %vm5255, %v4913, -inf
  %v6046 = vmax.f32 %v6044, %v6045
  %v6047 = vsel %vm5255, %v4700, -inf
  %v6048 = vsel %vm5255, %v4772, -inf
  %v6049 = vmax.f32 %v6047, %v6048
  %v6050 = vsel %vm5255, %v4844, -inf
  %v6051 = vmax.f32 %v6049, %v6050
  %v6052 = vsel %vm5255, %v4916, -inf
  %v6053 = vmax.f32 %v6051, %v6052
  %v6054 = vsel %vm5255, %v4705, -inf
  %v6055 = vsel %vm5255, %v4777, -inf
  %v6056 = vmax.f32 %v6054, %v6055
  %v6057 = vsel %vm5255, %v4849, -inf
  %v6058 = vmax.f32 %v6056, %v6057
  %v6059 = vsel %vm5255, %v4921, -inf
  %v6060 = vmax.f32 %v6058, %v6059
  %v6061 = vsel %vm5255, %v4708, -inf
  %v6062 = vsel %vm5255, %v4780, -inf
  %v6063 = vmax.f32 %v6061, %v6062
  %v6064 = vsel %vm5255, %v4852, -inf
  %v6065 = vmax.f32 %v6063, %v6064
  %v6066 = vsel %vm5255, %v4924, -inf
  %v6067 = vmax.f32 %v6065, %v6066
  %v6068 = vsel %vm5255, %v4713, -inf
  %v6069 = vsel %vm5255, %v4785, -inf
  %v6070 = vmax.f32 %v6068, %v6069
  %v6071 = vsel %vm5255, %v4857, -inf
  %v6072 = vmax.f32 %v6070, %v6071
  %v6073 = vsel %vm5255, %v4929, -inf
  %v6074 = vmax.f32 %v6072, %v6073
  %v6075 = vsel %vm5255, %v4716, -inf
  %v6076 = vsel %vm5255, %v4788, -inf
  %v6077 = vmax.f32 %v6075, %v6076
  %v6078 = vsel %vm5255, %v4860, -inf
  %v6079 = vmax.f32 %v6077, %v6078
  %v6080 = vsel %vm5255, %v4932, -inf
  %v6081 = vmax.f32 %v6079, %v6080
  %v6082 = vsel %vm5255, %v4721, -inf
  %v6083 = vsel %vm5255, %v4793, -inf
  %v6084 = vmax.f32 %v6082, %v6083
  %v6085 = vsel %vm5255, %v4865, -inf
  %v6086 = vmax.f32 %v6084, %v6085
  %v6087 = vsel %vm5255, %v4937, -inf
  %v6088 = vmax.f32 %v6086, %v6087
  %v6089 = vsel %vm5255, %v4724, -inf
  %v6090 = vsel %vm5255, %v4796, -inf
  %v6091 = vmax.f32 %v6089, %v6090
  %v6092 = vsel %vm5255, %v4868, -inf
  %v6093 = vmax.f32 %v6091, %v6092
  %v6094 = vsel %vm5255, %v4940, -inf
  %v6095 = vmax.f32 %v6093, %v6094
  %v6096 = vsel %vm5255, %v4729, -inf
  %v6097 = vsel %vm5255, %v4801, -inf
  %v6098 = vmax.f32 %v6096, %v6097
  %v6099 = vsel %vm5255, %v4873, -inf
  %v6100 = vmax.f32 %v6098, %v6099
  %v6101 = vsel %vm5255, %v4945, -inf
  %v6102 = vmax.f32 %v6100, %v6101
  %v6103 = vsel %vm5255, %v4732, -inf
  %v6104 = vsel %vm5255, %v4804, -inf
  %v6105 = vmax.f32 %v6103, %v6104
  %v6106 = vsel %vm5255, %v4876, -inf
  %v6107 = vmax.f32 %v6105, %v6106
  %v6108 = vsel %vm5255, %v4948, -inf
  %v6109 = vmax.f32 %v6107, %v6108
  %v6110 = vsel %vm5255, %v4737, -inf
  %v6111 = vsel %vm5255, %v4809, -inf
  %v6112 = vmax.f32 %v6110, %v6111
  %v6113 = vsel %vm5255, %v4881, -inf
  %v6114 = vmax.f32 %v6112, %v6113
  %v6115 = vsel %vm5255, %v4953, -inf
  %v6116 = vmax.f32 %v6114, %v6115
  %v6117 = vsel %vm5255, %v4740, -inf
  %v6118 = vsel %vm5255, %v4812, -inf
  %v6119 = vmax.f32 %v6117, %v6118
  %v6120 = vsel %vm5255, %v4884, -inf
  %v6121 = vmax.f32 %v6119, %v6120
  %v6122 = vsel %vm5255, %v4956, -inf
  %v6123 = vmax.f32 %v6121, %v6122
  %v6124 = vsel %vm5255, %v4745, -inf
  %v6125 = vsel %vm5255, %v4817, -inf
  %v6126 = vmax.f32 %v6124, %v6125
  %v6127 = vsel %vm5255, %v4889, -inf
  %v6128 = vmax.f32 %v6126, %v6127
  %v6129 = vsel %vm5255, %v4961, -inf
  %v6130 = vmax.f32 %v6128, %v6129
  %v6131 = vsel %vm5255, %v4748, -inf
  %v6132 = vsel %vm5255, %v4820, -inf
  %v6133 = vmax.f32 %v6131, %v6132
  %v6134 = vsel %vm5255, %v4892, -inf
  %v6135 = vmax.f32 %v6133, %v6134
  %v6136 = vsel %vm5255, %v4964, -inf
  %v6137 = vmax.f32 %v6135, %v6136
  %v6138 = vsel %vm5255, %v4969, -inf
  %v6139 = vsel %vm5255, %v5041, -inf
  %v6140 = vmax.f32 %v6138, %v6139
  %v6141 = vsel %vm5255, %v5113, -inf
  %v6142 = vmax.f32 %v6140, %v6141
  %v6143 = vsel %vm5255, %v5185, -inf
  %v6144 = vmax.f32 %v6142, %v6143
  %v6145 = vsel %vm5255, %v4972, -inf
  %v6146 = vsel %vm5255, %v5044, -inf
  %v6147 = vmax.f32 %v6145, %v6146
  %v6148 = vsel %vm5255, %v5116, -inf
  %v6149 = vmax.f32 %v6147, %v6148
  %v6150 = vsel %vm5255, %v5188, -inf
  %v6151 = vmax.f32 %v6149, %v6150
  %v6152 = vsel %vm5255, %v4977, -inf
  %v6153 = vsel %vm5255, %v5049, -inf
  %v6154 = vmax.f32 %v6152, %v6153
  %v6155 = vsel %vm5255, %v5121, -inf
  %v6156 = vmax.f32 %v6154, %v6155
  %v6157 = vsel %vm5255, %v5193, -inf
  %v6158 = vmax.f32 %v6156, %v6157
  %v6159 = vsel %vm5255, %v4980, -inf
  %v6160 = vsel %vm5255, %v5052, -inf
  %v6161 = vmax.f32 %v6159, %v6160
  %v6162 = vsel %vm5255, %v5124, -inf
  %v6163 = vmax.f32 %v6161, %v6162
  %v6164 = vsel %vm5255, %v5196, -inf
  %v6165 = vmax.f32 %v6163, %v6164
  %v6166 = vsel %vm5255, %v4985, -inf
  %v6167 = vsel %vm5255, %v5057, -inf
  %v6168 = vmax.f32 %v6166, %v6167
  %v6169 = vsel %vm5255, %v5129, -inf
  %v6170 = vmax.f32 %v6168, %v6169
  %v6171 = vsel %vm5255, %v5201, -inf
  %v6172 = vmax.f32 %v6170, %v6171
  %v6173 = vsel %vm5255, %v4988, -inf
  %v6174 = vsel %vm5255, %v5060, -inf
  %v6175 = vmax.f32 %v6173, %v6174
  %v6176 = vsel %vm5255, %v5132, -inf
  %v6177 = vmax.f32 %v6175, %v6176
  %v6178 = vsel %vm5255, %v5204, -inf
  %v6179 = vmax.f32 %v6177, %v6178
  %v6180 = vsel %vm5255, %v4993, -inf
  %v6181 = vsel %vm5255, %v5065, -inf
  %v6182 = vmax.f32 %v6180, %v6181
  %v6183 = vsel %vm5255, %v5137, -inf
  %v6184 = vmax.f32 %v6182, %v6183
  %v6185 = vsel %vm5255, %v5209, -inf
  %v6186 = vmax.f32 %v6184, %v6185
  %v6187 = vsel %vm5255, %v4996, -inf
  %v6188 = vsel %vm5255, %v5068, -inf
  %v6189 = vmax.f32 %v6187, %v6188
  %v6190 = vsel %vm5255, %v5140, -inf
  %v6191 = vmax.f32 %v6189, %v6190
  %v6192 = vsel %vm5255, %v5212, -inf
  %v6193 = vmax.f32 %v6191, %v6192
  %v6194 = vsel %vm5255, %v5001, -inf
  %v6195 = vsel %vm5255, %v5073, -inf
  %v6196 = vmax.f32 %v6194, %v6195
  %v6197 = vsel %vm5255, %v5145, -inf
  %v6198 = vmax.f32 %v6196, %v6197
  %v6199 = vsel %vm5255, %v5217, -inf
  %v6200 = vmax.f32 %v6198, %v6199
  %v6201 = vsel %vm5255, %v5004, -inf
  %v6202 = vsel %vm5255, %v5076, -inf
  %v6203 = vmax.f32 %v6201, %v6202
  %v6204 = vsel %vm5255, %v5148, -inf
  %v6205 = vmax.f32 %v6203, %v6204
  %v6206 = vsel %vm5255, %v5220, -inf
  %v6207 = vmax.f32 %v6205, %v6206
  %v6208 = vsel %vm5255, %v5009, -inf
  %v6209 = vsel %vm5255, %v5081, -inf
  %v6210 = vmax.f32 %v6208, %v6209
  %v6211 = vsel %vm5255, %v5153, -inf
  %v6212 = vmax.f32 %v6210, %v6211
  %v6213 = vsel %vm5255, %v5225, -inf
  %v6214 = vmax.f32 %v6212, %v6213
  %v6215 = vsel %vm5255, %v5012, -inf
  %v6216 = vsel %vm5255, %v5084, -inf
  %v6217 = vmax.f32 %v6215, %v6216
  %v6218 = vsel %vm5255, %v5156, -inf
  %v6219 = vmax.f32 %v6217, %v6218
  %v6220 = vsel %vm5255, %v5228, -inf
  %v6221 = vmax.f32 %v6219, %v6220
  %v6222 = vsel %vm5255, %v5017, -inf
  %v6223 = vsel %vm5255, %v5089, -inf
  %v6224 = vmax.f32 %v6222, %v6223
  %v6225 = vsel %vm5255, %v5161, -inf
  %v6226 = vmax.f32 %v6224, %v6225
  %v6227 = vsel %vm5255, %v5233, -inf
  %v6228 = vmax.f32 %v6226, %v6227
  %v6229 = vsel %vm5255, %v5020, -inf
  %v6230 = vsel %vm5255, %v5092, -inf
  %v6231 = vmax.f32 %v6229, %v6230
  %v6232 = vsel %vm5255, %v5164, -inf
  %v6233 = vmax.f32 %v6231, %v6232
  %v6234 = vsel %vm5255, %v5236, -inf
  %v6235 = vmax.f32 %v6233, %v6234
  %v6236 = vsel %vm5255, %v5025, -inf
  %v6237 = vsel %vm5255, %v5097, -inf
  %v6238 = vmax.f32 %v6236, %v6237
  %v6239 = vsel %vm5255, %v5169, -inf
  %v6240 = vmax.f32 %v6238, %v6239
  %v6241 = vsel %vm5255, %v5241, -inf
  %v6242 = vmax.f32 %v6240, %v6241
  %v6243 = vsel %vm5255, %v5028, -inf
  %v6244 = vsel %vm5255, %v5100, -inf
  %v6245 = vmax.f32 %v6243, %v6244
  %v6246 = vsel %vm5255, %v5172, -inf
  %v6247 = vmax.f32 %v6245, %v6246
  %v6248 = vsel %vm5255, %v5244, -inf
  %v6249 = vmax.f32 %v6247, %v6248
  %v6250 = vsel %vm5255, %v5033, -inf
  %v6251 = vsel %vm5255, %v5105, -inf
  %v6252 = vmax.f32 %v6250, %v6251
  %v6253 = vsel %vm5255, %v5177, -inf
  %v6254 = vmax.f32 %v6252, %v6253
  %v6255 = vsel %vm5255, %v5249, -inf
  %v6256 = vmax.f32 %v6254, %v6255
  %v6257 = vsel %vm5255, %v5036, -inf
  %v6258 = vsel %vm5255, %v5108, -inf
  %v6259 = vmax.f32 %v6257, %v6258
  %v6260 = vsel %vm5255, %v5180, -inf
  %v6261 = vmax.f32 %v6259, %v6260
  %v6262 = vsel %vm5255, %v5252, -inf
  %v6263 = vmax.f32 %v6261, %v6262
  %v6264 = vld [vmem:[%s2] sm:$0x1]
  %v6266 = vlaneseq
  %v6267 = vshrl.u32 %v6266, 7
  %v6268 = vsub.s32 0, %v6267
  %v6269 = vrot.slane %v6264, %v6268
  %v6271 = vadd.f32 %v5262, %v6269
  %v6272 = vadd.f32 %v5269, %v6269
  %v6273 = vadd.f32 %v5276, %v6269
  %v6274 = vadd.f32 %v5283, %v6269
  %v6275 = vadd.f32 %v5290, %v6269
  %v6276 = vadd.f32 %v5297, %v6269
  %v6277 = vadd.f32 %v5304, %v6269
  %v6278 = vadd.f32 %v5311, %v6269
  %v6279 = vadd.f32 %v5318, %v6269
  %v6280 = vadd.f32 %v5325, %v6269
  %v6281 = vadd.f32 %v5332, %v6269
  %v6282 = vadd.f32 %v5339, %v6269
  %v6283 = vadd.f32 %v5346, %v6269
  %v6284 = vadd.f32 %v5353, %v6269
  %v6285 = vadd.f32 %v5360, %v6269
  %v6286 = vadd.f32 %v5367, %v6269
  %v6287 = vadd.f32 %v5374, %v6269
  %v6288 = vadd.f32 %v5381, %v6269
  %v6289 = vadd.f32 %v5388, %v6269
  %v6290 = vadd.f32 %v5395, %v6269
  %v6291 = vadd.f32 %v5402, %v6269
  %v6292 = vadd.f32 %v5409, %v6269
  %v6293 = vadd.f32 %v5416, %v6269
  %v6294 = vadd.f32 %v5423, %v6269
  %v6295 = vadd.f32 %v5430, %v6269
  %v6296 = vadd.f32 %v5437, %v6269
  %v6297 = vadd.f32 %v5444, %v6269
  %v6298 = vadd.f32 %v5451, %v6269
  %v6299 = vadd.f32 %v5458, %v6269
  %v6300 = vadd.f32 %v5465, %v6269
  %v6301 = vadd.f32 %v5472, %v6269
  %v6302 = vadd.f32 %v5479, %v6269
  %v6303 = vadd.f32 %v5486, %v6269
  %v6304 = vadd.f32 %v5493, %v6269
  %v6305 = vadd.f32 %v5500, %v6269
  %v6306 = vadd.f32 %v5507, %v6269
  %v6307 = vadd.f32 %v5514, %v6269
  %v6308 = vadd.f32 %v5521, %v6269
  %v6309 = vadd.f32 %v5528, %v6269
  %v6310 = vadd.f32 %v5535, %v6269
  %v6311 = vadd.f32 %v5542, %v6269
  %v6312 = vadd.f32 %v5549, %v6269
  %v6313 = vadd.f32 %v5556, %v6269
  %v6314 = vadd.f32 %v5563, %v6269
  %v6315 = vadd.f32 %v5570, %v6269
  %v6316 = vadd.f32 %v5577, %v6269
  %v6317 = vadd.f32 %v5584, %v6269
  %v6318 = vadd.f32 %v5591, %v6269
  %v6319 = vadd.f32 %v5598, %v6269
  %v6320 = vadd.f32 %v5605, %v6269
  %v6321 = vadd.f32 %v5612, %v6269
  %v6322 = vadd.f32 %v5619, %v6269
  %v6323 = vadd.f32 %v5626, %v6269
  %v6324 = vadd.f32 %v5633, %v6269
  %v6325 = vadd.f32 %v5640, %v6269
  %v6326 = vadd.f32 %v5647, %v6269
  %v6327 = vadd.f32 %v5654, %v6269
  %v6328 = vadd.f32 %v5661, %v6269
  %v6329 = vadd.f32 %v5668, %v6269
  %v6330 = vadd.f32 %v5675, %v6269
  %v6331 = vadd.f32 %v5682, %v6269
  %v6332 = vadd.f32 %v5689, %v6269
  %v6333 = vadd.f32 %v5696, %v6269
  %v6334 = vadd.f32 %v5703, %v6269
  %v6335 = vadd.f32 %v5710, %v6269
  %v6336 = vadd.f32 %v5717, %v6269
  %v6337 = vadd.f32 %v5724, %v6269
  %v6338 = vadd.f32 %v5731, %v6269
  %v6339 = vadd.f32 %v5738, %v6269
  %v6340 = vadd.f32 %v5745, %v6269
  %v6341 = vadd.f32 %v5752, %v6269
  %v6342 = vadd.f32 %v5759, %v6269
  %v6343 = vadd.f32 %v5766, %v6269
  %v6344 = vadd.f32 %v5773, %v6269
  %v6345 = vadd.f32 %v5780, %v6269
  %v6346 = vadd.f32 %v5787, %v6269
  %v6347 = vadd.f32 %v5794, %v6269
  %v6348 = vadd.f32 %v5801, %v6269
  %v6349 = vadd.f32 %v5808, %v6269
  %v6350 = vadd.f32 %v5815, %v6269
  %v6351 = vadd.f32 %v5822, %v6269
  %v6352 = vadd.f32 %v5829, %v6269
  %v6353 = vadd.f32 %v5836, %v6269
  %v6354 = vadd.f32 %v5843, %v6269
  %v6355 = vadd.f32 %v5850, %v6269
  %v6356 = vadd.f32 %v5857, %v6269
  %v6357 = vadd.f32 %v5864, %v6269
  %v6358 = vadd.f32 %v5871, %v6269
  %v6359 = vadd.f32 %v5878, %v6269
  %v6360 = vadd.f32 %v5885, %v6269
  %v6361 = vadd.f32 %v5892, %v6269
  %v6362 = vadd.f32 %v5899, %v6269
  %v6363 = vadd.f32 %v5906, %v6269
  %v6364 = vadd.f32 %v5913, %v6269
  %v6365 = vadd.f32 %v5920, %v6269
  %v6366 = vadd.f32 %v5927, %v6269
  %v6367 = vadd.f32 %v5934, %v6269
  %v6368 = vadd.f32 %v5941, %v6269
  %v6369 = vadd.f32 %v5948, %v6269
  %v6370 = vadd.f32 %v5955, %v6269
  %v6371 = vadd.f32 %v5962, %v6269
  %v6372 = vadd.f32 %v5969, %v6269
  %v6373 = vadd.f32 %v5976, %v6269
  %v6374 = vadd.f32 %v5983, %v6269
  %v6375 = vadd.f32 %v5990, %v6269
  %v6376 = vadd.f32 %v5997, %v6269
  %v6377 = vadd.f32 %v6004, %v6269
  %v6378 = vadd.f32 %v6011, %v6269
  %v6379 = vadd.f32 %v6018, %v6269
  %v6380 = vadd.f32 %v6025, %v6269
  %v6381 = vadd.f32 %v6032, %v6269
  %v6382 = vadd.f32 %v6039, %v6269
  %v6383 = vadd.f32 %v6046, %v6269
  %v6384 = vadd.f32 %v6053, %v6269
  %v6385 = vadd.f32 %v6060, %v6269
  %v6386 = vadd.f32 %v6067, %v6269
  %v6387 = vadd.f32 %v6074, %v6269
  %v6388 = vadd.f32 %v6081, %v6269
  %v6389 = vadd.f32 %v6088, %v6269
  %v6390 = vadd.f32 %v6095, %v6269
  %v6391 = vadd.f32 %v6102, %v6269
  %v6392 = vadd.f32 %v6109, %v6269
  %v6393 = vadd.f32 %v6116, %v6269
  %v6394 = vadd.f32 %v6123, %v6269
  %v6395 = vadd.f32 %v6130, %v6269
  %v6396 = vadd.f32 %v6137, %v6269
  %v6397 = vadd.f32 %v6144, %v6269
  %v6398 = vadd.f32 %v6151, %v6269
  %v6399 = vadd.f32 %v6158, %v6269
  %v6400 = vadd.f32 %v6165, %v6269
  %v6401 = vadd.f32 %v6172, %v6269
  %v6402 = vadd.f32 %v6179, %v6269
  %v6403 = vadd.f32 %v6186, %v6269
  %v6404 = vadd.f32 %v6193, %v6269
  %v6405 = vadd.f32 %v6200, %v6269
  %v6406 = vadd.f32 %v6207, %v6269
  %v6407 = vadd.f32 %v6214, %v6269
  %v6408 = vadd.f32 %v6221, %v6269
  %v6409 = vadd.f32 %v6228, %v6269
  %v6410 = vadd.f32 %v6235, %v6269
  %v6411 = vadd.f32 %v6242, %v6269
  %v6412 = vadd.f32 %v6249, %v6269
  %v6413 = vadd.f32 %v6256, %v6269
  %v6414 = vadd.f32 %v6263, %v6269
  %v6415 = vmax.f32 %v6271, 0.0
  %v6416 = vmax.f32 %v6272, 0.0
  %v6417 = vmax.f32 %v6273, 0.0
  %v6418 = vmax.f32 %v6274, 0.0
  %v6419 = vmax.f32 %v6275, 0.0
  %v6420 = vmax.f32 %v6276, 0.0
  %v6421 = vmax.f32 %v6277, 0.0
  %v6422 = vmax.f32 %v6278, 0.0
  %v6423 = vmax.f32 %v6279, 0.0
  %v6424 = vmax.f32 %v6280, 0.0
  %v6425 = vmax.f32 %v6281, 0.0
  %v6426 = vmax.f32 %v6282, 0.0
  %v6427 = vmax.f32 %v6283, 0.0
  %v6428 = vmax.f32 %v6284, 0.0
  %v6429 = vmax.f32 %v6285, 0.0
  %v6430 = vmax.f32 %v6286, 0.0
  %v6431 = vmax.f32 %v6287, 0.0
  %v6432 = vmax.f32 %v6288, 0.0
  %v6433 = vmax.f32 %v6289, 0.0
  %v6434 = vmax.f32 %v6290, 0.0
  %v6435 = vmax.f32 %v6291, 0.0
  %v6436 = vmax.f32 %v6292, 0.0
  %v6437 = vmax.f32 %v6293, 0.0
  %v6438 = vmax.f32 %v6294, 0.0
  %v6439 = vmax.f32 %v6295, 0.0
  %v6440 = vmax.f32 %v6296, 0.0
  %v6441 = vmax.f32 %v6297, 0.0
  %v6442 = vmax.f32 %v6298, 0.0
  %v6443 = vmax.f32 %v6299, 0.0
  %v6444 = vmax.f32 %v6300, 0.0
  %v6445 = vmax.f32 %v6301, 0.0
  %v6446 = vmax.f32 %v6302, 0.0
  %v6447 = vmax.f32 %v6303, 0.0
  %v6448 = vmax.f32 %v6304, 0.0
  %v6449 = vmax.f32 %v6305, 0.0
  %v6450 = vmax.f32 %v6306, 0.0
  %v6451 = vmax.f32 %v6307, 0.0
  %v6452 = vmax.f32 %v6308, 0.0
  %v6453 = vmax.f32 %v6309, 0.0
  %v6454 = vmax.f32 %v6310, 0.0
  %v6455 = vmax.f32 %v6311, 0.0
  %v6456 = vmax.f32 %v6312, 0.0
  %v6457 = vmax.f32 %v6313, 0.0
  %v6458 = vmax.f32 %v6314, 0.0
  %v6459 = vmax.f32 %v6315, 0.0
  %v6460 = vmax.f32 %v6316, 0.0
  %v6461 = vmax.f32 %v6317, 0.0
  %v6462 = vmax.f32 %v6318, 0.0
  %v6463 = vmax.f32 %v6319, 0.0
  %v6464 = vmax.f32 %v6320, 0.0
  %v6465 = vmax.f32 %v6321, 0.0
  %v6466 = vmax.f32 %v6322, 0.0
  %v6467 = vmax.f32 %v6323, 0.0
  %v6468 = vmax.f32 %v6324, 0.0
  %v6469 = vmax.f32 %v6325, 0.0
  %v6470 = vmax.f32 %v6326, 0.0
  %v6471 = vmax.f32 %v6327, 0.0
  %v6472 = vmax.f32 %v6328, 0.0
  %v6473 = vmax.f32 %v6329, 0.0
  %v6474 = vmax.f32 %v6330, 0.0
  %v6475 = vmax.f32 %v6331, 0.0
  %v6476 = vmax.f32 %v6332, 0.0
  %v6477 = vmax.f32 %v6333, 0.0
  %v6478 = vmax.f32 %v6334, 0.0
  %v6479 = vmax.f32 %v6335, 0.0
  %v6480 = vmax.f32 %v6336, 0.0
  %v6481 = vmax.f32 %v6337, 0.0
  %v6482 = vmax.f32 %v6338, 0.0
  %v6483 = vmax.f32 %v6339, 0.0
  %v6484 = vmax.f32 %v6340, 0.0
  %v6485 = vmax.f32 %v6341, 0.0
  %v6486 = vmax.f32 %v6342, 0.0
  %v6487 = vmax.f32 %v6343, 0.0
  %v6488 = vmax.f32 %v6344, 0.0
  %v6489 = vmax.f32 %v6345, 0.0
  %v6490 = vmax.f32 %v6346, 0.0
  %v6491 = vmax.f32 %v6347, 0.0
  %v6492 = vmax.f32 %v6348, 0.0
  %v6493 = vmax.f32 %v6349, 0.0
  %v6494 = vmax.f32 %v6350, 0.0
  %v6495 = vmax.f32 %v6351, 0.0
  %v6496 = vmax.f32 %v6352, 0.0
  %v6497 = vmax.f32 %v6353, 0.0
  %v6498 = vmax.f32 %v6354, 0.0
  %v6499 = vmax.f32 %v6355, 0.0
  %v6500 = vmax.f32 %v6356, 0.0
  %v6501 = vmax.f32 %v6357, 0.0
  %v6502 = vmax.f32 %v6358, 0.0
  %v6503 = vmax.f32 %v6359, 0.0
  %v6504 = vmax.f32 %v6360, 0.0
  %v6505 = vmax.f32 %v6361, 0.0
  %v6506 = vmax.f32 %v6362, 0.0
  %v6507 = vmax.f32 %v6363, 0.0
  %v6508 = vmax.f32 %v6364, 0.0
  %v6509 = vmax.f32 %v6365, 0.0
  %v6510 = vmax.f32 %v6366, 0.0
  %v6511 = vmax.f32 %v6367, 0.0
  %v6512 = vmax.f32 %v6368, 0.0
  %v6513 = vmax.f32 %v6369, 0.0
  %v6514 = vmax.f32 %v6370, 0.0
  %v6515 = vmax.f32 %v6371, 0.0
  %v6516 = vmax.f32 %v6372, 0.0
  %v6517 = vmax.f32 %v6373, 0.0
  %v6518 = vmax.f32 %v6374, 0.0
  %v6519 = vmax.f32 %v6375, 0.0
  %v6520 = vmax.f32 %v6376, 0.0
  %v6521 = vmax.f32 %v6377, 0.0
  %v6522 = vmax.f32 %v6378, 0.0
  %v6523 = vmax.f32 %v6379, 0.0
  %v6524 = vmax.f32 %v6380, 0.0
  %v6525 = vmax.f32 %v6381, 0.0
  %v6526 = vmax.f32 %v6382, 0.0
  %v6527 = vmax.f32 %v6383, 0.0
  %v6528 = vmax.f32 %v6384, 0.0
  %v6529 = vmax.f32 %v6385, 0.0
  %v6530 = vmax.f32 %v6386, 0.0
  %v6531 = vmax.f32 %v6387, 0.0
  %v6532 = vmax.f32 %v6388, 0.0
  %v6533 = vmax.f32 %v6389, 0.0
  %v6534 = vmax.f32 %v6390, 0.0
  %v6535 = vmax.f32 %v6391, 0.0
  %v6536 = vmax.f32 %v6392, 0.0
  %v6537 = vmax.f32 %v6393, 0.0
  %v6538 = vmax.f32 %v6394, 0.0
  %v6539 = vmax.f32 %v6395, 0.0
  %v6540 = vmax.f32 %v6396, 0.0
  %v6541 = vmax.f32 %v6397, 0.0
  %v6542 = vmax.f32 %v6398, 0.0
  %v6543 = vmax.f32 %v6399, 0.0
  %v6544 = vmax.f32 %v6400, 0.0
  %v6545 = vmax.f32 %v6401, 0.0
  %v6546 = vmax.f32 %v6402, 0.0
  %v6547 = vmax.f32 %v6403, 0.0
  %v6548 = vmax.f32 %v6404, 0.0
  %v6549 = vmax.f32 %v6405, 0.0
  %v6550 = vmax.f32 %v6406, 0.0
  %v6551 = vmax.f32 %v6407, 0.0
  %v6552 = vmax.f32 %v6408, 0.0
  %v6553 = vmax.f32 %v6409, 0.0
  %v6554 = vmax.f32 %v6410, 0.0
  %v6555 = vmax.f32 %v6411, 0.0
  %v6556 = vmax.f32 %v6412, 0.0
  %v6557 = vmax.f32 %v6413, 0.0
  %v6558 = vmax.f32 %v6414, 0.0
  %v6559 = vpack.c.bf16 %v6416, %v6415
  %v6560 = vpack.c.bf16 %v6418, %v6417
  %v6561 = vpack.c.bf16 %v6420, %v6419
  %v6562 = vpack.c.bf16 %v6422, %v6421
  %v6563 = vpack.c.bf16 %v6424, %v6423
  %v6564 = vpack.c.bf16 %v6426, %v6425
  %v6565 = vpack.c.bf16 %v6428, %v6427
  %v6566 = vpack.c.bf16 %v6430, %v6429
  %v6567 = vpack.c.bf16 %v6432, %v6431
  %v6568 = vpack.c.bf16 %v6434, %v6433
  %v6569 = vpack.c.bf16 %v6436, %v6435
  %v6570 = vpack.c.bf16 %v6438, %v6437
  %v6571 = vpack.c.bf16 %v6440, %v6439
  %v6572 = vpack.c.bf16 %v6442, %v6441
  %v6573 = vpack.c.bf16 %v6444, %v6443
  %v6574 = vpack.c.bf16 %v6446, %v6445
  %v6575 = vpack.c.bf16 %v6448, %v6447
  %v6576 = vpack.c.bf16 %v6450, %v6449
  %v6577 = vpack.c.bf16 %v6452, %v6451
  %v6578 = vpack.c.bf16 %v6454, %v6453
  %v6579 = vpack.c.bf16 %v6456, %v6455
  %v6580 = vpack.c.bf16 %v6458, %v6457
  %v6581 = vpack.c.bf16 %v6460, %v6459
  %v6582 = vpack.c.bf16 %v6462, %v6461
  %v6583 = vpack.c.bf16 %v6464, %v6463
  %v6584 = vpack.c.bf16 %v6466, %v6465
  %v6585 = vpack.c.bf16 %v6468, %v6467
  %v6586 = vpack.c.bf16 %v6470, %v6469
  %v6587 = vpack.c.bf16 %v6472, %v6471
  %v6588 = vpack.c.bf16 %v6474, %v6473
  %v6589 = vpack.c.bf16 %v6476, %v6475
  %v6590 = vpack.c.bf16 %v6478, %v6477
  %v6591 = vpack.c.bf16 %v6480, %v6479
  %v6592 = vpack.c.bf16 %v6482, %v6481
  %v6593 = vpack.c.bf16 %v6484, %v6483
  %v6594 = vpack.c.bf16 %v6486, %v6485
  %v6595 = vpack.c.bf16 %v6488, %v6487
  %v6596 = vpack.c.bf16 %v6490, %v6489
  %v6597 = vpack.c.bf16 %v6492, %v6491
  %v6598 = vpack.c.bf16 %v6494, %v6493
  %v6599 = vpack.c.bf16 %v6496, %v6495
  %v6600 = vpack.c.bf16 %v6498, %v6497
  %v6601 = vpack.c.bf16 %v6500, %v6499
  %v6602 = vpack.c.bf16 %v6502, %v6501
  %v6603 = vpack.c.bf16 %v6504, %v6503
  %v6604 = vpack.c.bf16 %v6506, %v6505
  %v6605 = vpack.c.bf16 %v6508, %v6507
  %v6606 = vpack.c.bf16 %v6510, %v6509
  %v6607 = vpack.c.bf16 %v6512, %v6511
  %v6608 = vpack.c.bf16 %v6514, %v6513
  %v6609 = vpack.c.bf16 %v6516, %v6515
  %v6610 = vpack.c.bf16 %v6518, %v6517
  %v6611 = vpack.c.bf16 %v6520, %v6519
  %v6612 = vpack.c.bf16 %v6522, %v6521
  %v6613 = vpack.c.bf16 %v6524, %v6523
  %v6614 = vpack.c.bf16 %v6526, %v6525
  %v6615 = vpack.c.bf16 %v6528, %v6527
  %v6616 = vpack.c.bf16 %v6530, %v6529
  %v6617 = vpack.c.bf16 %v6532, %v6531
  %v6618 = vpack.c.bf16 %v6534, %v6533
  %v6619 = vpack.c.bf16 %v6536, %v6535
  %v6620 = vpack.c.bf16 %v6538, %v6537
  %v6621 = vpack.c.bf16 %v6540, %v6539
  %v6622 = vpack.c.bf16 %v6542, %v6541
  %v6623 = vpack.c.bf16 %v6544, %v6543
  %v6624 = vpack.c.bf16 %v6546, %v6545
  %v6625 = vpack.c.bf16 %v6548, %v6547
  %v6626 = vpack.c.bf16 %v6550, %v6549
  %v6627 = vpack.c.bf16 %v6552, %v6551
  %v6628 = vpack.c.bf16 %v6554, %v6553
  %v6629 = vpack.c.bf16 %v6556, %v6555
  %v6630 = vpack.c.bf16 %v6558, %v6557
  %v6703 = vunpack.c.l.b16 %v6559
  %v6704 = vunpack.c.h.b16 %v6559
  %v6705 = vunpack.c.l.b16 %v6560
  %v6706 = vunpack.c.h.b16 %v6560
  %v6707 = vunpack.c.l.b16 %v6561
  %v6708 = vunpack.c.h.b16 %v6561
  %v6709 = vunpack.c.l.b16 %v6562
  %v6710 = vunpack.c.h.b16 %v6562
  %v6711 = vunpack.c.l.b16 %v6563
  %v6712 = vunpack.c.h.b16 %v6563
  %v6713 = vunpack.c.l.b16 %v6564
  %v6714 = vunpack.c.h.b16 %v6564
  %v6715 = vunpack.c.l.b16 %v6565
  %v6716 = vunpack.c.h.b16 %v6565
  %v6717 = vunpack.c.l.b16 %v6566
  %v6718 = vunpack.c.h.b16 %v6566
  %v6719 = vunpack.c.l.b16 %v6567
  %v6720 = vunpack.c.h.b16 %v6567
  %v6721 = vunpack.c.l.b16 %v6568
  %v6722 = vunpack.c.h.b16 %v6568
  %v6723 = vunpack.c.l.b16 %v6569
  %v6724 = vunpack.c.h.b16 %v6569
  %v6725 = vunpack.c.l.b16 %v6570
  %v6726 = vunpack.c.h.b16 %v6570
  %v6727 = vunpack.c.l.b16 %v6571
  %v6728 = vunpack.c.h.b16 %v6571
  %v6729 = vunpack.c.l.b16 %v6572
  %v6730 = vunpack.c.h.b16 %v6572
  %v6731 = vunpack.c.l.b16 %v6573
  %v6732 = vunpack.c.h.b16 %v6573
  %v6733 = vunpack.c.l.b16 %v6574
  %v6734 = vunpack.c.h.b16 %v6574
  %v6735 = vunpack.c.l.b16 %v6575
  %v6736 = vunpack.c.h.b16 %v6575
  %v6737 = vunpack.c.l.b16 %v6576
  %v6738 = vunpack.c.h.b16 %v6576
  %v6739 = vunpack.c.l.b16 %v6577
  %v6740 = vunpack.c.h.b16 %v6577
  %v6741 = vunpack.c.l.b16 %v6578
  %v6742 = vunpack.c.h.b16 %v6578
  %v6743 = vunpack.c.l.b16 %v6579
  %v6744 = vunpack.c.h.b16 %v6579
  %v6745 = vunpack.c.l.b16 %v6580
  %v6746 = vunpack.c.h.b16 %v6580
  %v6747 = vunpack.c.l.b16 %v6581
  %v6748 = vunpack.c.h.b16 %v6581
  %v6749 = vunpack.c.l.b16 %v6582
  %v6750 = vunpack.c.h.b16 %v6582
  %v6751 = vunpack.c.l.b16 %v6583
  %v6752 = vunpack.c.h.b16 %v6583
  %v6753 = vunpack.c.l.b16 %v6584
  %v6754 = vunpack.c.h.b16 %v6584
  %v6755 = vunpack.c.l.b16 %v6585
  %v6756 = vunpack.c.h.b16 %v6585
  %v6757 = vunpack.c.l.b16 %v6586
  %v6758 = vunpack.c.h.b16 %v6586
  %v6759 = vunpack.c.l.b16 %v6587
  %v6760 = vunpack.c.h.b16 %v6587
  %v6761 = vunpack.c.l.b16 %v6588
  %v6762 = vunpack.c.h.b16 %v6588
  %v6763 = vunpack.c.l.b16 %v6589
  %v6764 = vunpack.c.h.b16 %v6589
  %v6765 = vunpack.c.l.b16 %v6590
  %v6766 = vunpack.c.h.b16 %v6590
  %v6767 = vunpack.c.l.b16 %v6591
  %v6768 = vunpack.c.h.b16 %v6591
  %v6769 = vunpack.c.l.b16 %v6592
  %v6770 = vunpack.c.h.b16 %v6592
  %v6771 = vunpack.c.l.b16 %v6593
  %v6772 = vunpack.c.h.b16 %v6593
  %v6773 = vunpack.c.l.b16 %v6594
  %v6774 = vunpack.c.h.b16 %v6594
  %v6775 = vunpack.c.l.b16 %v6595
  %v6776 = vunpack.c.h.b16 %v6595
  %v6777 = vunpack.c.l.b16 %v6596
  %v6778 = vunpack.c.h.b16 %v6596
  %v6779 = vunpack.c.l.b16 %v6597
  %v6780 = vunpack.c.h.b16 %v6597
  %v6781 = vunpack.c.l.b16 %v6598
  %v6782 = vunpack.c.h.b16 %v6598
  %v6783 = vunpack.c.l.b16 %v6599
  %v6784 = vunpack.c.h.b16 %v6599
  %v6785 = vunpack.c.l.b16 %v6600
  %v6786 = vunpack.c.h.b16 %v6600
  %v6787 = vunpack.c.l.b16 %v6601
  %v6788 = vunpack.c.h.b16 %v6601
  %v6789 = vunpack.c.l.b16 %v6602
  %v6790 = vunpack.c.h.b16 %v6602
  %v6791 = vunpack.c.l.b16 %v6603
  %v6792 = vunpack.c.h.b16 %v6603
  %v6793 = vunpack.c.l.b16 %v6604
  %v6794 = vunpack.c.h.b16 %v6604
  %v6795 = vunpack.c.l.b16 %v6605
  %v6796 = vunpack.c.h.b16 %v6605
  %v6797 = vunpack.c.l.b16 %v6606
  %v6798 = vunpack.c.h.b16 %v6606
  %v6799 = vunpack.c.l.b16 %v6607
  %v6800 = vunpack.c.h.b16 %v6607
  %v6801 = vunpack.c.l.b16 %v6608
  %v6802 = vunpack.c.h.b16 %v6608
  %v6803 = vunpack.c.l.b16 %v6609
  %v6804 = vunpack.c.h.b16 %v6609
  %v6805 = vunpack.c.l.b16 %v6610
  %v6806 = vunpack.c.h.b16 %v6610
  %v6807 = vunpack.c.l.b16 %v6611
  %v6808 = vunpack.c.h.b16 %v6611
  %v6809 = vunpack.c.l.b16 %v6612
  %v6810 = vunpack.c.h.b16 %v6612
  %v6811 = vunpack.c.l.b16 %v6613
  %v6812 = vunpack.c.h.b16 %v6613
  %v6813 = vunpack.c.l.b16 %v6614
  %v6814 = vunpack.c.h.b16 %v6614
  %v6815 = vunpack.c.l.b16 %v6615
  %v6816 = vunpack.c.h.b16 %v6615
  %v6817 = vunpack.c.l.b16 %v6616
  %v6818 = vunpack.c.h.b16 %v6616
  %v6819 = vunpack.c.l.b16 %v6617
  %v6820 = vunpack.c.h.b16 %v6617
  %v6821 = vunpack.c.l.b16 %v6618
  %v6822 = vunpack.c.h.b16 %v6618
  %v6823 = vunpack.c.l.b16 %v6619
  %v6824 = vunpack.c.h.b16 %v6619
  %v6825 = vunpack.c.l.b16 %v6620
  %v6826 = vunpack.c.h.b16 %v6620
  %v6827 = vunpack.c.l.b16 %v6621
  %v6828 = vunpack.c.h.b16 %v6621
  %v6829 = vunpack.c.l.b16 %v6622
  %v6830 = vunpack.c.h.b16 %v6622
  %v6831 = vunpack.c.l.b16 %v6623
  %v6832 = vunpack.c.h.b16 %v6623
  %v6833 = vunpack.c.l.b16 %v6624
  %v6834 = vunpack.c.h.b16 %v6624
  %v6835 = vunpack.c.l.b16 %v6625
  %v6836 = vunpack.c.h.b16 %v6625
  %v6837 = vunpack.c.l.b16 %v6626
  %v6838 = vunpack.c.h.b16 %v6626
  %v6839 = vunpack.c.l.b16 %v6627
  %v6840 = vunpack.c.h.b16 %v6627
  %v6841 = vunpack.c.l.b16 %v6628
  %v6842 = vunpack.c.h.b16 %v6628
  %v6843 = vunpack.c.l.b16 %v6629
  %v6844 = vunpack.c.h.b16 %v6629
  %v6845 = vunpack.c.l.b16 %v6630
  %v6846 = vunpack.c.h.b16 %v6630
  %v6847 = vpack.c.b16 %v6703, %v6703
  %v6848 = vpack.c.b16 %v6704, %v6704
  %v6849 = vpack.c.b16 %v6705, %v6705
  %v6850 = vpack.c.b16 %v6706, %v6706
  %v6851 = vpack.c.b16 %v6707, %v6707
  %v6852 = vpack.c.b16 %v6708, %v6708
  %v6853 = vpack.c.b16 %v6709, %v6709
  %v6854 = vpack.c.b16 %v6710, %v6710
  %v6855 = vpack.c.b16 %v6711, %v6711
  %v6856 = vpack.c.b16 %v6712, %v6712
  %v6857 = vpack.c.b16 %v6713, %v6713
  %v6858 = vpack.c.b16 %v6714, %v6714
  %v6859 = vpack.c.b16 %v6715, %v6715
  %v6860 = vpack.c.b16 %v6716, %v6716
  %v6861 = vpack.c.b16 %v6717, %v6717
  %v6862 = vpack.c.b16 %v6718, %v6718
  %v6863 = vpack.c.b16 %v6719, %v6719
  %v6864 = vpack.c.b16 %v6720, %v6720
  %v6865 = vpack.c.b16 %v6721, %v6721
  %v6866 = vpack.c.b16 %v6722, %v6722
  %v6867 = vpack.c.b16 %v6723, %v6723
  %v6868 = vpack.c.b16 %v6724, %v6724
  %v6869 = vpack.c.b16 %v6725, %v6725
  %v6870 = vpack.c.b16 %v6726, %v6726
  %v6871 = vpack.c.b16 %v6727, %v6727
  %v6872 = vpack.c.b16 %v6728, %v6728
  %v6873 = vpack.c.b16 %v6729, %v6729
  %v6874 = vpack.c.b16 %v6730, %v6730
  %v6875 = vpack.c.b16 %v6731, %v6731
  %v6876 = vpack.c.b16 %v6732, %v6732
  %v6877 = vpack.c.b16 %v6733, %v6733
  %v6878 = vpack.c.b16 %v6734, %v6734
  %v6879 = vpack.c.b16 %v6735, %v6735
  %v6880 = vpack.c.b16 %v6736, %v6736
  %v6881 = vpack.c.b16 %v6737, %v6737
  %v6882 = vpack.c.b16 %v6738, %v6738
  %v6883 = vpack.c.b16 %v6739, %v6739
  %v6884 = vpack.c.b16 %v6740, %v6740
  %v6885 = vpack.c.b16 %v6741, %v6741
  %v6886 = vpack.c.b16 %v6742, %v6742
  %v6887 = vpack.c.b16 %v6743, %v6743
  %v6888 = vpack.c.b16 %v6744, %v6744
  %v6889 = vpack.c.b16 %v6745, %v6745
  %v6890 = vpack.c.b16 %v6746, %v6746
  %v6891 = vpack.c.b16 %v6747, %v6747
  %v6892 = vpack.c.b16 %v6748, %v6748
  %v6893 = vpack.c.b16 %v6749, %v6749
  %v6894 = vpack.c.b16 %v6750, %v6750
  %v6895 = vpack.c.b16 %v6751, %v6751
  %v6896 = vpack.c.b16 %v6752, %v6752
  %v6897 = vpack.c.b16 %v6753, %v6753
  %v6898 = vpack.c.b16 %v6754, %v6754
  %v6899 = vpack.c.b16 %v6755, %v6755
  %v6900 = vpack.c.b16 %v6756, %v6756
  %v6901 = vpack.c.b16 %v6757, %v6757
  %v6902 = vpack.c.b16 %v6758, %v6758
  %v6903 = vpack.c.b16 %v6759, %v6759
  %v6904 = vpack.c.b16 %v6760, %v6760
  %v6905 = vpack.c.b16 %v6761, %v6761
  %v6906 = vpack.c.b16 %v6762, %v6762
  %v6907 = vpack.c.b16 %v6763, %v6763
  %v6908 = vpack.c.b16 %v6764, %v6764
  %v6909 = vpack.c.b16 %v6765, %v6765
  %v6910 = vpack.c.b16 %v6766, %v6766
  %v6911 = vpack.c.b16 %v6767, %v6767
  %v6912 = vpack.c.b16 %v6768, %v6768
  %v6913 = vpack.c.b16 %v6769, %v6769
  %v6914 = vpack.c.b16 %v6770, %v6770
  %v6915 = vpack.c.b16 %v6771, %v6771
  %v6916 = vpack.c.b16 %v6772, %v6772
  %v6917 = vpack.c.b16 %v6773, %v6773
  %v6918 = vpack.c.b16 %v6774, %v6774
  %v6919 = vpack.c.b16 %v6775, %v6775
  %v6920 = vpack.c.b16 %v6776, %v6776
  %v6921 = vpack.c.b16 %v6777, %v6777
  %v6922 = vpack.c.b16 %v6778, %v6778
  %v6923 = vpack.c.b16 %v6779, %v6779
  %v6924 = vpack.c.b16 %v6780, %v6780
  %v6925 = vpack.c.b16 %v6781, %v6781
  %v6926 = vpack.c.b16 %v6782, %v6782
  %v6927 = vpack.c.b16 %v6783, %v6783
  %v6928 = vpack.c.b16 %v6784, %v6784
  %v6929 = vpack.c.b16 %v6785, %v6785
  %v6930 = vpack.c.b16 %v6786, %v6786
  %v6931 = vpack.c.b16 %v6787, %v6787
  %v6932 = vpack.c.b16 %v6788, %v6788
  %v6933 = vpack.c.b16 %v6789, %v6789
  %v6934 = vpack.c.b16 %v6790, %v6790
  %v6935 = vpack.c.b16 %v6791, %v6791
  %v6936 = vpack.c.b16 %v6792, %v6792
  %v6937 = vpack.c.b16 %v6793, %v6793
  %v6938 = vpack.c.b16 %v6794, %v6794
  %v6939 = vpack.c.b16 %v6795, %v6795
  %v6940 = vpack.c.b16 %v6796, %v6796
  %v6941 = vpack.c.b16 %v6797, %v6797
  %v6942 = vpack.c.b16 %v6798, %v6798
  %v6943 = vpack.c.b16 %v6799, %v6799
  %v6944 = vpack.c.b16 %v6800, %v6800
  %v6945 = vpack.c.b16 %v6801, %v6801
  %v6946 = vpack.c.b16 %v6802, %v6802
  %v6947 = vpack.c.b16 %v6803, %v6803
  %v6948 = vpack.c.b16 %v6804, %v6804
  %v6949 = vpack.c.b16 %v6805, %v6805
  %v6950 = vpack.c.b16 %v6806, %v6806
  %v6951 = vpack.c.b16 %v6807, %v6807
  %v6952 = vpack.c.b16 %v6808, %v6808
  %v6953 = vpack.c.b16 %v6809, %v6809
  %v6954 = vpack.c.b16 %v6810, %v6810
  %v6955 = vpack.c.b16 %v6811, %v6811
  %v6956 = vpack.c.b16 %v6812, %v6812
  %v6957 = vpack.c.b16 %v6813, %v6813
  %v6958 = vpack.c.b16 %v6814, %v6814
  %v6959 = vpack.c.b16 %v6815, %v6815
  %v6960 = vpack.c.b16 %v6816, %v6816
  %v6961 = vpack.c.b16 %v6817, %v6817
  %v6962 = vpack.c.b16 %v6818, %v6818
  %v6963 = vpack.c.b16 %v6819, %v6819
  %v6964 = vpack.c.b16 %v6820, %v6820
  %v6965 = vpack.c.b16 %v6821, %v6821
  %v6966 = vpack.c.b16 %v6822, %v6822
  %v6967 = vpack.c.b16 %v6823, %v6823
  %v6968 = vpack.c.b16 %v6824, %v6824
  %v6969 = vpack.c.b16 %v6825, %v6825
  %v6970 = vpack.c.b16 %v6826, %v6826
  %v6971 = vpack.c.b16 %v6827, %v6827
  %v6972 = vpack.c.b16 %v6828, %v6828
  %v6973 = vpack.c.b16 %v6829, %v6829
  %v6974 = vpack.c.b16 %v6830, %v6830
  %v6975 = vpack.c.b16 %v6831, %v6831
  %v6976 = vpack.c.b16 %v6832, %v6832
  %v6977 = vpack.c.b16 %v6833, %v6833
  %v6978 = vpack.c.b16 %v6834, %v6834
  %v6979 = vpack.c.b16 %v6835, %v6835
  %v6980 = vpack.c.b16 %v6836, %v6836
  %v6981 = vpack.c.b16 %v6837, %v6837
  %v6982 = vpack.c.b16 %v6838, %v6838
  %v6983 = vpack.c.b16 %v6839, %v6839
  %v6984 = vpack.c.b16 %v6840, %v6840
  %v6985 = vpack.c.b16 %v6841, %v6841
  %v6986 = vpack.c.b16 %v6842, %v6842
  %v6987 = vpack.c.b16 %v6843, %v6843
  %v6988 = vpack.c.b16 %v6844, %v6844
  %v6989 = vpack.c.b16 %v6845, %v6845
  %v6990 = vpack.c.b16 %v6846, %v6846
  %vm7135 = vcmask 257024
  %7136 = vst.msk [vmem:[%s3] sm:$0xf] %vm7135, %v6847
  %7137 = vst.msk [vmem:[%s3 + $0x4] sm:$0xf] %vm7135, %v6848
  %7138 = vst.msk [vmem:[%s3 + $0x8] sm:$0xf] %vm7135, %v6849
  %7139 = vst.msk [vmem:[%s3 + $0xc] sm:$0xf] %vm7135, %v6850
  %7140 = vst.msk [vmem:[%s3 + $0x10] sm:$0xf] %vm7135, %v6851
  %7141 = vst.msk [vmem:[%s3 + $0x14] sm:$0xf] %vm7135, %v6852
  %7142 = vst.msk [vmem:[%s3 + $0x18] sm:$0xf] %vm7135, %v6853
  %7143 = vst.msk [vmem:[%s3 + $0x1c] sm:$0xf] %vm7135, %v6854
  %7144 = vst.msk [vmem:[%s3 + $0x20] sm:$0xf] %vm7135, %v6855
  %7145 = vst.msk [vmem:[%s3 + $0x24] sm:$0xf] %vm7135, %v6856
  %7146 = vst.msk [vmem:[%s3 + $0x28] sm:$0xf] %vm7135, %v6857
  %7147 = vst.msk [vmem:[%s3 + $0x2c] sm:$0xf] %vm7135, %v6858
  %7148 = vst.msk [vmem:[%s3 + $0x30] sm:$0xf] %vm7135, %v6859
  %7149 = vst.msk [vmem:[%s3 + $0x34] sm:$0xf] %vm7135, %v6860
  %7150 = vst.msk [vmem:[%s3 + $0x38] sm:$0xf] %vm7135, %v6861
  %7151 = vst.msk [vmem:[%s3 + $0x3c] sm:$0xf] %vm7135, %v6862
  %7152 = vst.msk [vmem:[%s3 + $0x40] sm:$0xf] %vm7135, %v6863
  %7153 = vst.msk [vmem:[%s3 + $0x44] sm:$0xf] %vm7135, %v6864
  %7154 = vst.msk [vmem:[%s3 + $0x48] sm:$0xf] %vm7135, %v6865
  %7155 = vst.msk [vmem:[%s3 + $0x4c] sm:$0xf] %vm7135, %v6866
  %7156 = vst.msk [vmem:[%s3 + $0x50] sm:$0xf] %vm7135, %v6867
  %7157 = vst.msk [vmem:[%s3 + $0x54] sm:$0xf] %vm7135, %v6868
  %7158 = vst.msk [vmem:[%s3 + $0x58] sm:$0xf] %vm7135, %v6869
  %7159 = vst.msk [vmem:[%s3 + $0x5c] sm:$0xf] %vm7135, %v6870
  %7160 = vst.msk [vmem:[%s3 + $0x60] sm:$0xf] %vm7135, %v6871
  %7161 = vst.msk [vmem:[%s3 + $0x64] sm:$0xf] %vm7135, %v6872
  %7162 = vst.msk [vmem:[%s3 + $0x68] sm:$0xf] %vm7135, %v6873
  %7163 = vst.msk [vmem:[%s3 + $0x6c] sm:$0xf] %vm7135, %v6874
  %7164 = vst.msk [vmem:[%s3 + $0x70] sm:$0xf] %vm7135, %v6875
  %7165 = vst.msk [vmem:[%s3 + $0x74] sm:$0xf] %vm7135, %v6876
  %7166 = vst.msk [vmem:[%s3 + $0x78] sm:$0xf] %vm7135, %v6877
  %7167 = vst.msk [vmem:[%s3 + $0x7c] sm:$0xf] %vm7135, %v6878
  %7168 = vst.msk [vmem:[%s3 + $0x80] sm:$0xf] %vm7135, %v6879
  %7169 = vst.msk [vmem:[%s3 + $0x84] sm:$0xf] %vm7135, %v6880
  %7170 = vst.msk [vmem:[%s3 + $0x88] sm:$0xf] %vm7135, %v6881
  %7171 = vst.msk [vmem:[%s3 + $0x8c] sm:$0xf] %vm7135, %v6882
  %7172 = vst.msk [vmem:[%s3 + $0x90] sm:$0xf] %vm7135, %v6883
  %7173 = vst.msk [vmem:[%s3 + $0x94] sm:$0xf] %vm7135, %v6884
  %7174 = vst.msk [vmem:[%s3 + $0x98] sm:$0xf] %vm7135, %v6885
  %7175 = vst.msk [vmem:[%s3 + $0x9c] sm:$0xf] %vm7135, %v6886
  %7176 = vst.msk [vmem:[%s3 + $0xa0] sm:$0xf] %vm7135, %v6887
  %7177 = vst.msk [vmem:[%s3 + $0xa4] sm:$0xf] %vm7135, %v6888
  %7178 = vst.msk [vmem:[%s3 + $0xa8] sm:$0xf] %vm7135, %v6889
  %7179 = vst.msk [vmem:[%s3 + $0xac] sm:$0xf] %vm7135, %v6890
  %7180 = vst.msk [vmem:[%s3 + $0xb0] sm:$0xf] %vm7135, %v6891
  %7181 = vst.msk [vmem:[%s3 + $0xb4] sm:$0xf] %vm7135, %v6892
  %7182 = vst.msk [vmem:[%s3 + $0xb8] sm:$0xf] %vm7135, %v6893
  %7183 = vst.msk [vmem:[%s3 + $0xbc] sm:$0xf] %vm7135, %v6894
  %7184 = vst.msk [vmem:[%s3 + $0xc0] sm:$0xf] %vm7135, %v6895
  %7185 = vst.msk [vmem:[%s3 + $0xc4] sm:$0xf] %vm7135, %v6896
  %7186 = vst.msk [vmem:[%s3 + $0xc8] sm:$0xf] %vm7135, %v6897
  %7187 = vst.msk [vmem:[%s3 + $0xcc] sm:$0xf] %vm7135, %v6898
  %7188 = vst.msk [vmem:[%s3 + $0xd0] sm:$0xf] %vm7135, %v6899
  %7189 = vst.msk [vmem:[%s3 + $0xd4] sm:$0xf] %vm7135, %v6900
  %7190 = vst.msk [vmem:[%s3 + $0xd8] sm:$0xf] %vm7135, %v6901
  %7191 = vst.msk [vmem:[%s3 + $0xdc] sm:$0xf] %vm7135, %v6902
  %7192 = vst.msk [vmem:[%s3 + $0xe0] sm:$0xf] %vm7135, %v6903
  %7193 = vst.msk [vmem:[%s3 + $0xe4] sm:$0xf] %vm7135, %v6904
  %7194 = vst.msk [vmem:[%s3 + $0xe8] sm:$0xf] %vm7135, %v6905
  %7195 = vst.msk [vmem:[%s3 + $0xec] sm:$0xf] %vm7135, %v6906
  %7196 = vst.msk [vmem:[%s3 + $0xf0] sm:$0xf] %vm7135, %v6907
  %7197 = vst.msk [vmem:[%s3 + $0xf4] sm:$0xf] %vm7135, %v6908
  %7198 = vst.msk [vmem:[%s3 + $0xf8] sm:$0xf] %vm7135, %v6909
  %7199 = vst.msk [vmem:[%s3 + $0xfc] sm:$0xf] %vm7135, %v6910
  %7200 = vst.msk [vmem:[%s3 + $0x100] sm:$0xf] %vm7135, %v6911
  %7201 = vst.msk [vmem:[%s3 + $0x104] sm:$0xf] %vm7135, %v6912
  %7202 = vst.msk [vmem:[%s3 + $0x108] sm:$0xf] %vm7135, %v6913
  %7203 = vst.msk [vmem:[%s3 + $0x10c] sm:$0xf] %vm7135, %v6914
  %7204 = vst.msk [vmem:[%s3 + $0x110] sm:$0xf] %vm7135, %v6915
  %7205 = vst.msk [vmem:[%s3 + $0x114] sm:$0xf] %vm7135, %v6916
  %7206 = vst.msk [vmem:[%s3 + $0x118] sm:$0xf] %vm7135, %v6917
  %7207 = vst.msk [vmem:[%s3 + $0x11c] sm:$0xf] %vm7135, %v6918
  %7208 = vst.msk [vmem:[%s3 + $0x120] sm:$0xf] %vm7135, %v6919
  %7209 = vst.msk [vmem:[%s3 + $0x124] sm:$0xf] %vm7135, %v6920
  %7210 = vst.msk [vmem:[%s3 + $0x128] sm:$0xf] %vm7135, %v6921
  %7211 = vst.msk [vmem:[%s3 + $0x12c] sm:$0xf] %vm7135, %v6922
  %7212 = vst.msk [vmem:[%s3 + $0x130] sm:$0xf] %vm7135, %v6923
  %7213 = vst.msk [vmem:[%s3 + $0x134] sm:$0xf] %vm7135, %v6924
  %7214 = vst.msk [vmem:[%s3 + $0x138] sm:$0xf] %vm7135, %v6925
  %7215 = vst.msk [vmem:[%s3 + $0x13c] sm:$0xf] %vm7135, %v6926
  %7216 = vst.msk [vmem:[%s3 + $0x140] sm:$0xf] %vm7135, %v6927
  %7217 = vst.msk [vmem:[%s3 + $0x144] sm:$0xf] %vm7135, %v6928
  %7218 = vst.msk [vmem:[%s3 + $0x148] sm:$0xf] %vm7135, %v6929
  %7219 = vst.msk [vmem:[%s3 + $0x14c] sm:$0xf] %vm7135, %v6930
  %7220 = vst.msk [vmem:[%s3 + $0x150] sm:$0xf] %vm7135, %v6931
  %7221 = vst.msk [vmem:[%s3 + $0x154] sm:$0xf] %vm7135, %v6932
  %7222 = vst.msk [vmem:[%s3 + $0x158] sm:$0xf] %vm7135, %v6933
  %7223 = vst.msk [vmem:[%s3 + $0x15c] sm:$0xf] %vm7135, %v6934
  %7224 = vst.msk [vmem:[%s3 + $0x160] sm:$0xf] %vm7135, %v6935
  %7225 = vst.msk [vmem:[%s3 + $0x164] sm:$0xf] %vm7135, %v6936
  %7226 = vst.msk [vmem:[%s3 + $0x168] sm:$0xf] %vm7135, %v6937
  %7227 = vst.msk [vmem:[%s3 + $0x16c] sm:$0xf] %vm7135, %v6938
  %7228 = vst.msk [vmem:[%s3 + $0x170] sm:$0xf] %vm7135, %v6939
  %7229 = vst.msk [vmem:[%s3 + $0x174] sm:$0xf] %vm7135, %v6940
  %7230 = vst.msk [vmem:[%s3 + $0x178] sm:$0xf] %vm7135, %v6941
  %7231 = vst.msk [vmem:[%s3 + $0x17c] sm:$0xf] %vm7135, %v6942
  %7232 = vst.msk [vmem:[%s3 + $0x180] sm:$0xf] %vm7135, %v6943
  %7233 = vst.msk [vmem:[%s3 + $0x184] sm:$0xf] %vm7135, %v6944
  %7234 = vst.msk [vmem:[%s3 + $0x188] sm:$0xf] %vm7135, %v6945
  %7235 = vst.msk [vmem:[%s3 + $0x18c] sm:$0xf] %vm7135, %v6946
  %7236 = vst.msk [vmem:[%s3 + $0x190] sm:$0xf] %vm7135, %v6947
  %7237 = vst.msk [vmem:[%s3 + $0x194] sm:$0xf] %vm7135, %v6948
  %7238 = vst.msk [vmem:[%s3 + $0x198] sm:$0xf] %vm7135, %v6949
  %7239 = vst.msk [vmem:[%s3 + $0x19c] sm:$0xf] %vm7135, %v6950
  %7240 = vst.msk [vmem:[%s3 + $0x1a0] sm:$0xf] %vm7135, %v6951
  %7241 = vst.msk [vmem:[%s3 + $0x1a4] sm:$0xf] %vm7135, %v6952
  %7242 = vst.msk [vmem:[%s3 + $0x1a8] sm:$0xf] %vm7135, %v6953
  %7243 = vst.msk [vmem:[%s3 + $0x1ac] sm:$0xf] %vm7135, %v6954
  %7244 = vst.msk [vmem:[%s3 + $0x1b0] sm:$0xf] %vm7135, %v6955
  %7245 = vst.msk [vmem:[%s3 + $0x1b4] sm:$0xf] %vm7135, %v6956
  %7246 = vst.msk [vmem:[%s3 + $0x1b8] sm:$0xf] %vm7135, %v6957
  %7247 = vst.msk [vmem:[%s3 + $0x1bc] sm:$0xf] %vm7135, %v6958
  %7248 = vst.msk [vmem:[%s3 + $0x1c0] sm:$0xf] %vm7135, %v6959
  %7249 = vst.msk [vmem:[%s3 + $0x1c4] sm:$0xf] %vm7135, %v6960
  %7250 = vst.msk [vmem:[%s3 + $0x1c8] sm:$0xf] %vm7135, %v6961
  %7251 = vst.msk [vmem:[%s3 + $0x1cc] sm:$0xf] %vm7135, %v6962
  %7252 = vst.msk [vmem:[%s3 + $0x1d0] sm:$0xf] %vm7135, %v6963
  %7253 = vst.msk [vmem:[%s3 + $0x1d4] sm:$0xf] %vm7135, %v6964
  %7254 = vst.msk [vmem:[%s3 + $0x1d8] sm:$0xf] %vm7135, %v6965
  %7255 = vst.msk [vmem:[%s3 + $0x1dc] sm:$0xf] %vm7135, %v6966
  %7256 = vst.msk [vmem:[%s3 + $0x1e0] sm:$0xf] %vm7135, %v6967
  %7257 = vst.msk [vmem:[%s3 + $0x1e4] sm:$0xf] %vm7135, %v6968
  %7258 = vst.msk [vmem:[%s3 + $0x1e8] sm:$0xf] %vm7135, %v6969
  %7259 = vst.msk [vmem:[%s3 + $0x1ec] sm:$0xf] %vm7135, %v6970
  %7260 = vst.msk [vmem:[%s3 + $0x1f0] sm:$0xf] %vm7135, %v6971
  %7261 = vst.msk [vmem:[%s3 + $0x1f4] sm:$0xf] %vm7135, %v6972
  %7262 = vst.msk [vmem:[%s3 + $0x1f8] sm:$0xf] %vm7135, %v6973
  %7263 = vst.msk [vmem:[%s3 + $0x1fc] sm:$0xf] %vm7135, %v6974
  %7264 = vst.msk [vmem:[%s3 + $0x200] sm:$0xf] %vm7135, %v6975
  %7265 = vst.msk [vmem:[%s3 + $0x204] sm:$0xf] %vm7135, %v6976
  %7266 = vst.msk [vmem:[%s3 + $0x208] sm:$0xf] %vm7135, %v6977
  %7267 = vst.msk [vmem:[%s3 + $0x20c] sm:$0xf] %vm7135, %v6978
  %7268 = vst.msk [vmem:[%s3 + $0x210] sm:$0xf] %vm7135, %v6979
  %7269 = vst.msk [vmem:[%s3 + $0x214] sm:$0xf] %vm7135, %v6980
  %7270 = vst.msk [vmem:[%s3 + $0x218] sm:$0xf] %vm7135, %v6981
  %7271 = vst.msk [vmem:[%s3 + $0x21c] sm:$0xf] %vm7135, %v6982
  %7272 = vst.msk [vmem:[%s3 + $0x220] sm:$0xf] %vm7135, %v6983
  %7273 = vst.msk [vmem:[%s3 + $0x224] sm:$0xf] %vm7135, %v6984
  %7274 = vst.msk [vmem:[%s3 + $0x228] sm:$0xf] %vm7135, %v6985
  %7275 = vst.msk [vmem:[%s3 + $0x22c] sm:$0xf] %vm7135, %v6986
  %7276 = vst.msk [vmem:[%s3 + $0x230] sm:$0xf] %vm7135, %v6987
  %7277 = vst.msk [vmem:[%s3 + $0x234] sm:$0xf] %vm7135, %v6988
  %7278 = vst.msk [vmem:[%s3 + $0x238] sm:$0xf] %vm7135, %v6989
  %7279 = vst.msk [vmem:[%s3 + $0x23c] sm:$0xf] %vm7135, %v6990
  // Predicated region
  $region14: #{simple_cnn_forward.3} parent=0 // pred_check
    _
  $region15: #{simple_cnn_forward.3} parent=0 // pred_check_branch
    %7281 = sbr.rel (0) target = $region17
  $region16: #{simple_cnn_forward.3} parent=0 // pred_region
    _
  $region17: #{simple_cnn_forward.3} parent=0 // pred_fallthru
    _
  // Predicated region
  $region18: #{simple_cnn_forward.3} parent=0 // pred_check
    _
  $region19: #{simple_cnn_forward.3} parent=0 // pred_check_branch
    %7283 = sbr.rel (0) target = $region21
  $region20: #{simple_cnn_forward.3} parent=0 // pred_region
    _
  $region21: #{simple_cnn_forward.3} parent=0 // pred_fallthru
    _

// kernel: simple_cnn_forward.5
$region0: #{simple_cnn_forward.5}
  #allocation0 [shape = 'u32[]', space=smem, size = 0x4, offset = 0x4, fixed_abs, tag = 'smem constant byte address 0x4 - core index']
  #allocation1 [shape = 'u32[144,128]{1,0:T(1,128)}', space=vmem, size = 0x12000, scoped, tag = 'internal scratch']
  %s0 = inlined_call_operand.vmem [shape: bf16[8,1024], index: 0, kind: input, shape index: {}]
  %s1 = inlined_call_operand.vmem [shape: bf16[1024,128], index: 1, kind: input, shape index: {}]
  %s2 = inlined_call_operand.vmem [shape: f32[1,128], index: 2, kind: input, shape index: {}]
  %s3 = inlined_call_operand.vmem [shape: bf16[128,128], index: 3, kind: input, shape index: {}]
  %s4 = inlined_call_operand.vmem [shape: f32[1,128], index: 4, kind: input, shape index: {}]
  %s5 = inlined_call_operand.vmem [shape: f32[8,128], index: 5, kind: output, shape index: {}]
  %s6 = sld [smem:[#allocation0]]
  $region30: #{simple_cnn_forward.5} parent=0
    _
  %s8 = ssub.s32 1, %s6
  %s9 = scalar_select 0, %s8, %s6
  // Predicated region
  $region2: #{simple_cnn_forward.5} parent=0 // pred_check
    _
  $region3: #{simple_cnn_forward.5} parent=0 // pred_check_branch
    %11 = sbr.rel (0) target = $region5
  $region4: #{simple_cnn_forward.5} parent=0 // pred_region
    _
  $region5: #{simple_cnn_forward.5} parent=0 // pred_fallthru
    _
  // Predicated region
  $region6: #{simple_cnn_forward.5} parent=0 // pred_check
    _
  $region7: #{simple_cnn_forward.5} parent=0 // pred_check_branch
    %13 = sbr.rel (0) target = $region9
  $region8: #{simple_cnn_forward.5} parent=0 // pred_region
    _
  $region9: #{simple_cnn_forward.5} parent=0 // pred_fallthru
    _
  // Predicated region
  $region10: #{simple_cnn_forward.5} parent=0 // pred_check
    _
  $region11: #{simple_cnn_forward.5} parent=0 // pred_check_branch
    %15 = sbr.rel (0) target = $region13
  $region12: #{simple_cnn_forward.5} parent=0 // pred_region
    _
  $region13: #{simple_cnn_forward.5} parent=0 // pred_fallthru
    _
  // Predicated region
  $region14: #{simple_cnn_forward.5} parent=0 // pred_check
    _
  $region15: #{simple_cnn_forward.5} parent=0 // pred_check_branch
    %17 = sbr.rel (0) target = $region17
  $region16: #{simple_cnn_forward.5} parent=0 // pred_region
    _
  $region17: #{simple_cnn_forward.5} parent=0 // pred_fallthru
    _
  // Predicated region
  $region18: #{simple_cnn_forward.5} parent=0 // pred_check
    _
  $region19: #{simple_cnn_forward.5} parent=0 // pred_check_branch
    %19 = sbr.rel (0) target = $region21
  $region20: #{simple_cnn_forward.5} parent=0 // pred_region
    _
  $region21: #{simple_cnn_forward.5} parent=0 // pred_fallthru
    _
  %v21 = vld [vmem:[%s0] sm:$0xff]
  %v22 = vld [vmem:[%s0 + $0x8] sm:$0xff]
  %v23 = vld [vmem:[%s0 + $0x10] sm:$0xff]
  %v24 = vld [vmem:[%s0 + $0x18] sm:$0xff]
  %v25 = vld [vmem:[%s1] sm:$0xf]
  %v26 = vld [vmem:[%s1 + $0x4] sm:$0xf]
  %v27 = vld [vmem:[%s1 + $0x8] sm:$0xf]
  %v28 = vld [vmem:[%s1 + $0xc] sm:$0xf]
  %v29 = vld [vmem:[%s1 + $0x10] sm:$0xf]
  %v30 = vld [vmem:[%s1 + $0x14] sm:$0xf]
  %v31 = vld [vmem:[%s1 + $0x18] sm:$0xf]
  %v32 = vld [vmem:[%s1 + $0x1c] sm:$0xf]
  %v33 = vld [vmem:[%s1 + $0x20] sm:$0xf]
  %v34 = vld [vmem:[%s1 + $0x24] sm:$0xf]
  %v35 = vld [vmem:[%s1 + $0x28] sm:$0xf]
  %v36 = vld [vmem:[%s1 + $0x2c] sm:$0xf]
  %v37 = vld [vmem:[%s1 + $0x30] sm:$0xf]
  %v38 = vld [vmem:[%s1 + $0x34] sm:$0xf]
  %v39 = vld [vmem:[%s1 + $0x38] sm:$0xf]
  %v40 = vld [vmem:[%s1 + $0x3c] sm:$0xf]
  %v41 = vld [vmem:[%s1 + $0x40] sm:$0xf]
  %v42 = vld [vmem:[%s1 + $0x44] sm:$0xf]
  %v43 = vld [vmem:[%s1 + $0x48] sm:$0xf]
  %v44 = vld [vmem:[%s1 + $0x4c] sm:$0xf]
  %v45 = vld [vmem:[%s1 + $0x50] sm:$0xf]
  %v46 = vld [vmem:[%s1 + $0x54] sm:$0xf]
  %v47 = vld [vmem:[%s1 + $0x58] sm:$0xf]
  %v48 = vld [vmem:[%s1 + $0x5c] sm:$0xf]
  %v49 = vld [vmem:[%s1 + $0x60] sm:$0xf]
  %v50 = vld [vmem:[%s1 + $0x64] sm:$0xf]
  %v51 = vld [vmem:[%s1 + $0x68] sm:$0xf]
  %v52 = vld [vmem:[%s1 + $0x6c] sm:$0xf]
  %v53 = vld [vmem:[%s1 + $0x70] sm:$0xf]
  %v54 = vld [vmem:[%s1 + $0x74] sm:$0xf]
  %v55 = vld [vmem:[%s1 + $0x78] sm:$0xf]
  %v56 = vld [vmem:[%s1 + $0x7c] sm:$0xf]
  %v57 = vld [vmem:[%s1 + $0x80] sm:$0xf]
  %v58 = vld [vmem:[%s1 + $0x84] sm:$0xf]
  %v59 = vld [vmem:[%s1 + $0x88] sm:$0xf]
  %v60 = vld [vmem:[%s1 + $0x8c] sm:$0xf]
  %v61 = vld [vmem:[%s1 + $0x90] sm:$0xf]
  %v62 = vld [vmem:[%s1 + $0x94] sm:$0xf]
  %v63 = vld [vmem:[%s1 + $0x98] sm:$0xf]
  %v64 = vld [vmem:[%s1 + $0x9c] sm:$0xf]
  %v65 = vld [vmem:[%s1 + $0xa0] sm:$0xf]
  %v66 = vld [vmem:[%s1 + $0xa4] sm:$0xf]
  %v67 = vld [vmem:[%s1 + $0xa8] sm:$0xf]
  %v68 = vld [vmem:[%s1 + $0xac] sm:$0xf]
  %v69 = vld [vmem:[%s1 + $0xb0] sm:$0xf]
  %v70 = vld [vmem:[%s1 + $0xb4] sm:$0xf]
  %v71 = vld [vmem:[%s1 + $0xb8] sm:$0xf]
  %v72 = vld [vmem:[%s1 + $0xbc] sm:$0xf]
  %v73 = vld [vmem:[%s1 + $0xc0] sm:$0xf]
  %v74 = vld [vmem:[%s1 + $0xc4] sm:$0xf]
  %v75 = vld [vmem:[%s1 + $0xc8] sm:$0xf]
  %v76 = vld [vmem:[%s1 + $0xcc] sm:$0xf]
  %v77 = vld [vmem:[%s1 + $0xd0] sm:$0xf]
  %v78 = vld [vmem:[%s1 + $0xd4] sm:$0xf]
  %v79 = vld [vmem:[%s1 + $0xd8] sm:$0xf]
  %v80 = vld [vmem:[%s1 + $0xdc] sm:$0xf]
  %v81 = vld [vmem:[%s1 + $0xe0] sm:$0xf]
  %v82 = vld [vmem:[%s1 + $0xe4] sm:$0xf]
  %v83 = vld [vmem:[%s1 + $0xe8] sm:$0xf]
  %v84 = vld [vmem:[%s1 + $0xec] sm:$0xf]
  %v85 = vld [vmem:[%s1 + $0xf0] sm:$0xf]
  %v86 = vld [vmem:[%s1 + $0xf4] sm:$0xf]
  %v87 = vld [vmem:[%s1 + $0xf8] sm:$0xf]
  %v88 = vld [vmem:[%s1 + $0xfc] sm:$0xf]
  %v89 = vld [vmem:[%s1 + $0x100] sm:$0xf]
  %v90 = vld [vmem:[%s1 + $0x104] sm:$0xf]
  %v91 = vld [vmem:[%s1 + $0x108] sm:$0xf]
  %v92 = vld [vmem:[%s1 + $0x10c] sm:$0xf]
  %v93 = vld [vmem:[%s1 + $0x110] sm:$0xf]
  %v94 = vld [vmem:[%s1 + $0x114] sm:$0xf]
  %v95 = vld [vmem:[%s1 + $0x118] sm:$0xf]
  %v96 = vld [vmem:[%s1 + $0x11c] sm:$0xf]
  %v97 = vld [vmem:[%s1 + $0x120] sm:$0xf]
  %v98 = vld [vmem:[%s1 + $0x124] sm:$0xf]
  %v99 = vld [vmem:[%s1 + $0x128] sm:$0xf]
  %v100 = vld [vmem:[%s1 + $0x12c] sm:$0xf]
  %v101 = vld [vmem:[%s1 + $0x130] sm:$0xf]
  %v102 = vld [vmem:[%s1 + $0x134] sm:$0xf]
  %v103 = vld [vmem:[%s1 + $0x138] sm:$0xf]
  %v104 = vld [vmem:[%s1 + $0x13c] sm:$0xf]
  %v105 = vld [vmem:[%s1 + $0x140] sm:$0xf]
  %v106 = vld [vmem:[%s1 + $0x144] sm:$0xf]
  %v107 = vld [vmem:[%s1 + $0x148] sm:$0xf]
  %v108 = vld [vmem:[%s1 + $0x14c] sm:$0xf]
  %v109 = vld [vmem:[%s1 + $0x150] sm:$0xf]
  %v110 = vld [vmem:[%s1 + $0x154] sm:$0xf]
  %v111 = vld [vmem:[%s1 + $0x158] sm:$0xf]
  %v112 = vld [vmem:[%s1 + $0x15c] sm:$0xf]
  %v113 = vld [vmem:[%s1 + $0x160] sm:$0xf]
  %v114 = vld [vmem:[%s1 + $0x164] sm:$0xf]
  %v115 = vld [vmem:[%s1 + $0x168] sm:$0xf]
  %v116 = vld [vmem:[%s1 + $0x16c] sm:$0xf]
  %v117 = vld [vmem:[%s1 + $0x170] sm:$0xf]
  %v118 = vld [vmem:[%s1 + $0x174] sm:$0xf]
  %v119 = vld [vmem:[%s1 + $0x178] sm:$0xf]
  %v120 = vld [vmem:[%s1 + $0x17c] sm:$0xf]
  %v121 = vld [vmem:[%s1 + $0x180] sm:$0xf]
  %v122 = vld [vmem:[%s1 + $0x184] sm:$0xf]
  %v123 = vld [vmem:[%s1 + $0x188] sm:$0xf]
  %v124 = vld [vmem:[%s1 + $0x18c] sm:$0xf]
  %v125 = vld [vmem:[%s1 + $0x190] sm:$0xf]
  %v126 = vld [vmem:[%s1 + $0x194] sm:$0xf]
  %v127 = vld [vmem:[%s1 + $0x198] sm:$0xf]
  %v128 = vld [vmem:[%s1 + $0x19c] sm:$0xf]
  %v129 = vld [vmem:[%s1 + $0x1a0] sm:$0xf]
  %v130 = vld [vmem:[%s1 + $0x1a4] sm:$0xf]
  %v131 = vld [vmem:[%s1 + $0x1a8] sm:$0xf]
  %v132 = vld [vmem:[%s1 + $0x1ac] sm:$0xf]
  %v133 = vld [vmem:[%s1 + $0x1b0] sm:$0xf]
  %v134 = vld [vmem:[%s1 + $0x1b4] sm:$0xf]
  %v135 = vld [vmem:[%s1 + $0x1b8] sm:$0xf]
  %v136 = vld [vmem:[%s1 + $0x1bc] sm:$0xf]
  %v137 = vld [vmem:[%s1 + $0x1c0] sm:$0xf]
  %v138 = vld [vmem:[%s1 + $0x1c4] sm:$0xf]
  %v139 = vld [vmem:[%s1 + $0x1c8] sm:$0xf]
  %v140 = vld [vmem:[%s1 + $0x1cc] sm:$0xf]
  %v141 = vld [vmem:[%s1 + $0x1d0] sm:$0xf]
  %v142 = vld [vmem:[%s1 + $0x1d4] sm:$0xf]
  %v143 = vld [vmem:[%s1 + $0x1d8] sm:$0xf]
  %v144 = vld [vmem:[%s1 + $0x1dc] sm:$0xf]
  %v145 = vld [vmem:[%s1 + $0x1e0] sm:$0xf]
  %v146 = vld [vmem:[%s1 + $0x1e4] sm:$0xf]
  %v147 = vld [vmem:[%s1 + $0x1e8] sm:$0xf]
  %v148 = vld [vmem:[%s1 + $0x1ec] sm:$0xf]
  %v149 = vld [vmem:[%s1 + $0x1f0] sm:$0xf]
  %v150 = vld [vmem:[%s1 + $0x1f4] sm:$0xf]
  %v151 = vld [vmem:[%s1 + $0x1f8] sm:$0xf]
  %v152 = vld [vmem:[%s1 + $0x1fc] sm:$0xf]
  %v153 = vld [vmem:[%s2] sm:$0x1]
  %v155 = vlaneseq
  %v156 = vshrl.u32 %v155, 7
  %v157 = vsub.s32 0, %v156
  %v158 = vrot.slane %v153, %v157
  %v164 = vunpack.c.l.b16 %v21
  %v165 = vunpack.c.h.b16 %v21
  %v166 = vunpack.c.l.b16 %v22
  %v167 = vunpack.c.h.b16 %v22
  %v168 = vunpack.c.l.b16 %v23
  %v169 = vunpack.c.h.b16 %v23
  %v170 = vunpack.c.l.b16 %v24
  %v171 = vunpack.c.h.b16 %v24
  %v172 = vpack.c.b16 %v164, %v164
  %v173 = vpack.c.b16 %v165, %v165
  %v174 = vpack.c.b16 %v166, %v166
  %v175 = vpack.c.b16 %v167, %v167
  %v176 = vpack.c.b16 %v168, %v168
  %v177 = vpack.c.b16 %v169, %v169
  %v178 = vpack.c.b16 %v170, %v170
  %v179 = vpack.c.b16 %v171, %v171
  %v316 = vunpack.c.l.b16 %v25
  %v317 = vunpack.c.l.b16 %v26
  %v318 = vunpack.c.l.b16 %v27
  %v319 = vunpack.c.l.b16 %v28
  %v320 = vunpack.c.l.b16 %v29
  %v321 = vunpack.c.l.b16 %v30
  %v322 = vunpack.c.l.b16 %v31
  %v323 = vunpack.c.l.b16 %v32
  %v324 = vunpack.c.l.b16 %v33
  %v325 = vunpack.c.l.b16 %v34
  %v326 = vunpack.c.l.b16 %v35
  %v327 = vunpack.c.l.b16 %v36
  %v328 = vunpack.c.l.b16 %v37
  %v329 = vunpack.c.l.b16 %v38
  %v330 = vunpack.c.l.b16 %v39
  %v331 = vunpack.c.l.b16 %v40
  %v332 = vunpack.c.l.b16 %v41
  %v333 = vunpack.c.l.b16 %v42
  %v334 = vunpack.c.l.b16 %v43
  %v335 = vunpack.c.l.b16 %v44
  %v336 = vunpack.c.l.b16 %v45
  %v337 = vunpack.c.l.b16 %v46
  %v338 = vunpack.c.l.b16 %v47
  %v339 = vunpack.c.l.b16 %v48
  %v340 = vunpack.c.l.b16 %v49
  %v341 = vunpack.c.l.b16 %v50
  %v342 = vunpack.c.l.b16 %v51
  %v343 = vunpack.c.l.b16 %v52
  %v344 = vunpack.c.l.b16 %v53
  %v345 = vunpack.c.l.b16 %v54
  %v346 = vunpack.c.l.b16 %v55
  %v347 = vunpack.c.l.b16 %v56
  %v348 = vunpack.c.l.b16 %v57
  %v349 = vunpack.c.l.b16 %v58
  %v350 = vunpack.c.l.b16 %v59
  %v351 = vunpack.c.l.b16 %v60
  %v352 = vunpack.c.l.b16 %v61
  %v353 = vunpack.c.l.b16 %v62
  %v354 = vunpack.c.l.b16 %v63
  %v355 = vunpack.c.l.b16 %v64
  %v356 = vunpack.c.l.b16 %v65
  %v357 = vunpack.c.l.b16 %v66
  %v358 = vunpack.c.l.b16 %v67
  %v359 = vunpack.c.l.b16 %v68
  %v360 = vunpack.c.l.b16 %v69
  %v361 = vunpack.c.l.b16 %v70
  %v362 = vunpack.c.l.b16 %v71
  %v363 = vunpack.c.l.b16 %v72
  %v364 = vunpack.c.l.b16 %v73
  %v365 = vunpack.c.l.b16 %v74
  %v366 = vunpack.c.l.b16 %v75
  %v367 = vunpack.c.l.b16 %v76
  %v368 = vunpack.c.l.b16 %v77
  %v369 = vunpack.c.l.b16 %v78
  %v370 = vunpack.c.l.b16 %v79
  %v371 = vunpack.c.l.b16 %v80
  %v372 = vunpack.c.l.b16 %v81
  %v373 = vunpack.c.l.b16 %v82
  %v374 = vunpack.c.l.b16 %v83
  %v375 = vunpack.c.l.b16 %v84
  %v376 = vunpack.c.l.b16 %v85
  %v377 = vunpack.c.l.b16 %v86
  %v378 = vunpack.c.l.b16 %v87
  %v379 = vunpack.c.l.b16 %v88
  %v380 = vunpack.c.l.b16 %v89
  %v381 = vunpack.c.l.b16 %v90
  %v382 = vunpack.c.l.b16 %v91
  %v383 = vunpack.c.l.b16 %v92
  %v384 = vunpack.c.l.b16 %v93
  %v385 = vunpack.c.l.b16 %v94
  %v386 = vunpack.c.l.b16 %v95
  %v387 = vunpack.c.l.b16 %v96
  %v388 = vunpack.c.l.b16 %v97
  %v389 = vunpack.c.l.b16 %v98
  %v390 = vunpack.c.l.b16 %v99
  %v391 = vunpack.c.l.b16 %v100
  %v392 = vunpack.c.l.b16 %v101
  %v393 = vunpack.c.l.b16 %v102
  %v394 = vunpack.c.l.b16 %v103
  %v395 = vunpack.c.l.b16 %v104
  %v396 = vunpack.c.l.b16 %v105
  %v397 = vunpack.c.l.b16 %v106
  %v398 = vunpack.c.l.b16 %v107
  %v399 = vunpack.c.l.b16 %v108
  %v400 = vunpack.c.l.b16 %v109
  %v401 = vunpack.c.l.b16 %v110
  %v402 = vunpack.c.l.b16 %v111
  %v403 = vunpack.c.l.b16 %v112
  %v404 = vunpack.c.l.b16 %v113
  %v405 = vunpack.c.l.b16 %v114
  %v406 = vunpack.c.l.b16 %v115
  %v407 = vunpack.c.l.b16 %v116
  %v408 = vunpack.c.l.b16 %v117
  %v409 = vunpack.c.l.b16 %v118
  %v410 = vunpack.c.l.b16 %v119
  %v411 = vunpack.c.l.b16 %v120
  %v412 = vunpack.c.l.b16 %v121
  %v413 = vunpack.c.l.b16 %v122
  %v414 = vunpack.c.l.b16 %v123
  %v415 = vunpack.c.l.b16 %v124
  %v416 = vunpack.c.l.b16 %v125
  %v417 = vunpack.c.l.b16 %v126
  %v418 = vunpack.c.l.b16 %v127
  %v419 = vunpack.c.l.b16 %v128
  %v420 = vunpack.c.l.b16 %v129
  %v421 = vunpack.c.l.b16 %v130
  %v422 = vunpack.c.l.b16 %v131
  %v423 = vunpack.c.l.b16 %v132
  %v424 = vunpack.c.l.b16 %v133
  %v425 = vunpack.c.l.b16 %v134
  %v426 = vunpack.c.l.b16 %v135
  %v427 = vunpack.c.l.b16 %v136
  %v428 = vunpack.c.l.b16 %v137
  %v429 = vunpack.c.l.b16 %v138
  %v430 = vunpack.c.l.b16 %v139
  %v431 = vunpack.c.l.b16 %v140
  %v432 = vunpack.c.l.b16 %v141
  %v433 = vunpack.c.l.b16 %v142
  %v434 = vunpack.c.l.b16 %v143
  %v435 = vunpack.c.l.b16 %v144
  %v436 = vunpack.c.l.b16 %v145
  %v437 = vunpack.c.l.b16 %v146
  %v438 = vunpack.c.l.b16 %v147
  %v439 = vunpack.c.l.b16 %v148
  %v440 = vunpack.c.l.b16 %v149
  %v441 = vunpack.c.l.b16 %v150
  %v442 = vunpack.c.l.b16 %v151
  %v443 = vunpack.c.l.b16 %v152
  %v444 = vpack.c.b16 %v317, %v316
  %v445 = vpack.c.b16 %v319, %v318
  %v446 = vpack.c.b16 %v321, %v320
  %v447 = vpack.c.b16 %v323, %v322
  %v448 = vpack.c.b16 %v325, %v324
  %v449 = vpack.c.b16 %v327, %v326
  %v450 = vpack.c.b16 %v329, %v328
  %v451 = vpack.c.b16 %v331, %v330
  %v452 = vpack.c.b16 %v333, %v332
  %v453 = vpack.c.b16 %v335, %v334
  %v454 = vpack.c.b16 %v337, %v336
  %v455 = vpack.c.b16 %v339, %v338
  %v456 = vpack.c.b16 %v341, %v340
  %v457 = vpack.c.b16 %v343, %v342
  %v458 = vpack.c.b16 %v345, %v344
  %v459 = vpack.c.b16 %v347, %v346
  %v460 = vpack.c.b16 %v349, %v348
  %v461 = vpack.c.b16 %v351, %v350
  %v462 = vpack.c.b16 %v353, %v352
  %v463 = vpack.c.b16 %v355, %v354
  %v464 = vpack.c.b16 %v357, %v356
  %v465 = vpack.c.b16 %v359, %v358
  %v466 = vpack.c.b16 %v361, %v360
  %v467 = vpack.c.b16 %v363, %v362
  %v468 = vpack.c.b16 %v365, %v364
  %v469 = vpack.c.b16 %v367, %v366
  %v470 = vpack.c.b16 %v369, %v368
  %v471 = vpack.c.b16 %v371, %v370
  %v472 = vpack.c.b16 %v373, %v372
  %v473 = vpack.c.b16 %v375, %v374
  %v474 = vpack.c.b16 %v377, %v376
  %v475 = vpack.c.b16 %v379, %v378
  %v476 = vpack.c.b16 %v381, %v380
  %v477 = vpack.c.b16 %v383, %v382
  %v478 = vpack.c.b16 %v385, %v384
  %v479 = vpack.c.b16 %v387, %v386
  %v480 = vpack.c.b16 %v389, %v388
  %v481 = vpack.c.b16 %v391, %v390
  %v482 = vpack.c.b16 %v393, %v392
  %v483 = vpack.c.b16 %v395, %v394
  %v484 = vpack.c.b16 %v397, %v396
  %v485 = vpack.c.b16 %v399, %v398
  %v486 = vpack.c.b16 %v401, %v400
  %v487 = vpack.c.b16 %v403, %v402
  %v488 = vpack.c.b16 %v405, %v404
  %v489 = vpack.c.b16 %v407, %v406
  %v490 = vpack.c.b16 %v409, %v408
  %v491 = vpack.c.b16 %v411, %v410
  %v492 = vpack.c.b16 %v413, %v412
  %v493 = vpack.c.b16 %v415, %v414
  %v494 = vpack.c.b16 %v417, %v416
  %v495 = vpack.c.b16 %v419, %v418
  %v496 = vpack.c.b16 %v421, %v420
  %v497 = vpack.c.b16 %v423, %v422
  %v498 = vpack.c.b16 %v425, %v424
  %v499 = vpack.c.b16 %v427, %v426
  %v500 = vpack.c.b16 %v429, %v428
  %v501 = vpack.c.b16 %v431, %v430
  %v502 = vpack.c.b16 %v433, %v432
  %v503 = vpack.c.b16 %v435, %v434
  %v504 = vpack.c.b16 %v437, %v436
  %v505 = vpack.c.b16 %v439, %v438
  %v506 = vpack.c.b16 %v441, %v440
  %v507 = vpack.c.b16 %v443, %v442
  %572 = vmatprep.subr.bf16.mxu0 0
  %573 = vmatpush1.bf16.msra.mxu0 %v451
  %574 = vmatprep.subr.bf16.mxu0 0
  %575 = vmatpush1.bf16.msra.mxu0 %v450
  %576 = vmatprep.subr.bf16.mxu0 0
  %577 = vmatpush1.bf16.msra.mxu0 %v449
  %578 = vmatprep.subr.bf16.mxu0 0
  %579 = vmatpush1.bf16.msra.mxu0 %v448
  %580 = vmatprep.subr.bf16.mxu0 0
  %581 = vmatpush1.bf16.msra.mxu0 %v447
  %582 = vmatprep.subr.bf16.mxu0 0
  %583 = vmatpush1.bf16.msra.mxu0 %v446
  %584 = vmatprep.subr.bf16.mxu0 0
  %585 = vmatpush1.bf16.msra.mxu0 %v445
  %586 = vmatprep.subr.bf16.mxu0 0
  %587 = vmatpush1.bf16.msra.mxu0 %v444
  %588 = vmatprep.subr.bf16.mxu0 0
  %589 = vmatpush2.bf16.msra.mxu0 %v459
  %590 = vmatprep.subr.bf16.mxu0 0
  %591 = vmatpush2.bf16.msra.mxu0 %v458
  %592 = vmatprep.subr.bf16.mxu0 0
  %593 = vmatpush2.bf16.msra.mxu0 %v457
  %594 = vmatprep.subr.bf16.mxu0 0
  %595 = vmatpush2.bf16.msra.mxu0 %v456
  %596 = vmatprep.subr.bf16.mxu0 0
  %597 = vmatpush2.bf16.msra.mxu0 %v455
  %598 = vmatprep.subr.bf16.mxu0 0
  %599 = vmatpush2.bf16.msra.mxu0 %v454
  %600 = vmatprep.subr.bf16.mxu0 0
  %601 = vmatpush2.bf16.msra.mxu0 %v453
  %602 = vmatprep.subr.bf16.mxu0 0
  %603 = vmatpush2.bf16.msra.mxu0 %v452
  %604 = vmatprep.mubr.bf16.mxu0 %v173
  %605 = vmatmul.mubr.bf16.gmra.mxu0 %v172
  %v606 = vpop.f32.mrf.mxu0
  %v607 = vadd.f32 %v158, %v606
  %v608 = vpop.f32.mrf.mxu0
  %v609 = vpop.f32.mrf.mxu0
  %v610 = vpop.f32.mrf.mxu0
  %611 = vdwg.mxu0
  %612 = vmatprep.subr.bf16.mxu0 0
  %613 = vmatpush1.bf16.msra.mxu0 %v467
  %614 = vmatprep.subr.bf16.mxu0 0
  %615 = vmatpush1.bf16.msra.mxu0 %v466
  %616 = vmatprep.subr.bf16.mxu0 0
  %617 = vmatpush1.bf16.msra.mxu0 %v465
  %618 = vmatprep.subr.bf16.mxu0 0
  %619 = vmatpush1.bf16.msra.mxu0 %v464
  %620 = vmatprep.subr.bf16.mxu0 0
  %621 = vmatpush1.bf16.msra.mxu0 %v463
  %622 = vmatprep.subr.bf16.mxu0 0
  %623 = vmatpush1.bf16.msra.mxu0 %v462
  %624 = vmatprep.subr.bf16.mxu0 0
  %625 = vmatpush1.bf16.msra.mxu0 %v461
  %626 = vmatprep.subr.bf16.mxu0 0
  %627 = vmatpush1.bf16.msra.mxu0 %v460
  %628 = vmatprep.subr.bf16.mxu0 0
  %629 = vmatpush2.bf16.msra.mxu0 %v475
  %630 = vmatprep.subr.bf16.mxu0 0
  %631 = vmatpush2.bf16.msra.mxu0 %v474
  %632 = vmatprep.subr.bf16.mxu0 0
  %633 = vmatpush2.bf16.msra.mxu0 %v473
  %634 = vmatprep.subr.bf16.mxu0 0
  %635 = vmatpush2.bf16.msra.mxu0 %v472
  %636 = vmatprep.subr.bf16.mxu0 0
  %637 = vmatpush2.bf16.msra.mxu0 %v471
  %638 = vmatprep.subr.bf16.mxu0 0
  %639 = vmatpush2.bf16.msra.mxu0 %v470
  %640 = vmatprep.subr.bf16.mxu0 0
  %641 = vmatpush2.bf16.msra.mxu0 %v469
  %642 = vmatprep.subr.bf16.mxu0 0
  %643 = vmatpush2.bf16.msra.mxu0 %v468
  %644 = vmatprep.mubr.bf16.mxu0 %v175
  %645 = vmatmul.mubr.bf16.gmra.mxu0 %v174
  %v646 = vpop.f32.mrf.mxu0
  %v647 = vadd.f32 %v607, %v646
  %v648 = vpop.f32.mrf.mxu0
  %v649 = vpop.f32.mrf.mxu0
  %v650 = vpop.f32.mrf.mxu0
  %651 = vdwg.mxu0
  %652 = vmatprep.subr.bf16.mxu0 0
  %653 = vmatpush1.bf16.msra.mxu0 %v483
  %654 = vmatprep.subr.bf16.mxu0 0
  %655 = vmatpush1.bf16.msra.mxu0 %v482
  %656 = vmatprep.subr.bf16.mxu0 0
  %657 = vmatpush1.bf16.msra.mxu0 %v481
  %658 = vmatprep.subr.bf16.mxu0 0
  %659 = vmatpush1.bf16.msra.mxu0 %v480
  %660 = vmatprep.subr.bf16.mxu0 0
  %661 = vmatpush1.bf16.msra.mxu0 %v479
  %662 = vmatprep.subr.bf16.mxu0 0
  %663 = vmatpush1.bf16.msra.mxu0 %v478
  %664 = vmatprep.subr.bf16.mxu0 0
  %665 = vmatpush1.bf16.msra.mxu0 %v477
  %666 = vmatprep.subr.bf16.mxu0 0
  %667 = vmatpush1.bf16.msra.mxu0 %v476
  %668 = vmatprep.subr.bf16.mxu0 0
  %669 = vmatpush2.bf16.msra.mxu0 %v491
  %670 = vmatprep.subr.bf16.mxu0 0
  %671 = vmatpush2.bf16.msra.mxu0 %v490
  %672 = vmatprep.subr.bf16.mxu0 0
  %673 = vmatpush2.bf16.msra.mxu0 %v489
  %674 = vmatprep.subr.bf16.mxu0 0
  %675 = vmatpush2.bf16.msra.mxu0 %v488
  %676 = vmatprep.subr.bf16.mxu0 0
  %677 = vmatpush2.bf16.msra.mxu0 %v487
  %678 = vmatprep.subr.bf16.mxu0 0
  %679 = vmatpush2.bf16.msra.mxu0 %v486
  %680 = vmatprep.subr.bf16.mxu0 0
  %681 = vmatpush2.bf16.msra.mxu0 %v485
  %682 = vmatprep.subr.bf16.mxu0 0
  %683 = vmatpush2.bf16.msra.mxu0 %v484
  %684 = vmatprep.mubr.bf16.mxu0 %v177
  %685 = vmatmul.mubr.bf16.gmra.mxu0 %v176
  %v686 = vpop.f32.mrf.mxu0
  %v687 = vadd.f32 %v647, %v686
  %v688 = vpop.f32.mrf.mxu0
  %v689 = vpop.f32.mrf.mxu0
  %v690 = vpop.f32.mrf.mxu0
  %691 = vdwg.mxu0
  %692 = vmatprep.subr.bf16.mxu0 0
  %693 = vmatpush1.bf16.msra.mxu0 %v499
  %694 = vmatprep.subr.bf16.mxu0 0
  %695 = vmatpush1.bf16.msra.mxu0 %v498
  %696 = vmatprep.subr.bf16.mxu0 0
  %697 = vmatpush1.bf16.msra.mxu0 %v497
  %698 = vmatprep.subr.bf16.mxu0 0
  %699 = vmatpush1.bf16.msra.mxu0 %v496
  %700 = vmatprep.subr.bf16.mxu0 0
  %701 = vmatpush1.bf16.msra.mxu0 %v495
  %702 = vmatprep.subr.bf16.mxu0 0
  %703 = vmatpush1.bf16.msra.mxu0 %v494
  %704 = vmatprep.subr.bf16.mxu0 0
  %705 = vmatpush1.bf16.msra.mxu0 %v493
  %706 = vmatprep.subr.bf16.mxu0 0
  %707 = vmatpush1.bf16.msra.mxu0 %v492
  %708 = vmatprep.subr.bf16.mxu0 0
  %709 = vmatpush2.bf16.msra.mxu0 %v507
  %710 = vmatprep.subr.bf16.mxu0 0
  %711 = vmatpush2.bf16.msra.mxu0 %v506
  %712 = vmatprep.subr.bf16.mxu0 0
  %713 = vmatpush2.bf16.msra.mxu0 %v505
  %714 = vmatprep.subr.bf16.mxu0 0
  %715 = vmatpush2.bf16.msra.mxu0 %v504
  %716 = vmatprep.subr.bf16.mxu0 0
  %717 = vmatpush2.bf16.msra.mxu0 %v503
  %718 = vmatprep.subr.bf16.mxu0 0
  %719 = vmatpush2.bf16.msra.mxu0 %v502
  %720 = vmatprep.subr.bf16.mxu0 0
  %721 = vmatpush2.bf16.msra.mxu0 %v501
  %722 = vmatprep.subr.bf16.mxu0 0
  %723 = vmatpush2.bf16.msra.mxu0 %v500
  %724 = vmatprep.mubr.bf16.mxu0 %v179
  %725 = vmatmul.mubr.bf16.gmra.mxu0 %v178
  %v726 = vpop.f32.mrf.mxu0
  %v727 = vadd.f32 %v687, %v726
  %v728 = vpop.f32.mrf.mxu0
  %v729 = vpop.f32.mrf.mxu0
  %v730 = vpop.f32.mrf.mxu0
  %731 = vdwg.mxu0
  %v732 = vmax.f32 %v727, 0.0
  %v733 = vpack.c.bf16 %v732, %v732
  %v734 = vld [vmem:[%s3] sm:$0xf]
  %v735 = vld [vmem:[%s3 + $0x4] sm:$0xf]
  %v736 = vld [vmem:[%s3 + $0x8] sm:$0xf]
  %v737 = vld [vmem:[%s3 + $0xc] sm:$0xf]
  %v738 = vld [vmem:[%s3 + $0x10] sm:$0xf]
  %v739 = vld [vmem:[%s3 + $0x14] sm:$0xf]
  %v740 = vld [vmem:[%s3 + $0x18] sm:$0xf]
  %v741 = vld [vmem:[%s3 + $0x1c] sm:$0xf]
  %v742 = vld [vmem:[%s3 + $0x20] sm:$0xf]
  %v743 = vld [vmem:[%s3 + $0x24] sm:$0xf]
  %v744 = vld [vmem:[%s3 + $0x28] sm:$0xf]
  %v745 = vld [vmem:[%s3 + $0x2c] sm:$0xf]
  %v746 = vld [vmem:[%s3 + $0x30] sm:$0xf]
  %v747 = vld [vmem:[%s3 + $0x34] sm:$0xf]
  %v748 = vld [vmem:[%s3 + $0x38] sm:$0xf]
  %v749 = vld [vmem:[%s3 + $0x3c] sm:$0xf]
  %v750 = vld [vmem:[%s4] sm:$0x1]
  %v752 = vlaneseq
  %v753 = vshrl.u32 %v752, 7
  %v754 = vsub.s32 0, %v753
  %v755 = vrot.slane %v750, %v754
  %v773 = vunpack.c.l.b16 %v734
  %v774 = vunpack.c.l.b16 %v735
  %v775 = vunpack.c.l.b16 %v736
  %v776 = vunpack.c.l.b16 %v737
  %v777 = vunpack.c.l.b16 %v738
  %v778 = vunpack.c.l.b16 %v739
  %v779 = vunpack.c.l.b16 %v740
  %v780 = vunpack.c.l.b16 %v741
  %v781 = vunpack.c.l.b16 %v742
  %v782 = vunpack.c.l.b16 %v743
  %v783 = vunpack.c.l.b16 %v744
  %v784 = vunpack.c.l.b16 %v745
  %v785 = vunpack.c.l.b16 %v746
  %v786 = vunpack.c.l.b16 %v747
  %v787 = vunpack.c.l.b16 %v748
  %v788 = vunpack.c.l.b16 %v749
  %v789 = vpack.c.b16 %v774, %v773
  %v790 = vpack.c.b16 %v776, %v775
  %v791 = vpack.c.b16 %v778, %v777
  %v792 = vpack.c.b16 %v780, %v779
  %v793 = vpack.c.b16 %v782, %v781
  %v794 = vpack.c.b16 %v784, %v783
  %v795 = vpack.c.b16 %v786, %v785
  %v796 = vpack.c.b16 %v788, %v787
  %805 = vmatprep.subr.bf16.mxu0 0
  %806 = vmatpush1.bf16.msra.mxu0 %v796
  %807 = vmatprep.subr.bf16.mxu0 0
  %808 = vmatpush1.bf16.msra.mxu0 %v795
  %809 = vmatprep.subr.bf16.mxu0 0
  %810 = vmatpush1.bf16.msra.mxu0 %v794
  %811 = vmatprep.subr.bf16.mxu0 0
  %812 = vmatpush1.bf16.msra.mxu0 %v793
  %813 = vmatprep.subr.bf16.mxu0 0
  %814 = vmatpush1.bf16.msra.mxu0 %v792
  %815 = vmatprep.subr.bf16.mxu0 0
  %816 = vmatpush1.bf16.msra.mxu0 %v791
  %817 = vmatprep.subr.bf16.mxu0 0
  %818 = vmatpush1.bf16.msra.mxu0 %v790
  %819 = vmatprep.subr.bf16.mxu0 0
  %820 = vmatpush1.bf16.msra.mxu0 %v789
  %821 = vmatprep.subr.bf16.mxu0 0
  %822 = vmatpush2.bf16.msra.mxu0 0
  %823 = vmatprep.subr.bf16.mxu0 0
  %824 = vmatpush2.bf16.msra.mxu0 0
  %825 = vmatprep.subr.bf16.mxu0 0
  %826 = vmatpush2.bf16.msra.mxu0 0
  %827 = vmatprep.subr.bf16.mxu0 0
  %828 = vmatpush2.bf16.msra.mxu0 0
  %829 = vmatprep.subr.bf16.mxu0 0
  %830 = vmatpush2.bf16.msra.mxu0 0
  %831 = vmatprep.subr.bf16.mxu0 0
  %832 = vmatpush2.bf16.msra.mxu0 0
  %833 = vmatprep.subr.bf16.mxu0 0
  %834 = vmatpush2.bf16.msra.mxu0 0
  %835 = vmatprep.subr.bf16.mxu0 0
  %836 = vmatpush2.bf16.msra.mxu0 0
  %837 = vmatprep.mubr.bf16.mxu0 0
  %838 = vmatmul.mubr.bf16.gmra.mxu0 %v733
  %v839 = vpop.f32.mrf.mxu0
  %v840 = vadd.f32 %v755, %v839
  %v841 = vpop.f32.mrf.mxu0
  %v842 = vpop.f32.mrf.mxu0
  %v843 = vpop.f32.mrf.mxu0
  %844 = vdwg.mxu0
  %845 = vst [vmem:[%s5] sm:$0xff] %v840
  // Predicated region
  $region22: #{simple_cnn_forward.5} parent=0 // pred_check
    _
  $region23: #{simple_cnn_forward.5} parent=0 // pred_check_branch
    %847 = sbr.rel (0) target = $region25
  $region24: #{simple_cnn_forward.5} parent=0 // pred_region
    _
  $region25: #{simple_cnn_forward.5} parent=0 // pred_fallthru
    _
  // Predicated region
  $region26: #{simple_cnn_forward.5} parent=0 // pred_check
    _
  $region27: #{simple_cnn_forward.5} parent=0 // pred_check_branch
    %849 = sbr.rel (0) target = $region29
  $region28: #{simple_cnn_forward.5} parent=0 // pred_region
    _
  $region29: #{simple_cnn_forward.5} parent=0 // pred_fallthru
    _

// kernel: simple_cnn_forward.4
$region0: #{simple_cnn_forward.4}
  #allocation0 [shape = 'u32[]', space=smem, size = 0x4, offset = 0x4, fixed_abs, tag = 'smem constant byte address 0x4 - core index']
  #allocation1 [shape = 'u32[144,128]{1,0:T(1,128)}', space=vmem, size = 0x12000, scoped, tag = 'internal scratch']
  %s0 = inlined_call_operand.vmem [shape: bf16[8,64,800], index: 0, kind: input, shape index: {}]
  %s1 = inlined_call_operand.vmem [shape: bf16[800,64], index: 1, kind: input, shape index: {}]
  %s2 = inlined_call_operand.vmem [shape: f32[1,64], index: 2, kind: input, shape index: {}]
  %s3 = inlined_call_operand.vmem [shape: bf16[8,16,64], index: 3, kind: output, shape index: {}]
  %s4 = sld [smem:[#allocation0]]
  $region22: #{simple_cnn_forward.4} parent=0
    _
  %s6 = ssub.s32 1, %s4
  %s7 = scalar_select 0, %s6, %s4
  // Predicated region
  $region2: #{simple_cnn_forward.4} parent=0 // pred_check
    _
  $region3: #{simple_cnn_forward.4} parent=0 // pred_check_branch
    %9 = sbr.rel (0) target = $region5
  $region4: #{simple_cnn_forward.4} parent=0 // pred_region
    _
  $region5: #{simple_cnn_forward.4} parent=0 // pred_fallthru
    _
  // Predicated region
  $region6: #{simple_cnn_forward.4} parent=0 // pred_check
    _
  $region7: #{simple_cnn_forward.4} parent=0 // pred_check_branch
    %11 = sbr.rel (0) target = $region9
  $region8: #{simple_cnn_forward.4} parent=0 // pred_region
    _
  $region9: #{simple_cnn_forward.4} parent=0 // pred_fallthru
    _
  // Predicated region
  $region10: #{simple_cnn_forward.4} parent=0 // pred_check
    _
  $region11: #{simple_cnn_forward.4} parent=0 // pred_check_branch
    %13 = sbr.rel (0) target = $region13
  $region12: #{simple_cnn_forward.4} parent=0 // pred_region
    _
  $region13: #{simple_cnn_forward.4} parent=0 // pred_fallthru
    _
  %v15 = vld [vmem:[%s0] sm:$0xff]
  %v16 = vld [vmem:[%s0 + $0x8] sm:$0xff]
  %v17 = vld [vmem:[%s0 + $0x10] sm:$0xff]
  %v18 = vld [vmem:[%s0 + $0x18] sm:$0xf]
  %v19 = vld [vmem:[%s0 + $0x1c] sm:$0xff]
  %v20 = vld [vmem:[%s0 + $0x24] sm:$0xff]
  %v21 = vld [vmem:[%s0 + $0x2c] sm:$0xff]
  %v22 = vld [vmem:[%s0 + $0x34] sm:$0xf]
  %v23 = vld [vmem:[%s0 + $0x38] sm:$0xff]
  %v24 = vld [vmem:[%s0 + $0x40] sm:$0xff]
  %v25 = vld [vmem:[%s0 + $0x48] sm:$0xff]
  %v26 = vld [vmem:[%s0 + $0x50] sm:$0xf]
  %v27 = vld [vmem:[%s0 + $0x54] sm:$0xff]
  %v28 = vld [vmem:[%s0 + $0x5c] sm:$0xff]
  %v29 = vld [vmem:[%s0 + $0x64] sm:$0xff]
  %v30 = vld [vmem:[%s0 + $0x6c] sm:$0xf]
  %v31 = vld [vmem:[%s0 + $0x70] sm:$0xff]
  %v32 = vld [vmem:[%s0 + $0x78] sm:$0xff]
  %v33 = vld [vmem:[%s0 + $0x80] sm:$0xff]
  %v34 = vld [vmem:[%s0 + $0x88] sm:$0xf]
  %v35 = vld [vmem:[%s0 + $0x8c] sm:$0xff]
  %v36 = vld [vmem:[%s0 + $0x94] sm:$0xff]
  %v37 = vld [vmem:[%s0 + $0x9c] sm:$0xff]
  %v38 = vld [vmem:[%s0 + $0xa4] sm:$0xf]
  %v39 = vld [vmem:[%s0 + $0xa8] sm:$0xff]
  %v40 = vld [vmem:[%s0 + $0xb0] sm:$0xff]
  %v41 = vld [vmem:[%s0 + $0xb8] sm:$0xff]
  %v42 = vld [vmem:[%s0 + $0xc0] sm:$0xf]
  %v43 = vld [vmem:[%s0 + $0xc4] sm:$0xff]
  %v44 = vld [vmem:[%s0 + $0xcc] sm:$0xff]
  %v45 = vld [vmem:[%s0 + $0xd4] sm:$0xff]
  %v46 = vld [vmem:[%s0 + $0xdc] sm:$0xf]
  %v47 = vld [vmem:[%s0 + $0xe0] sm:$0xff]
  %v48 = vld [vmem:[%s0 + $0xe8] sm:$0xff]
  %v49 = vld [vmem:[%s0 + $0xf0] sm:$0xff]
  %v50 = vld [vmem:[%s0 + $0xf8] sm:$0xf]
  %v51 = vld [vmem:[%s0 + $0xfc] sm:$0xff]
  %v52 = vld [vmem:[%s0 + $0x104] sm:$0xff]
  %v53 = vld [vmem:[%s0 + $0x10c] sm:$0xff]
  %v54 = vld [vmem:[%s0 + $0x114] sm:$0xf]
  %v55 = vld [vmem:[%s0 + $0x118] sm:$0xff]
  %v56 = vld [vmem:[%s0 + $0x120] sm:$0xff]
  %v57 = vld [vmem:[%s0 + $0x128] sm:$0xff]
  %v58 = vld [vmem:[%s0 + $0x130] sm:$0xf]
  %v59 = vld [vmem:[%s0 + $0x134] sm:$0xff]
  %v60 = vld [vmem:[%s0 + $0x13c] sm:$0xff]
  %v61 = vld [vmem:[%s0 + $0x144] sm:$0xff]
  %v62 = vld [vmem:[%s0 + $0x14c] sm:$0xf]
  %v63 = vld [vmem:[%s0 + $0x150] sm:$0xff]
  %v64 = vld [vmem:[%s0 + $0x158] sm:$0xff]
  %v65 = vld [vmem:[%s0 + $0x160] sm:$0xff]
  %v66 = vld [vmem:[%s0 + $0x168] sm:$0xf]
  %v67 = vld [vmem:[%s0 + $0x16c] sm:$0xff]
  %v68 = vld [vmem:[%s0 + $0x174] sm:$0xff]
  %v69 = vld [vmem:[%s0 + $0x17c] sm:$0xff]
  %v70 = vld [vmem:[%s0 + $0x184] sm:$0xf]
  %v71 = vld [vmem:[%s0 + $0x188] sm:$0xff]
  %v72 = vld [vmem:[%s0 + $0x190] sm:$0xff]
  %v73 = vld [vmem:[%s0 + $0x198] sm:$0xff]
  %v74 = vld [vmem:[%s0 + $0x1a0] sm:$0xf]
  %v75 = vld [vmem:[%s0 + $0x1a4] sm:$0xff]
  %v76 = vld [vmem:[%s0 + $0x1ac] sm:$0xff]
  %v77 = vld [vmem:[%s0 + $0x1b4] sm:$0xff]
  %v78 = vld [vmem:[%s0 + $0x1bc] sm:$0xf]
  %v79 = vld [vmem:[%s0 + $0x1c0] sm:$0xff]
  %v80 = vld [vmem:[%s0 + $0x1c8] sm:$0xff]
  %v81 = vld [vmem:[%s0 + $0x1d0] sm:$0xff]
  %v82 = vld [vmem:[%s0 + $0x1d8] sm:$0xf]
  %v83 = vld [vmem:[%s0 + $0x1dc] sm:$0xff]
  %v84 = vld [vmem:[%s0 + $0x1e4] sm:$0xff]
  %v85 = vld [vmem:[%s0 + $0x1ec] sm:$0xff]
  %v86 = vld [vmem:[%s0 + $0x1f4] sm:$0xf]
  %v87 = vld [vmem:[%s0 + $0x1f8] sm:$0xff]
  %v88 = vld [vmem:[%s0 + $0x200] sm:$0xff]
  %v89 = vld [vmem:[%s0 + $0x208] sm:$0xff]
  %v90 = vld [vmem:[%s0 + $0x210] sm:$0xf]
  %v91 = vld [vmem:[%s0 + $0x214] sm:$0xff]
  %v92 = vld [vmem:[%s0 + $0x21c] sm:$0xff]
  %v93 = vld [vmem:[%s0 + $0x224] sm:$0xff]
  %v94 = vld [vmem:[%s0 + $0x22c] sm:$0xf]
  %v95 = vld [vmem:[%s0 + $0x230] sm:$0xff]
  %v96 = vld [vmem:[%s0 + $0x238] sm:$0xff]
  %v97 = vld [vmem:[%s0 + $0x240] sm:$0xff]
  %v98 = vld [vmem:[%s0 + $0x248] sm:$0xf]
  %v99 = vld [vmem:[%s0 + $0x24c] sm:$0xff]
  %v100 = vld [vmem:[%s0 + $0x254] sm:$0xff]
  %v101 = vld [vmem:[%s0 + $0x25c] sm:$0xff]
  %v102 = vld [vmem:[%s0 + $0x264] sm:$0xf]
  %v103 = vld [vmem:[%s0 + $0x268] sm:$0xff]
  %v104 = vld [vmem:[%s0 + $0x270] sm:$0xff]
  %v105 = vld [vmem:[%s0 + $0x278] sm:$0xff]
  %v106 = vld [vmem:[%s0 + $0x280] sm:$0xf]
  %v107 = vld [vmem:[%s0 + $0x284] sm:$0xff]
  %v108 = vld [vmem:[%s0 + $0x28c] sm:$0xff]
  %v109 = vld [vmem:[%s0 + $0x294] sm:$0xff]
  %v110 = vld [vmem:[%s0 + $0x29c] sm:$0xf]
  %v111 = vld [vmem:[%s0 + $0x2a0] sm:$0xff]
  %v112 = vld [vmem:[%s0 + $0x2a8] sm:$0xff]
  %v113 = vld [vmem:[%s0 + $0x2b0] sm:$0xff]
  %v114 = vld [vmem:[%s0 + $0x2b8] sm:$0xf]
  %v115 = vld [vmem:[%s0 + $0x2bc] sm:$0xff]
  %v116 = vld [vmem:[%s0 + $0x2c4] sm:$0xff]
  %v117 = vld [vmem:[%s0 + $0x2cc] sm:$0xff]
  %v118 = vld [vmem:[%s0 + $0x2d4] sm:$0xf]
  %v119 = vld [vmem:[%s0 + $0x2d8] sm:$0xff]
  %v120 = vld [vmem:[%s0 + $0x2e0] sm:$0xff]
  %v121 = vld [vmem:[%s0 + $0x2e8] sm:$0xff]
  %v122 = vld [vmem:[%s0 + $0x2f0] sm:$0xf]
  %v123 = vld [vmem:[%s0 + $0x2f4] sm:$0xff]
  %v124 = vld [vmem:[%s0 + $0x2fc] sm:$0xff]
  %v125 = vld [vmem:[%s0 + $0x304] sm:$0xff]
  %v126 = vld [vmem:[%s0 + $0x30c] sm:$0xf]
  %v127 = vld [vmem:[%s0 + $0x310] sm:$0xff]
  %v128 = vld [vmem:[%s0 + $0x318] sm:$0xff]
  %v129 = vld [vmem:[%s0 + $0x320] sm:$0xff]
  %v130 = vld [vmem:[%s0 + $0x328] sm:$0xf]
  %v131 = vld [vmem:[%s0 + $0x32c] sm:$0xff]
  %v132 = vld [vmem:[%s0 + $0x334] sm:$0xff]
  %v133 = vld [vmem:[%s0 + $0x33c] sm:$0xff]
  %v134 = vld [vmem:[%s0 + $0x344] sm:$0xf]
  %v135 = vld [vmem:[%s0 + $0x348] sm:$0xff]
  %v136 = vld [vmem:[%s0 + $0x350] sm:$0xff]
  %v137 = vld [vmem:[%s0 + $0x358] sm:$0xff]
  %v138 = vld [vmem:[%s0 + $0x360] sm:$0xf]
  %v139 = vld [vmem:[%s0 + $0x364] sm:$0xff]
  %v140 = vld [vmem:[%s0 + $0x36c] sm:$0xff]
  %v141 = vld [vmem:[%s0 + $0x374] sm:$0xff]
  %v142 = vld [vmem:[%s0 + $0x37c] sm:$0xf]
  %v143 = vld [vmem:[%s0 + $0x380] sm:$0xff]
  %v144 = vld [vmem:[%s0 + $0x388] sm:$0xff]
  %v145 = vld [vmem:[%s0 + $0x390] sm:$0xff]
  %v146 = vld [vmem:[%s0 + $0x398] sm:$0xf]
  %v147 = vld [vmem:[%s0 + $0x39c] sm:$0xff]
  %v148 = vld [vmem:[%s0 + $0x3a4] sm:$0xff]
  %v149 = vld [vmem:[%s0 + $0x3ac] sm:$0xff]
  %v150 = vld [vmem:[%s0 + $0x3b4] sm:$0xf]
  %v151 = vld [vmem:[%s0 + $0x3b8] sm:$0xff]
  %v152 = vld [vmem:[%s0 + $0x3c0] sm:$0xff]
  %v153 = vld [vmem:[%s0 + $0x3c8] sm:$0xff]
  %v154 = vld [vmem:[%s0 + $0x3d0] sm:$0xf]
  %v155 = vld [vmem:[%s0 + $0x3d4] sm:$0xff]
  %v156 = vld [vmem:[%s0 + $0x3dc] sm:$0xff]
  %v157 = vld [vmem:[%s0 + $0x3e4] sm:$0xff]
  %v158 = vld [vmem:[%s0 + $0x3ec] sm:$0xf]
  %v159 = vld [vmem:[%s0 + $0x3f0] sm:$0xff]
  %v160 = vld [vmem:[%s0 + $0x3f8] sm:$0xff]
  %v161 = vld [vmem:[%s0 + $0x400] sm:$0xff]
  %v162 = vld [vmem:[%s0 + $0x408] sm:$0xf]
  %v163 = vld [vmem:[%s0 + $0x40c] sm:$0xff]
  %v164 = vld [vmem:[%s0 + $0x414] sm:$0xff]
  %v165 = vld [vmem:[%s0 + $0x41c] sm:$0xff]
  %v166 = vld [vmem:[%s0 + $0x424] sm:$0xf]
  %v167 = vld [vmem:[%s0 + $0x428] sm:$0xff]
  %v168 = vld [vmem:[%s0 + $0x430] sm:$0xff]
  %v169 = vld [vmem:[%s0 + $0x438] sm:$0xff]
  %v170 = vld [vmem:[%s0 + $0x440] sm:$0xf]
  %v171 = vld [vmem:[%s0 + $0x444] sm:$0xff]
  %v172 = vld [vmem:[%s0 + $0x44c] sm:$0xff]
  %v173 = vld [vmem:[%s0 + $0x454] sm:$0xff]
  %v174 = vld [vmem:[%s0 + $0x45c] sm:$0xf]
  %v175 = vld [vmem:[%s0 + $0x460] sm:$0xff]
  %v176 = vld [vmem:[%s0 + $0x468] sm:$0xff]
  %v177 = vld [vmem:[%s0 + $0x470] sm:$0xff]
  %v178 = vld [vmem:[%s0 + $0x478] sm:$0xf]
  %v179 = vld [vmem:[%s0 + $0x47c] sm:$0xff]
  %v180 = vld [vmem:[%s0 + $0x484] sm:$0xff]
  %v181 = vld [vmem:[%s0 + $0x48c] sm:$0xff]
  %v182 = vld [vmem:[%s0 + $0x494] sm:$0xf]
  %v183 = vld [vmem:[%s0 + $0x498] sm:$0xff]
  %v184 = vld [vmem:[%s0 + $0x4a0] sm:$0xff]
  %v185 = vld [vmem:[%s0 + $0x4a8] sm:$0xff]
  %v186 = vld [vmem:[%s0 + $0x4b0] sm:$0xf]
  %v187 = vld [vmem:[%s0 + $0x4b4] sm:$0xff]
  %v188 = vld [vmem:[%s0 + $0x4bc] sm:$0xff]
  %v189 = vld [vmem:[%s0 + $0x4c4] sm:$0xff]
  %v190 = vld [vmem:[%s0 + $0x4cc] sm:$0xf]
  %v191 = vld [vmem:[%s0 + $0x4d0] sm:$0xff]
  %v192 = vld [vmem:[%s0 + $0x4d8] sm:$0xff]
  %v193 = vld [vmem:[%s0 + $0x4e0] sm:$0xff]
  %v194 = vld [vmem:[%s0 + $0x4e8] sm:$0xf]
  %v195 = vld [vmem:[%s0 + $0x4ec] sm:$0xff]
  %v196 = vld [vmem:[%s0 + $0x4f4] sm:$0xff]
  %v197 = vld [vmem:[%s0 + $0x4fc] sm:$0xff]
  %v198 = vld [vmem:[%s0 + $0x504] sm:$0xf]
  %v199 = vld [vmem:[%s0 + $0x508] sm:$0xff]
  %v200 = vld [vmem:[%s0 + $0x510] sm:$0xff]
  %v201 = vld [vmem:[%s0 + $0x518] sm:$0xff]
  %v202 = vld [vmem:[%s0 + $0x520] sm:$0xf]
  %v203 = vld [vmem:[%s0 + $0x524] sm:$0xff]
  %v204 = vld [vmem:[%s0 + $0x52c] sm:$0xff]
  %v205 = vld [vmem:[%s0 + $0x534] sm:$0xff]
  %v206 = vld [vmem:[%s0 + $0x53c] sm:$0xf]
  %v207 = vld [vmem:[%s0 + $0x540] sm:$0xff]
  %v208 = vld [vmem:[%s0 + $0x548] sm:$0xff]
  %v209 = vld [vmem:[%s0 + $0x550] sm:$0xff]
  %v210 = vld [vmem:[%s0 + $0x558] sm:$0xf]
  %v211 = vld [vmem:[%s0 + $0x55c] sm:$0xff]
  %v212 = vld [vmem:[%s0 + $0x564] sm:$0xff]
  %v213 = vld [vmem:[%s0 + $0x56c] sm:$0xff]
  %v214 = vld [vmem:[%s0 + $0x574] sm:$0xf]
  %v215 = vld [vmem:[%s0 + $0x578] sm:$0xff]
  %v216 = vld [vmem:[%s0 + $0x580] sm:$0xff]
  %v217 = vld [vmem:[%s0 + $0x588] sm:$0xff]
  %v218 = vld [vmem:[%s0 + $0x590] sm:$0xf]
  %v219 = vld [vmem:[%s0 + $0x594] sm:$0xff]
  %v220 = vld [vmem:[%s0 + $0x59c] sm:$0xff]
  %v221 = vld [vmem:[%s0 + $0x5a4] sm:$0xff]
  %v222 = vld [vmem:[%s0 + $0x5ac] sm:$0xf]
  %v223 = vld [vmem:[%s0 + $0x5b0] sm:$0xff]
  %v224 = vld [vmem:[%s0 + $0x5b8] sm:$0xff]
  %v225 = vld [vmem:[%s0 + $0x5c0] sm:$0xff]
  %v226 = vld [vmem:[%s0 + $0x5c8] sm:$0xf]
  %v227 = vld [vmem:[%s0 + $0x5cc] sm:$0xff]
  %v228 = vld [vmem:[%s0 + $0x5d4] sm:$0xff]
  %v229 = vld [vmem:[%s0 + $0x5dc] sm:$0xff]
  %v230 = vld [vmem:[%s0 + $0x5e4] sm:$0xf]
  %v231 = vld [vmem:[%s0 + $0x5e8] sm:$0xff]
  %v232 = vld [vmem:[%s0 + $0x5f0] sm:$0xff]
  %v233 = vld [vmem:[%s0 + $0x5f8] sm:$0xff]
  %v234 = vld [vmem:[%s0 + $0x600] sm:$0xf]
  %v235 = vld [vmem:[%s0 + $0x604] sm:$0xff]
  %v236 = vld [vmem:[%s0 + $0x60c] sm:$0xff]
  %v237 = vld [vmem:[%s0 + $0x614] sm:$0xff]
  %v238 = vld [vmem:[%s0 + $0x61c] sm:$0xf]
  %v239 = vld [vmem:[%s0 + $0x620] sm:$0xff]
  %v240 = vld [vmem:[%s0 + $0x628] sm:$0xff]
  %v241 = vld [vmem:[%s0 + $0x630] sm:$0xff]
  %v242 = vld [vmem:[%s0 + $0x638] sm:$0xf]
  %v243 = vld [vmem:[%s0 + $0x63c] sm:$0xff]
  %v244 = vld [vmem:[%s0 + $0x644] sm:$0xff]
  %v245 = vld [vmem:[%s0 + $0x64c] sm:$0xff]
  %v246 = vld [vmem:[%s0 + $0x654] sm:$0xf]
  %v247 = vld [vmem:[%s0 + $0x658] sm:$0xff]
  %v248 = vld [vmem:[%s0 + $0x660] sm:$0xff]
  %v249 = vld [vmem:[%s0 + $0x668] sm:$0xff]
  %v250 = vld [vmem:[%s0 + $0x670] sm:$0xf]
  %v251 = vld [vmem:[%s0 + $0x674] sm:$0xff]
  %v252 = vld [vmem:[%s0 + $0x67c] sm:$0xff]
  %v253 = vld [vmem:[%s0 + $0x684] sm:$0xff]
  %v254 = vld [vmem:[%s0 + $0x68c] sm:$0xf]
  %v255 = vld [vmem:[%s0 + $0x690] sm:$0xff]
  %v256 = vld [vmem:[%s0 + $0x698] sm:$0xff]
  %v257 = vld [vmem:[%s0 + $0x6a0] sm:$0xff]
  %v258 = vld [vmem:[%s0 + $0x6a8] sm:$0xf]
  %v259 = vld [vmem:[%s0 + $0x6ac] sm:$0xff]
  %v260 = vld [vmem:[%s0 + $0x6b4] sm:$0xff]
  %v261 = vld [vmem:[%s0 + $0x6bc] sm:$0xff]
  %v262 = vld [vmem:[%s0 + $0x6c4] sm:$0xf]
  %v263 = vld [vmem:[%s0 + $0x6c8] sm:$0xff]
  %v264 = vld [vmem:[%s0 + $0x6d0] sm:$0xff]
  %v265 = vld [vmem:[%s0 + $0x6d8] sm:$0xff]
  %v266 = vld [vmem:[%s0 + $0x6e0] sm:$0xf]
  %v267 = vld [vmem:[%s0 + $0x6e4] sm:$0xff]
  %v268 = vld [vmem:[%s0 + $0x6ec] sm:$0xff]
  %v269 = vld [vmem:[%s0 + $0x6f4] sm:$0xff]
  %v270 = vld [vmem:[%s0 + $0x6fc] sm:$0xf]
  %v271 = vld [vmem:[%s1] sm:$0xf]
  %v272 = vld [vmem:[%s1 + $0x4] sm:$0xf]
  %v273 = vld [vmem:[%s1 + $0x8] sm:$0xf]
  %v274 = vld [vmem:[%s1 + $0xc] sm:$0xf]
  %v275 = vld [vmem:[%s1 + $0x10] sm:$0xf]
  %v276 = vld [vmem:[%s1 + $0x14] sm:$0xf]
  %v277 = vld [vmem:[%s1 + $0x18] sm:$0xf]
  %v278 = vld [vmem:[%s1 + $0x1c] sm:$0xf]
  %v279 = vld [vmem:[%s1 + $0x20] sm:$0xf]
  %v280 = vld [vmem:[%s1 + $0x24] sm:$0xf]
  %v281 = vld [vmem:[%s1 + $0x28] sm:$0xf]
  %v282 = vld [vmem:[%s1 + $0x2c] sm:$0xf]
  %v283 = vld [vmem:[%s1 + $0x30] sm:$0xf]
  %v284 = vld [vmem:[%s1 + $0x34] sm:$0xf]
  %v285 = vld [vmem:[%s1 + $0x38] sm:$0xf]
  %v286 = vld [vmem:[%s1 + $0x3c] sm:$0xf]
  %v287 = vld [vmem:[%s1 + $0x40] sm:$0xf]
  %v288 = vld [vmem:[%s1 + $0x44] sm:$0xf]
  %v289 = vld [vmem:[%s1 + $0x48] sm:$0xf]
  %v290 = vld [vmem:[%s1 + $0x4c] sm:$0xf]
  %v291 = vld [vmem:[%s1 + $0x50] sm:$0xf]
  %v292 = vld [vmem:[%s1 + $0x54] sm:$0xf]
  %v293 = vld [vmem:[%s1 + $0x58] sm:$0xf]
  %v294 = vld [vmem:[%s1 + $0x5c] sm:$0xf]
  %v295 = vld [vmem:[%s1 + $0x60] sm:$0xf]
  %v296 = vld [vmem:[%s1 + $0x64] sm:$0xf]
  %v297 = vld [vmem:[%s1 + $0x68] sm:$0xf]
  %v298 = vld [vmem:[%s1 + $0x6c] sm:$0xf]
  %v299 = vld [vmem:[%s1 + $0x70] sm:$0xf]
  %v300 = vld [vmem:[%s1 + $0x74] sm:$0xf]
  %v301 = vld [vmem:[%s1 + $0x78] sm:$0xf]
  %v302 = vld [vmem:[%s1 + $0x7c] sm:$0xf]
  %v303 = vld [vmem:[%s1 + $0x80] sm:$0xf]
  %v304 = vld [vmem:[%s1 + $0x84] sm:$0xf]
  %v305 = vld [vmem:[%s1 + $0x88] sm:$0xf]
  %v306 = vld [vmem:[%s1 + $0x8c] sm:$0xf]
  %v307 = vld [vmem:[%s1 + $0x90] sm:$0xf]
  %v308 = vld [vmem:[%s1 + $0x94] sm:$0xf]
  %v309 = vld [vmem:[%s1 + $0x98] sm:$0xf]
  %v310 = vld [vmem:[%s1 + $0x9c] sm:$0xf]
  %v311 = vld [vmem:[%s1 + $0xa0] sm:$0xf]
  %v312 = vld [vmem:[%s1 + $0xa4] sm:$0xf]
  %v313 = vld [vmem:[%s1 + $0xa8] sm:$0xf]
  %v314 = vld [vmem:[%s1 + $0xac] sm:$0xf]
  %v315 = vld [vmem:[%s1 + $0xb0] sm:$0xf]
  %v316 = vld [vmem:[%s1 + $0xb4] sm:$0xf]
  %v317 = vld [vmem:[%s1 + $0xb8] sm:$0xf]
  %v318 = vld [vmem:[%s1 + $0xbc] sm:$0xf]
  %v319 = vld [vmem:[%s1 + $0xc0] sm:$0xf]
  %v320 = vld [vmem:[%s1 + $0xc4] sm:$0xf]
  %v321 = vld [vmem:[%s1 + $0xc8] sm:$0xf]
  %v322 = vld [vmem:[%s1 + $0xcc] sm:$0xf]
  %v323 = vld [vmem:[%s1 + $0xd0] sm:$0xf]
  %v324 = vld [vmem:[%s1 + $0xd4] sm:$0xf]
  %v325 = vld [vmem:[%s1 + $0xd8] sm:$0xf]
  %v326 = vld [vmem:[%s1 + $0xdc] sm:$0xf]
  %v327 = vld [vmem:[%s1 + $0xe0] sm:$0xf]
  %v328 = vld [vmem:[%s1 + $0xe4] sm:$0xf]
  %v329 = vld [vmem:[%s1 + $0xe8] sm:$0xf]
  %v330 = vld [vmem:[%s1 + $0xec] sm:$0xf]
  %v331 = vld [vmem:[%s1 + $0xf0] sm:$0xf]
  %v332 = vld [vmem:[%s1 + $0xf4] sm:$0xf]
  %v333 = vld [vmem:[%s1 + $0xf8] sm:$0xf]
  %v334 = vld [vmem:[%s1 + $0xfc] sm:$0xf]
  %v335 = vld [vmem:[%s1 + $0x100] sm:$0xf]
  %v336 = vld [vmem:[%s1 + $0x104] sm:$0xf]
  %v337 = vld [vmem:[%s1 + $0x108] sm:$0xf]
  %v338 = vld [vmem:[%s1 + $0x10c] sm:$0xf]
  %v339 = vld [vmem:[%s1 + $0x110] sm:$0xf]
  %v340 = vld [vmem:[%s1 + $0x114] sm:$0xf]
  %v341 = vld [vmem:[%s1 + $0x118] sm:$0xf]
  %v342 = vld [vmem:[%s1 + $0x11c] sm:$0xf]
  %v343 = vld [vmem:[%s1 + $0x120] sm:$0xf]
  %v344 = vld [vmem:[%s1 + $0x124] sm:$0xf]
  %v345 = vld [vmem:[%s1 + $0x128] sm:$0xf]
  %v346 = vld [vmem:[%s1 + $0x12c] sm:$0xf]
  %v347 = vld [vmem:[%s1 + $0x130] sm:$0xf]
  %v348 = vld [vmem:[%s1 + $0x134] sm:$0xf]
  %v349 = vld [vmem:[%s1 + $0x138] sm:$0xf]
  %v350 = vld [vmem:[%s1 + $0x13c] sm:$0xf]
  %v351 = vld [vmem:[%s1 + $0x140] sm:$0xf]
  %v352 = vld [vmem:[%s1 + $0x144] sm:$0xf]
  %v353 = vld [vmem:[%s1 + $0x148] sm:$0xf]
  %v354 = vld [vmem:[%s1 + $0x14c] sm:$0xf]
  %v355 = vld [vmem:[%s1 + $0x150] sm:$0xf]
  %v356 = vld [vmem:[%s1 + $0x154] sm:$0xf]
  %v357 = vld [vmem:[%s1 + $0x158] sm:$0xf]
  %v358 = vld [vmem:[%s1 + $0x15c] sm:$0xf]
  %v359 = vld [vmem:[%s1 + $0x160] sm:$0xf]
  %v360 = vld [vmem:[%s1 + $0x164] sm:$0xf]
  %v361 = vld [vmem:[%s1 + $0x168] sm:$0xf]
  %v362 = vld [vmem:[%s1 + $0x16c] sm:$0xf]
  %v363 = vld [vmem:[%s1 + $0x170] sm:$0xf]
  %v364 = vld [vmem:[%s1 + $0x174] sm:$0xf]
  %v365 = vld [vmem:[%s1 + $0x178] sm:$0xf]
  %v366 = vld [vmem:[%s1 + $0x17c] sm:$0xf]
  %v367 = vld [vmem:[%s1 + $0x180] sm:$0xf]
  %v368 = vld [vmem:[%s1 + $0x184] sm:$0xf]
  %v369 = vld [vmem:[%s1 + $0x188] sm:$0xf]
  %v370 = vld [vmem:[%s1 + $0x18c] sm:$0xf]
  %v627 = vunpack.c.l.b16 %v15
  %v628 = vunpack.c.h.b16 %v15
  %v629 = vunpack.c.l.b16 %v16
  %v630 = vunpack.c.h.b16 %v16
  %v631 = vunpack.c.l.b16 %v17
  %v632 = vunpack.c.h.b16 %v17
  %v633 = vunpack.c.l.b16 %v18
  %v634 = vunpack.c.l.b16 %v19
  %v635 = vunpack.c.h.b16 %v19
  %v636 = vunpack.c.l.b16 %v20
  %v637 = vunpack.c.h.b16 %v20
  %v638 = vunpack.c.l.b16 %v21
  %v639 = vunpack.c.h.b16 %v21
  %v640 = vunpack.c.l.b16 %v22
  %v641 = vunpack.c.l.b16 %v23
  %v642 = vunpack.c.h.b16 %v23
  %v643 = vunpack.c.l.b16 %v24
  %v644 = vunpack.c.h.b16 %v24
  %v645 = vunpack.c.l.b16 %v25
  %v646 = vunpack.c.h.b16 %v25
  %v647 = vunpack.c.l.b16 %v26
  %v648 = vunpack.c.l.b16 %v27
  %v649 = vunpack.c.h.b16 %v27
  %v650 = vunpack.c.l.b16 %v28
  %v651 = vunpack.c.h.b16 %v28
  %v652 = vunpack.c.l.b16 %v29
  %v653 = vunpack.c.h.b16 %v29
  %v654 = vunpack.c.l.b16 %v30
  %v655 = vunpack.c.l.b16 %v31
  %v656 = vunpack.c.h.b16 %v31
  %v657 = vunpack.c.l.b16 %v32
  %v658 = vunpack.c.h.b16 %v32
  %v659 = vunpack.c.l.b16 %v33
  %v660 = vunpack.c.h.b16 %v33
  %v661 = vunpack.c.l.b16 %v34
  %v662 = vunpack.c.l.b16 %v35
  %v663 = vunpack.c.h.b16 %v35
  %v664 = vunpack.c.l.b16 %v36
  %v665 = vunpack.c.h.b16 %v36
  %v666 = vunpack.c.l.b16 %v37
  %v667 = vunpack.c.h.b16 %v37
  %v668 = vunpack.c.l.b16 %v38
  %v669 = vunpack.c.l.b16 %v39
  %v670 = vunpack.c.h.b16 %v39
  %v671 = vunpack.c.l.b16 %v40
  %v672 = vunpack.c.h.b16 %v40
  %v673 = vunpack.c.l.b16 %v41
  %v674 = vunpack.c.h.b16 %v41
  %v675 = vunpack.c.l.b16 %v42
  %v676 = vunpack.c.l.b16 %v43
  %v677 = vunpack.c.h.b16 %v43
  %v678 = vunpack.c.l.b16 %v44
  %v679 = vunpack.c.h.b16 %v44
  %v680 = vunpack.c.l.b16 %v45
  %v681 = vunpack.c.h.b16 %v45
  %v682 = vunpack.c.l.b16 %v46
  %v683 = vunpack.c.l.b16 %v47
  %v684 = vunpack.c.h.b16 %v47
  %v685 = vunpack.c.l.b16 %v48
  %v686 = vunpack.c.h.b16 %v48
  %v687 = vunpack.c.l.b16 %v49
  %v688 = vunpack.c.h.b16 %v49
  %v689 = vunpack.c.l.b16 %v50
  %v690 = vunpack.c.l.b16 %v51
  %v691 = vunpack.c.h.b16 %v51
  %v692 = vunpack.c.l.b16 %v52
  %v693 = vunpack.c.h.b16 %v52
  %v694 = vunpack.c.l.b16 %v53
  %v695 = vunpack.c.h.b16 %v53
  %v696 = vunpack.c.l.b16 %v54
  %v697 = vunpack.c.l.b16 %v55
  %v698 = vunpack.c.h.b16 %v55
  %v699 = vunpack.c.l.b16 %v56
  %v700 = vunpack.c.h.b16 %v56
  %v701 = vunpack.c.l.b16 %v57
  %v702 = vunpack.c.h.b16 %v57
  %v703 = vunpack.c.l.b16 %v58
  %v704 = vunpack.c.l.b16 %v59
  %v705 = vunpack.c.h.b16 %v59
  %v706 = vunpack.c.l.b16 %v60
  %v707 = vunpack.c.h.b16 %v60
  %v708 = vunpack.c.l.b16 %v61
  %v709 = vunpack.c.h.b16 %v61
  %v710 = vunpack.c.l.b16 %v62
  %v711 = vunpack.c.l.b16 %v63
  %v712 = vunpack.c.h.b16 %v63
  %v713 = vunpack.c.l.b16 %v64
  %v714 = vunpack.c.h.b16 %v64
  %v715 = vunpack.c.l.b16 %v65
  %v716 = vunpack.c.h.b16 %v65
  %v717 = vunpack.c.l.b16 %v66
  %v718 = vunpack.c.l.b16 %v67
  %v719 = vunpack.c.h.b16 %v67
  %v720 = vunpack.c.l.b16 %v68
  %v721 = vunpack.c.h.b16 %v68
  %v722 = vunpack.c.l.b16 %v69
  %v723 = vunpack.c.h.b16 %v69
  %v724 = vunpack.c.l.b16 %v70
  %v725 = vunpack.c.l.b16 %v71
  %v726 = vunpack.c.h.b16 %v71
  %v727 = vunpack.c.l.b16 %v72
  %v728 = vunpack.c.h.b16 %v72
  %v729 = vunpack.c.l.b16 %v73
  %v730 = vunpack.c.h.b16 %v73
  %v731 = vunpack.c.l.b16 %v74
  %v732 = vunpack.c.l.b16 %v75
  %v733 = vunpack.c.h.b16 %v75
  %v734 = vunpack.c.l.b16 %v76
  %v735 = vunpack.c.h.b16 %v76
  %v736 = vunpack.c.l.b16 %v77
  %v737 = vunpack.c.h.b16 %v77
  %v738 = vunpack.c.l.b16 %v78
  %v739 = vunpack.c.l.b16 %v79
  %v740 = vunpack.c.h.b16 %v79
  %v741 = vunpack.c.l.b16 %v80
  %v742 = vunpack.c.h.b16 %v80
  %v743 = vunpack.c.l.b16 %v81
  %v744 = vunpack.c.h.b16 %v81
  %v745 = vunpack.c.l.b16 %v82
  %v746 = vunpack.c.l.b16 %v83
  %v747 = vunpack.c.h.b16 %v83
  %v748 = vunpack.c.l.b16 %v84
  %v749 = vunpack.c.h.b16 %v84
  %v750 = vunpack.c.l.b16 %v85
  %v751 = vunpack.c.h.b16 %v85
  %v752 = vunpack.c.l.b16 %v86
  %v753 = vunpack.c.l.b16 %v87
  %v754 = vunpack.c.h.b16 %v87
  %v755 = vunpack.c.l.b16 %v88
  %v756 = vunpack.c.h.b16 %v88
  %v757 = vunpack.c.l.b16 %v89
  %v758 = vunpack.c.h.b16 %v89
  %v759 = vunpack.c.l.b16 %v90
  %v760 = vunpack.c.l.b16 %v91
  %v761 = vunpack.c.h.b16 %v91
  %v762 = vunpack.c.l.b16 %v92
  %v763 = vunpack.c.h.b16 %v92
  %v764 = vunpack.c.l.b16 %v93
  %v765 = vunpack.c.h.b16 %v93
  %v766 = vunpack.c.l.b16 %v94
  %v767 = vunpack.c.l.b16 %v95
  %v768 = vunpack.c.h.b16 %v95
  %v769 = vunpack.c.l.b16 %v96
  %v770 = vunpack.c.h.b16 %v96
  %v771 = vunpack.c.l.b16 %v97
  %v772 = vunpack.c.h.b16 %v97
  %v773 = vunpack.c.l.b16 %v98
  %v774 = vunpack.c.l.b16 %v99
  %v775 = vunpack.c.h.b16 %v99
  %v776 = vunpack.c.l.b16 %v100
  %v777 = vunpack.c.h.b16 %v100
  %v778 = vunpack.c.l.b16 %v101
  %v779 = vunpack.c.h.b16 %v101
  %v780 = vunpack.c.l.b16 %v102
  %v781 = vunpack.c.l.b16 %v103
  %v782 = vunpack.c.h.b16 %v103
  %v783 = vunpack.c.l.b16 %v104
  %v784 = vunpack.c.h.b16 %v104
  %v785 = vunpack.c.l.b16 %v105
  %v786 = vunpack.c.h.b16 %v105
  %v787 = vunpack.c.l.b16 %v106
  %v788 = vunpack.c.l.b16 %v107
  %v789 = vunpack.c.h.b16 %v107
  %v790 = vunpack.c.l.b16 %v108
  %v791 = vunpack.c.h.b16 %v108
  %v792 = vunpack.c.l.b16 %v109
  %v793 = vunpack.c.h.b16 %v109
  %v794 = vunpack.c.l.b16 %v110
  %v795 = vunpack.c.l.b16 %v111
  %v796 = vunpack.c.h.b16 %v111
  %v797 = vunpack.c.l.b16 %v112
  %v798 = vunpack.c.h.b16 %v112
  %v799 = vunpack.c.l.b16 %v113
  %v800 = vunpack.c.h.b16 %v113
  %v801 = vunpack.c.l.b16 %v114
  %v802 = vunpack.c.l.b16 %v115
  %v803 = vunpack.c.h.b16 %v115
  %v804 = vunpack.c.l.b16 %v116
  %v805 = vunpack.c.h.b16 %v116
  %v806 = vunpack.c.l.b16 %v117
  %v807 = vunpack.c.h.b16 %v117
  %v808 = vunpack.c.l.b16 %v118
  %v809 = vunpack.c.l.b16 %v119
  %v810 = vunpack.c.h.b16 %v119
  %v811 = vunpack.c.l.b16 %v120
  %v812 = vunpack.c.h.b16 %v120
  %v813 = vunpack.c.l.b16 %v121
  %v814 = vunpack.c.h.b16 %v121
  %v815 = vunpack.c.l.b16 %v122
  %v816 = vunpack.c.l.b16 %v123
  %v817 = vunpack.c.h.b16 %v123
  %v818 = vunpack.c.l.b16 %v124
  %v819 = vunpack.c.h.b16 %v124
  %v820 = vunpack.c.l.b16 %v125
  %v821 = vunpack.c.h.b16 %v125
  %v822 = vunpack.c.l.b16 %v126
  %v823 = vunpack.c.l.b16 %v127
  %v824 = vunpack.c.h.b16 %v127
  %v825 = vunpack.c.l.b16 %v128
  %v826 = vunpack.c.h.b16 %v128
  %v827 = vunpack.c.l.b16 %v129
  %v828 = vunpack.c.h.b16 %v129
  %v829 = vunpack.c.l.b16 %v130
  %v830 = vunpack.c.l.b16 %v131
  %v831 = vunpack.c.h.b16 %v131
  %v832 = vunpack.c.l.b16 %v132
  %v833 = vunpack.c.h.b16 %v132
  %v834 = vunpack.c.l.b16 %v133
  %v835 = vunpack.c.h.b16 %v133
  %v836 = vunpack.c.l.b16 %v134
  %v837 = vunpack.c.l.b16 %v135
  %v838 = vunpack.c.h.b16 %v135
  %v839 = vunpack.c.l.b16 %v136
  %v840 = vunpack.c.h.b16 %v136
  %v841 = vunpack.c.l.b16 %v137
  %v842 = vunpack.c.h.b16 %v137
  %v843 = vunpack.c.l.b16 %v138
  %v844 = vunpack.c.l.b16 %v139
  %v845 = vunpack.c.h.b16 %v139
  %v846 = vunpack.c.l.b16 %v140
  %v847 = vunpack.c.h.b16 %v140
  %v848 = vunpack.c.l.b16 %v141
  %v849 = vunpack.c.h.b16 %v141
  %v850 = vunpack.c.l.b16 %v142
  %v851 = vunpack.c.l.b16 %v143
  %v852 = vunpack.c.h.b16 %v143
  %v853 = vunpack.c.l.b16 %v144
  %v854 = vunpack.c.h.b16 %v144
  %v855 = vunpack.c.l.b16 %v145
  %v856 = vunpack.c.h.b16 %v145
  %v857 = vunpack.c.l.b16 %v146
  %v858 = vunpack.c.l.b16 %v147
  %v859 = vunpack.c.h.b16 %v147
  %v860 = vunpack.c.l.b16 %v148
  %v861 = vunpack.c.h.b16 %v148
  %v862 = vunpack.c.l.b16 %v149
  %v863 = vunpack.c.h.b16 %v149
  %v864 = vunpack.c.l.b16 %v150
  %v865 = vunpack.c.l.b16 %v151
  %v866 = vunpack.c.h.b16 %v151
  %v867 = vunpack.c.l.b16 %v152
  %v868 = vunpack.c.h.b16 %v152
  %v869 = vunpack.c.l.b16 %v153
  %v870 = vunpack.c.h.b16 %v153
  %v871 = vunpack.c.l.b16 %v154
  %v872 = vunpack.c.l.b16 %v155
  %v873 = vunpack.c.h.b16 %v155
  %v874 = vunpack.c.l.b16 %v156
  %v875 = vunpack.c.h.b16 %v156
  %v876 = vunpack.c.l.b16 %v157
  %v877 = vunpack.c.h.b16 %v157
  %v878 = vunpack.c.l.b16 %v158
  %v879 = vunpack.c.l.b16 %v159
  %v880 = vunpack.c.h.b16 %v159
  %v881 = vunpack.c.l.b16 %v160
  %v882 = vunpack.c.h.b16 %v160
  %v883 = vunpack.c.l.b16 %v161
  %v884 = vunpack.c.h.b16 %v161
  %v885 = vunpack.c.l.b16 %v162
  %v886 = vunpack.c.l.b16 %v163
  %v887 = vunpack.c.h.b16 %v163
  %v888 = vunpack.c.l.b16 %v164
  %v889 = vunpack.c.h.b16 %v164
  %v890 = vunpack.c.l.b16 %v165
  %v891 = vunpack.c.h.b16 %v165
  %v892 = vunpack.c.l.b16 %v166
  %v893 = vunpack.c.l.b16 %v167
  %v894 = vunpack.c.h.b16 %v167
  %v895 = vunpack.c.l.b16 %v168
  %v896 = vunpack.c.h.b16 %v168
  %v897 = vunpack.c.l.b16 %v169
  %v898 = vunpack.c.h.b16 %v169
  %v899 = vunpack.c.l.b16 %v170
  %v900 = vunpack.c.l.b16 %v171
  %v901 = vunpack.c.h.b16 %v171
  %v902 = vunpack.c.l.b16 %v172
  %v903 = vunpack.c.h.b16 %v172
  %v904 = vunpack.c.l.b16 %v173
  %v905 = vunpack.c.h.b16 %v173
  %v906 = vunpack.c.l.b16 %v174
  %v907 = vunpack.c.l.b16 %v175
  %v908 = vunpack.c.h.b16 %v175
  %v909 = vunpack.c.l.b16 %v176
  %v910 = vunpack.c.h.b16 %v176
  %v911 = vunpack.c.l.b16 %v177
  %v912 = vunpack.c.h.b16 %v177
  %v913 = vunpack.c.l.b16 %v178
  %v914 = vunpack.c.l.b16 %v179
  %v915 = vunpack.c.h.b16 %v179
  %v916 = vunpack.c.l.b16 %v180
  %v917 = vunpack.c.h.b16 %v180
  %v918 = vunpack.c.l.b16 %v181
  %v919 = vunpack.c.h.b16 %v181
  %v920 = vunpack.c.l.b16 %v182
  %v921 = vunpack.c.l.b16 %v183
  %v922 = vunpack.c.h.b16 %v183
  %v923 = vunpack.c.l.b16 %v184
  %v924 = vunpack.c.h.b16 %v184
  %v925 = vunpack.c.l.b16 %v185
  %v926 = vunpack.c.h.b16 %v185
  %v927 = vunpack.c.l.b16 %v186
  %v928 = vunpack.c.l.b16 %v187
  %v929 = vunpack.c.h.b16 %v187
  %v930 = vunpack.c.l.b16 %v188
  %v931 = vunpack.c.h.b16 %v188
  %v932 = vunpack.c.l.b16 %v189
  %v933 = vunpack.c.h.b16 %v189
  %v934 = vunpack.c.l.b16 %v190
  %v935 = vunpack.c.l.b16 %v191
  %v936 = vunpack.c.h.b16 %v191
  %v937 = vunpack.c.l.b16 %v192
  %v938 = vunpack.c.h.b16 %v192
  %v939 = vunpack.c.l.b16 %v193
  %v940 = vunpack.c.h.b16 %v193
  %v941 = vunpack.c.l.b16 %v194
  %v942 = vunpack.c.l.b16 %v195
  %v943 = vunpack.c.h.b16 %v195
  %v944 = vunpack.c.l.b16 %v196
  %v945 = vunpack.c.h.b16 %v196
  %v946 = vunpack.c.l.b16 %v197
  %v947 = vunpack.c.h.b16 %v197
  %v948 = vunpack.c.l.b16 %v198
  %v949 = vunpack.c.l.b16 %v199
  %v950 = vunpack.c.h.b16 %v199
  %v951 = vunpack.c.l.b16 %v200
  %v952 = vunpack.c.h.b16 %v200
  %v953 = vunpack.c.l.b16 %v201
  %v954 = vunpack.c.h.b16 %v201
  %v955 = vunpack.c.l.b16 %v202
  %v956 = vunpack.c.l.b16 %v203
  %v957 = vunpack.c.h.b16 %v203
  %v958 = vunpack.c.l.b16 %v204
  %v959 = vunpack.c.h.b16 %v204
  %v960 = vunpack.c.l.b16 %v205
  %v961 = vunpack.c.h.b16 %v205
  %v962 = vunpack.c.l.b16 %v206
  %v963 = vunpack.c.l.b16 %v207
  %v964 = vunpack.c.h.b16 %v207
  %v965 = vunpack.c.l.b16 %v208
  %v966 = vunpack.c.h.b16 %v208
  %v967 = vunpack.c.l.b16 %v209
  %v968 = vunpack.c.h.b16 %v209
  %v969 = vunpack.c.l.b16 %v210
  %v970 = vunpack.c.l.b16 %v211
  %v971 = vunpack.c.h.b16 %v211
  %v972 = vunpack.c.l.b16 %v212
  %v973 = vunpack.c.h.b16 %v212
  %v974 = vunpack.c.l.b16 %v213
  %v975 = vunpack.c.h.b16 %v213
  %v976 = vunpack.c.l.b16 %v214
  %v977 = vunpack.c.l.b16 %v215
  %v978 = vunpack.c.h.b16 %v215
  %v979 = vunpack.c.l.b16 %v216
  %v980 = vunpack.c.h.b16 %v216
  %v981 = vunpack.c.l.b16 %v217
  %v982 = vunpack.c.h.b16 %v217
  %v983 = vunpack.c.l.b16 %v218
  %v984 = vunpack.c.l.b16 %v219
  %v985 = vunpack.c.h.b16 %v219
  %v986 = vunpack.c.l.b16 %v220
  %v987 = vunpack.c.h.b16 %v220
  %v988 = vunpack.c.l.b16 %v221
  %v989 = vunpack.c.h.b16 %v221
  %v990 = vunpack.c.l.b16 %v222
  %v991 = vunpack.c.l.b16 %v223
  %v992 = vunpack.c.h.b16 %v223
  %v993 = vunpack.c.l.b16 %v224
  %v994 = vunpack.c.h.b16 %v224
  %v995 = vunpack.c.l.b16 %v225
  %v996 = vunpack.c.h.b16 %v225
  %v997 = vunpack.c.l.b16 %v226
  %v998 = vunpack.c.l.b16 %v227
  %v999 = vunpack.c.h.b16 %v227
  %v1000 = vunpack.c.l.b16 %v228
  %v1001 = vunpack.c.h.b16 %v228
  %v1002 = vunpack.c.l.b16 %v229
  %v1003 = vunpack.c.h.b16 %v229
  %v1004 = vunpack.c.l.b16 %v230
  %v1005 = vunpack.c.l.b16 %v231
  %v1006 = vunpack.c.h.b16 %v231
  %v1007 = vunpack.c.l.b16 %v232
  %v1008 = vunpack.c.h.b16 %v232
  %v1009 = vunpack.c.l.b16 %v233
  %v1010 = vunpack.c.h.b16 %v233
  %v1011 = vunpack.c.l.b16 %v234
  %v1012 = vunpack.c.l.b16 %v235
  %v1013 = vunpack.c.h.b16 %v235
  %v1014 = vunpack.c.l.b16 %v236
  %v1015 = vunpack.c.h.b16 %v236
  %v1016 = vunpack.c.l.b16 %v237
  %v1017 = vunpack.c.h.b16 %v237
  %v1018 = vunpack.c.l.b16 %v238
  %v1019 = vunpack.c.l.b16 %v239
  %v1020 = vunpack.c.h.b16 %v239
  %v1021 = vunpack.c.l.b16 %v240
  %v1022 = vunpack.c.h.b16 %v240
  %v1023 = vunpack.c.l.b16 %v241
  %v1024 = vunpack.c.h.b16 %v241
  %v1025 = vunpack.c.l.b16 %v242
  %v1026 = vunpack.c.l.b16 %v243
  %v1027 = vunpack.c.h.b16 %v243
  %v1028 = vunpack.c.l.b16 %v244
  %v1029 = vunpack.c.h.b16 %v244
  %v1030 = vunpack.c.l.b16 %v245
  %v1031 = vunpack.c.h.b16 %v245
  %v1032 = vunpack.c.l.b16 %v246
  %v1033 = vunpack.c.l.b16 %v247
  %v1034 = vunpack.c.h.b16 %v247
  %v1035 = vunpack.c.l.b16 %v248
  %v1036 = vunpack.c.h.b16 %v248
  %v1037 = vunpack.c.l.b16 %v249
  %v1038 = vunpack.c.h.b16 %v249
  %v1039 = vunpack.c.l.b16 %v250
  %v1040 = vunpack.c.l.b16 %v251
  %v1041 = vunpack.c.h.b16 %v251
  %v1042 = vunpack.c.l.b16 %v252
  %v1043 = vunpack.c.h.b16 %v252
  %v1044 = vunpack.c.l.b16 %v253
  %v1045 = vunpack.c.h.b16 %v253
  %v1046 = vunpack.c.l.b16 %v254
  %v1047 = vunpack.c.l.b16 %v255
  %v1048 = vunpack.c.h.b16 %v255
  %v1049 = vunpack.c.l.b16 %v256
  %v1050 = vunpack.c.h.b16 %v256
  %v1051 = vunpack.c.l.b16 %v257
  %v1052 = vunpack.c.h.b16 %v257
  %v1053 = vunpack.c.l.b16 %v258
  %v1054 = vunpack.c.l.b16 %v259
  %v1055 = vunpack.c.h.b16 %v259
  %v1056 = vunpack.c.l.b16 %v260
  %v1057 = vunpack.c.h.b16 %v260
  %v1058 = vunpack.c.l.b16 %v261
  %v1059 = vunpack.c.h.b16 %v261
  %v1060 = vunpack.c.l.b16 %v262
  %v1061 = vunpack.c.l.b16 %v263
  %v1062 = vunpack.c.h.b16 %v263
  %v1063 = vunpack.c.l.b16 %v264
  %v1064 = vunpack.c.h.b16 %v264
  %v1065 = vunpack.c.l.b16 %v265
  %v1066 = vunpack.c.h.b16 %v265
  %v1067 = vunpack.c.l.b16 %v266
  %v1068 = vunpack.c.l.b16 %v267
  %v1069 = vunpack.c.h.b16 %v267
  %v1070 = vunpack.c.l.b16 %v268
  %v1071 = vunpack.c.h.b16 %v268
  %v1072 = vunpack.c.l.b16 %v269
  %v1073 = vunpack.c.h.b16 %v269
  %v1074 = vunpack.c.l.b16 %v270
  %v1075 = vpack.c.b16 %v634, %v627
  %v1076 = vpack.c.b16 %v635, %v628
  %v1077 = vpack.c.b16 %v636, %v629
  %v1078 = vpack.c.b16 %v637, %v630
  %v1079 = vpack.c.b16 %v638, %v631
  %v1080 = vpack.c.b16 %v639, %v632
  %v1081 = vpack.c.b16 %v640, %v633
  %v1082 = vpack.c.b16 %v648, %v641
  %v1083 = vpack.c.b16 %v649, %v642
  %v1084 = vpack.c.b16 %v650, %v643
  %v1085 = vpack.c.b16 %v651, %v644
  %v1086 = vpack.c.b16 %v652, %v645
  %v1087 = vpack.c.b16 %v653, %v646
  %v1088 = vpack.c.b16 %v654, %v647
  %v1089 = vpack.c.b16 %v662, %v655
  %v1090 = vpack.c.b16 %v663, %v656
  %v1091 = vpack.c.b16 %v664, %v657
  %v1092 = vpack.c.b16 %v665, %v658
  %v1093 = vpack.c.b16 %v666, %v659
  %v1094 = vpack.c.b16 %v667, %v660
  %v1095 = vpack.c.b16 %v668, %v661
  %v1096 = vpack.c.b16 %v676, %v669
  %v1097 = vpack.c.b16 %v677, %v670
  %v1098 = vpack.c.b16 %v678, %v671
  %v1099 = vpack.c.b16 %v679, %v672
  %v1100 = vpack.c.b16 %v680, %v673
  %v1101 = vpack.c.b16 %v681, %v674
  %v1102 = vpack.c.b16 %v682, %v675
  %v1103 = vpack.c.b16 %v690, %v683
  %v1104 = vpack.c.b16 %v691, %v684
  %v1105 = vpack.c.b16 %v692, %v685
  %v1106 = vpack.c.b16 %v693, %v686
  %v1107 = vpack.c.b16 %v694, %v687
  %v1108 = vpack.c.b16 %v695, %v688
  %v1109 = vpack.c.b16 %v696, %v689
  %v1110 = vpack.c.b16 %v704, %v697
  %v1111 = vpack.c.b16 %v705, %v698
  %v1112 = vpack.c.b16 %v706, %v699
  %v1113 = vpack.c.b16 %v707, %v700
  %v1114 = vpack.c.b16 %v708, %v701
  %v1115 = vpack.c.b16 %v709, %v702
  %v1116 = vpack.c.b16 %v710, %v703
  %v1117 = vpack.c.b16 %v718, %v711
  %v1118 = vpack.c.b16 %v719, %v712
  %v1119 = vpack.c.b16 %v720, %v713
  %v1120 = vpack.c.b16 %v721, %v714
  %v1121 = vpack.c.b16 %v722, %v715
  %v1122 = vpack.c.b16 %v723, %v716
  %v1123 = vpack.c.b16 %v724, %v717
  %v1124 = vpack.c.b16 %v732, %v725
  %v1125 = vpack.c.b16 %v733, %v726
  %v1126 = vpack.c.b16 %v734, %v727
  %v1127 = vpack.c.b16 %v735, %v728
  %v1128 = vpack.c.b16 %v736, %v729
  %v1129 = vpack.c.b16 %v737, %v730
  %v1130 = vpack.c.b16 %v738, %v731
  %v1131 = vpack.c.b16 %v746, %v739
  %v1132 = vpack.c.b16 %v747, %v740
  %v1133 = vpack.c.b16 %v748, %v741
  %v1134 = vpack.c.b16 %v749, %v742
  %v1135 = vpack.c.b16 %v750, %v743
  %v1136 = vpack.c.b16 %v751, %v744
  %v1137 = vpack.c.b16 %v752, %v745
  %v1138 = vpack.c.b16 %v760, %v753
  %v1139 = vpack.c.b16 %v761, %v754
  %v1140 = vpack.c.b16 %v762, %v755
  %v1141 = vpack.c.b16 %v763, %v756
  %v1142 = vpack.c.b16 %v764, %v757
  %v1143 = vpack.c.b16 %v765, %v758
  %v1144 = vpack.c.b16 %v766, %v759
  %v1145 = vpack.c.b16 %v774, %v767
  %v1146 = vpack.c.b16 %v775, %v768
  %v1147 = vpack.c.b16 %v776, %v769
  %v1148 = vpack.c.b16 %v777, %v770
  %v1149 = vpack.c.b16 %v778, %v771
  %v1150 = vpack.c.b16 %v779, %v772
  %v1151 = vpack.c.b16 %v780, %v773
  %v1152 = vpack.c.b16 %v788, %v781
  %v1153 = vpack.c.b16 %v789, %v782
  %v1154 = vpack.c.b16 %v790, %v783
  %v1155 = vpack.c.b16 %v791, %v784
  %v1156 = vpack.c.b16 %v792, %v785
  %v1157 = vpack.c.b16 %v793, %v786
  %v1158 = vpack.c.b16 %v794, %v787
  %v1159 = vpack.c.b16 %v802, %v795
  %v1160 = vpack.c.b16 %v803, %v796
  %v1161 = vpack.c.b16 %v804, %v797
  %v1162 = vpack.c.b16 %v805, %v798
  %v1163 = vpack.c.b16 %v806, %v799
  %v1164 = vpack.c.b16 %v807, %v800
  %v1165 = vpack.c.b16 %v808, %v801
  %v1166 = vpack.c.b16 %v816, %v809
  %v1167 = vpack.c.b16 %v817, %v810
  %v1168 = vpack.c.b16 %v818, %v811
  %v1169 = vpack.c.b16 %v819, %v812
  %v1170 = vpack.c.b16 %v820, %v813
  %v1171 = vpack.c.b16 %v821, %v814
  %v1172 = vpack.c.b16 %v822, %v815
  %v1173 = vpack.c.b16 %v830, %v823
  %v1174 = vpack.c.b16 %v831, %v824
  %v1175 = vpack.c.b16 %v832, %v825
  %v1176 = vpack.c.b16 %v833, %v826
  %v1177 = vpack.c.b16 %v834, %v827
  %v1178 = vpack.c.b16 %v835, %v828
  %v1179 = vpack.c.b16 %v836, %v829
  %v1180 = vpack.c.b16 %v844, %v837
  %v1181 = vpack.c.b16 %v845, %v838
  %v1182 = vpack.c.b16 %v846, %v839
  %v1183 = vpack.c.b16 %v847, %v840
  %v1184 = vpack.c.b16 %v848, %v841
  %v1185 = vpack.c.b16 %v849, %v842
  %v1186 = vpack.c.b16 %v850, %v843
  %v1187 = vpack.c.b16 %v858, %v851
  %v1188 = vpack.c.b16 %v859, %v852
  %v1189 = vpack.c.b16 %v860, %v853
  %v1190 = vpack.c.b16 %v861, %v854
  %v1191 = vpack.c.b16 %v862, %v855
  %v1192 = vpack.c.b16 %v863, %v856
  %v1193 = vpack.c.b16 %v864, %v857
  %v1194 = vpack.c.b16 %v872, %v865
  %v1195 = vpack.c.b16 %v873, %v866
  %v1196 = vpack.c.b16 %v874, %v867
  %v1197 = vpack.c.b16 %v875, %v868
  %v1198 = vpack.c.b16 %v876, %v869
  %v1199 = vpack.c.b16 %v877, %v870
  %v1200 = vpack.c.b16 %v878, %v871
  %v1201 = vpack.c.b16 %v886, %v879
  %v1202 = vpack.c.b16 %v887, %v880
  %v1203 = vpack.c.b16 %v888, %v881
  %v1204 = vpack.c.b16 %v889, %v882
  %v1205 = vpack.c.b16 %v890, %v883
  %v1206 = vpack.c.b16 %v891, %v884
  %v1207 = vpack.c.b16 %v892, %v885
  %v1208 = vpack.c.b16 %v900, %v893
  %v1209 = vpack.c.b16 %v901, %v894
  %v1210 = vpack.c.b16 %v902, %v895
  %v1211 = vpack.c.b16 %v903, %v896
  %v1212 = vpack.c.b16 %v904, %v897
  %v1213 = vpack.c.b16 %v905, %v898
  %v1214 = vpack.c.b16 %v906, %v899
  %v1215 = vpack.c.b16 %v914, %v907
  %v1216 = vpack.c.b16 %v915, %v908
  %v1217 = vpack.c.b16 %v916, %v909
  %v1218 = vpack.c.b16 %v917, %v910
  %v1219 = vpack.c.b16 %v918, %v911
  %v1220 = vpack.c.b16 %v919, %v912
  %v1221 = vpack.c.b16 %v920, %v913
  %v1222 = vpack.c.b16 %v928, %v921
  %v1223 = vpack.c.b16 %v929, %v922
  %v1224 = vpack.c.b16 %v930, %v923
  %v1225 = vpack.c.b16 %v931, %v924
  %v1226 = vpack.c.b16 %v932, %v925
  %v1227 = vpack.c.b16 %v933, %v926
  %v1228 = vpack.c.b16 %v934, %v927
  %v1229 = vpack.c.b16 %v942, %v935
  %v1230 = vpack.c.b16 %v943, %v936
  %v1231 = vpack.c.b16 %v944, %v937
  %v1232 = vpack.c.b16 %v945, %v938
  %v1233 = vpack.c.b16 %v946, %v939
  %v1234 = vpack.c.b16 %v947, %v940
  %v1235 = vpack.c.b16 %v948, %v941
  %v1236 = vpack.c.b16 %v956, %v949
  %v1237 = vpack.c.b16 %v957, %v950
  %v1238 = vpack.c.b16 %v958, %v951
  %v1239 = vpack.c.b16 %v959, %v952
  %v1240 = vpack.c.b16 %v960, %v953
  %v1241 = vpack.c.b16 %v961, %v954
  %v1242 = vpack.c.b16 %v962, %v955
  %v1243 = vpack.c.b16 %v970, %v963
  %v1244 = vpack.c.b16 %v971, %v964
  %v1245 = vpack.c.b16 %v972, %v965
  %v1246 = vpack.c.b16 %v973, %v966
  %v1247 = vpack.c.b16 %v974, %v967
  %v1248 = vpack.c.b16 %v975, %v968
  %v1249 = vpack.c.b16 %v976, %v969
  %v1250 = vpack.c.b16 %v984, %v977
  %v1251 = vpack.c.b16 %v985, %v978
  %v1252 = vpack.c.b16 %v986, %v979
  %v1253 = vpack.c.b16 %v987, %v980
  %v1254 = vpack.c.b16 %v988, %v981
  %v1255 = vpack.c.b16 %v989, %v982
  %v1256 = vpack.c.b16 %v990, %v983
  %v1257 = vpack.c.b16 %v998, %v991
  %v1258 = vpack.c.b16 %v999, %v992
  %v1259 = vpack.c.b16 %v1000, %v993
  %v1260 = vpack.c.b16 %v1001, %v994
  %v1261 = vpack.c.b16 %v1002, %v995
  %v1262 = vpack.c.b16 %v1003, %v996
  %v1263 = vpack.c.b16 %v1004, %v997
  %v1264 = vpack.c.b16 %v1012, %v1005
  %v1265 = vpack.c.b16 %v1013, %v1006
  %v1266 = vpack.c.b16 %v1014, %v1007
  %v1267 = vpack.c.b16 %v1015, %v1008
  %v1268 = vpack.c.b16 %v1016, %v1009
  %v1269 = vpack.c.b16 %v1017, %v1010
  %v1270 = vpack.c.b16 %v1018, %v1011
  %v1271 = vpack.c.b16 %v1026, %v1019
  %v1272 = vpack.c.b16 %v1027, %v1020
  %v1273 = vpack.c.b16 %v1028, %v1021
  %v1274 = vpack.c.b16 %v1029, %v1022
  %v1275 = vpack.c.b16 %v1030, %v1023
  %v1276 = vpack.c.b16 %v1031, %v1024
  %v1277 = vpack.c.b16 %v1032, %v1025
  %v1278 = vpack.c.b16 %v1040, %v1033
  %v1279 = vpack.c.b16 %v1041, %v1034
  %v1280 = vpack.c.b16 %v1042, %v1035
  %v1281 = vpack.c.b16 %v1043, %v1036
  %v1282 = vpack.c.b16 %v1044, %v1037
  %v1283 = vpack.c.b16 %v1045, %v1038
  %v1284 = vpack.c.b16 %v1046, %v1039
  %v1285 = vpack.c.b16 %v1054, %v1047
  %v1286 = vpack.c.b16 %v1055, %v1048
  %v1287 = vpack.c.b16 %v1056, %v1049
  %v1288 = vpack.c.b16 %v1057, %v1050
  %v1289 = vpack.c.b16 %v1058, %v1051
  %v1290 = vpack.c.b16 %v1059, %v1052
  %v1291 = vpack.c.b16 %v1060, %v1053
  %v1292 = vpack.c.b16 %v1068, %v1061
  %v1293 = vpack.c.b16 %v1069, %v1062
  %v1294 = vpack.c.b16 %v1070, %v1063
  %v1295 = vpack.c.b16 %v1071, %v1064
  %v1296 = vpack.c.b16 %v1072, %v1065
  %v1297 = vpack.c.b16 %v1073, %v1066
  %v1298 = vpack.c.b16 %v1074, %v1067
  %v1591 = vunpack.c.l.b16 %v271
  %v1592 = vunpack.c.l.b16 %v272
  %v1593 = vunpack.c.l.b16 %v273
  %v1594 = vunpack.c.l.b16 %v274
  %v1595 = vunpack.c.l.b16 %v275
  %v1596 = vunpack.c.l.b16 %v276
  %v1597 = vunpack.c.l.b16 %v277
  %v1598 = vunpack.c.l.b16 %v278
  %v1599 = vunpack.c.l.b16 %v279
  %v1600 = vunpack.c.l.b16 %v280
  %v1601 = vunpack.c.l.b16 %v281
  %v1602 = vunpack.c.l.b16 %v282
  %v1603 = vunpack.c.l.b16 %v283
  %v1604 = vunpack.c.l.b16 %v284
  %v1605 = vunpack.c.l.b16 %v285
  %v1606 = vunpack.c.l.b16 %v286
  %v1607 = vunpack.c.l.b16 %v287
  %v1608 = vunpack.c.l.b16 %v288
  %v1609 = vunpack.c.l.b16 %v289
  %v1610 = vunpack.c.l.b16 %v290
  %v1611 = vunpack.c.l.b16 %v291
  %v1612 = vunpack.c.l.b16 %v292
  %v1613 = vunpack.c.l.b16 %v293
  %v1614 = vunpack.c.l.b16 %v294
  %v1615 = vunpack.c.l.b16 %v295
  %v1616 = vunpack.c.l.b16 %v296
  %v1617 = vunpack.c.l.b16 %v297
  %v1618 = vunpack.c.l.b16 %v298
  %v1619 = vunpack.c.l.b16 %v299
  %v1620 = vunpack.c.l.b16 %v300
  %v1621 = vunpack.c.l.b16 %v301
  %v1622 = vunpack.c.l.b16 %v302
  %v1623 = vunpack.c.l.b16 %v303
  %v1624 = vunpack.c.l.b16 %v304
  %v1625 = vunpack.c.l.b16 %v305
  %v1626 = vunpack.c.l.b16 %v306
  %v1627 = vunpack.c.l.b16 %v307
  %v1628 = vunpack.c.l.b16 %v308
  %v1629 = vunpack.c.l.b16 %v309
  %v1630 = vunpack.c.l.b16 %v310
  %v1631 = vunpack.c.l.b16 %v311
  %v1632 = vunpack.c.l.b16 %v312
  %v1633 = vunpack.c.l.b16 %v313
  %v1634 = vunpack.c.l.b16 %v314
  %v1635 = vunpack.c.l.b16 %v315
  %v1636 = vunpack.c.l.b16 %v316
  %v1637 = vunpack.c.l.b16 %v317
  %v1638 = vunpack.c.l.b16 %v318
  %v1639 = vunpack.c.l.b16 %v319
  %v1640 = vunpack.c.l.b16 %v320
  %v1641 = vunpack.c.l.b16 %v321
  %v1642 = vunpack.c.l.b16 %v322
  %v1643 = vunpack.c.l.b16 %v323
  %v1644 = vunpack.c.l.b16 %v324
  %v1645 = vunpack.c.l.b16 %v325
  %v1646 = vunpack.c.l.b16 %v326
  %v1647 = vunpack.c.l.b16 %v327
  %v1648 = vunpack.c.l.b16 %v328
  %v1649 = vunpack.c.l.b16 %v329
  %v1650 = vunpack.c.l.b16 %v330
  %v1651 = vunpack.c.l.b16 %v331
  %v1652 = vunpack.c.l.b16 %v332
  %v1653 = vunpack.c.l.b16 %v333
  %v1654 = vunpack.c.l.b16 %v334
  %v1655 = vunpack.c.l.b16 %v335
  %v1656 = vunpack.c.l.b16 %v336
  %v1657 = vunpack.c.l.b16 %v337
  %v1658 = vunpack.c.l.b16 %v338
  %v1659 = vunpack.c.l.b16 %v339
  %v1660 = vunpack.c.l.b16 %v340
  %v1661 = vunpack.c.l.b16 %v341
  %v1662 = vunpack.c.l.b16 %v342
  %v1663 = vunpack.c.l.b16 %v343
  %v1664 = vunpack.c.l.b16 %v344
  %v1665 = vunpack.c.l.b16 %v345
  %v1666 = vunpack.c.l.b16 %v346
  %v1667 = vunpack.c.l.b16 %v347
  %v1668 = vunpack.c.l.b16 %v348
  %v1669 = vunpack.c.l.b16 %v349
  %v1670 = vunpack.c.l.b16 %v350
  %v1671 = vunpack.c.l.b16 %v351
  %v1672 = vunpack.c.l.b16 %v352
  %v1673 = vunpack.c.l.b16 %v353
  %v1674 = vunpack.c.l.b16 %v354
  %v1675 = vunpack.c.l.b16 %v355
  %v1676 = vunpack.c.l.b16 %v356
  %v1677 = vunpack.c.l.b16 %v357
  %v1678 = vunpack.c.l.b16 %v358
  %v1679 = vunpack.c.l.b16 %v359
  %v1680 = vunpack.c.l.b16 %v360
  %v1681 = vunpack.c.l.b16 %v361
  %v1682 = vunpack.c.l.b16 %v362
  %v1683 = vunpack.c.l.b16 %v363
  %v1684 = vunpack.c.l.b16 %v364
  %v1685 = vunpack.c.l.b16 %v365
  %v1686 = vunpack.c.l.b16 %v366
  %v1687 = vunpack.c.l.b16 %v367
  %v1688 = vunpack.c.l.b16 %v368
  %v1689 = vunpack.c.l.b16 %v369
  %v1690 = vunpack.c.l.b16 %v370
  %v1691 = vpack.c.b16 %v1592, %v1591
  %v1692 = vpack.c.b16 %v1594, %v1593
  %v1693 = vpack.c.b16 %v1596, %v1595
  %v1694 = vpack.c.b16 %v1598, %v1597
  %v1695 = vpack.c.b16 %v1600, %v1599
  %v1696 = vpack.c.b16 %v1602, %v1601
  %v1697 = vpack.c.b16 %v1604, %v1603
  %v1698 = vpack.c.b16 %v1606, %v1605
  %v1699 = vpack.c.b16 %v1608, %v1607
  %v1700 = vpack.c.b16 %v1610, %v1609
  %v1701 = vpack.c.b16 %v1612, %v1611
  %v1702 = vpack.c.b16 %v1614, %v1613
  %v1703 = vpack.c.b16 %v1616, %v1615
  %v1704 = vpack.c.b16 %v1618, %v1617
  %v1705 = vpack.c.b16 %v1620, %v1619
  %v1706 = vpack.c.b16 %v1622, %v1621
  %v1707 = vpack.c.b16 %v1624, %v1623
  %v1708 = vpack.c.b16 %v1626, %v1625
  %v1709 = vpack.c.b16 %v1628, %v1627
  %v1710 = vpack.c.b16 %v1630, %v1629
  %v1711 = vpack.c.b16 %v1632, %v1631
  %v1712 = vpack.c.b16 %v1634, %v1633
  %v1713 = vpack.c.b16 %v1636, %v1635
  %v1714 = vpack.c.b16 %v1638, %v1637
  %v1715 = vpack.c.b16 %v1640, %v1639
  %v1716 = vpack.c.b16 %v1642, %v1641
  %v1717 = vpack.c.b16 %v1644, %v1643
  %v1718 = vpack.c.b16 %v1646, %v1645
  %v1719 = vpack.c.b16 %v1648, %v1647
  %v1720 = vpack.c.b16 %v1650, %v1649
  %v1721 = vpack.c.b16 %v1652, %v1651
  %v1722 = vpack.c.b16 %v1654, %v1653
  %v1723 = vpack.c.b16 %v1656, %v1655
  %v1724 = vpack.c.b16 %v1658, %v1657
  %v1725 = vpack.c.b16 %v1660, %v1659
  %v1726 = vpack.c.b16 %v1662, %v1661
  %v1727 = vpack.c.b16 %v1664, %v1663
  %v1728 = vpack.c.b16 %v1666, %v1665
  %v1729 = vpack.c.b16 %v1668, %v1667
  %v1730 = vpack.c.b16 %v1670, %v1669
  %v1731 = vpack.c.b16 %v1672, %v1671
  %v1732 = vpack.c.b16 %v1674, %v1673
  %v1733 = vpack.c.b16 %v1676, %v1675
  %v1734 = vpack.c.b16 %v1678, %v1677
  %v1735 = vpack.c.b16 %v1680, %v1679
  %v1736 = vpack.c.b16 %v1682, %v1681
  %v1737 = vpack.c.b16 %v1684, %v1683
  %v1738 = vpack.c.b16 %v1686, %v1685
  %v1739 = vpack.c.b16 %v1688, %v1687
  %v1740 = vpack.c.b16 %v1690, %v1689
  %vm1791 = vcmask 261120
  %v1793 = vsel %vm1791, %v1081, 0
  %v1796 = vsel %vm1791, %v1088, 0
  %v1799 = vsel %vm1791, %v1095, 0
  %v1802 = vsel %vm1791, %v1102, 0
  %v1805 = vsel %vm1791, %v1109, 0
  %v1808 = vsel %vm1791, %v1116, 0
  %v1811 = vsel %vm1791, %v1123, 0
  %v1814 = vsel %vm1791, %v1130, 0
  %v1817 = vsel %vm1791, %v1137, 0
  %v1820 = vsel %vm1791, %v1144, 0
  %v1823 = vsel %vm1791, %v1151, 0
  %v1826 = vsel %vm1791, %v1158, 0
  %v1829 = vsel %vm1791, %v1165, 0
  %v1832 = vsel %vm1791, %v1172, 0
  %v1835 = vsel %vm1791, %v1179, 0
  %v1838 = vsel %vm1791, %v1186, 0
  %v1841 = vsel %vm1791, %v1193, 0
  %v1844 = vsel %vm1791, %v1200, 0
  %v1847 = vsel %vm1791, %v1207, 0
  %v1850 = vsel %vm1791, %v1214, 0
  %v1853 = vsel %vm1791, %v1221, 0
  %v1856 = vsel %vm1791, %v1228, 0
  %v1859 = vsel %vm1791, %v1235, 0
  %v1862 = vsel %vm1791, %v1242, 0
  %v1865 = vsel %vm1791, %v1249, 0
  %v1868 = vsel %vm1791, %v1256, 0
  %v1871 = vsel %vm1791, %v1263, 0
  %v1874 = vsel %vm1791, %v1270, 0
  %v1877 = vsel %vm1791, %v1277, 0
  %v1880 = vsel %vm1791, %v1284, 0
  %v1883 = vsel %vm1791, %v1291, 0
  %v1886 = vsel %vm1791, %v1298, 0
  %1888 = vmatprep.subr.bf16.mxu0 0
  %1889 = vmatpush1.bf16.msra.mxu0 %v1698
  %1890 = vmatprep.subr.bf16.mxu0 0
  %1891 = vmatpush1.bf16.msra.mxu0 %v1697
  %1892 = vmatprep.subr.bf16.mxu0 0
  %1893 = vmatpush1.bf16.msra.mxu0 %v1696
  %1894 = vmatprep.subr.bf16.mxu0 0
  %1895 = vmatpush1.bf16.msra.mxu0 %v1695
  %1896 = vmatprep.subr.bf16.mxu0 0
  %1897 = vmatpush1.bf16.msra.mxu0 %v1694
  %1898 = vmatprep.subr.bf16.mxu0 0
  %1899 = vmatpush1.bf16.msra.mxu0 %v1693
  %1900 = vmatprep.subr.bf16.mxu0 0
  %1901 = vmatpush1.bf16.msra.mxu0 %v1692
  %1902 = vmatprep.subr.bf16.mxu0 0
  %1903 = vmatpush1.bf16.msra.mxu0 %v1691
  %1904 = vmatprep.subr.bf16.mxu0 0
  %1905 = vmatpush2.bf16.msra.mxu0 %v1706
  %1906 = vmatprep.subr.bf16.mxu0 0
  %1907 = vmatpush2.bf16.msra.mxu0 %v1705
  %1908 = vmatprep.subr.bf16.mxu0 0
  %1909 = vmatpush2.bf16.msra.mxu0 %v1704
  %1910 = vmatprep.subr.bf16.mxu0 0
  %1911 = vmatpush2.bf16.msra.mxu0 %v1703
  %1912 = vmatprep.subr.bf16.mxu0 0
  %1913 = vmatpush2.bf16.msra.mxu0 %v1702
  %1914 = vmatprep.subr.bf16.mxu0 0
  %1915 = vmatpush2.bf16.msra.mxu0 %v1701
  %1916 = vmatprep.subr.bf16.mxu0 0
  %1917 = vmatpush2.bf16.msra.mxu0 %v1700
  %1918 = vmatprep.subr.bf16.mxu0 0
  %1919 = vmatpush2.bf16.msra.mxu0 %v1699
  %1920 = vmatprep.mubr.bf16.mxu0 %v1076
  %1921 = vmatmul.mubr.bf16.gmra.mxu0 %v1075
  %v1922 = vpop.f32.mrf.mxu0
  %v1923 = vadd.f32 0.0, %v1922
  %v1924 = vpop.f32.mrf.mxu0
  %v1925 = vpop.f32.mrf.mxu0
  %v1926 = vadd.f32 0.0, %v1925
  %v1927 = vpop.f32.mrf.mxu0
  %1928 = vmatprep.mubr.bf16.mxu0 %v1083
  %1929 = vmatmul.mubr.bf16.gmra.mxu0 %v1082
  %v1930 = vpop.f32.mrf.mxu0
  %v1931 = vadd.f32 0.0, %v1930
  %v1932 = vpop.f32.mrf.mxu0
  %v1933 = vpop.f32.mrf.mxu0
  %v1934 = vadd.f32 0.0, %v1933
  %v1935 = vpop.f32.mrf.mxu0
  %1936 = vmatprep.mubr.bf16.mxu0 %v1090
  %1937 = vmatmul.mubr.bf16.gmra.mxu0 %v1089
  %v1938 = vpop.f32.mrf.mxu0
  %v1939 = vadd.f32 0.0, %v1938
  %v1940 = vpop.f32.mrf.mxu0
  %v1941 = vpop.f32.mrf.mxu0
  %v1942 = vadd.f32 0.0, %v1941
  %v1943 = vpop.f32.mrf.mxu0
  %1944 = vmatprep.mubr.bf16.mxu0 %v1097
  %1945 = vmatmul.mubr.bf16.gmra.mxu0 %v1096
  %v1946 = vpop.f32.mrf.mxu0
  %v1947 = vadd.f32 0.0, %v1946
  %v1948 = vpop.f32.mrf.mxu0
  %v1949 = vpop.f32.mrf.mxu0
  %v1950 = vadd.f32 0.0, %v1949
  %v1951 = vpop.f32.mrf.mxu0
  %1952 = vmatprep.mubr.bf16.mxu0 %v1104
  %1953 = vmatmul.mubr.bf16.gmra.mxu0 %v1103
  %v1954 = vpop.f32.mrf.mxu0
  %v1955 = vadd.f32 0.0, %v1954
  %v1956 = vpop.f32.mrf.mxu0
  %v1957 = vpop.f32.mrf.mxu0
  %v1958 = vadd.f32 0.0, %v1957
  %v1959 = vpop.f32.mrf.mxu0
  %1960 = vmatprep.mubr.bf16.mxu0 %v1111
  %1961 = vmatmul.mubr.bf16.gmra.mxu0 %v1110
  %v1962 = vpop.f32.mrf.mxu0
  %v1963 = vadd.f32 0.0, %v1962
  %v1964 = vpop.f32.mrf.mxu0
  %v1965 = vpop.f32.mrf.mxu0
  %v1966 = vadd.f32 0.0, %v1965
  %v1967 = vpop.f32.mrf.mxu0
  %1968 = vmatprep.mubr.bf16.mxu0 %v1118
  %1969 = vmatmul.mubr.bf16.gmra.mxu0 %v1117
  %v1970 = vpop.f32.mrf.mxu0
  %v1971 = vadd.f32 0.0, %v1970
  %v1972 = vpop.f32.mrf.mxu0
  %v1973 = vpop.f32.mrf.mxu0
  %v1974 = vadd.f32 0.0, %v1973
  %v1975 = vpop.f32.mrf.mxu0
  %1976 = vmatprep.mubr.bf16.mxu0 %v1125
  %1977 = vmatmul.mubr.bf16.gmra.mxu0 %v1124
  %v1978 = vpop.f32.mrf.mxu0
  %v1979 = vadd.f32 0.0, %v1978
  %v1980 = vpop.f32.mrf.mxu0
  %v1981 = vpop.f32.mrf.mxu0
  %v1982 = vadd.f32 0.0, %v1981
  %v1983 = vpop.f32.mrf.mxu0
  %1984 = vmatprep.mubr.bf16.mxu0 %v1132
  %1985 = vmatmul.mubr.bf16.gmra.mxu0 %v1131
  %v1986 = vpop.f32.mrf.mxu0
  %v1987 = vadd.f32 0.0, %v1986
  %v1988 = vpop.f32.mrf.mxu0
  %v1989 = vpop.f32.mrf.mxu0
  %v1990 = vadd.f32 0.0, %v1989
  %v1991 = vpop.f32.mrf.mxu0
  %1992 = vmatprep.mubr.bf16.mxu0 %v1139
  %1993 = vmatmul.mubr.bf16.gmra.mxu0 %v1138
  %v1994 = vpop.f32.mrf.mxu0
  %v1995 = vadd.f32 0.0, %v1994
  %v1996 = vpop.f32.mrf.mxu0
  %v1997 = vpop.f32.mrf.mxu0
  %v1998 = vadd.f32 0.0, %v1997
  %v1999 = vpop.f32.mrf.mxu0
  %2000 = vmatprep.mubr.bf16.mxu0 %v1146
  %2001 = vmatmul.mubr.bf16.gmra.mxu0 %v1145
  %v2002 = vpop.f32.mrf.mxu0
  %v2003 = vadd.f32 0.0, %v2002
  %v2004 = vpop.f32.mrf.mxu0
  %v2005 = vpop.f32.mrf.mxu0
  %v2006 = vadd.f32 0.0, %v2005
  %v2007 = vpop.f32.mrf.mxu0
  %2008 = vmatprep.mubr.bf16.mxu0 %v1153
  %2009 = vmatmul.mubr.bf16.gmra.mxu0 %v1152
  %v2010 = vpop.f32.mrf.mxu0
  %v2011 = vadd.f32 0.0, %v2010
  %v2012 = vpop.f32.mrf.mxu0
  %v2013 = vpop.f32.mrf.mxu0
  %v2014 = vadd.f32 0.0, %v2013
  %v2015 = vpop.f32.mrf.mxu0
  %2016 = vmatprep.mubr.bf16.mxu0 %v1160
  %2017 = vmatmul.mubr.bf16.gmra.mxu0 %v1159
  %v2018 = vpop.f32.mrf.mxu0
  %v2019 = vadd.f32 0.0, %v2018
  %v2020 = vpop.f32.mrf.mxu0
  %v2021 = vpop.f32.mrf.mxu0
  %v2022 = vadd.f32 0.0, %v2021
  %v2023 = vpop.f32.mrf.mxu0
  %2024 = vmatprep.mubr.bf16.mxu0 %v1167
  %2025 = vmatmul.mubr.bf16.gmra.mxu0 %v1166
  %v2026 = vpop.f32.mrf.mxu0
  %v2027 = vadd.f32 0.0, %v2026
  %v2028 = vpop.f32.mrf.mxu0
  %v2029 = vpop.f32.mrf.mxu0
  %v2030 = vadd.f32 0.0, %v2029
  %v2031 = vpop.f32.mrf.mxu0
  %2032 = vmatprep.mubr.bf16.mxu0 %v1174
  %2033 = vmatmul.mubr.bf16.gmra.mxu0 %v1173
  %v2034 = vpop.f32.mrf.mxu0
  %v2035 = vadd.f32 0.0, %v2034
  %v2036 = vpop.f32.mrf.mxu0
  %v2037 = vpop.f32.mrf.mxu0
  %v2038 = vadd.f32 0.0, %v2037
  %v2039 = vpop.f32.mrf.mxu0
  %2040 = vmatprep.mubr.bf16.mxu0 %v1181
  %2041 = vmatmul.mubr.bf16.gmra.mxu0 %v1180
  %v2042 = vpop.f32.mrf.mxu0
  %v2043 = vadd.f32 0.0, %v2042
  %v2044 = vpop.f32.mrf.mxu0
  %v2045 = vpop.f32.mrf.mxu0
  %v2046 = vadd.f32 0.0, %v2045
  %v2047 = vpop.f32.mrf.mxu0
  %2048 = vmatprep.mubr.bf16.mxu0 %v1188
  %2049 = vmatmul.mubr.bf16.gmra.mxu0 %v1187
  %v2050 = vpop.f32.mrf.mxu0
  %v2051 = vadd.f32 0.0, %v2050
  %v2052 = vpop.f32.mrf.mxu0
  %v2053 = vpop.f32.mrf.mxu0
  %v2054 = vadd.f32 0.0, %v2053
  %v2055 = vpop.f32.mrf.mxu0
  %2056 = vmatprep.mubr.bf16.mxu0 %v1195
  %2057 = vmatmul.mubr.bf16.gmra.mxu0 %v1194
  %v2058 = vpop.f32.mrf.mxu0
  %v2059 = vadd.f32 0.0, %v2058
  %v2060 = vpop.f32.mrf.mxu0
  %v2061 = vpop.f32.mrf.mxu0
  %v2062 = vadd.f32 0.0, %v2061
  %v2063 = vpop.f32.mrf.mxu0
  %2064 = vmatprep.mubr.bf16.mxu0 %v1202
  %2065 = vmatmul.mubr.bf16.gmra.mxu0 %v1201
  %v2066 = vpop.f32.mrf.mxu0
  %v2067 = vadd.f32 0.0, %v2066
  %v2068 = vpop.f32.mrf.mxu0
  %v2069 = vpop.f32.mrf.mxu0
  %v2070 = vadd.f32 0.0, %v2069
  %v2071 = vpop.f32.mrf.mxu0
  %2072 = vmatprep.mubr.bf16.mxu0 %v1209
  %2073 = vmatmul.mubr.bf16.gmra.mxu0 %v1208
  %v2074 = vpop.f32.mrf.mxu0
  %v2075 = vadd.f32 0.0, %v2074
  %v2076 = vpop.f32.mrf.mxu0
  %v2077 = vpop.f32.mrf.mxu0
  %v2078 = vadd.f32 0.0, %v2077
  %v2079 = vpop.f32.mrf.mxu0
  %2080 = vmatprep.mubr.bf16.mxu0 %v1216
  %2081 = vmatmul.mubr.bf16.gmra.mxu0 %v1215
  %v2082 = vpop.f32.mrf.mxu0
  %v2083 = vadd.f32 0.0, %v2082
  %v2084 = vpop.f32.mrf.mxu0
  %v2085 = vpop.f32.mrf.mxu0
  %v2086 = vadd.f32 0.0, %v2085
  %v2087 = vpop.f32.mrf.mxu0
  %2088 = vmatprep.mubr.bf16.mxu0 %v1223
  %2089 = vmatmul.mubr.bf16.gmra.mxu0 %v1222
  %v2090 = vpop.f32.mrf.mxu0
  %v2091 = vadd.f32 0.0, %v2090
  %v2092 = vpop.f32.mrf.mxu0
  %v2093 = vpop.f32.mrf.mxu0
  %v2094 = vadd.f32 0.0, %v2093
  %v2095 = vpop.f32.mrf.mxu0
  %2096 = vmatprep.mubr.bf16.mxu0 %v1230
  %2097 = vmatmul.mubr.bf16.gmra.mxu0 %v1229
  %v2098 = vpop.f32.mrf.mxu0
  %v2099 = vadd.f32 0.0, %v2098
  %v2100 = vpop.f32.mrf.mxu0
  %v2101 = vpop.f32.mrf.mxu0
  %v2102 = vadd.f32 0.0, %v2101
  %v2103 = vpop.f32.mrf.mxu0
  %2104 = vmatprep.mubr.bf16.mxu0 %v1237
  %2105 = vmatmul.mubr.bf16.gmra.mxu0 %v1236
  %v2106 = vpop.f32.mrf.mxu0
  %v2107 = vadd.f32 0.0, %v2106
  %v2108 = vpop.f32.mrf.mxu0
  %v2109 = vpop.f32.mrf.mxu0
  %v2110 = vadd.f32 0.0, %v2109
  %v2111 = vpop.f32.mrf.mxu0
  %2112 = vmatprep.mubr.bf16.mxu0 %v1244
  %2113 = vmatmul.mubr.bf16.gmra.mxu0 %v1243
  %v2114 = vpop.f32.mrf.mxu0
  %v2115 = vadd.f32 0.0, %v2114
  %v2116 = vpop.f32.mrf.mxu0
  %v2117 = vpop.f32.mrf.mxu0
  %v2118 = vadd.f32 0.0, %v2117
  %v2119 = vpop.f32.mrf.mxu0
  %2120 = vmatprep.mubr.bf16.mxu0 %v1251
  %2121 = vmatmul.mubr.bf16.gmra.mxu0 %v1250
  %v2122 = vpop.f32.mrf.mxu0
  %v2123 = vadd.f32 0.0, %v2122
  %v2124 = vpop.f32.mrf.mxu0
  %v2125 = vpop.f32.mrf.mxu0
  %v2126 = vadd.f32 0.0, %v2125
  %v2127 = vpop.f32.mrf.mxu0
  %2128 = vmatprep.mubr.bf16.mxu0 %v1258
  %2129 = vmatmul.mubr.bf16.gmra.mxu0 %v1257
  %v2130 = vpop.f32.mrf.mxu0
  %v2131 = vadd.f32 0.0, %v2130
  %v2132 = vpop.f32.mrf.mxu0
  %v2133 = vpop.f32.mrf.mxu0
  %v2134 = vadd.f32 0.0, %v2133
  %v2135 = vpop.f32.mrf.mxu0
  %2136 = vmatprep.mubr.bf16.mxu0 %v1265
  %2137 = vmatmul.mubr.bf16.gmra.mxu0 %v1264
  %v2138 = vpop.f32.mrf.mxu0
  %v2139 = vadd.f32 0.0, %v2138
  %v2140 = vpop.f32.mrf.mxu0
  %v2141 = vpop.f32.mrf.mxu0
  %v2142 = vadd.f32 0.0, %v2141
  %v2143 = vpop.f32.mrf.mxu0
  %2144 = vmatprep.mubr.bf16.mxu0 %v1272
  %2145 = vmatmul.mubr.bf16.gmra.mxu0 %v1271
  %v2146 = vpop.f32.mrf.mxu0
  %v2147 = vadd.f32 0.0, %v2146
  %v2148 = vpop.f32.mrf.mxu0
  %v2149 = vpop.f32.mrf.mxu0
  %v2150 = vadd.f32 0.0, %v2149
  %v2151 = vpop.f32.mrf.mxu0
  %2152 = vmatprep.mubr.bf16.mxu0 %v1279
  %2153 = vmatmul.mubr.bf16.gmra.mxu0 %v1278
  %v2154 = vpop.f32.mrf.mxu0
  %v2155 = vadd.f32 0.0, %v2154
  %v2156 = vpop.f32.mrf.mxu0
  %v2157 = vpop.f32.mrf.mxu0
  %v2158 = vadd.f32 0.0, %v2157
  %v2159 = vpop.f32.mrf.mxu0
  %2160 = vmatprep.mubr.bf16.mxu0 %v1286
  %2161 = vmatmul.mubr.bf16.gmra.mxu0 %v1285
  %v2162 = vpop.f32.mrf.mxu0
  %v2163 = vadd.f32 0.0, %v2162
  %v2164 = vpop.f32.mrf.mxu0
  %v2165 = vpop.f32.mrf.mxu0
  %v2166 = vadd.f32 0.0, %v2165
  %v2167 = vpop.f32.mrf.mxu0
  %2168 = vmatprep.mubr.bf16.mxu0 %v1293
  %2169 = vmatmul.mubr.bf16.gmra.mxu0 %v1292
  %v2170 = vpop.f32.mrf.mxu0
  %v2171 = vadd.f32 0.0, %v2170
  %v2172 = vpop.f32.mrf.mxu0
  %v2173 = vpop.f32.mrf.mxu0
  %v2174 = vadd.f32 0.0, %v2173
  %v2175 = vpop.f32.mrf.mxu0
  %2176 = vdwg.mxu0
  %2177 = vmatprep.subr.bf16.mxu0 0
  %2178 = vmatpush1.bf16.msra.mxu0 %v1714
  %2179 = vmatprep.subr.bf16.mxu0 0
  %2180 = vmatpush1.bf16.msra.mxu0 %v1713
  %2181 = vmatprep.subr.bf16.mxu0 0
  %2182 = vmatpush1.bf16.msra.mxu0 %v1712
  %2183 = vmatprep.subr.bf16.mxu0 0
  %2184 = vmatpush1.bf16.msra.mxu0 %v1711
  %2185 = vmatprep.subr.bf16.mxu0 0
  %2186 = vmatpush1.bf16.msra.mxu0 %v1710
  %2187 = vmatprep.subr.bf16.mxu0 0
  %2188 = vmatpush1.bf16.msra.mxu0 %v1709
  %2189 = vmatprep.subr.bf16.mxu0 0
  %2190 = vmatpush1.bf16.msra.mxu0 %v1708
  %2191 = vmatprep.subr.bf16.mxu0 0
  %2192 = vmatpush1.bf16.msra.mxu0 %v1707
  %2193 = vmatprep.subr.bf16.mxu0 0
  %2194 = vmatpush2.bf16.msra.mxu0 %v1722
  %2195 = vmatprep.subr.bf16.mxu0 0
  %2196 = vmatpush2.bf16.msra.mxu0 %v1721
  %2197 = vmatprep.subr.bf16.mxu0 0
  %2198 = vmatpush2.bf16.msra.mxu0 %v1720
  %2199 = vmatprep.subr.bf16.mxu0 0
  %2200 = vmatpush2.bf16.msra.mxu0 %v1719
  %2201 = vmatprep.subr.bf16.mxu0 0
  %2202 = vmatpush2.bf16.msra.mxu0 %v1718
  %2203 = vmatprep.subr.bf16.mxu0 0
  %2204 = vmatpush2.bf16.msra.mxu0 %v1717
  %2205 = vmatprep.subr.bf16.mxu0 0
  %2206 = vmatpush2.bf16.msra.mxu0 %v1716
  %2207 = vmatprep.subr.bf16.mxu0 0
  %2208 = vmatpush2.bf16.msra.mxu0 %v1715
  %2209 = vmatprep.mubr.bf16.mxu0 %v1078
  %2210 = vmatmul.mubr.bf16.gmra.mxu0 %v1077
  %v2211 = vpop.f32.mrf.mxu0
  %v2212 = vadd.f32 %v1923, %v2211
  %v2213 = vpop.f32.mrf.mxu0
  %v2214 = vpop.f32.mrf.mxu0
  %v2215 = vadd.f32 %v1926, %v2214
  %v2216 = vpop.f32.mrf.mxu0
  %2217 = vmatprep.mubr.bf16.mxu0 %v1085
  %2218 = vmatmul.mubr.bf16.gmra.mxu0 %v1084
  %v2219 = vpop.f32.mrf.mxu0
  %v2220 = vadd.f32 %v1931, %v2219
  %v2221 = vpop.f32.mrf.mxu0
  %v2222 = vpop.f32.mrf.mxu0
  %v2223 = vadd.f32 %v1934, %v2222
  %v2224 = vpop.f32.mrf.mxu0
  %2225 = vmatprep.mubr.bf16.mxu0 %v1092
  %2226 = vmatmul.mubr.bf16.gmra.mxu0 %v1091
  %v2227 = vpop.f32.mrf.mxu0
  %v2228 = vadd.f32 %v1939, %v2227
  %v2229 = vpop.f32.mrf.mxu0
  %v2230 = vpop.f32.mrf.mxu0
  %v2231 = vadd.f32 %v1942, %v2230
  %v2232 = vpop.f32.mrf.mxu0
  %2233 = vmatprep.mubr.bf16.mxu0 %v1099
  %2234 = vmatmul.mubr.bf16.gmra.mxu0 %v1098
  %v2235 = vpop.f32.mrf.mxu0
  %v2236 = vadd.f32 %v1947, %v2235
  %v2237 = vpop.f32.mrf.mxu0
  %v2238 = vpop.f32.mrf.mxu0
  %v2239 = vadd.f32 %v1950, %v2238
  %v2240 = vpop.f32.mrf.mxu0
  %2241 = vmatprep.mubr.bf16.mxu0 %v1106
  %2242 = vmatmul.mubr.bf16.gmra.mxu0 %v1105
  %v2243 = vpop.f32.mrf.mxu0
  %v2244 = vadd.f32 %v1955, %v2243
  %v2245 = vpop.f32.mrf.mxu0
  %v2246 = vpop.f32.mrf.mxu0
  %v2247 = vadd.f32 %v1958, %v2246
  %v2248 = vpop.f32.mrf.mxu0
  %2249 = vmatprep.mubr.bf16.mxu0 %v1113
  %2250 = vmatmul.mubr.bf16.gmra.mxu0 %v1112
  %v2251 = vpop.f32.mrf.mxu0
  %v2252 = vadd.f32 %v1963, %v2251
  %v2253 = vpop.f32.mrf.mxu0
  %v2254 = vpop.f32.mrf.mxu0
  %v2255 = vadd.f32 %v1966, %v2254
  %v2256 = vpop.f32.mrf.mxu0
  %2257 = vmatprep.mubr.bf16.mxu0 %v1120
  %2258 = vmatmul.mubr.bf16.gmra.mxu0 %v1119
  %v2259 = vpop.f32.mrf.mxu0
  %v2260 = vadd.f32 %v1971, %v2259
  %v2261 = vpop.f32.mrf.mxu0
  %v2262 = vpop.f32.mrf.mxu0
  %v2263 = vadd.f32 %v1974, %v2262
  %v2264 = vpop.f32.mrf.mxu0
  %2265 = vmatprep.mubr.bf16.mxu0 %v1127
  %2266 = vmatmul.mubr.bf16.gmra.mxu0 %v1126
  %v2267 = vpop.f32.mrf.mxu0
  %v2268 = vadd.f32 %v1979, %v2267
  %v2269 = vpop.f32.mrf.mxu0
  %v2270 = vpop.f32.mrf.mxu0
  %v2271 = vadd.f32 %v1982, %v2270
  %v2272 = vpop.f32.mrf.mxu0
  %2273 = vmatprep.mubr.bf16.mxu0 %v1134
  %2274 = vmatmul.mubr.bf16.gmra.mxu0 %v1133
  %v2275 = vpop.f32.mrf.mxu0
  %v2276 = vadd.f32 %v1987, %v2275
  %v2277 = vpop.f32.mrf.mxu0
  %v2278 = vpop.f32.mrf.mxu0
  %v2279 = vadd.f32 %v1990, %v2278
  %v2280 = vpop.f32.mrf.mxu0
  %2281 = vmatprep.mubr.bf16.mxu0 %v1141
  %2282 = vmatmul.mubr.bf16.gmra.mxu0 %v1140
  %v2283 = vpop.f32.mrf.mxu0
  %v2284 = vadd.f32 %v1995, %v2283
  %v2285 = vpop.f32.mrf.mxu0
  %v2286 = vpop.f32.mrf.mxu0
  %v2287 = vadd.f32 %v1998, %v2286
  %v2288 = vpop.f32.mrf.mxu0
  %2289 = vmatprep.mubr.bf16.mxu0 %v1148
  %2290 = vmatmul.mubr.bf16.gmra.mxu0 %v1147
  %v2291 = vpop.f32.mrf.mxu0
  %v2292 = vadd.f32 %v2003, %v2291
  %v2293 = vpop.f32.mrf.mxu0
  %v2294 = vpop.f32.mrf.mxu0
  %v2295 = vadd.f32 %v2006, %v2294
  %v2296 = vpop.f32.mrf.mxu0
  %2297 = vmatprep.mubr.bf16.mxu0 %v1155
  %2298 = vmatmul.mubr.bf16.gmra.mxu0 %v1154
  %v2299 = vpop.f32.mrf.mxu0
  %v2300 = vadd.f32 %v2011, %v2299
  %v2301 = vpop.f32.mrf.mxu0
  %v2302 = vpop.f32.mrf.mxu0
  %v2303 = vadd.f32 %v2014, %v2302
  %v2304 = vpop.f32.mrf.mxu0
  %2305 = vmatprep.mubr.bf16.mxu0 %v1162
  %2306 = vmatmul.mubr.bf16.gmra.mxu0 %v1161
  %v2307 = vpop.f32.mrf.mxu0
  %v2308 = vadd.f32 %v2019, %v2307
  %v2309 = vpop.f32.mrf.mxu0
  %v2310 = vpop.f32.mrf.mxu0
  %v2311 = vadd.f32 %v2022, %v2310
  %v2312 = vpop.f32.mrf.mxu0
  %2313 = vmatprep.mubr.bf16.mxu0 %v1169
  %2314 = vmatmul.mubr.bf16.gmra.mxu0 %v1168
  %v2315 = vpop.f32.mrf.mxu0
  %v2316 = vadd.f32 %v2027, %v2315
  %v2317 = vpop.f32.mrf.mxu0
  %v2318 = vpop.f32.mrf.mxu0
  %v2319 = vadd.f32 %v2030, %v2318
  %v2320 = vpop.f32.mrf.mxu0
  %2321 = vmatprep.mubr.bf16.mxu0 %v1176
  %2322 = vmatmul.mubr.bf16.gmra.mxu0 %v1175
  %v2323 = vpop.f32.mrf.mxu0
  %v2324 = vadd.f32 %v2035, %v2323
  %v2325 = vpop.f32.mrf.mxu0
  %v2326 = vpop.f32.mrf.mxu0
  %v2327 = vadd.f32 %v2038, %v2326
  %v2328 = vpop.f32.mrf.mxu0
  %2329 = vmatprep.mubr.bf16.mxu0 %v1183
  %2330 = vmatmul.mubr.bf16.gmra.mxu0 %v1182
  %v2331 = vpop.f32.mrf.mxu0
  %v2332 = vadd.f32 %v2043, %v2331
  %v2333 = vpop.f32.mrf.mxu0
  %v2334 = vpop.f32.mrf.mxu0
  %v2335 = vadd.f32 %v2046, %v2334
  %v2336 = vpop.f32.mrf.mxu0
  %2337 = vmatprep.mubr.bf16.mxu0 %v1190
  %2338 = vmatmul.mubr.bf16.gmra.mxu0 %v1189
  %v2339 = vpop.f32.mrf.mxu0
  %v2340 = vadd.f32 %v2051, %v2339
  %v2341 = vpop.f32.mrf.mxu0
  %v2342 = vpop.f32.mrf.mxu0
  %v2343 = vadd.f32 %v2054, %v2342
  %v2344 = vpop.f32.mrf.mxu0
  %2345 = vmatprep.mubr.bf16.mxu0 %v1197
  %2346 = vmatmul.mubr.bf16.gmra.mxu0 %v1196
  %v2347 = vpop.f32.mrf.mxu0
  %v2348 = vadd.f32 %v2059, %v2347
  %v2349 = vpop.f32.mrf.mxu0
  %v2350 = vpop.f32.mrf.mxu0
  %v2351 = vadd.f32 %v2062, %v2350
  %v2352 = vpop.f32.mrf.mxu0
  %2353 = vmatprep.mubr.bf16.mxu0 %v1204
  %2354 = vmatmul.mubr.bf16.gmra.mxu0 %v1203
  %v2355 = vpop.f32.mrf.mxu0
  %v2356 = vadd.f32 %v2067, %v2355
  %v2357 = vpop.f32.mrf.mxu0
  %v2358 = vpop.f32.mrf.mxu0
  %v2359 = vadd.f32 %v2070, %v2358
  %v2360 = vpop.f32.mrf.mxu0
  %2361 = vmatprep.mubr.bf16.mxu0 %v1211
  %2362 = vmatmul.mubr.bf16.gmra.mxu0 %v1210
  %v2363 = vpop.f32.mrf.mxu0
  %v2364 = vadd.f32 %v2075, %v2363
  %v2365 = vpop.f32.mrf.mxu0
  %v2366 = vpop.f32.mrf.mxu0
  %v2367 = vadd.f32 %v2078, %v2366
  %v2368 = vpop.f32.mrf.mxu0
  %2369 = vmatprep.mubr.bf16.mxu0 %v1218
  %2370 = vmatmul.mubr.bf16.gmra.mxu0 %v1217
  %v2371 = vpop.f32.mrf.mxu0
  %v2372 = vadd.f32 %v2083, %v2371
  %v2373 = vpop.f32.mrf.mxu0
  %v2374 = vpop.f32.mrf.mxu0
  %v2375 = vadd.f32 %v2086, %v2374
  %v2376 = vpop.f32.mrf.mxu0
  %2377 = vmatprep.mubr.bf16.mxu0 %v1225
  %2378 = vmatmul.mubr.bf16.gmra.mxu0 %v1224
  %v2379 = vpop.f32.mrf.mxu0
  %v2380 = vadd.f32 %v2091, %v2379
  %v2381 = vpop.f32.mrf.mxu0
  %v2382 = vpop.f32.mrf.mxu0
  %v2383 = vadd.f32 %v2094, %v2382
  %v2384 = vpop.f32.mrf.mxu0
  %2385 = vmatprep.mubr.bf16.mxu0 %v1232
  %2386 = vmatmul.mubr.bf16.gmra.mxu0 %v1231
  %v2387 = vpop.f32.mrf.mxu0
  %v2388 = vadd.f32 %v2099, %v2387
  %v2389 = vpop.f32.mrf.mxu0
  %v2390 = vpop.f32.mrf.mxu0
  %v2391 = vadd.f32 %v2102, %v2390
  %v2392 = vpop.f32.mrf.mxu0
  %2393 = vmatprep.mubr.bf16.mxu0 %v1239
  %2394 = vmatmul.mubr.bf16.gmra.mxu0 %v1238
  %v2395 = vpop.f32.mrf.mxu0
  %v2396 = vadd.f32 %v2107, %v2395
  %v2397 = vpop.f32.mrf.mxu0
  %v2398 = vpop.f32.mrf.mxu0
  %v2399 = vadd.f32 %v2110, %v2398
  %v2400 = vpop.f32.mrf.mxu0
  %2401 = vmatprep.mubr.bf16.mxu0 %v1246
  %2402 = vmatmul.mubr.bf16.gmra.mxu0 %v1245
  %v2403 = vpop.f32.mrf.mxu0
  %v2404 = vadd.f32 %v2115, %v2403
  %v2405 = vpop.f32.mrf.mxu0
  %v2406 = vpop.f32.mrf.mxu0
  %v2407 = vadd.f32 %v2118, %v2406
  %v2408 = vpop.f32.mrf.mxu0
  %2409 = vmatprep.mubr.bf16.mxu0 %v1253
  %2410 = vmatmul.mubr.bf16.gmra.mxu0 %v1252
  %v2411 = vpop.f32.mrf.mxu0
  %v2412 = vadd.f32 %v2123, %v2411
  %v2413 = vpop.f32.mrf.mxu0
  %v2414 = vpop.f32.mrf.mxu0
  %v2415 = vadd.f32 %v2126, %v2414
  %v2416 = vpop.f32.mrf.mxu0
  %2417 = vmatprep.mubr.bf16.mxu0 %v1260
  %2418 = vmatmul.mubr.bf16.gmra.mxu0 %v1259
  %v2419 = vpop.f32.mrf.mxu0
  %v2420 = vadd.f32 %v2131, %v2419
  %v2421 = vpop.f32.mrf.mxu0
  %v2422 = vpop.f32.mrf.mxu0
  %v2423 = vadd.f32 %v2134, %v2422
  %v2424 = vpop.f32.mrf.mxu0
  %2425 = vmatprep.mubr.bf16.mxu0 %v1267
  %2426 = vmatmul.mubr.bf16.gmra.mxu0 %v1266
  %v2427 = vpop.f32.mrf.mxu0
  %v2428 = vadd.f32 %v2139, %v2427
  %v2429 = vpop.f32.mrf.mxu0
  %v2430 = vpop.f32.mrf.mxu0
  %v2431 = vadd.f32 %v2142, %v2430
  %v2432 = vpop.f32.mrf.mxu0
  %2433 = vmatprep.mubr.bf16.mxu0 %v1274
  %2434 = vmatmul.mubr.bf16.gmra.mxu0 %v1273
  %v2435 = vpop.f32.mrf.mxu0
  %v2436 = vadd.f32 %v2147, %v2435
  %v2437 = vpop.f32.mrf.mxu0
  %v2438 = vpop.f32.mrf.mxu0
  %v2439 = vadd.f32 %v2150, %v2438
  %v2440 = vpop.f32.mrf.mxu0
  %2441 = vmatprep.mubr.bf16.mxu0 %v1281
  %2442 = vmatmul.mubr.bf16.gmra.mxu0 %v1280
  %v2443 = vpop.f32.mrf.mxu0
  %v2444 = vadd.f32 %v2155, %v2443
  %v2445 = vpop.f32.mrf.mxu0
  %v2446 = vpop.f32.mrf.mxu0
  %v2447 = vadd.f32 %v2158, %v2446
  %v2448 = vpop.f32.mrf.mxu0
  %2449 = vmatprep.mubr.bf16.mxu0 %v1288
  %2450 = vmatmul.mubr.bf16.gmra.mxu0 %v1287
  %v2451 = vpop.f32.mrf.mxu0
  %v2452 = vadd.f32 %v2163, %v2451
  %v2453 = vpop.f32.mrf.mxu0
  %v2454 = vpop.f32.mrf.mxu0
  %v2455 = vadd.f32 %v2166, %v2454
  %v2456 = vpop.f32.mrf.mxu0
  %2457 = vmatprep.mubr.bf16.mxu0 %v1295
  %2458 = vmatmul.mubr.bf16.gmra.mxu0 %v1294
  %v2459 = vpop.f32.mrf.mxu0
  %v2460 = vadd.f32 %v2171, %v2459
  %v2461 = vpop.f32.mrf.mxu0
  %v2462 = vpop.f32.mrf.mxu0
  %v2463 = vadd.f32 %v2174, %v2462
  %v2464 = vpop.f32.mrf.mxu0
  %2465 = vdwg.mxu0
  %2466 = vmatprep.subr.bf16.mxu0 0
  %2467 = vmatpush1.bf16.msra.mxu0 %v1730
  %2468 = vmatprep.subr.bf16.mxu0 0
  %2469 = vmatpush1.bf16.msra.mxu0 %v1729
  %2470 = vmatprep.subr.bf16.mxu0 0
  %2471 = vmatpush1.bf16.msra.mxu0 %v1728
  %2472 = vmatprep.subr.bf16.mxu0 0
  %2473 = vmatpush1.bf16.msra.mxu0 %v1727
  %2474 = vmatprep.subr.bf16.mxu0 0
  %2475 = vmatpush1.bf16.msra.mxu0 %v1726
  %2476 = vmatprep.subr.bf16.mxu0 0
  %2477 = vmatpush1.bf16.msra.mxu0 %v1725
  %2478 = vmatprep.subr.bf16.mxu0 0
  %2479 = vmatpush1.bf16.msra.mxu0 %v1724
  %2480 = vmatprep.subr.bf16.mxu0 0
  %2481 = vmatpush1.bf16.msra.mxu0 %v1723
  %2482 = vmatprep.subr.bf16.mxu0 0
  %2483 = vmatpush2.bf16.msra.mxu0 %v1738
  %2484 = vmatprep.subr.bf16.mxu0 0
  %2485 = vmatpush2.bf16.msra.mxu0 %v1737
  %2486 = vmatprep.subr.bf16.mxu0 0
  %2487 = vmatpush2.bf16.msra.mxu0 %v1736
  %2488 = vmatprep.subr.bf16.mxu0 0
  %2489 = vmatpush2.bf16.msra.mxu0 %v1735
  %2490 = vmatprep.subr.bf16.mxu0 0
  %2491 = vmatpush2.bf16.msra.mxu0 %v1734
  %2492 = vmatprep.subr.bf16.mxu0 0
  %2493 = vmatpush2.bf16.msra.mxu0 %v1733
  %2494 = vmatprep.subr.bf16.mxu0 0
  %2495 = vmatpush2.bf16.msra.mxu0 %v1732
  %2496 = vmatprep.subr.bf16.mxu0 0
  %2497 = vmatpush2.bf16.msra.mxu0 %v1731
  %2498 = vmatprep.mubr.bf16.mxu0 %v1080
  %2499 = vmatmul.mubr.bf16.gmra.mxu0 %v1079
  %v2500 = vpop.f32.mrf.mxu0
  %v2501 = vadd.f32 %v2212, %v2500
  %v2502 = vpop.f32.mrf.mxu0
  %v2503 = vpop.f32.mrf.mxu0
  %v2504 = vadd.f32 %v2215, %v2503
  %v2505 = vpop.f32.mrf.mxu0
  %2506 = vmatprep.mubr.bf16.mxu0 %v1087
  %2507 = vmatmul.mubr.bf16.gmra.mxu0 %v1086
  %v2508 = vpop.f32.mrf.mxu0
  %v2509 = vadd.f32 %v2220, %v2508
  %v2510 = vpop.f32.mrf.mxu0
  %v2511 = vpop.f32.mrf.mxu0
  %v2512 = vadd.f32 %v2223, %v2511
  %v2513 = vpop.f32.mrf.mxu0
  %2514 = vmatprep.mubr.bf16.mxu0 %v1094
  %2515 = vmatmul.mubr.bf16.gmra.mxu0 %v1093
  %v2516 = vpop.f32.mrf.mxu0
  %v2517 = vadd.f32 %v2228, %v2516
  %v2518 = vpop.f32.mrf.mxu0
  %v2519 = vpop.f32.mrf.mxu0
  %v2520 = vadd.f32 %v2231, %v2519
  %v2521 = vpop.f32.mrf.mxu0
  %2522 = vmatprep.mubr.bf16.mxu0 %v1101
  %2523 = vmatmul.mubr.bf16.gmra.mxu0 %v1100
  %v2524 = vpop.f32.mrf.mxu0
  %v2525 = vadd.f32 %v2236, %v2524
  %v2526 = vpop.f32.mrf.mxu0
  %v2527 = vpop.f32.mrf.mxu0
  %v2528 = vadd.f32 %v2239, %v2527
  %v2529 = vpop.f32.mrf.mxu0
  %2530 = vmatprep.mubr.bf16.mxu0 %v1108
  %2531 = vmatmul.mubr.bf16.gmra.mxu0 %v1107
  %v2532 = vpop.f32.mrf.mxu0
  %v2533 = vadd.f32 %v2244, %v2532
  %v2534 = vpop.f32.mrf.mxu0
  %v2535 = vpop.f32.mrf.mxu0
  %v2536 = vadd.f32 %v2247, %v2535
  %v2537 = vpop.f32.mrf.mxu0
  %2538 = vmatprep.mubr.bf16.mxu0 %v1115
  %2539 = vmatmul.mubr.bf16.gmra.mxu0 %v1114
  %v2540 = vpop.f32.mrf.mxu0
  %v2541 = vadd.f32 %v2252, %v2540
  %v2542 = vpop.f32.mrf.mxu0
  %v2543 = vpop.f32.mrf.mxu0
  %v2544 = vadd.f32 %v2255, %v2543
  %v2545 = vpop.f32.mrf.mxu0
  %2546 = vmatprep.mubr.bf16.mxu0 %v1122
  %2547 = vmatmul.mubr.bf16.gmra.mxu0 %v1121
  %v2548 = vpop.f32.mrf.mxu0
  %v2549 = vadd.f32 %v2260, %v2548
  %v2550 = vpop.f32.mrf.mxu0
  %v2551 = vpop.f32.mrf.mxu0
  %v2552 = vadd.f32 %v2263, %v2551
  %v2553 = vpop.f32.mrf.mxu0
  %2554 = vmatprep.mubr.bf16.mxu0 %v1129
  %2555 = vmatmul.mubr.bf16.gmra.mxu0 %v1128
  %v2556 = vpop.f32.mrf.mxu0
  %v2557 = vadd.f32 %v2268, %v2556
  %v2558 = vpop.f32.mrf.mxu0
  %v2559 = vpop.f32.mrf.mxu0
  %v2560 = vadd.f32 %v2271, %v2559
  %v2561 = vpop.f32.mrf.mxu0
  %2562 = vmatprep.mubr.bf16.mxu0 %v1136
  %2563 = vmatmul.mubr.bf16.gmra.mxu0 %v1135
  %v2564 = vpop.f32.mrf.mxu0
  %v2565 = vadd.f32 %v2276, %v2564
  %v2566 = vpop.f32.mrf.mxu0
  %v2567 = vpop.f32.mrf.mxu0
  %v2568 = vadd.f32 %v2279, %v2567
  %v2569 = vpop.f32.mrf.mxu0
  %2570 = vmatprep.mubr.bf16.mxu0 %v1143
  %2571 = vmatmul.mubr.bf16.gmra.mxu0 %v1142
  %v2572 = vpop.f32.mrf.mxu0
  %v2573 = vadd.f32 %v2284, %v2572
  %v2574 = vpop.f32.mrf.mxu0
  %v2575 = vpop.f32.mrf.mxu0
  %v2576 = vadd.f32 %v2287, %v2575
  %v2577 = vpop.f32.mrf.mxu0
  %2578 = vmatprep.mubr.bf16.mxu0 %v1150
  %2579 = vmatmul.mubr.bf16.gmra.mxu0 %v1149
  %v2580 = vpop.f32.mrf.mxu0
  %v2581 = vadd.f32 %v2292, %v2580
  %v2582 = vpop.f32.mrf.mxu0
  %v2583 = vpop.f32.mrf.mxu0
  %v2584 = vadd.f32 %v2295, %v2583
  %v2585 = vpop.f32.mrf.mxu0
  %2586 = vmatprep.mubr.bf16.mxu0 %v1157
  %2587 = vmatmul.mubr.bf16.gmra.mxu0 %v1156
  %v2588 = vpop.f32.mrf.mxu0
  %v2589 = vadd.f32 %v2300, %v2588
  %v2590 = vpop.f32.mrf.mxu0
  %v2591 = vpop.f32.mrf.mxu0
  %v2592 = vadd.f32 %v2303, %v2591
  %v2593 = vpop.f32.mrf.mxu0
  %2594 = vmatprep.mubr.bf16.mxu0 %v1164
  %2595 = vmatmul.mubr.bf16.gmra.mxu0 %v1163
  %v2596 = vpop.f32.mrf.mxu0
  %v2597 = vadd.f32 %v2308, %v2596
  %v2598 = vpop.f32.mrf.mxu0
  %v2599 = vpop.f32.mrf.mxu0
  %v2600 = vadd.f32 %v2311, %v2599
  %v2601 = vpop.f32.mrf.mxu0
  %2602 = vmatprep.mubr.bf16.mxu0 %v1171
  %2603 = vmatmul.mubr.bf16.gmra.mxu0 %v1170
  %v2604 = vpop.f32.mrf.mxu0
  %v2605 = vadd.f32 %v2316, %v2604
  %v2606 = vpop.f32.mrf.mxu0
  %v2607 = vpop.f32.mrf.mxu0
  %v2608 = vadd.f32 %v2319, %v2607
  %v2609 = vpop.f32.mrf.mxu0
  %2610 = vmatprep.mubr.bf16.mxu0 %v1178
  %2611 = vmatmul.mubr.bf16.gmra.mxu0 %v1177
  %v2612 = vpop.f32.mrf.mxu0
  %v2613 = vadd.f32 %v2324, %v2612
  %v2614 = vpop.f32.mrf.mxu0
  %v2615 = vpop.f32.mrf.mxu0
  %v2616 = vadd.f32 %v2327, %v2615
  %v2617 = vpop.f32.mrf.mxu0
  %2618 = vmatprep.mubr.bf16.mxu0 %v1185
  %2619 = vmatmul.mubr.bf16.gmra.mxu0 %v1184
  %v2620 = vpop.f32.mrf.mxu0
  %v2621 = vadd.f32 %v2332, %v2620
  %v2622 = vpop.f32.mrf.mxu0
  %v2623 = vpop.f32.mrf.mxu0
  %v2624 = vadd.f32 %v2335, %v2623
  %v2625 = vpop.f32.mrf.mxu0
  %2626 = vmatprep.mubr.bf16.mxu0 %v1192
  %2627 = vmatmul.mubr.bf16.gmra.mxu0 %v1191
  %v2628 = vpop.f32.mrf.mxu0
  %v2629 = vadd.f32 %v2340, %v2628
  %v2630 = vpop.f32.mrf.mxu0
  %v2631 = vpop.f32.mrf.mxu0
  %v2632 = vadd.f32 %v2343, %v2631
  %v2633 = vpop.f32.mrf.mxu0
  %2634 = vmatprep.mubr.bf16.mxu0 %v1199
  %2635 = vmatmul.mubr.bf16.gmra.mxu0 %v1198
  %v2636 = vpop.f32.mrf.mxu0
  %v2637 = vadd.f32 %v2348, %v2636
  %v2638 = vpop.f32.mrf.mxu0
  %v2639 = vpop.f32.mrf.mxu0
  %v2640 = vadd.f32 %v2351, %v2639
  %v2641 = vpop.f32.mrf.mxu0
  %2642 = vmatprep.mubr.bf16.mxu0 %v1206
  %2643 = vmatmul.mubr.bf16.gmra.mxu0 %v1205
  %v2644 = vpop.f32.mrf.mxu0
  %v2645 = vadd.f32 %v2356, %v2644
  %v2646 = vpop.f32.mrf.mxu0
  %v2647 = vpop.f32.mrf.mxu0
  %v2648 = vadd.f32 %v2359, %v2647
  %v2649 = vpop.f32.mrf.mxu0
  %2650 = vmatprep.mubr.bf16.mxu0 %v1213
  %2651 = vmatmul.mubr.bf16.gmra.mxu0 %v1212
  %v2652 = vpop.f32.mrf.mxu0
  %v2653 = vadd.f32 %v2364, %v2652
  %v2654 = vpop.f32.mrf.mxu0
  %v2655 = vpop.f32.mrf.mxu0
  %v2656 = vadd.f32 %v2367, %v2655
  %v2657 = vpop.f32.mrf.mxu0
  %2658 = vmatprep.mubr.bf16.mxu0 %v1220
  %2659 = vmatmul.mubr.bf16.gmra.mxu0 %v1219
  %v2660 = vpop.f32.mrf.mxu0
  %v2661 = vadd.f32 %v2372, %v2660
  %v2662 = vpop.f32.mrf.mxu0
  %v2663 = vpop.f32.mrf.mxu0
  %v2664 = vadd.f32 %v2375, %v2663
  %v2665 = vpop.f32.mrf.mxu0
  %2666 = vmatprep.mubr.bf16.mxu0 %v1227
  %2667 = vmatmul.mubr.bf16.gmra.mxu0 %v1226
  %v2668 = vpop.f32.mrf.mxu0
  %v2669 = vadd.f32 %v2380, %v2668
  %v2670 = vpop.f32.mrf.mxu0
  %v2671 = vpop.f32.mrf.mxu0
  %v2672 = vadd.f32 %v2383, %v2671
  %v2673 = vpop.f32.mrf.mxu0
  %2674 = vmatprep.mubr.bf16.mxu0 %v1234
  %2675 = vmatmul.mubr.bf16.gmra.mxu0 %v1233
  %v2676 = vpop.f32.mrf.mxu0
  %v2677 = vadd.f32 %v2388, %v2676
  %v2678 = vpop.f32.mrf.mxu0
  %v2679 = vpop.f32.mrf.mxu0
  %v2680 = vadd.f32 %v2391, %v2679
  %v2681 = vpop.f32.mrf.mxu0
  %2682 = vmatprep.mubr.bf16.mxu0 %v1241
  %2683 = vmatmul.mubr.bf16.gmra.mxu0 %v1240
  %v2684 = vpop.f32.mrf.mxu0
  %v2685 = vadd.f32 %v2396, %v2684
  %v2686 = vpop.f32.mrf.mxu0
  %v2687 = vpop.f32.mrf.mxu0
  %v2688 = vadd.f32 %v2399, %v2687
  %v2689 = vpop.f32.mrf.mxu0
  %2690 = vmatprep.mubr.bf16.mxu0 %v1248
  %2691 = vmatmul.mubr.bf16.gmra.mxu0 %v1247
  %v2692 = vpop.f32.mrf.mxu0
  %v2693 = vadd.f32 %v2404, %v2692
  %v2694 = vpop.f32.mrf.mxu0
  %v2695 = vpop.f32.mrf.mxu0
  %v2696 = vadd.f32 %v2407, %v2695
  %v2697 = vpop.f32.mrf.mxu0
  %2698 = vmatprep.mubr.bf16.mxu0 %v1255
  %2699 = vmatmul.mubr.bf16.gmra.mxu0 %v1254
  %v2700 = vpop.f32.mrf.mxu0
  %v2701 = vadd.f32 %v2412, %v2700
  %v2702 = vpop.f32.mrf.mxu0
  %v2703 = vpop.f32.mrf.mxu0
  %v2704 = vadd.f32 %v2415, %v2703
  %v2705 = vpop.f32.mrf.mxu0
  %2706 = vmatprep.mubr.bf16.mxu0 %v1262
  %2707 = vmatmul.mubr.bf16.gmra.mxu0 %v1261
  %v2708 = vpop.f32.mrf.mxu0
  %v2709 = vadd.f32 %v2420, %v2708
  %v2710 = vpop.f32.mrf.mxu0
  %v2711 = vpop.f32.mrf.mxu0
  %v2712 = vadd.f32 %v2423, %v2711
  %v2713 = vpop.f32.mrf.mxu0
  %2714 = vmatprep.mubr.bf16.mxu0 %v1269
  %2715 = vmatmul.mubr.bf16.gmra.mxu0 %v1268
  %v2716 = vpop.f32.mrf.mxu0
  %v2717 = vadd.f32 %v2428, %v2716
  %v2718 = vpop.f32.mrf.mxu0
  %v2719 = vpop.f32.mrf.mxu0
  %v2720 = vadd.f32 %v2431, %v2719
  %v2721 = vpop.f32.mrf.mxu0
  %2722 = vmatprep.mubr.bf16.mxu0 %v1276
  %2723 = vmatmul.mubr.bf16.gmra.mxu0 %v1275
  %v2724 = vpop.f32.mrf.mxu0
  %v2725 = vadd.f32 %v2436, %v2724
  %v2726 = vpop.f32.mrf.mxu0
  %v2727 = vpop.f32.mrf.mxu0
  %v2728 = vadd.f32 %v2439, %v2727
  %v2729 = vpop.f32.mrf.mxu0
  %2730 = vmatprep.mubr.bf16.mxu0 %v1283
  %2731 = vmatmul.mubr.bf16.gmra.mxu0 %v1282
  %v2732 = vpop.f32.mrf.mxu0
  %v2733 = vadd.f32 %v2444, %v2732
  %v2734 = vpop.f32.mrf.mxu0
  %v2735 = vpop.f32.mrf.mxu0
  %v2736 = vadd.f32 %v2447, %v2735
  %v2737 = vpop.f32.mrf.mxu0
  %2738 = vmatprep.mubr.bf16.mxu0 %v1290
  %2739 = vmatmul.mubr.bf16.gmra.mxu0 %v1289
  %v2740 = vpop.f32.mrf.mxu0
  %v2741 = vadd.f32 %v2452, %v2740
  %v2742 = vpop.f32.mrf.mxu0
  %v2743 = vpop.f32.mrf.mxu0
  %v2744 = vadd.f32 %v2455, %v2743
  %v2745 = vpop.f32.mrf.mxu0
  %2746 = vmatprep.mubr.bf16.mxu0 %v1297
  %2747 = vmatmul.mubr.bf16.gmra.mxu0 %v1296
  %v2748 = vpop.f32.mrf.mxu0
  %v2749 = vadd.f32 %v2460, %v2748
  %v2750 = vpop.f32.mrf.mxu0
  %v2751 = vpop.f32.mrf.mxu0
  %v2752 = vadd.f32 %v2463, %v2751
  %v2753 = vpop.f32.mrf.mxu0
  %2754 = vdwg.mxu0
  %2755 = vmatprep.subr.bf16.mxu0 0
  %2756 = vmatpush1.bf16.msra.mxu0 0
  %2757 = vmatprep.subr.bf16.mxu0 0
  %2758 = vmatpush1.bf16.msra.mxu0 0
  %2759 = vmatprep.subr.bf16.mxu0 0
  %2760 = vmatpush1.bf16.msra.mxu0 0
  %2761 = vmatprep.subr.bf16.mxu0 0
  %2762 = vmatpush1.bf16.msra.mxu0 0
  %2763 = vmatprep.subr.bf16.mxu0 0
  %2764 = vmatpush1.bf16.msra.mxu0 0
  %2765 = vmatprep.subr.bf16.mxu0 0
  %2766 = vmatpush1.bf16.msra.mxu0 0
  %2767 = vmatprep.subr.bf16.mxu0 0
  %2768 = vmatpush1.bf16.msra.mxu0 %v1740
  %2769 = vmatprep.subr.bf16.mxu0 0
  %2770 = vmatpush1.bf16.msra.mxu0 %v1739
  %2771 = vmatprep.subr.bf16.mxu0 0
  %2772 = vmatpush2.bf16.msra.mxu0 0
  %2773 = vmatprep.subr.bf16.mxu0 0
  %2774 = vmatpush2.bf16.msra.mxu0 0
  %2775 = vmatprep.subr.bf16.mxu0 0
  %2776 = vmatpush2.bf16.msra.mxu0 0
  %2777 = vmatprep.subr.bf16.mxu0 0
  %2778 = vmatpush2.bf16.msra.mxu0 0
  %2779 = vmatprep.subr.bf16.mxu0 0
  %2780 = vmatpush2.bf16.msra.mxu0 0
  %2781 = vmatprep.subr.bf16.mxu0 0
  %2782 = vmatpush2.bf16.msra.mxu0 0
  %2783 = vmatprep.subr.bf16.mxu0 0
  %2784 = vmatpush2.bf16.msra.mxu0 0
  %2785 = vmatprep.subr.bf16.mxu0 0
  %2786 = vmatpush2.bf16.msra.mxu0 0
  %2787 = vmatprep.mubr.bf16.mxu0 0
  %2788 = vmatmul.mubr.bf16.gmra.mxu0 %v1793
  %v2789 = vpop.f32.mrf.mxu0
  %v2790 = vadd.f32 %v2501, %v2789
  %v2791 = vpop.f32.mrf.mxu0
  %v2792 = vpop.f32.mrf.mxu0
  %v2793 = vadd.f32 %v2504, %v2792
  %v2794 = vpop.f32.mrf.mxu0
  %2795 = vmatprep.mubr.bf16.mxu0 0
  %2796 = vmatmul.mubr.bf16.gmra.mxu0 %v1796
  %v2797 = vpop.f32.mrf.mxu0
  %v2798 = vadd.f32 %v2509, %v2797
  %v2799 = vpop.f32.mrf.mxu0
  %v2800 = vpop.f32.mrf.mxu0
  %v2801 = vadd.f32 %v2512, %v2800
  %v2802 = vpop.f32.mrf.mxu0
  %2803 = vmatprep.mubr.bf16.mxu0 0
  %2804 = vmatmul.mubr.bf16.gmra.mxu0 %v1799
  %v2805 = vpop.f32.mrf.mxu0
  %v2806 = vadd.f32 %v2517, %v2805
  %v2807 = vpop.f32.mrf.mxu0
  %v2808 = vpop.f32.mrf.mxu0
  %v2809 = vadd.f32 %v2520, %v2808
  %v2810 = vpop.f32.mrf.mxu0
  %2811 = vmatprep.mubr.bf16.mxu0 0
  %2812 = vmatmul.mubr.bf16.gmra.mxu0 %v1802
  %v2813 = vpop.f32.mrf.mxu0
  %v2814 = vadd.f32 %v2525, %v2813
  %v2815 = vpop.f32.mrf.mxu0
  %v2816 = vpop.f32.mrf.mxu0
  %v2817 = vadd.f32 %v2528, %v2816
  %v2818 = vpop.f32.mrf.mxu0
  %2819 = vmatprep.mubr.bf16.mxu0 0
  %2820 = vmatmul.mubr.bf16.gmra.mxu0 %v1805
  %v2821 = vpop.f32.mrf.mxu0
  %v2822 = vadd.f32 %v2533, %v2821
  %v2823 = vpop.f32.mrf.mxu0
  %v2824 = vpop.f32.mrf.mxu0
  %v2825 = vadd.f32 %v2536, %v2824
  %v2826 = vpop.f32.mrf.mxu0
  %2827 = vmatprep.mubr.bf16.mxu0 0
  %2828 = vmatmul.mubr.bf16.gmra.mxu0 %v1808
  %v2829 = vpop.f32.mrf.mxu0
  %v2830 = vadd.f32 %v2541, %v2829
  %v2831 = vpop.f32.mrf.mxu0
  %v2832 = vpop.f32.mrf.mxu0
  %v2833 = vadd.f32 %v2544, %v2832
  %v2834 = vpop.f32.mrf.mxu0
  %2835 = vmatprep.mubr.bf16.mxu0 0
  %2836 = vmatmul.mubr.bf16.gmra.mxu0 %v1811
  %v2837 = vpop.f32.mrf.mxu0
  %v2838 = vadd.f32 %v2549, %v2837
  %v2839 = vpop.f32.mrf.mxu0
  %v2840 = vpop.f32.mrf.mxu0
  %v2841 = vadd.f32 %v2552, %v2840
  %v2842 = vpop.f32.mrf.mxu0
  %2843 = vmatprep.mubr.bf16.mxu0 0
  %2844 = vmatmul.mubr.bf16.gmra.mxu0 %v1814
  %v2845 = vpop.f32.mrf.mxu0
  %v2846 = vadd.f32 %v2557, %v2845
  %v2847 = vpop.f32.mrf.mxu0
  %v2848 = vpop.f32.mrf.mxu0
  %v2849 = vadd.f32 %v2560, %v2848
  %v2850 = vpop.f32.mrf.mxu0
  %2851 = vmatprep.mubr.bf16.mxu0 0
  %2852 = vmatmul.mubr.bf16.gmra.mxu0 %v1817
  %v2853 = vpop.f32.mrf.mxu0
  %v2854 = vadd.f32 %v2565, %v2853
  %v2855 = vpop.f32.mrf.mxu0
  %v2856 = vpop.f32.mrf.mxu0
  %v2857 = vadd.f32 %v2568, %v2856
  %v2858 = vpop.f32.mrf.mxu0
  %2859 = vmatprep.mubr.bf16.mxu0 0
  %2860 = vmatmul.mubr.bf16.gmra.mxu0 %v1820
  %v2861 = vpop.f32.mrf.mxu0
  %v2862 = vadd.f32 %v2573, %v2861
  %v2863 = vpop.f32.mrf.mxu0
  %v2864 = vpop.f32.mrf.mxu0
  %v2865 = vadd.f32 %v2576, %v2864
  %v2866 = vpop.f32.mrf.mxu0
  %2867 = vmatprep.mubr.bf16.mxu0 0
  %2868 = vmatmul.mubr.bf16.gmra.mxu0 %v1823
  %v2869 = vpop.f32.mrf.mxu0
  %v2870 = vadd.f32 %v2581, %v2869
  %v2871 = vpop.f32.mrf.mxu0
  %v2872 = vpop.f32.mrf.mxu0
  %v2873 = vadd.f32 %v2584, %v2872
  %v2874 = vpop.f32.mrf.mxu0
  %2875 = vmatprep.mubr.bf16.mxu0 0
  %2876 = vmatmul.mubr.bf16.gmra.mxu0 %v1826
  %v2877 = vpop.f32.mrf.mxu0
  %v2878 = vadd.f32 %v2589, %v2877
  %v2879 = vpop.f32.mrf.mxu0
  %v2880 = vpop.f32.mrf.mxu0
  %v2881 = vadd.f32 %v2592, %v2880
  %v2882 = vpop.f32.mrf.mxu0
  %2883 = vmatprep.mubr.bf16.mxu0 0
  %2884 = vmatmul.mubr.bf16.gmra.mxu0 %v1829
  %v2885 = vpop.f32.mrf.mxu0
  %v2886 = vadd.f32 %v2597, %v2885
  %v2887 = vpop.f32.mrf.mxu0
  %v2888 = vpop.f32.mrf.mxu0
  %v2889 = vadd.f32 %v2600, %v2888
  %v2890 = vpop.f32.mrf.mxu0
  %2891 = vmatprep.mubr.bf16.mxu0 0
  %2892 = vmatmul.mubr.bf16.gmra.mxu0 %v1832
  %v2893 = vpop.f32.mrf.mxu0
  %v2894 = vadd.f32 %v2605, %v2893
  %v2895 = vpop.f32.mrf.mxu0
  %v2896 = vpop.f32.mrf.mxu0
  %v2897 = vadd.f32 %v2608, %v2896
  %v2898 = vpop.f32.mrf.mxu0
  %2899 = vmatprep.mubr.bf16.mxu0 0
  %2900 = vmatmul.mubr.bf16.gmra.mxu0 %v1835
  %v2901 = vpop.f32.mrf.mxu0
  %v2902 = vadd.f32 %v2613, %v2901
  %v2903 = vpop.f32.mrf.mxu0
  %v2904 = vpop.f32.mrf.mxu0
  %v2905 = vadd.f32 %v2616, %v2904
  %v2906 = vpop.f32.mrf.mxu0
  %2907 = vmatprep.mubr.bf16.mxu0 0
  %2908 = vmatmul.mubr.bf16.gmra.mxu0 %v1838
  %v2909 = vpop.f32.mrf.mxu0
  %v2910 = vadd.f32 %v2621, %v2909
  %v2911 = vpop.f32.mrf.mxu0
  %v2912 = vpop.f32.mrf.mxu0
  %v2913 = vadd.f32 %v2624, %v2912
  %v2914 = vpop.f32.mrf.mxu0
  %2915 = vmatprep.mubr.bf16.mxu0 0
  %2916 = vmatmul.mubr.bf16.gmra.mxu0 %v1841
  %v2917 = vpop.f32.mrf.mxu0
  %v2918 = vadd.f32 %v2629, %v2917
  %v2919 = vpop.f32.mrf.mxu0
  %v2920 = vpop.f32.mrf.mxu0
  %v2921 = vadd.f32 %v2632, %v2920
  %v2922 = vpop.f32.mrf.mxu0
  %2923 = vmatprep.mubr.bf16.mxu0 0
  %2924 = vmatmul.mubr.bf16.gmra.mxu0 %v1844
  %v2925 = vpop.f32.mrf.mxu0
  %v2926 = vadd.f32 %v2637, %v2925
  %v2927 = vpop.f32.mrf.mxu0
  %v2928 = vpop.f32.mrf.mxu0
  %v2929 = vadd.f32 %v2640, %v2928
  %v2930 = vpop.f32.mrf.mxu0
  %2931 = vmatprep.mubr.bf16.mxu0 0
  %2932 = vmatmul.mubr.bf16.gmra.mxu0 %v1847
  %v2933 = vpop.f32.mrf.mxu0
  %v2934 = vadd.f32 %v2645, %v2933
  %v2935 = vpop.f32.mrf.mxu0
  %v2936 = vpop.f32.mrf.mxu0
  %v2937 = vadd.f32 %v2648, %v2936
  %v2938 = vpop.f32.mrf.mxu0
  %2939 = vmatprep.mubr.bf16.mxu0 0
  %2940 = vmatmul.mubr.bf16.gmra.mxu0 %v1850
  %v2941 = vpop.f32.mrf.mxu0
  %v2942 = vadd.f32 %v2653, %v2941
  %v2943 = vpop.f32.mrf.mxu0
  %v2944 = vpop.f32.mrf.mxu0
  %v2945 = vadd.f32 %v2656, %v2944
  %v2946 = vpop.f32.mrf.mxu0
  %2947 = vmatprep.mubr.bf16.mxu0 0
  %2948 = vmatmul.mubr.bf16.gmra.mxu0 %v1853
  %v2949 = vpop.f32.mrf.mxu0
  %v2950 = vadd.f32 %v2661, %v2949
  %v2951 = vpop.f32.mrf.mxu0
  %v2952 = vpop.f32.mrf.mxu0
  %v2953 = vadd.f32 %v2664, %v2952
  %v2954 = vpop.f32.mrf.mxu0
  %2955 = vmatprep.mubr.bf16.mxu0 0
  %2956 = vmatmul.mubr.bf16.gmra.mxu0 %v1856
  %v2957 = vpop.f32.mrf.mxu0
  %v2958 = vadd.f32 %v2669, %v2957
  %v2959 = vpop.f32.mrf.mxu0
  %v2960 = vpop.f32.mrf.mxu0
  %v2961 = vadd.f32 %v2672, %v2960
  %v2962 = vpop.f32.mrf.mxu0
  %2963 = vmatprep.mubr.bf16.mxu0 0
  %2964 = vmatmul.mubr.bf16.gmra.mxu0 %v1859
  %v2965 = vpop.f32.mrf.mxu0
  %v2966 = vadd.f32 %v2677, %v2965
  %v2967 = vpop.f32.mrf.mxu0
  %v2968 = vpop.f32.mrf.mxu0
  %v2969 = vadd.f32 %v2680, %v2968
  %v2970 = vpop.f32.mrf.mxu0
  %2971 = vmatprep.mubr.bf16.mxu0 0
  %2972 = vmatmul.mubr.bf16.gmra.mxu0 %v1862
  %v2973 = vpop.f32.mrf.mxu0
  %v2974 = vadd.f32 %v2685, %v2973
  %v2975 = vpop.f32.mrf.mxu0
  %v2976 = vpop.f32.mrf.mxu0
  %v2977 = vadd.f32 %v2688, %v2976
  %v2978 = vpop.f32.mrf.mxu0
  %2979 = vmatprep.mubr.bf16.mxu0 0
  %2980 = vmatmul.mubr.bf16.gmra.mxu0 %v1865
  %v2981 = vpop.f32.mrf.mxu0
  %v2982 = vadd.f32 %v2693, %v2981
  %v2983 = vpop.f32.mrf.mxu0
  %v2984 = vpop.f32.mrf.mxu0
  %v2985 = vadd.f32 %v2696, %v2984
  %v2986 = vpop.f32.mrf.mxu0
  %2987 = vmatprep.mubr.bf16.mxu0 0
  %2988 = vmatmul.mubr.bf16.gmra.mxu0 %v1868
  %v2989 = vpop.f32.mrf.mxu0
  %v2990 = vadd.f32 %v2701, %v2989
  %v2991 = vpop.f32.mrf.mxu0
  %v2992 = vpop.f32.mrf.mxu0
  %v2993 = vadd.f32 %v2704, %v2992
  %v2994 = vpop.f32.mrf.mxu0
  %2995 = vmatprep.mubr.bf16.mxu0 0
  %2996 = vmatmul.mubr.bf16.gmra.mxu0 %v1871
  %v2997 = vpop.f32.mrf.mxu0
  %v2998 = vadd.f32 %v2709, %v2997
  %v2999 = vpop.f32.mrf.mxu0
  %v3000 = vpop.f32.mrf.mxu0
  %v3001 = vadd.f32 %v2712, %v3000
  %v3002 = vpop.f32.mrf.mxu0
  %3003 = vmatprep.mubr.bf16.mxu0 0
  %3004 = vmatmul.mubr.bf16.gmra.mxu0 %v1874
  %v3005 = vpop.f32.mrf.mxu0
  %v3006 = vadd.f32 %v2717, %v3005
  %v3007 = vpop.f32.mrf.mxu0
  %v3008 = vpop.f32.mrf.mxu0
  %v3009 = vadd.f32 %v2720, %v3008
  %v3010 = vpop.f32.mrf.mxu0
  %3011 = vmatprep.mubr.bf16.mxu0 0
  %3012 = vmatmul.mubr.bf16.gmra.mxu0 %v1877
  %v3013 = vpop.f32.mrf.mxu0
  %v3014 = vadd.f32 %v2725, %v3013
  %v3015 = vpop.f32.mrf.mxu0
  %v3016 = vpop.f32.mrf.mxu0
  %v3017 = vadd.f32 %v2728, %v3016
  %v3018 = vpop.f32.mrf.mxu0
  %3019 = vmatprep.mubr.bf16.mxu0 0
  %3020 = vmatmul.mubr.bf16.gmra.mxu0 %v1880
  %v3021 = vpop.f32.mrf.mxu0
  %v3022 = vadd.f32 %v2733, %v3021
  %v3023 = vpop.f32.mrf.mxu0
  %v3024 = vpop.f32.mrf.mxu0
  %v3025 = vadd.f32 %v2736, %v3024
  %v3026 = vpop.f32.mrf.mxu0
  %3027 = vmatprep.mubr.bf16.mxu0 0
  %3028 = vmatmul.mubr.bf16.gmra.mxu0 %v1883
  %v3029 = vpop.f32.mrf.mxu0
  %v3030 = vadd.f32 %v2741, %v3029
  %v3031 = vpop.f32.mrf.mxu0
  %v3032 = vpop.f32.mrf.mxu0
  %v3033 = vadd.f32 %v2744, %v3032
  %v3034 = vpop.f32.mrf.mxu0
  %3035 = vmatprep.mubr.bf16.mxu0 0
  %3036 = vmatmul.mubr.bf16.gmra.mxu0 %v1886
  %v3037 = vpop.f32.mrf.mxu0
  %v3038 = vadd.f32 %v2749, %v3037
  %v3039 = vpop.f32.mrf.mxu0
  %v3040 = vpop.f32.mrf.mxu0
  %v3041 = vadd.f32 %v2752, %v3040
  %v3042 = vpop.f32.mrf.mxu0
  %3043 = vdwg.mxu0
  %vm3044 = vcmask 523264
  %v3045 = vsel %vm3044, %v2790, -inf
  %v3046 = vsel %vm3044, %v2798, -inf
  %v3047 = vmax.f32 %v3045, %v3046
  %v3048 = vsel %vm3044, %v2806, -inf
  %v3049 = vmax.f32 %v3047, %v3048
  %v3050 = vsel %vm3044, %v2814, -inf
  %v3051 = vmax.f32 %v3049, %v3050
  %v3052 = vsel %vm3044, %v2793, -inf
  %v3053 = vsel %vm3044, %v2801, -inf
  %v3054 = vmax.f32 %v3052, %v3053
  %v3055 = vsel %vm3044, %v2809, -inf
  %v3056 = vmax.f32 %v3054, %v3055
  %v3057 = vsel %vm3044, %v2817, -inf
  %v3058 = vmax.f32 %v3056, %v3057
  %v3059 = vsel %vm3044, %v2822, -inf
  %v3060 = vsel %vm3044, %v2830, -inf
  %v3061 = vmax.f32 %v3059, %v3060
  %v3062 = vsel %vm3044, %v2838, -inf
  %v3063 = vmax.f32 %v3061, %v3062
  %v3064 = vsel %vm3044, %v2846, -inf
  %v3065 = vmax.f32 %v3063, %v3064
  %v3066 = vsel %vm3044, %v2825, -inf
  %v3067 = vsel %vm3044, %v2833, -inf
  %v3068 = vmax.f32 %v3066, %v3067
  %v3069 = vsel %vm3044, %v2841, -inf
  %v3070 = vmax.f32 %v3068, %v3069
  %v3071 = vsel %vm3044, %v2849, -inf
  %v3072 = vmax.f32 %v3070, %v3071
  %v3073 = vsel %vm3044, %v2854, -inf
  %v3074 = vsel %vm3044, %v2862, -inf
  %v3075 = vmax.f32 %v3073, %v3074
  %v3076 = vsel %vm3044, %v2870, -inf
  %v3077 = vmax.f32 %v3075, %v3076
  %v3078 = vsel %vm3044, %v2878, -inf
  %v3079 = vmax.f32 %v3077, %v3078
  %v3080 = vsel %vm3044, %v2857, -inf
  %v3081 = vsel %vm3044, %v2865, -inf
  %v3082 = vmax.f32 %v3080, %v3081
  %v3083 = vsel %vm3044, %v2873, -inf
  %v3084 = vmax.f32 %v3082, %v3083
  %v3085 = vsel %vm3044, %v2881, -inf
  %v3086 = vmax.f32 %v3084, %v3085
  %v3087 = vsel %vm3044, %v2886, -inf
  %v3088 = vsel %vm3044, %v2894, -inf
  %v3089 = vmax.f32 %v3087, %v3088
  %v3090 = vsel %vm3044, %v2902, -inf
  %v3091 = vmax.f32 %v3089, %v3090
  %v3092 = vsel %vm3044, %v2910, -inf
  %v3093 = vmax.f32 %v3091, %v3092
  %v3094 = vsel %vm3044, %v2889, -inf
  %v3095 = vsel %vm3044, %v2897, -inf
  %v3096 = vmax.f32 %v3094, %v3095
  %v3097 = vsel %vm3044, %v2905, -inf
  %v3098 = vmax.f32 %v3096, %v3097
  %v3099 = vsel %vm3044, %v2913, -inf
  %v3100 = vmax.f32 %v3098, %v3099
  %v3101 = vsel %vm3044, %v2918, -inf
  %v3102 = vsel %vm3044, %v2926, -inf
  %v3103 = vmax.f32 %v3101, %v3102
  %v3104 = vsel %vm3044, %v2934, -inf
  %v3105 = vmax.f32 %v3103, %v3104
  %v3106 = vsel %vm3044, %v2942, -inf
  %v3107 = vmax.f32 %v3105, %v3106
  %v3108 = vsel %vm3044, %v2921, -inf
  %v3109 = vsel %vm3044, %v2929, -inf
  %v3110 = vmax.f32 %v3108, %v3109
  %v3111 = vsel %vm3044, %v2937, -inf
  %v3112 = vmax.f32 %v3110, %v3111
  %v3113 = vsel %vm3044, %v2945, -inf
  %v3114 = vmax.f32 %v3112, %v3113
  %v3115 = vsel %vm3044, %v2950, -inf
  %v3116 = vsel %vm3044, %v2958, -inf
  %v3117 = vmax.f32 %v3115, %v3116
  %v3118 = vsel %vm3044, %v2966, -inf
  %v3119 = vmax.f32 %v3117, %v3118
  %v3120 = vsel %vm3044, %v2974, -inf
  %v3121 = vmax.f32 %v3119, %v3120
  %v3122 = vsel %vm3044, %v2953, -inf
  %v3123 = vsel %vm3044, %v2961, -inf
  %v3124 = vmax.f32 %v3122, %v3123
  %v3125 = vsel %vm3044, %v2969, -inf
  %v3126 = vmax.f32 %v3124, %v3125
  %v3127 = vsel %vm3044, %v2977, -inf
  %v3128 = vmax.f32 %v3126, %v3127
  %v3129 = vsel %vm3044, %v2982, -inf
  %v3130 = vsel %vm3044, %v2990, -inf
  %v3131 = vmax.f32 %v3129, %v3130
  %v3132 = vsel %vm3044, %v2998, -inf
  %v3133 = vmax.f32 %v3131, %v3132
  %v3134 = vsel %vm3044, %v3006, -inf
  %v3135 = vmax.f32 %v3133, %v3134
  %v3136 = vsel %vm3044, %v2985, -inf
  %v3137 = vsel %vm3044, %v2993, -inf
  %v3138 = vmax.f32 %v3136, %v3137
  %v3139 = vsel %vm3044, %v3001, -inf
  %v3140 = vmax.f32 %v3138, %v3139
  %v3141 = vsel %vm3044, %v3009, -inf
  %v3142 = vmax.f32 %v3140, %v3141
  %v3143 = vsel %vm3044, %v3014, -inf
  %v3144 = vsel %vm3044, %v3022, -inf
  %v3145 = vmax.f32 %v3143, %v3144
  %v3146 = vsel %vm3044, %v3030, -inf
  %v3147 = vmax.f32 %v3145, %v3146
  %v3148 = vsel %vm3044, %v3038, -inf
  %v3149 = vmax.f32 %v3147, %v3148
  %v3150 = vsel %vm3044, %v3017, -inf
  %v3151 = vsel %vm3044, %v3025, -inf
  %v3152 = vmax.f32 %v3150, %v3151
  %v3153 = vsel %vm3044, %v3033, -inf
  %v3154 = vmax.f32 %v3152, %v3153
  %v3155 = vsel %vm3044, %v3041, -inf
  %v3156 = vmax.f32 %v3154, %v3155
  %v3157 = vld [vmem:[%s2] sm:$0x1]
  %v3159 = vlaneseq
  %v3160 = vshrl.u32 %v3159, 7
  %v3161 = vsub.s32 0, %v3160
  %v3162 = vrot.slane %v3157, %v3161
  %v3164 = vadd.f32 %v3051, %v3162
  %v3165 = vadd.f32 %v3058, %v3162
  %v3166 = vadd.f32 %v3065, %v3162
  %v3167 = vadd.f32 %v3072, %v3162
  %v3168 = vadd.f32 %v3079, %v3162
  %v3169 = vadd.f32 %v3086, %v3162
  %v3170 = vadd.f32 %v3093, %v3162
  %v3171 = vadd.f32 %v3100, %v3162
  %v3172 = vadd.f32 %v3107, %v3162
  %v3173 = vadd.f32 %v3114, %v3162
  %v3174 = vadd.f32 %v3121, %v3162
  %v3175 = vadd.f32 %v3128, %v3162
  %v3176 = vadd.f32 %v3135, %v3162
  %v3177 = vadd.f32 %v3142, %v3162
  %v3178 = vadd.f32 %v3149, %v3162
  %v3179 = vadd.f32 %v3156, %v3162
  %v3180 = vmax.f32 %v3164, 0.0
  %v3181 = vmax.f32 %v3165, 0.0
  %v3182 = vmax.f32 %v3166, 0.0
  %v3183 = vmax.f32 %v3167, 0.0
  %v3184 = vmax.f32 %v3168, 0.0
  %v3185 = vmax.f32 %v3169, 0.0
  %v3186 = vmax.f32 %v3170, 0.0
  %v3187 = vmax.f32 %v3171, 0.0
  %v3188 = vmax.f32 %v3172, 0.0
  %v3189 = vmax.f32 %v3173, 0.0
  %v3190 = vmax.f32 %v3174, 0.0
  %v3191 = vmax.f32 %v3175, 0.0
  %v3192 = vmax.f32 %v3176, 0.0
  %v3193 = vmax.f32 %v3177, 0.0
  %v3194 = vmax.f32 %v3178, 0.0
  %v3195 = vmax.f32 %v3179, 0.0
  %v3196 = vpack.c.bf16 %v3181, %v3180
  %v3197 = vpack.c.bf16 %v3183, %v3182
  %v3198 = vpack.c.bf16 %v3185, %v3184
  %v3199 = vpack.c.bf16 %v3187, %v3186
  %v3200 = vpack.c.bf16 %v3189, %v3188
  %v3201 = vpack.c.bf16 %v3191, %v3190
  %v3202 = vpack.c.bf16 %v3193, %v3192
  %v3203 = vpack.c.bf16 %v3195, %v3194
  %v3212 = vunpack.c.l.b16 %v3196
  %v3213 = vunpack.c.h.b16 %v3196
  %v3214 = vunpack.c.l.b16 %v3197
  %v3215 = vunpack.c.h.b16 %v3197
  %v3216 = vunpack.c.l.b16 %v3198
  %v3217 = vunpack.c.h.b16 %v3198
  %v3218 = vunpack.c.l.b16 %v3199
  %v3219 = vunpack.c.h.b16 %v3199
  %v3220 = vunpack.c.l.b16 %v3200
  %v3221 = vunpack.c.h.b16 %v3200
  %v3222 = vunpack.c.l.b16 %v3201
  %v3223 = vunpack.c.h.b16 %v3201
  %v3224 = vunpack.c.l.b16 %v3202
  %v3225 = vunpack.c.h.b16 %v3202
  %v3226 = vunpack.c.l.b16 %v3203
  %v3227 = vunpack.c.h.b16 %v3203
  %v3228 = vpack.c.b16 %v3212, %v3212
  %v3229 = vpack.c.b16 %v3213, %v3213
  %v3230 = vpack.c.b16 %v3214, %v3214
  %v3231 = vpack.c.b16 %v3215, %v3215
  %v3232 = vpack.c.b16 %v3216, %v3216
  %v3233 = vpack.c.b16 %v3217, %v3217
  %v3234 = vpack.c.b16 %v3218, %v3218
  %v3235 = vpack.c.b16 %v3219, %v3219
  %v3236 = vpack.c.b16 %v3220, %v3220
  %v3237 = vpack.c.b16 %v3221, %v3221
  %v3238 = vpack.c.b16 %v3222, %v3222
  %v3239 = vpack.c.b16 %v3223, %v3223
  %v3240 = vpack.c.b16 %v3224, %v3224
  %v3241 = vpack.c.b16 %v3225, %v3225
  %v3242 = vpack.c.b16 %v3226, %v3226
  %v3243 = vpack.c.b16 %v3227, %v3227
  %vm3260 = vcmask 519168
  %3261 = vst.msk [vmem:[%s3] sm:$0xf] %vm3260, %v3228
  %3262 = vst.msk [vmem:[%s3 + $0x4] sm:$0xf] %vm3260, %v3229
  %3263 = vst.msk [vmem:[%s3 + $0x8] sm:$0xf] %vm3260, %v3230
  %3264 = vst.msk [vmem:[%s3 + $0xc] sm:$0xf] %vm3260, %v3231
  %3265 = vst.msk [vmem:[%s3 + $0x10] sm:$0xf] %vm3260, %v3232
  %3266 = vst.msk [vmem:[%s3 + $0x14] sm:$0xf] %vm3260, %v3233
  %3267 = vst.msk [vmem:[%s3 + $0x18] sm:$0xf] %vm3260, %v3234
  %3268 = vst.msk [vmem:[%s3 + $0x1c] sm:$0xf] %vm3260, %v3235
  %3269 = vst.msk [vmem:[%s3 + $0x20] sm:$0xf] %vm3260, %v3236
  %3270 = vst.msk [vmem:[%s3 + $0x24] sm:$0xf] %vm3260, %v3237
  %3271 = vst.msk [vmem:[%s3 + $0x28] sm:$0xf] %vm3260, %v3238
  %3272 = vst.msk [vmem:[%s3 + $0x2c] sm:$0xf] %vm3260, %v3239
  %3273 = vst.msk [vmem:[%s3 + $0x30] sm:$0xf] %vm3260, %v3240
  %3274 = vst.msk [vmem:[%s3 + $0x34] sm:$0xf] %vm3260, %v3241
  %3275 = vst.msk [vmem:[%s3 + $0x38] sm:$0xf] %vm3260, %v3242
  %3276 = vst.msk [vmem:[%s3 + $0x3c] sm:$0xf] %vm3260, %v3243
  // Predicated region
  $region14: #{simple_cnn_forward.4} parent=0 // pred_check
    _
  $region15: #{simple_cnn_forward.4} parent=0 // pred_check_branch
    %3278 = sbr.rel (0) target = $region17
  $region16: #{simple_cnn_forward.4} parent=0 // pred_region
    _
  $region17: #{simple_cnn_forward.4} parent=0 // pred_fallthru
    _
  // Predicated region
  $region18: #{simple_cnn_forward.4} parent=0 // pred_check
    _
  $region19: #{simple_cnn_forward.4} parent=0 // pred_check_branch
    %3280 = sbr.rel (0) target = $region21
  $region20: #{simple_cnn_forward.4} parent=0 // pred_region
    _
  $region21: #{simple_cnn_forward.4} parent=0 // pred_fallthru
    _

</llo_original>
